<compile_context>
chip_gen: v7x
topology: tpu7x:2x2x1
jax: 0.10.0
libtpu: 0.0.40
codegen_flags: <defaults>
</compile_context>

<pallas_src>
import functools

import jax
import jax.numpy as jnp
from jax import lax
from jax.experimental import pallas as pl
from jax.experimental.pallas import tpu as pltpu

NEG_SLOPE = 0.01
VMEM_LIMIT = 32 * 1024 * 1024  # explicit cap; leaves headroom on v7x (64 MiB physical)


def _round_up(x, m):
    return ((x + m - 1) // m) * m


# ----------------------- conv1: conv + bias + lrelu + pool ------------------ #

def _conv1_kernel(p_ref, w_ref, b_ref, o_ref, *, slope):
    """p_ref: (4, tg, 32) quadrant-major im2col patches (K padded 25->32), bf16.
    w_ref: (32, 32) bf16; b_ref: (1, 32) f32; o_ref: (tg, 32) bf16.

    Quadrant q holds the patches of conv-output positions (2r+dh, 2s+dw); the max
    over q of LeakyReLU(patch @ w + b) IS the 2x2 maxpool -> fully fused stage.
    """
    best = None
    for q in range(4):
        y = jnp.dot(p_ref[q], w_ref[...], preferred_element_type=jnp.float32)
        y = y + b_ref[...]
        y = jnp.where(y >= 0.0, y, slope * y)
        best = y if best is None else jnp.maximum(best, y)
    o_ref[...] = best.astype(o_ref.dtype)


def conv1_fused(patches, w1, b1, *, slope=NEG_SLOPE, tg_cap=1024):
    """patches: (4, G, 32) bf16 -> pooled conv1 rows (G, 32) bf16, G = N*12*12."""
    _, G, K = patches.shape
    C = w1.shape[1]
    tg = min(G, tg_cap)                      # G = N*144 is always a multiple of 8
    return pl.pallas_call(
        functools.partial(_conv1_kernel, slope=slope),
        out_shape=jax.ShapeDtypeStruct((G, C), jnp.bfloat16),
        grid=(pl.cdiv(G, tg),),
        in_specs=[
            pl.BlockSpec((4, tg, K), lambda i: (0, i, 0)),
            pl.BlockSpec((K, C), lambda i: (0, 0)),
            pl.BlockSpec((1, C), lambda i: (0, 0)),
        ],
        out_specs=pl.BlockSpec((tg, C), lambda i: (i, 0)),
        compiler_params=pltpu.CompilerParams(
            dimension_semantics=("parallel",), vmem_limit_bytes=VMEM_LIMIT),
        cost_estimate=pl.CostEstimate(
            flops=2 * 4 * G * K * C,
            transcendentals=0,
            bytes_accessed=4 * G * K * 2 + K * C * 2 + C * 4 + G * C * 2),
    )(patches, w1, b1)


def conv1_quadrant_patches(x):
    """x: (N, 28, 28) bf16 -> (4, N*144, 32) bf16 quadrant-major im2col patches."""
    N = x.shape[0]
    quads = []
    for dh in range(2):
        for dw in range(2):
            cols = [x[:, dh + kh:dh + kh + 23:2, dw + kw:dw + kw + 23:2]
                    for kh in range(5) for kw in range(5)]          # each (N, 12, 12)
            q = jnp.stack(cols, axis=-1).reshape(N * 144, 25)       # rows (n, r, s)
            quads.append(q)
    p = jnp.stack(quads, axis=0)                                    # (4, N*144, 25)
    return jnp.pad(p, ((0, 0), (0, 0), (0, 7)))                     # K 25 -> 32


# ------------- conv2: in-kernel im2col + bias + lrelu + (H) pool ------------ #

def _conv2_kernel(h_ref, w_ref, b_ref, o_ref, *, slope):
    """h_ref: (tb, 12, 12, 32) bf16 pooled conv1 map (resident in VMEM).
    w_ref: (25, 32, 64) bf16 tap-major; b_ref: (1, 64) f32.
    o_ref: (tb, 32, 64) bf16 -- rows within an image are (oh_pooled r in 0..3, ow in 0..7),
    i.e. conv2 + bias + LeakyReLU with the H half of the 2x2 maxpool fused.

    The im2col is done in-kernel: 25 shifted-window loads of the resident map, so
    the (N*64, 800) patch matrix never exists in HBM.
    """
    tb = h_ref.shape[0]
    acc = None
    for kh in range(5):
        for kw in range(5):
            patch = h_ref[:, kh:kh + 8, kw:kw + 8, :].reshape(tb * 64, 32)
            d = jnp.dot(patch, w_ref[5 * kh + kw],
                        preferred_element_type=jnp.float32)
            acc = d if acc is None else acc + d
    y = acc + b_ref[...]
    y = jnp.where(y >= 0.0, y, slope * y)
    y = y.reshape(tb, 8, 8, 64)                                  # (img, oh, ow, c)
    for r in range(4):                                           # pool over oh
        row = jnp.maximum(y[:, 2 * r], y[:, 2 * r + 1])          # (tb, 8, 64)
        o_ref[:, 8 * r:8 * (r + 1), :] = row.astype(o_ref.dtype)


def conv2_fused(h1, w2, b2, *, slope=NEG_SLOPE, tb_cap=16):
    """h1: (N, 12, 12, 32) bf16 -> (N, 32, 64) bf16 (rows = (oh_pooled, ow))."""
    N = h1.shape[0]
    tb = min(N, tb_cap)
    return pl.pallas_call(
        functools.partial(_conv2_kernel, slope=slope),
        out_shape=jax.ShapeDtypeStruct((N, 32, 64), jnp.bfloat16),
        grid=(pl.cdiv(N, tb),),
        in_specs=[
            pl.BlockSpec((tb, 12, 12, 32), lambda i: (i, 0, 0, 0)),
            pl.BlockSpec((25, 32, 64), lambda i: (0, 0, 0)),
            pl.BlockSpec((1, 64), lambda i: (0, 0)),
        ],
        out_specs=pl.BlockSpec((tb, 32, 64), lambda i: (i, 0, 0)),
        compiler_params=pltpu.CompilerParams(
            dimension_semantics=("parallel",), vmem_limit_bytes=VMEM_LIMIT),
        cost_estimate=pl.CostEstimate(
            flops=2 * 25 * N * 64 * 32 * 64,
            transcendentals=0,
            bytes_accessed=(N * 12 * 12 * 32 * 2 + 25 * 32 * 64 * 2 + 64 * 4
                            + N * 32 * 64 * 2)),
    )(h1, w2, b2)


# -------------------- fused FC: part_1 (1024) + part_2 (1) ------------------ #

def _fc_fused_kernel(a_ref, w3_ref, b3_ref, w4_ref, b4_ref, p1_ref, p2_ref, *, slope):
    """part1 = LeakyReLU(a @ w3 + b3); part2 = part1 @ w4^T + b4 (fused)."""
    y = jnp.dot(a_ref[...], w3_ref[...], preferred_element_type=jnp.float32)
    y = y + b3_ref[...]
    y = jnp.where(y >= 0.0, y, slope * y)            # post-inplace-LeakyReLU part_1
    p1_ref[...] = y.astype(p1_ref.dtype)
    z = jnp.sum(y * w4_ref[...], axis=1, keepdims=True) + b4_ref[...]
    p2_ref[...] = z.astype(p2_ref.dtype)


def _fc_row_tile(m):
    # >=2 grid steps whenever M > 8 so dimension_semantics=('parallel',) can shard
    # the FC across both TensorCores on v7x; capped at 256 so the constant-index
    # w3 stays resident and per-step MXU work remains large (v5e/v6e single-TC).
    if m <= 8:
        return m
    return min(256, _round_up(-(-m // 2), 8))


def fc_part1_part2(a, w3, b3, w4row, b4, *, slope=NEG_SLOPE):
    """a: (M, 1024) bf16; w3: (1024, 1024) bf16; b3/w4row: (1, 1024) f32; b4: (1, 1) f32."""
    M, K = a.shape
    _, Nout = w3.shape
    tm = _fc_row_tile(M)
    flops = 2 * M * K * Nout + 3 * M * Nout
    bytes_accessed = (M * K * 2 + K * Nout * 2 + (2 * Nout + 1) * 4
                      + M * Nout * 4 + M * 4)
    return pl.pallas_call(
        functools.partial(_fc_fused_kernel, slope=slope),
        out_shape=(
            jax.ShapeDtypeStruct((M, Nout), jnp.float32),   # part_1 (module output: keep f32)
            jax.ShapeDtypeStruct((M, 1), jnp.float32),      # part_2 (logits)
        ),
        grid=(pl.cdiv(M, tm),),
        in_specs=[
            pl.BlockSpec((tm, K), lambda i: (i, 0)),
            pl.BlockSpec((K, Nout), lambda i: (0, 0)),
            pl.BlockSpec((1, Nout), lambda i: (0, 0)),
            pl.BlockSpec((1, Nout), lambda i: (0, 0)),
            pl.BlockSpec((1, 1), lambda i: (0, 0)),
        ],
        out_specs=(
            pl.BlockSpec((tm, Nout), lambda i: (i, 0)),
            pl.BlockSpec((tm, 1), lambda i: (i, 0)),
        ),
        compiler_params=pltpu.CompilerParams(
            dimension_semantics=("parallel",), vmem_limit_bytes=VMEM_LIMIT),
        cost_estimate=pl.CostEstimate(
            flops=flops, transcendentals=0, bytes_accessed=bytes_accessed),
    )(a, w3, b3, w4row, b4)


# ------------------------------- params / glue ------------------------------ #

def init_params(key):
    """Deterministic synthetic init in PyTorch layout (N(0, 0.02) weights, zero biases)."""
    k1, k2, k3, k4 = jax.random.split(key, 4)
    std = 0.02
    return dict(
        w1=jax.random.normal(k1, (32, 1, 5, 5), jnp.float32) * std,   # Conv2d(1, 32, 5)
        b1=jnp.zeros((32,), jnp.float32),
        w2=jax.random.normal(k2, (64, 32, 5, 5), jnp.float32) * std,  # Conv2d(32, 64, 5)
        b2=jnp.zeros((64,), jnp.float32),
        w3=jax.random.normal(k3, (1024, 1024), jnp.float32) * std,    # Linear(1024, 1024)
        b3=jnp.zeros((1024,), jnp.float32),
        w4=jax.random.normal(k4, (1, 1024), jnp.float32) * std,       # Linear(1024, 1)
        b4=jnp.zeros((1,), jnp.float32),
    )


def prepare_params(params):
    """One-time weight prep (outside jit): kernel layouts + bf16 cast.

    * conv1 weight -> (kh*kw, cout) with K zero-padded 25 -> 32.
    * conv2 weight -> tap-major (25, cin, cout) for the in-kernel im2col matmuls.
    * w3's input dim is permuted from PyTorch's (c, h, w) flatten order to the
      (h, w, c) order produced by the NHWC pipeline (no runtime transpose).
    """
    w1 = params["w1"].transpose(2, 3, 1, 0).reshape(25, 32)
    w1 = jnp.pad(w1, ((0, 7), (0, 0))).astype(jnp.bfloat16)
    w2 = params["w2"].transpose(2, 3, 1, 0).reshape(25, 32, 64).astype(jnp.bfloat16)
    w3 = params["w3"].reshape(1024, 64, 4, 4).transpose(2, 3, 1, 0)
    w3 = w3.reshape(1024, 1024).astype(jnp.bfloat16)
    return dict(
        w1=w1, b1=params["b1"].reshape(1, 32).astype(jnp.float32),
        w2=w2, b2=params["b2"].reshape(1, 64).astype(jnp.float32),
        w3=w3, b3=params["b3"].reshape(1, 1024).astype(jnp.float32),
        w4=params["w4"].reshape(1, 1024).astype(jnp.float32),
        b4=params["b4"].reshape(1, 1).astype(jnp.float32),
    )


@jax.jit
def discriminator_forward(x, prep):
    """x: (N, 1, 28, 28) float32. Returns (part_2 (N, 1), part_1 (N, 1024))."""
    N = x.shape[0]
    x = x.reshape(N, 28, 28).astype(jnp.bfloat16)

    # Conv2d(1,32,5) + LeakyReLU + MaxPool(2): fully fused (quadrant-major patches)
    patches = conv1_quadrant_patches(x)                        # (4, N*144, 32)
    h1 = conv1_fused(patches, prep["w1"], prep["b1"])          # (N*144, 32)
    h1 = h1.reshape(N, 12, 12, 32)

    # Conv2d(32,64,5) + LeakyReLU + MaxPool(2): in-kernel im2col, H-pool fused,
    # tiny W-pool (4 KB/img) finished in XLA.
    hp = conv2_fused(h1, prep["w2"], prep["b2"])               # (N, 32, 64)
    h2 = jnp.max(hp.reshape(N, 4, 4, 2, 64), axis=3)           # (N, 4, 4, 64)

    flat = h2.reshape(N, 1024)                                 # (h, w, c) order
    part1, part2 = fc_part1_part2(flat, prep["w3"], prep["b3"],
                                  prep["w4"], prep["b4"])
    return part2, part1


# --------------------------- pure-JAX reference ----------------------------- #

def reference_forward(x, params):
    def lrelu(v):
        return jnp.where(v >= 0, v, NEG_SLOPE * v)

    def pool(v):
        return lax.reduce_window(v, -jnp.inf, lax.max, (1, 1, 2, 2), (1, 1, 2, 2), "VALID")

    N = x.shape[0]
    x = x.reshape(N, 1, 28, 28)
    h = lax.conv_general_dilated(x, params["w1"], (1, 1), "VALID",
                                 dimension_numbers=("NCHW", "OIHW", "NCHW"))
    h = pool(lrelu(h + params["b1"][None, :, None, None]))
    h = lax.conv_general_dilated(h, params["w2"], (1, 1), "VALID",
                                 dimension_numbers=("NCHW", "OIHW", "NCHW"))
    h = pool(lrelu(h + params["b2"][None, :, None, None]))
    flat = h.reshape(N, -1)
    part1 = lrelu(flat @ params["w3"].T + params["b3"])
    part2 = part1 @ params["w4"].T + params["b4"]
    return part2, part1


if __name__ == "__main__":
    key = jax.random.PRNGKey(0)
    kx, kp = jax.random.split(key)
    x = jax.random.normal(kx, (2, 1, 28, 28), jnp.float32)
    params = init_params(kp)
    prep = prepare_params(params)          # one-time weight layout/bf16 prep

    part2, part1 = discriminator_forward(x, prep)
    jax.block_until_ready((part2, part1))
    assert part2.shape == (2, 1) and part1.shape == (2, 1024)

    ref2, ref1 = reference_forward(x, params)
    assert jnp.allclose(part2, ref2, atol=2e-3, rtol=1e-2), \
        float(jnp.max(jnp.abs(part2 - ref2)))
    assert jnp.allclose(part1, ref1, atol=2e-3, rtol=1e-2), \
        float(jnp.max(jnp.abs(part1 - ref1)))

    print("KERNEL_OK")
</pallas_src>

<mosaic_0001>
module attributes {stable_mosaic.version = 11 : i64} {
  func.func @_conv1_kernel(%arg0: i32, %arg1: memref<4x288x32xbf16, #tpu.memory_space<vmem>>, %arg2: memref<32x32xbf16, #tpu.memory_space<vmem>>, %arg3: memref<1x32xf32, #tpu.memory_space<vmem>>, %arg4: memref<288x32xbf16, #tpu.memory_space<vmem>>) attributes {dimension_semantics = [#tpu.dimension_semantics<parallel>], iteration_bounds = array<i64: 1>, scalar_prefetch = 0 : i64, scratch_operands = 0 : i64, tpu.core_type = #tpu.core_type<tc>, window_params = [{transform_indices = @transform_0, window_bounds = array<i64: 4, 288, 32>}, {pipeline_mode = #tpu.pipeline_mode<synchronous>, transform_indices = @transform_1, window_bounds = array<i64: 32, 32>}, {pipeline_mode = #tpu.pipeline_mode<synchronous>, transform_indices = @transform_2, window_bounds = array<i64: 1, 32>}, {transform_indices = @transform_3, window_bounds = array<i64: 288, 32>}]} {
    %c0 = arith.constant 0 : index
    %c0_0 = arith.constant 0 : index
    %c0_1 = arith.constant 0 : index
    %0 = vector.load %arg1[%c0, %c0_0, %c0_1] : memref<4x288x32xbf16, #tpu.memory_space<vmem>>, vector<1x288x32xbf16>
    %1 = vector.shape_cast %0 : vector<1x288x32xbf16> to vector<288x32xbf16>
    %c0_2 = arith.constant 0 : index
    %c0_3 = arith.constant 0 : index
    %2 = vector.load %arg2[%c0_2, %c0_3] : memref<32x32xbf16, #tpu.memory_space<vmem>>, vector<32x32xbf16>
    %cst = arith.constant dense<0.000000e+00> : vector<288x32xf32>
    %3 = tpu.matmul %1, %2, %cst {dimension_numbers = #tpu.dot_dimension_numbers<[1], [0], [0], [1], [0, 0, 1, 1], [], []>} : vector<288x32xbf16>, vector<32x32xbf16>, vector<288x32xf32> -> vector<288x32xf32>
    %c0_4 = arith.constant 0 : index
    %c0_5 = arith.constant 0 : index
    %4 = vector.load %arg3[%c0_4, %c0_5] : memref<1x32xf32, #tpu.memory_space<vmem>>, vector<1x32xf32>
    %5 = vector.broadcast %4 : vector<1x32xf32> to vector<288x32xf32>
    %6 = arith.addf %3, %5 : vector<288x32xf32>
    %cst_6 = arith.constant 0.000000e+00 : f32
    %7 = vector.broadcast %cst_6 : f32 to vector<288x32xf32>
    %8 = arith.cmpf oge, %6, %7 : vector<288x32xf32>
    %cst_7 = arith.constant 0.00999999977 : f32
    %9 = vector.broadcast %cst_7 : f32 to vector<288x32xf32>
    %10 = arith.mulf %9, %6 : vector<288x32xf32>
    %11 = arith.select %8, %6, %10 : vector<288x32xi1>, vector<288x32xf32>
    %c1 = arith.constant 1 : index
    %c0_8 = arith.constant 0 : index
    %c0_9 = arith.constant 0 : index
    %12 = vector.load %arg1[%c1, %c0_8, %c0_9] : memref<4x288x32xbf16, #tpu.memory_space<vmem>>, vector<1x288x32xbf16>
    %13 = vector.shape_cast %12 : vector<1x288x32xbf16> to vector<288x32xbf16>
    %c0_10 = arith.constant 0 : index
    %c0_11 = arith.constant 0 : index
    %14 = vector.load %arg2[%c0_10, %c0_11] : memref<32x32xbf16, #tpu.memory_space<vmem>>, vector<32x32xbf16>
    %cst_12 = arith.constant dense<0.000000e+00> : vector<288x32xf32>
    %15 = tpu.matmul %13, %14, %cst_12 {dimension_numbers = #tpu.dot_dimension_numbers<[1], [0], [0], [1], [0, 0, 1, 1], [], []>} : vector<288x32xbf16>, vector<32x32xbf16>, vector<288x32xf32> -> vector<288x32xf32>
    %c0_13 = arith.constant 0 : index
    %c0_14 = arith.constant 0 : index
    %16 = vector.load %arg3[%c0_13, %c0_14] : memref<1x32xf32, #tpu.memory_space<vmem>>, vector<1x32xf32>
    %17 = vector.broadcast %16 : vector<1x32xf32> to vector<288x32xf32>
    %18 = arith.addf %15, %17 : vector<288x32xf32>
    %cst_15 = arith.constant 0.000000e+00 : f32
    %19 = vector.broadcast %cst_15 : f32 to vector<288x32xf32>
    %20 = arith.cmpf oge, %18, %19 : vector<288x32xf32>
    %cst_16 = arith.constant 0.00999999977 : f32
    %21 = vector.broadcast %cst_16 : f32 to vector<288x32xf32>
    %22 = arith.mulf %21, %18 : vector<288x32xf32>
    %23 = arith.select %20, %18, %22 : vector<288x32xi1>, vector<288x32xf32>
    %24 = arith.maximumf %11, %23 : vector<288x32xf32>
    %c2 = arith.constant 2 : index
    %c0_17 = arith.constant 0 : index
    %c0_18 = arith.constant 0 : index
    %25 = vector.load %arg1[%c2, %c0_17, %c0_18] : memref<4x288x32xbf16, #tpu.memory_space<vmem>>, vector<1x288x32xbf16>
    %26 = vector.shape_cast %25 : vector<1x288x32xbf16> to vector<288x32xbf16>
    %c0_19 = arith.constant 0 : index
    %c0_20 = arith.constant 0 : index
    %27 = vector.load %arg2[%c0_19, %c0_20] : memref<32x32xbf16, #tpu.memory_space<vmem>>, vector<32x32xbf16>
    %cst_21 = arith.constant dense<0.000000e+00> : vector<288x32xf32>
    %28 = tpu.matmul %26, %27, %cst_21 {dimension_numbers = #tpu.dot_dimension_numbers<[1], [0], [0], [1], [0, 0, 1, 1], [], []>} : vector<288x32xbf16>, vector<32x32xbf16>, vector<288x32xf32> -> vector<288x32xf32>
    %c0_22 = arith.constant 0 : index
    %c0_23 = arith.constant 0 : index
    %29 = vector.load %arg3[%c0_22, %c0_23] : memref<1x32xf32, #tpu.memory_space<vmem>>, vector<1x32xf32>
    %30 = vector.broadcast %29 : vector<1x32xf32> to vector<288x32xf32>
    %31 = arith.addf %28, %30 : vector<288x32xf32>
    %cst_24 = arith.constant 0.000000e+00 : f32
    %32 = vector.broadcast %cst_24 : f32 to vector<288x32xf32>
    %33 = arith.cmpf oge, %31, %32 : vector<288x32xf32>
    %cst_25 = arith.constant 0.00999999977 : f32
    %34 = vector.broadcast %cst_25 : f32 to vector<288x32xf32>
    %35 = arith.mulf %34, %31 : vector<288x32xf32>
    %36 = arith.select %33, %31, %35 : vector<288x32xi1>, vector<288x32xf32>
    %37 = arith.maximumf %24, %36 : vector<288x32xf32>
    %c3 = arith.constant 3 : index
    %c0_26 = arith.constant 0 : index
    %c0_27 = arith.constant 0 : index
    %38 = vector.load %arg1[%c3, %c0_26, %c0_27] : memref<4x288x32xbf16, #tpu.memory_space<vmem>>, vector<1x288x32xbf16>
    %39 = vector.shape_cast %38 : vector<1x288x32xbf16> to vector<288x32xbf16>
    %c0_28 = arith.constant 0 : index
    %c0_29 = arith.constant 0 : index
    %40 = vector.load %arg2[%c0_28, %c0_29] : memref<32x32xbf16, #tpu.memory_space<vmem>>, vector<32x32xbf16>
    %cst_30 = arith.constant dense<0.000000e+00> : vector<288x32xf32>
    %41 = tpu.matmul %39, %40, %cst_30 {dimension_numbers = #tpu.dot_dimension_numbers<[1], [0], [0], [1], [0, 0, 1, 1], [], []>} : vector<288x32xbf16>, vector<32x32xbf16>, vector<288x32xf32> -> vector<288x32xf32>
    %c0_31 = arith.constant 0 : index
    %c0_32 = arith.constant 0 : index
    %42 = vector.load %arg3[%c0_31, %c0_32] : memref<1x32xf32, #tpu.memory_space<vmem>>, vector<1x32xf32>
    %43 = vector.broadcast %42 : vector<1x32xf32> to vector<288x32xf32>
    %44 = arith.addf %41, %43 : vector<288x32xf32>
    %cst_33 = arith.constant 0.000000e+00 : f32
    %45 = vector.broadcast %cst_33 : f32 to vector<288x32xf32>
    %46 = arith.cmpf oge, %44, %45 : vector<288x32xf32>
    %cst_34 = arith.constant 0.00999999977 : f32
    %47 = vector.broadcast %cst_34 : f32 to vector<288x32xf32>
    %48 = arith.mulf %47, %44 : vector<288x32xf32>
    %49 = arith.select %46, %44, %48 : vector<288x32xi1>, vector<288x32xf32>
    %50 = arith.maximumf %37, %49 : vector<288x32xf32>
    %51 = arith.truncf %50 : vector<288x32xf32> to vector<288x32xbf16>
    %c0_35 = arith.constant 0 : index
    %c0_36 = arith.constant 0 : index
    %52 = vector.load %arg4[%c0_35, %c0_36] : memref<288x32xbf16, #tpu.memory_space<vmem>>, vector<288x32xbf16>
    tpu.vector_store %arg4[%c0_35, %c0_36], %51 {strides = array<i32>} : memref<288x32xbf16, #tpu.memory_space<vmem>>, vector<288x32xbf16>,
    return
  }
  func.func @transform_0(%arg0: i32) -> (i32, i32, i32) {
    %c0_i32 = arith.constant 0 : i32
    %c0_i32_0 = arith.constant 0 : i32
    %c0_i32_1 = arith.constant 0 : i32
    return %c0_i32, %arg0, %c0_i32_0 : i32, i32, i32
  }
  func.func @transform_1(%arg0: i32) -> (i32, i32) {
    %c0_i32 = arith.constant 0 : i32
    %c0_i32_0 = arith.constant 0 : i32
    %c0_i32_1 = arith.constant 0 : i32
    return %c0_i32, %c0_i32_0 : i32, i32
  }
  func.func @transform_2(%arg0: i32) -> (i32, i32) {
    %c0_i32 = arith.constant 0 : i32
    %c0_i32_0 = arith.constant 0 : i32
    %c0_i32_1 = arith.constant 0 : i32
    return %c0_i32, %c0_i32_0 : i32, i32
  }
  func.func @transform_3(%arg0: i32) -> (i32, i32) {
    %c0_i32 = arith.constant 0 : i32
    %c0_i32_0 = arith.constant 0 : i32
    return %arg0, %c0_i32 : i32, i32
  }
}

module attributes {stable_mosaic.version = 11 : i64} {
  func.func @_conv2_kernel(%arg0: i32, %arg1: memref<2x12x12x32xbf16, #tpu.memory_space<vmem>>, %arg2: memref<25x32x64xbf16, #tpu.memory_space<vmem>>, %arg3: memref<1x64xf32, #tpu.memory_space<vmem>>, %arg4: memref<2x32x64xbf16, #tpu.memory_space<vmem>>) attributes {dimension_semantics = [#tpu.dimension_semantics<parallel>], iteration_bounds = array<i64: 1>, scalar_prefetch = 0 : i64, scratch_operands = 0 : i64, tpu.core_type = #tpu.core_type<tc>, window_params = [{transform_indices = @transform_0, window_bounds = array<i64: 2, 12, 12, 32>}, {pipeline_mode = #tpu.pipeline_mode<synchronous>, transform_indices = @transform_1, window_bounds = array<i64: 25, 32, 64>}, {pipeline_mode = #tpu.pipeline_mode<synchronous>, transform_indices = @transform_2, window_bounds = array<i64: 1, 64>}, {transform_indices = @transform_3, window_bounds = array<i64: 2, 32, 64>}]} {
    %c0 = arith.constant 0 : index
    %c0_0 = arith.constant 0 : index
    %c0_1 = arith.constant 0 : index
    %c0_2 = arith.constant 0 : index
    %0 = vector.load %arg1[%c0, %c0_0, %c0_1, %c0_2] : memref<2x12x12x32xbf16, #tpu.memory_space<vmem>>, vector<2x8x8x32xbf16>
    %1 = vector.shape_cast %0 : vector<2x8x8x32xbf16> to vector<128x32xbf16>
    %c0_3 = arith.constant 0 : index
    %c0_4 = arith.constant 0 : index
    %c0_5 = arith.constant 0 : index
    %2 = vector.load %arg2[%c0_3, %c0_4, %c0_5] : memref<25x32x64xbf16, #tpu.memory_space<vmem>>, vector<1x32x64xbf16>
    %3 = vector.shape_cast %2 : vector<1x32x64xbf16> to vector<32x64xbf16>
    %cst = arith.constant dense<0.000000e+00> : vector<128x64xf32>
    %4 = tpu.matmul %1, %3, %cst {dimension_numbers = #tpu.dot_dimension_numbers<[1], [0], [0], [1], [0, 0, 1, 1], [], []>} : vector<128x32xbf16>, vector<32x64xbf16>, vector<128x64xf32> -> vector<128x64xf32>
    %c0_6 = arith.constant 0 : index
    %c0_7 = arith.constant 0 : index
    %c1 = arith.constant 1 : index
    %c0_8 = arith.constant 0 : index
    %5 = vector.load %arg1[%c0_6, %c0_7, %c1, %c0_8] : memref<2x12x12x32xbf16, #tpu.memory_space<vmem>>, vector<2x8x8x32xbf16>
    %6 = vector.shape_cast %5 : vector<2x8x8x32xbf16> to vector<128x32xbf16>
    %c1_9 = arith.constant 1 : index
    %c0_10 = arith.constant 0 : index
    %c0_11 = arith.constant 0 : index
    %7 = vector.load %arg2[%c1_9, %c0_10, %c0_11] : memref<25x32x64xbf16, #tpu.memory_space<vmem>>, vector<1x32x64xbf16>
    %8 = vector.shape_cast %7 : vector<1x32x64xbf16> to vector<32x64xbf16>
    %cst_12 = arith.constant dense<0.000000e+00> : vector<128x64xf32>
    %9 = tpu.matmul %6, %8, %cst_12 {dimension_numbers = #tpu.dot_dimension_numbers<[1], [0], [0], [1], [0, 0, 1, 1], [], []>} : vector<128x32xbf16>, vector<32x64xbf16>, vector<128x64xf32> -> vector<128x64xf32>
    %10 = arith.addf %4, %9 : vector<128x64xf32>
    %c0_13 = arith.constant 0 : index
    %c0_14 = arith.constant 0 : index
    %c2 = arith.constant 2 : index
    %c0_15 = arith.constant 0 : index
    %11 = vector.load %arg1[%c0_13, %c0_14, %c2, %c0_15] : memref<2x12x12x32xbf16, #tpu.memory_space<vmem>>, vector<2x8x8x32xbf16>
    %12 = vector.shape_cast %11 : vector<2x8x8x32xbf16> to vector<128x32xbf16>
    %c2_16 = arith.constant 2 : index
    %c0_17 = arith.constant 0 : index
    %c0_18 = arith.constant 0 : index
    %13 = vector.load %arg2[%c2_16, %c0_17, %c0_18] : memref<25x32x64xbf16, #tpu.memory_space<vmem>>, vector<1x32x64xbf16>
    %14 = vector.shape_cast %13 : vector<1x32x64xbf16> to vector<32x64xbf16>
    %cst_19 = arith.constant dense<0.000000e+00> : vector<128x64xf32>
    %15 = tpu.matmul %12, %14, %cst_19 {dimension_numbers = #tpu.dot_dimension_numbers<[1], [0], [0], [1], [0, 0, 1, 1], [], []>} : vector<128x32xbf16>, vector<32x64xbf16>, vector<128x64xf32> -> vector<128x64xf32>
    %16 = arith.addf %10, %15 : vector<128x64xf32>
    %c0_20 = arith.constant 0 : index
    %c0_21 = arith.constant 0 : index
    %c3 = arith.constant 3 : index
    %c0_22 = arith.constant 0 : index
    %17 = vector.load %arg1[%c0_20, %c0_21, %c3, %c0_22] : memref<2x12x12x32xbf16, #tpu.memory_space<vmem>>, vector<2x8x8x32xbf16>
    %18 = vector.shape_cast %17 : vector<2x8x8x32xbf16> to vector<128x32xbf16>
    %c3_23 = arith.constant 3 : index
    %c0_24 = arith.constant 0 : index
    %c0_25 = arith.constant 0 : index
    %19 = vector.load %arg2[%c3_23, %c0_24, %c0_25] : memref<25x32x64xbf16, #tpu.memory_space<vmem>>, vector<1x32x64xbf16>
    %20 = vector.shape_cast %19 : vector<1x32x64xbf16> to vector<32x64xbf16>
    %cst_26 = arith.constant dense<0.000000e+00> : vector<128x64xf32>
    %21 = tpu.matmul %18, %20, %cst_26 {dimension_numbers = #tpu.dot_dimension_numbers<[1], [0], [0], [1], [0, 0, 1, 1], [], []>} : vector<128x32xbf16>, vector<32x64xbf16>, vector<128x64xf32> -> vector<128x64xf32>
    %22 = arith.addf %16, %21 : vector<128x64xf32>
    %c0_27 = arith.constant 0 : index
    %c0_28 = arith.constant 0 : index
    %c4 = arith.constant 4 : index
    %c0_29 = arith.constant 0 : index
    %23 = vector.load %arg1[%c0_27, %c0_28, %c4, %c0_29] : memref<2x12x12x32xbf16, #tpu.memory_space<vmem>>, vector<2x8x8x32xbf16>
    %24 = vector.shape_cast %23 : vector<2x8x8x32xbf16> to vector<128x32xbf16>
    %c4_30 = arith.constant 4 : index
    %c0_31 = arith.constant 0 : index
    %c0_32 = arith.constant 0 : index
    %25 = vector.load %arg2[%c4_30, %c0_31, %c0_32] : memref<25x32x64xbf16, #tpu.memory_space<vmem>>, vector<1x32x64xbf16>
    %26 = vector.shape_cast %25 : vector<1x32x64xbf16> to vector<32x64xbf16>
    %cst_33 = arith.constant dense<0.000000e+00> : vector<128x64xf32>
    %27 = tpu.matmul %24, %26, %cst_33 {dimension_numbers = #tpu.dot_dimension_numbers<[1], [0], [0], [1], [0, 0, 1, 1], [], []>} : vector<128x32xbf16>, vector<32x64xbf16>, vector<128x64xf32> -> vector<128x64xf32>
    %28 = arith.addf %22, %27 : vector<128x64xf32>
    %c0_34 = arith.constant 0 : index
    %c1_35 = arith.constant 1 : index
    %c0_36 = arith.constant 0 : index
    %c0_37 = arith.constant 0 : index
    %29 = vector.load %arg1[%c0_34, %c1_35, %c0_36, %c0_37] : memref<2x12x12x32xbf16, #tpu.memory_space<vmem>>, vector<2x8x8x32xbf16>
    %30 = vector.shape_cast %29 : vector<2x8x8x32xbf16> to vector<128x32xbf16>
    %c5 = arith.constant 5 : index
    %c0_38 = arith.constant 0 : index
    %c0_39 = arith.constant 0 : index
    %31 = vector.load %arg2[%c5, %c0_38, %c0_39] : memref<25x32x64xbf16, #tpu.memory_space<vmem>>, vector<1x32x64xbf16>
    %32 = vector.shape_cast %31 : vector<1x32x64xbf16> to vector<32x64xbf16>
    %cst_40 = arith.constant dense<0.000000e+00> : vector<128x64xf32>
    %33 = tpu.matmul %30, %32, %cst_40 {dimension_numbers = #tpu.dot_dimension_numbers<[1], [0], [0], [1], [0, 0, 1, 1], [], []>} : vector<128x32xbf16>, vector<32x64xbf16>, vector<128x64xf32> -> vector<128x64xf32>
    %34 = arith.addf %28, %33 : vector<128x64xf32>
    %c0_41 = arith.constant 0 : index
    %c1_42 = arith.constant 1 : index
    %c1_43 = arith.constant 1 : index
    %c0_44 = arith.constant 0 : index
    %35 = vector.load %arg1[%c0_41, %c1_42, %c1_43, %c0_44] : memref<2x12x12x32xbf16, #tpu.memory_space<vmem>>, vector<2x8x8x32xbf16>
    %36 = vector.shape_cast %35 : vector<2x8x8x32xbf16> to vector<128x32xbf16>
    %c6 = arith.constant 6 : index
    %c0_45 = arith.constant 0 : index
    %c0_46 = arith.constant 0 : index
    %37 = vector.load %arg2[%c6, %c0_45, %c0_46] : memref<25x32x64xbf16, #tpu.memory_space<vmem>>, vector<1x32x64xbf16>
    %38 = vector.shape_cast %37 : vector<1x32x64xbf16> to vector<32x64xbf16>
    %cst_47 = arith.constant dense<0.000000e+00> : vector<128x64xf32>
    %39 = tpu.matmul %36, %38, %cst_47 {dimension_numbers = #tpu.dot_dimension_numbers<[1], [0], [0], [1], [0, 0, 1, 1], [], []>} : vector<128x32xbf16>, vector<32x64xbf16>, vector<128x64xf32> -> vector<128x64xf32>
    %40 = arith.addf %34, %39 : vector<128x64xf32>
    %c0_48 = arith.constant 0 : index
    %c1_49 = arith.constant 1 : index
    %c2_50 = arith.constant 2 : index
    %c0_51 = arith.constant 0 : index
    %41 = vector.load %arg1[%c0_48, %c1_49, %c2_50, %c0_51] : memref<2x12x12x32xbf16, #tpu.memory_space<vmem>>, vector<2x8x8x32xbf16>
    %42 = vector.shape_cast %41 : vector<2x8x8x32xbf16> to vector<128x32xbf16>
    %c7 = arith.constant 7 : index
    %c0_52 = arith.constant 0 : index
    %c0_53 = arith.constant 0 : index
    %43 = vector.load %arg2[%c7, %c0_52, %c0_53] : memref<25x32x64xbf16, #tpu.memory_space<vmem>>, vector<1x32x64xbf16>
    %44 = vector.shape_cast %43 : vector<1x32x64xbf16> to vector<32x64xbf16>
    %cst_54 = arith.constant dense<0.000000e+00> : vector<128x64xf32>
    %45 = tpu.matmul %42, %44, %cst_54 {dimension_numbers = #tpu.dot_dimension_numbers<[1], [0], [0], [1], [0, 0, 1, 1], [], []>} : vector<128x32xbf16>, vector<32x64xbf16>, vector<128x64xf32> -> vector<128x64xf32>
    %46 = arith.addf %40, %45 : vector<128x64xf32>
    %c0_55 = arith.constant 0 : index
    %c1_56 = arith.constant 1 : index
    %c3_57 = arith.constant 3 : index
    %c0_58 = arith.constant 0 : index
    %47 = vector.load %arg1[%c0_55, %c1_56, %c3_57, %c0_58] : memref<2x12x12x32xbf16, #tpu.memory_space<vmem>>, vector<2x8x8x32xbf16>
    %48 = vector.shape_cast %47 : vector<2x8x8x32xbf16> to vector<128x32xbf16>
    %c8 = arith.constant 8 : index
    %c0_59 = arith.constant 0 : index
    %c0_60 = arith.constant 0 : index
    %49 = vector.load %arg2[%c8, %c0_59, %c0_60] : memref<25x32x64xbf16, #tpu.memory_space<vmem>>, vector<1x32x64xbf16>
    %50 = vector.shape_cast %49 : vector<1x32x64xbf16> to vector<32x64xbf16>
    %cst_61 = arith.constant dense<0.000000e+00> : vector<128x64xf32>
    %51 = tpu.matmul %48, %50, %cst_61 {dimension_numbers = #tpu.dot_dimension_numbers<[1], [0], [0], [1], [0, 0, 1, 1], [], []>} : vector<128x32xbf16>, vector<32x64xbf16>, vector<128x64xf32> -> vector<128x64xf32>
    %52 = arith.addf %46, %51 : vector<128x64xf32>
    %c0_62 = arith.constant 0 : index
    %c1_63 = arith.constant 1 : index
    %c4_64 = arith.constant 4 : index
    %c0_65 = arith.constant 0 : index
    %53 = vector.load %arg1[%c0_62, %c1_63, %c4_64, %c0_65] : memref<2x12x12x32xbf16, #tpu.memory_space<vmem>>, vector<2x8x8x32xbf16>
    %54 = vector.shape_cast %53 : vector<2x8x8x32xbf16> to vector<128x32xbf16>
    %c9 = arith.constant 9 : index
    %c0_66 = arith.constant 0 : index
    %c0_67 = arith.constant 0 : index
    %55 = vector.load %arg2[%c9, %c0_66, %c0_67] : memref<25x32x64xbf16, #tpu.memory_space<vmem>>, vector<1x32x64xbf16>
    %56 = vector.shape_cast %55 : vector<1x32x64xbf16> to vector<32x64xbf16>
    %cst_68 = arith.constant dense<0.000000e+00> : vector<128x64xf32>
    %57 = tpu.matmul %54, %56, %cst_68 {dimension_numbers = #tpu.dot_dimension_numbers<[1], [0], [0], [1], [0, 0, 1, 1], [], []>} : vector<128x32xbf16>, vector<32x64xbf16>, vector<128x64xf32> -> vector<128x64xf32>
    %58 = arith.addf %52, %57 : vector<128x64xf32>
    %c0_69 = arith.constant 0 : index
    %c2_70 = arith.constant 2 : index
    %c0_71 = arith.constant 0 : index
    %c0_72 = arith.constant 0 : index
    %59 = vector.load %arg1[%c0_69, %c2_70, %c0_71, %c0_72] : memref<2x12x12x32xbf16, #tpu.memory_space<vmem>>, vector<2x8x8x32xbf16>
    %60 = vector.shape_cast %59 : vector<2x8x8x32xbf16> to vector<128x32xbf16>
    %c10 = arith.constant 10 : index
    %c0_73 = arith.constant 0 : index
    %c0_74 = arith.constant 0 : index
    %61 = vector.load %arg2[%c10, %c0_73, %c0_74] : memref<25x32x64xbf16, #tpu.memory_space<vmem>>, vector<1x32x64xbf16>
    %62 = vector.shape_cast %61 : vector<1x32x64xbf16> to vector<32x64xbf16>
    %cst_75 = arith.constant dense<0.000000e+00> : vector<128x64xf32>
    %63 = tpu.matmul %60, %62, %cst_75 {dimension_numbers = #tpu.dot_dimension_numbers<[1], [0], [0], [1], [0, 0, 1, 1], [], []>} : vector<128x32xbf16>, vector<32x64xbf16>, vector<128x64xf32> -> vector<128x64xf32>
    %64 = arith.addf %58, %63 : vector<128x64xf32>
    %c0_76 = arith.constant 0 : index
    %c2_77 = arith.constant 2 : index
    %c1_78 = arith.constant 1 : index
    %c0_79 = arith.constant 0 : index
    %65 = vector.load %arg1[%c0_76, %c2_77, %c1_78, %c0_79] : memref<2x12x12x32xbf16, #tpu.memory_space<vmem>>, vector<2x8x8x32xbf16>
    %66 = vector.shape_cast %65 : vector<2x8x8x32xbf16> to vector<128x32xbf16>
    %c11 = arith.constant 11 : index
    %c0_80 = arith.constant 0 : index
    %c0_81 = arith.constant 0 : index
    %67 = vector.load %arg2[%c11, %c0_80, %c0_81] : memref<25x32x64xbf16, #tpu.memory_space<vmem>>, vector<1x32x64xbf16>
    %68 = vector.shape_cast %67 : vector<1x32x64xbf16> to vector<32x64xbf16>
    %cst_82 = arith.constant dense<0.000000e+00> : vector<128x64xf32>
    %69 = tpu.matmul %66, %68, %cst_82 {dimension_numbers = #tpu.dot_dimension_numbers<[1], [0], [0], [1], [0, 0, 1, 1], [], []>} : vector<128x32xbf16>, vector<32x64xbf16>, vector<128x64xf32> -> vector<128x64xf32>
    %70 = arith.addf %64, %69 : vector<128x64xf32>
    %c0_83 = arith.constant 0 : index
    %c2_84 = arith.constant 2 : index
    %c2_85 = arith.constant 2 : index
    %c0_86 = arith.constant 0 : index
    %71 = vector.load %arg1[%c0_83, %c2_84, %c2_85, %c0_86] : memref<2x12x12x32xbf16, #tpu.memory_space<vmem>>, vector<2x8x8x32xbf16>
    %72 = vector.shape_cast %71 : vector<2x8x8x32xbf16> to vector<128x32xbf16>
    %c12 = arith.constant 12 : index
    %c0_87 = arith.constant 0 : index
    %c0_88 = arith.constant 0 : index
    %73 = vector.load %arg2[%c12, %c0_87, %c0_88] : memref<25x32x64xbf16, #tpu.memory_space<vmem>>, vector<1x32x64xbf16>
    %74 = vector.shape_cast %73 : vector<1x32x64xbf16> to vector<32x64xbf16>
    %cst_89 = arith.constant dense<0.000000e+00> : vector<128x64xf32>
    %75 = tpu.matmul %72, %74, %cst_89 {dimension_numbers = #tpu.dot_dimension_numbers<[1], [0], [0], [1], [0, 0, 1, 1], [], []>} : vector<128x32xbf16>, vector<32x64xbf16>, vector<128x64xf32> -> vector<128x64xf32>
    %76 = arith.addf %70, %75 : vector<128x64xf32>
    %c0_90 = arith.constant 0 : index
    %c2_91 = arith.constant 2 : index
    %c3_92 = arith.constant 3 : index
    %c0_93 = arith.constant 0 : index
    %77 = vector.load %arg1[%c0_90, %c2_91, %c3_92, %c0_93] : memref<2x12x12x32xbf16, #tpu.memory_space<vmem>>, vector<2x8x8x32xbf16>
    %78 = vector.shape_cast %77 : vector<2x8x8x32xbf16> to vector<128x32xbf16>
    %c13 = arith.constant 13 : index
    %c0_94 = arith.constant 0 : index
    %c0_95 = arith.constant 0 : index
    %79 = vector.load %arg2[%c13, %c0_94, %c0_95] : memref<25x32x64xbf16, #tpu.memory_space<vmem>>, vector<1x32x64xbf16>
    %80 = vector.shape_cast %79 : vector<1x32x64xbf16> to vector<32x64xbf16>
    %cst_96 = arith.constant dense<0.000000e+00> : vector<128x64xf32>
    %81 = tpu.matmul %78, %80, %cst_96 {dimension_numbers = #tpu.dot_dimension_numbers<[1], [0], [0], [1], [0, 0, 1, 1], [], []>} : vector<128x32xbf16>, vector<32x64xbf16>, vector<128x64xf32> -> vector<128x64xf32>
    %82 = arith.addf %76, %81 : vector<128x64xf32>
    %c0_97 = arith.constant 0 : index
    %c2_98 = arith.constant 2 : index
    %c4_99 = arith.constant 4 : index
    %c0_100 = arith.constant 0 : index
    %83 = vector.load %arg1[%c0_97, %c2_98, %c4_99, %c0_100] : memref<2x12x12x32xbf16, #tpu.memory_space<vmem>>, vector<2x8x8x32xbf16>
    %84 = vector.shape_cast %83 : vector<2x8x8x32xbf16> to vector<128x32xbf16>
    %c14 = arith.constant 14 : index
    %c0_101 = arith.constant 0 : index
    %c0_102 = arith.constant 0 : index
    %85 = vector.load %arg2[%c14, %c0_101, %c0_102] : memref<25x32x64xbf16, #tpu.memory_space<vmem>>, vector<1x32x64xbf16>
    %86 = vector.shape_cast %85 : vector<1x32x64xbf16> to vector<32x64xbf16>
    %cst_103 = arith.constant dense<0.000000e+00> : vector<128x64xf32>
    %87 = tpu.matmul %84, %86, %cst_103 {dimension_numbers = #tpu.dot_dimension_numbers<[1], [0], [0], [1], [0, 0, 1, 1], [], []>} : vector<128x32xbf16>, vector<32x64xbf16>, vector<128x64xf32> -> vector<128x64xf32>
    %88 = arith.addf %82, %87 : vector<128x64xf32>
    %c0_104 = arith.constant 0 : index
    %c3_105 = arith.constant 3 : index
    %c0_106 = arith.constant 0 : index
    %c0_107 = arith.constant 0 : index
    %89 = vector.load %arg1[%c0_104, %c3_105, %c0_106, %c0_107] : memref<2x12x12x32xbf16, #tpu.memory_space<vmem>>, vector<2x8x8x32xbf16>
    %90 = vector.shape_cast %89 : vector<2x8x8x32xbf16> to vector<128x32xbf16>
    %c15 = arith.constant 15 : index
    %c0_108 = arith.constant 0 : index
    %c0_109 = arith.constant 0 : index
    %91 = vector.load %arg2[%c15, %c0_108, %c0_109] : memref<25x32x64xbf16, #tpu.memory_space<vmem>>, vector<1x32x64xbf16>
    %92 = vector.shape_cast %91 : vector<1x32x64xbf16> to vector<32x64xbf16>
    %cst_110 = arith.constant dense<0.000000e+00> : vector<128x64xf32>
    %93 = tpu.matmul %90, %92, %cst_110 {dimension_numbers = #tpu.dot_dimension_numbers<[1], [0], [0], [1], [0, 0, 1, 1], [], []>} : vector<128x32xbf16>, vector<32x64xbf16>, vector<128x64xf32> -> vector<128x64xf32>
    %94 = arith.addf %88, %93 : vector<128x64xf32>
    %c0_111 = arith.constant 0 : index
    %c3_112 = arith.constant 3 : index
    %c1_113 = arith.constant 1 : index
    %c0_114 = arith.constant 0 : index
    %95 = vector.load %arg1[%c0_111, %c3_112, %c1_113, %c0_114] : memref<2x12x12x32xbf16, #tpu.memory_space<vmem>>, vector<2x8x8x32xbf16>
    %96 = vector.shape_cast %95 : vector<2x8x8x32xbf16> to vector<128x32xbf16>
    %c16 = arith.constant 16 : index
    %c0_115 = arith.constant 0 : index
    %c0_116 = arith.constant 0 : index
    %97 = vector.load %arg2[%c16, %c0_115, %c0_116] : memref<25x32x64xbf16, #tpu.memory_space<vmem>>, vector<1x32x64xbf16>
    %98 = vector.shape_cast %97 : vector<1x32x64xbf16> to vector<32x64xbf16>
    %cst_117 = arith.constant dense<0.000000e+00> : vector<128x64xf32>
    %99 = tpu.matmul %96, %98, %cst_117 {dimension_numbers = #tpu.dot_dimension_numbers<[1], [0], [0], [1], [0, 0, 1, 1], [], []>} : vector<128x32xbf16>, vector<32x64xbf16>, vector<128x64xf32> -> vector<128x64xf32>
    %100 = arith.addf %94, %99 : vector<128x64xf32>
    %c0_118 = arith.constant 0 : index
    %c3_119 = arith.constant 3 : index
    %c2_120 = arith.constant 2 : index
    %c0_121 = arith.constant 0 : index
    %101 = vector.load %arg1[%c0_118, %c3_119, %c2_120, %c0_121] : memref<2x12x12x32xbf16, #tpu.memory_space<vmem>>, vector<2x8x8x32xbf16>
    %102 = vector.shape_cast %101 : vector<2x8x8x32xbf16> to vector<128x32xbf16>
    %c17 = arith.constant 17 : index
    %c0_122 = arith.constant 0 : index
    %c0_123 = arith.constant 0 : index
    %103 = vector.load %arg2[%c17, %c0_122, %c0_123] : memref<25x32x64xbf16, #tpu.memory_space<vmem>>, vector<1x32x64xbf16>
    %104 = vector.shape_cast %103 : vector<1x32x64xbf16> to vector<32x64xbf16>
    %cst_124 = arith.constant dense<0.000000e+00> : vector<128x64xf32>
    %105 = tpu.matmul %102, %104, %cst_124 {dimension_numbers = #tpu.dot_dimension_numbers<[1], [0], [0], [1], [0, 0, 1, 1], [], []>} : vector<128x32xbf16>, vector<32x64xbf16>, vector<128x64xf32> -> vector<128x64xf32>
    %106 = arith.addf %100, %105 : vector<128x64xf32>
    %c0_125 = arith.constant 0 : index
    %c3_126 = arith.constant 3 : index
    %c3_127 = arith.constant 3 : index
    %c0_128 = arith.constant 0 : index
    %107 = vector.load %arg1[%c0_125, %c3_126, %c3_127, %c0_128] : memref<2x12x12x32xbf16, #tpu.memory_space<vmem>>, vector<2x8x8x32xbf16>
    %108 = vector.shape_cast %107 : vector<2x8x8x32xbf16> to vector<128x32xbf16>
    %c18 = arith.constant 18 : index
    %c0_129 = arith.constant 0 : index
    %c0_130 = arith.constant 0 : index
    %109 = vector.load %arg2[%c18, %c0_129, %c0_130] : memref<25x32x64xbf16, #tpu.memory_space<vmem>>, vector<1x32x64xbf16>
    %110 = vector.shape_cast %109 : vector<1x32x64xbf16> to vector<32x64xbf16>
    %cst_131 = arith.constant dense<0.000000e+00> : vector<128x64xf32>
    %111 = tpu.matmul %108, %110, %cst_131 {dimension_numbers = #tpu.dot_dimension_numbers<[1], [0], [0], [1], [0, 0, 1, 1], [], []>} : vector<128x32xbf16>, vector<32x64xbf16>, vector<128x64xf32> -> vector<128x64xf32>
    %112 = arith.addf %106, %111 : vector<128x64xf32>
    %c0_132 = arith.constant 0 : index
    %c3_133 = arith.constant 3 : index
    %c4_134 = arith.constant 4 : index
    %c0_135 = arith.constant 0 : index
    %113 = vector.load %arg1[%c0_132, %c3_133, %c4_134, %c0_135] : memref<2x12x12x32xbf16, #tpu.memory_space<vmem>>, vector<2x8x8x32xbf16>
    %114 = vector.shape_cast %113 : vector<2x8x8x32xbf16> to vector<128x32xbf16>
    %c19 = arith.constant 19 : index
    %c0_136 = arith.constant 0 : index
    %c0_137 = arith.constant 0 : index
    %115 = vector.load %arg2[%c19, %c0_136, %c0_137] : memref<25x32x64xbf16, #tpu.memory_space<vmem>>, vector<1x32x64xbf16>
    %116 = vector.shape_cast %115 : vector<1x32x64xbf16> to vector<32x64xbf16>
    %cst_138 = arith.constant dense<0.000000e+00> : vector<128x64xf32>
    %117 = tpu.matmul %114, %116, %cst_138 {dimension_numbers = #tpu.dot_dimension_numbers<[1], [0], [0], [1], [0, 0, 1, 1], [], []>} : vector<128x32xbf16>, vector<32x64xbf16>, vector<128x64xf32> -> vector<128x64xf32>
    %118 = arith.addf %112, %117 : vector<128x64xf32>
    %c0_139 = arith.constant 0 : index
    %c4_140 = arith.constant 4 : index
    %c0_141 = arith.constant 0 : index
    %c0_142 = arith.constant 0 : index
    %119 = vector.load %arg1[%c0_139, %c4_140, %c0_141, %c0_142] : memref<2x12x12x32xbf16, #tpu.memory_space<vmem>>, vector<2x8x8x32xbf16>
    %120 = vector.shape_cast %119 : vector<2x8x8x32xbf16> to vector<128x32xbf16>
    %c20 = arith.constant 20 : index
    %c0_143 = arith.constant 0 : index
    %c0_144 = arith.constant 0 : index
    %121 = vector.load %arg2[%c20, %c0_143, %c0_144] : memref<25x32x64xbf16, #tpu.memory_space<vmem>>, vector<1x32x64xbf16>
    %122 = vector.shape_cast %121 : vector<1x32x64xbf16> to vector<32x64xbf16>
    %cst_145 = arith.constant dense<0.000000e+00> : vector<128x64xf32>
    %123 = tpu.matmul %120, %122, %cst_145 {dimension_numbers = #tpu.dot_dimension_numbers<[1], [0], [0], [1], [0, 0, 1, 1], [], []>} : vector<128x32xbf16>, vector<32x64xbf16>, vector<128x64xf32> -> vector<128x64xf32>
    %124 = arith.addf %118, %123 : vector<128x64xf32>
    %c0_146 = arith.constant 0 : index
    %c4_147 = arith.constant 4 : index
    %c1_148 = arith.constant 1 : index
    %c0_149 = arith.constant 0 : index
    %125 = vector.load %arg1[%c0_146, %c4_147, %c1_148, %c0_149] : memref<2x12x12x32xbf16, #tpu.memory_space<vmem>>, vector<2x8x8x32xbf16>
    %126 = vector.shape_cast %125 : vector<2x8x8x32xbf16> to vector<128x32xbf16>
    %c21 = arith.constant 21 : index
    %c0_150 = arith.constant 0 : index
    %c0_151 = arith.constant 0 : index
    %127 = vector.load %arg2[%c21, %c0_150, %c0_151] : memref<25x32x64xbf16, #tpu.memory_space<vmem>>, vector<1x32x64xbf16>
    %128 = vector.shape_cast %127 : vector<1x32x64xbf16> to vector<32x64xbf16>
    %cst_152 = arith.constant dense<0.000000e+00> : vector<128x64xf32>
    %129 = tpu.matmul %126, %128, %cst_152 {dimension_numbers = #tpu.dot_dimension_numbers<[1], [0], [0], [1], [0, 0, 1, 1], [], []>} : vector<128x32xbf16>, vector<32x64xbf16>, vector<128x64xf32> -> vector<128x64xf32>
    %130 = arith.addf %124, %129 : vector<128x64xf32>
    %c0_153 = arith.constant 0 : index
    %c4_154 = arith.constant 4 : index
    %c2_155 = arith.constant 2 : index
    %c0_156 = arith.constant 0 : index
    %131 = vector.load %arg1[%c0_153, %c4_154, %c2_155, %c0_156] : memref<2x12x12x32xbf16, #tpu.memory_space<vmem>>, vector<2x8x8x32xbf16>
    %132 = vector.shape_cast %131 : vector<2x8x8x32xbf16> to vector<128x32xbf16>
    %c22 = arith.constant 22 : index
    %c0_157 = arith.constant 0 : index
    %c0_158 = arith.constant 0 : index
    %133 = vector.load %arg2[%c22, %c0_157, %c0_158] : memref<25x32x64xbf16, #tpu.memory_space<vmem>>, vector<1x32x64xbf16>
    %134 = vector.shape_cast %133 : vector<1x32x64xbf16> to vector<32x64xbf16>
    %cst_159 = arith.constant dense<0.000000e+00> : vector<128x64xf32>
    %135 = tpu.matmul %132, %134, %cst_159 {dimension_numbers = #tpu.dot_dimension_numbers<[1], [0], [0], [1], [0, 0, 1, 1], [], []>} : vector<128x32xbf16>, vector<32x64xbf16>, vector<128x64xf32> -> vector<128x64xf32>
    %136 = arith.addf %130, %135 : vector<128x64xf32>
    %c0_160 = arith.constant 0 : index
    %c4_161 = arith.constant 4 : index
    %c3_162 = arith.constant 3 : index
    %c0_163 = arith.constant 0 : index
    %137 = vector.load %arg1[%c0_160, %c4_161, %c3_162, %c0_163] : memref<2x12x12x32xbf16, #tpu.memory_space<vmem>>, vector<2x8x8x32xbf16>
    %138 = vector.shape_cast %137 : vector<2x8x8x32xbf16> to vector<128x32xbf16>
    %c23 = arith.constant 23 : index
    %c0_164 = arith.constant 0 : index
    %c0_165 = arith.constant 0 : index
    %139 = vector.load %arg2[%c23, %c0_164, %c0_165] : memref<25x32x64xbf16, #tpu.memory_space<vmem>>, vector<1x32x64xbf16>
    %140 = vector.shape_cast %139 : vector<1x32x64xbf16> to vector<32x64xbf16>
    %cst_166 = arith.constant dense<0.000000e+00> : vector<128x64xf32>
    %141 = tpu.matmul %138, %140, %cst_166 {dimension_numbers = #tpu.dot_dimension_numbers<[1], [0], [0], [1], [0, 0, 1, 1], [], []>} : vector<128x32xbf16>, vector<32x64xbf16>, vector<128x64xf32> -> vector<128x64xf32>
    %142 = arith.addf %136, %141 : vector<128x64xf32>
    %c0_167 = arith.constant 0 : index
    %c4_168 = arith.constant 4 : index
    %c4_169 = arith.constant 4 : index
    %c0_170 = arith.constant 0 : index
    %143 = vector.load %arg1[%c0_167, %c4_168, %c4_169, %c0_170] : memref<2x12x12x32xbf16, #tpu.memory_space<vmem>>, vector<2x8x8x32xbf16>
    %144 = vector.shape_cast %143 : vector<2x8x8x32xbf16> to vector<128x32xbf16>
    %c24 = arith.constant 24 : index
    %c0_171 = arith.constant 0 : index
    %c0_172 = arith.constant 0 : index
    %145 = vector.load %arg2[%c24, %c0_171, %c0_172] : memref<25x32x64xbf16, #tpu.memory_space<vmem>>, vector<1x32x64xbf16>
    %146 = vector.shape_cast %145 : vector<1x32x64xbf16> to vector<32x64xbf16>
    %cst_173 = arith.constant dense<0.000000e+00> : vector<128x64xf32>
    %147 = tpu.matmul %144, %146, %cst_173 {dimension_numbers = #tpu.dot_dimension_numbers<[1], [0], [0], [1], [0, 0, 1, 1], [], []>} : vector<128x32xbf16>, vector<32x64xbf16>, vector<128x64xf32> -> vector<128x64xf32>
    %148 = arith.addf %142, %147 : vector<128x64xf32>
    %c0_174 = arith.constant 0 : index
    %c0_175 = arith.constant 0 : index
    %149 = vector.load %arg3[%c0_174, %c0_175] : memref<1x64xf32, #tpu.memory_space<vmem>>, vector<1x64xf32>
    %150 = vector.broadcast %149 : vector<1x64xf32> to vector<128x64xf32>
    %151 = arith.addf %148, %150 : vector<128x64xf32>
    %cst_176 = arith.constant 0.000000e+00 : f32
    %152 = vector.broadcast %cst_176 : f32 to vector<128x64xf32>
    %153 = arith.cmpf oge, %151, %152 : vector<128x64xf32>
    %cst_177 = arith.constant 0.00999999977 : f32
    %154 = vector.broadcast %cst_177 : f32 to vector<128x64xf32>
    %155 = arith.mulf %154, %151 : vector<128x64xf32>
    %156 = arith.select %153, %151, %155 : vector<128x64xi1>, vector<128x64xf32>
    %157 = vector.shape_cast %156 : vector<128x64xf32> to vector<2x8x8x64xf32>
    %158 = vector.extract_strided_slice %157 {offsets = [0, 0, 0, 0], sizes = [2, 1, 8, 64], strides = [1, 1, 1, 1]} : vector<2x8x8x64xf32> to vector<2x1x8x64xf32>
    %159 = vector.shape_cast %158 : vector<2x1x8x64xf32> to vector<2x8x64xf32>
    %160 = vector.extract_strided_slice %157 {offsets = [0, 1, 0, 0], sizes = [2, 1, 8, 64], strides = [1, 1, 1, 1]} : vector<2x8x8x64xf32> to vector<2x1x8x64xf32>
    %161 = vector.shape_cast %160 : vector<2x1x8x64xf32> to vector<2x8x64xf32>
    %162 = arith.maximumf %159, %161 : vector<2x8x64xf32>
    %163 = arith.truncf %162 : vector<2x8x64xf32> to vector<2x8x64xbf16>
    %c0_178 = arith.constant 0 : index
    %c0_179 = arith.constant 0 : index
    %c0_180 = arith.constant 0 : index
    %164 = vector.load %arg4[%c0_178, %c0_179, %c0_180] : memref<2x32x64xbf16, #tpu.memory_space<vmem>>, vector<2x8x64xbf16>
    tpu.vector_store %arg4[%c0_178, %c0_179, %c0_180], %163 {strides = array<i32>} : memref<2x32x64xbf16, #tpu.memory_space<vmem>>, vector<2x8x64xbf16>,
    %165 = vector.extract_strided_slice %157 {offsets = [0, 2, 0, 0], sizes = [2, 1, 8, 64], strides = [1, 1, 1, 1]} : vector<2x8x8x64xf32> to vector<2x1x8x64xf32>
    %166 = vector.shape_cast %165 : vector<2x1x8x64xf32> to vector<2x8x64xf32>
    %167 = vector.extract_strided_slice %157 {offsets = [0, 3, 0, 0], sizes = [2, 1, 8, 64], strides = [1, 1, 1, 1]} : vector<2x8x8x64xf32> to vector<2x1x8x64xf32>
    %168 = vector.shape_cast %167 : vector<2x1x8x64xf32> to vector<2x8x64xf32>
    %169 = arith.maximumf %166, %168 : vector<2x8x64xf32>
    %170 = arith.truncf %169 : vector<2x8x64xf32> to vector<2x8x64xbf16>
    %c0_181 = arith.constant 0 : index
    %c8_182 = arith.constant 8 : index
    %c0_183 = arith.constant 0 : index
    %171 = vector.load %arg4[%c0_181, %c8_182, %c0_183] : memref<2x32x64xbf16, #tpu.memory_space<vmem>>, vector<2x8x64xbf16>
    tpu.vector_store %arg4[%c0_181, %c8_182, %c0_183], %170 {strides = array<i32>} : memref<2x32x64xbf16, #tpu.memory_space<vmem>>, vector<2x8x64xbf16>,
    %172 = vector.extract_strided_slice %157 {offsets = [0, 4, 0, 0], sizes = [2, 1, 8, 64], strides = [1, 1, 1, 1]} : vector<2x8x8x64xf32> to vector<2x1x8x64xf32>
    %173 = vector.shape_cast %172 : vector<2x1x8x64xf32> to vector<2x8x64xf32>
    %174 = vector.extract_strided_slice %157 {offsets = [0, 5, 0, 0], sizes = [2, 1, 8, 64], strides = [1, 1, 1, 1]} : vector<2x8x8x64xf32> to vector<2x1x8x64xf32>
    %175 = vector.shape_cast %174 : vector<2x1x8x64xf32> to vector<2x8x64xf32>
    %176 = arith.maximumf %173, %175 : vector<2x8x64xf32>
    %177 = arith.truncf %176 : vector<2x8x64xf32> to vector<2x8x64xbf16>
    %c0_184 = arith.constant 0 : index
    %c16_185 = arith.constant 16 : index
    %c0_186 = arith.constant 0 : index
    %178 = vector.load %arg4[%c0_184, %c16_185, %c0_186] : memref<2x32x64xbf16, #tpu.memory_space<vmem>>, vector<2x8x64xbf16>
    tpu.vector_store %arg4[%c0_184, %c16_185, %c0_186], %177 {strides = array<i32>} : memref<2x32x64xbf16, #tpu.memory_space<vmem>>, vector<2x8x64xbf16>,
    %179 = vector.extract_strided_slice %157 {offsets = [0, 6, 0, 0], sizes = [2, 1, 8, 64], strides = [1, 1, 1, 1]} : vector<2x8x8x64xf32> to vector<2x1x8x64xf32>
    %180 = vector.shape_cast %179 : vector<2x1x8x64xf32> to vector<2x8x64xf32>
    %181 = vector.extract_strided_slice %157 {offsets = [0, 7, 0, 0], sizes = [2, 1, 8, 64], strides = [1, 1, 1, 1]} : vector<2x8x8x64xf32> to vector<2x1x8x64xf32>
    %182 = vector.shape_cast %181 : vector<2x1x8x64xf32> to vector<2x8x64xf32>
    %183 = arith.maximumf %180, %182 : vector<2x8x64xf32>
    %184 = arith.truncf %183 : vector<2x8x64xf32> to vector<2x8x64xbf16>
    %c0_187 = arith.constant 0 : index
    %c24_188 = arith.constant 24 : index
    %c0_189 = arith.constant 0 : index
    %185 = vector.load %arg4[%c0_187, %c24_188, %c0_189] : memref<2x32x64xbf16, #tpu.memory_space<vmem>>, vector<2x8x64xbf16>
    tpu.vector_store %arg4[%c0_187, %c24_188, %c0_189], %184 {strides = array<i32>} : memref<2x32x64xbf16, #tpu.memory_space<vmem>>, vector<2x8x64xbf16>,
    return
  }
  func.func @transform_0(%arg0: i32) -> (i32, i32, i32, i32) {
    %c0_i32 = arith.constant 0 : i32
    %c0_i32_0 = arith.constant 0 : i32
    %c0_i32_1 = arith.constant 0 : i32
    %c0_i32_2 = arith.constant 0 : i32
    return %arg0, %c0_i32, %c0_i32_0, %c0_i32_1 : i32, i32, i32, i32
  }
  func.func @transform_1(%arg0: i32) -> (i32, i32, i32) {
    %c0_i32 = arith.constant 0 : i32
    %c0_i32_0 = arith.constant 0 : i32
    %c0_i32_1 = arith.constant 0 : i32
    %c0_i32_2 = arith.constant 0 : i32
    return %c0_i32, %c0_i32_0, %c0_i32_1 : i32, i32, i32
  }
  func.func @transform_2(%arg0: i32) -> (i32, i32) {
    %c0_i32 = arith.constant 0 : i32
    %c0_i32_0 = arith.constant 0 : i32
    %c0_i32_1 = arith.constant 0 : i32
    return %c0_i32, %c0_i32_0 : i32, i32
  }
  func.func @transform_3(%arg0: i32) -> (i32, i32, i32) {
    %c0_i32 = arith.constant 0 : i32
    %c0_i32_0 = arith.constant 0 : i32
    %c0_i32_1 = arith.constant 0 : i32
    return %arg0, %c0_i32, %c0_i32_0 : i32, i32, i32
  }
}

module attributes {stable_mosaic.version = 11 : i64} {
  func.func @_fc_fused_kernel(%arg0: i32, %arg1: memref<2x1024xbf16, #tpu.memory_space<vmem>>, %arg2: memref<1024x1024xbf16, #tpu.memory_space<vmem>>, %arg3: memref<1x1024xf32, #tpu.memory_space<vmem>>, %arg4: memref<1x1024xf32, #tpu.memory_space<vmem>>, %arg5: memref<1x1xf32, #tpu.memory_space<vmem>>, %arg6: memref<2x1024xf32, #tpu.memory_space<vmem>>, %arg7: memref<2x1xf32, #tpu.memory_space<vmem>>) attributes {dimension_semantics = [#tpu.dimension_semantics<parallel>], iteration_bounds = array<i64: 1>, scalar_prefetch = 0 : i64, scratch_operands = 0 : i64, tpu.core_type = #tpu.core_type<tc>, window_params = [{transform_indices = @transform_0, window_bounds = array<i64: 2, 1024>}, {pipeline_mode = #tpu.pipeline_mode<synchronous>, transform_indices = @transform_1, window_bounds = array<i64: 1024, 1024>}, {pipeline_mode = #tpu.pipeline_mode<synchronous>, transform_indices = @transform_2, window_bounds = array<i64: 1, 1024>}, {pipeline_mode = #tpu.pipeline_mode<synchronous>, transform_indices = @transform_3, window_bounds = array<i64: 1, 1024>}, {pipeline_mode = #tpu.pipeline_mode<synchronous>, transform_indices = @transform_4, window_bounds = array<i64: 1, 1>}, {transform_indices = @transform_5, window_bounds = array<i64: 2, 1024>}, {transform_indices = @transform_6, window_bounds = array<i64: 2, 1>}]} {
    %c0 = arith.constant 0 : index
    %c0_0 = arith.constant 0 : index
    %0 = vector.load %arg1[%c0, %c0_0] : memref<2x1024xbf16, #tpu.memory_space<vmem>>, vector<2x1024xbf16>
    %c0_1 = arith.constant 0 : index
    %c0_2 = arith.constant 0 : index
    %1 = vector.load %arg2[%c0_1, %c0_2] : memref<1024x1024xbf16, #tpu.memory_space<vmem>>, vector<1024x1024xbf16>
    %cst = arith.constant dense<0.000000e+00> : vector<2x1024xf32>
    %2 = tpu.matmul %0, %1, %cst {dimension_numbers = #tpu.dot_dimension_numbers<[1], [0], [0], [1], [0, 0, 1, 1], [], []>} : vector<2x1024xbf16>, vector<1024x1024xbf16>, vector<2x1024xf32> -> vector<2x1024xf32>
    %c0_3 = arith.constant 0 : index
    %c0_4 = arith.constant 0 : index
    %3 = vector.load %arg3[%c0_3, %c0_4] : memref<1x1024xf32, #tpu.memory_space<vmem>>, vector<1x1024xf32>
    %4 = vector.broadcast %3 : vector<1x1024xf32> to vector<2x1024xf32>
    %5 = arith.addf %2, %4 : vector<2x1024xf32>
    %cst_5 = arith.constant 0.000000e+00 : f32
    %6 = vector.broadcast %cst_5 : f32 to vector<2x1024xf32>
    %7 = arith.cmpf oge, %5, %6 : vector<2x1024xf32>
    %cst_6 = arith.constant 0.00999999977 : f32
    %8 = vector.broadcast %cst_6 : f32 to vector<2x1024xf32>
    %9 = arith.mulf %8, %5 : vector<2x1024xf32>
    %10 = arith.select %7, %5, %9 : vector<2x1024xi1>, vector<2x1024xf32>
    %c0_7 = arith.constant 0 : index
    %c0_8 = arith.constant 0 : index
    %11 = vector.load %arg6[%c0_7, %c0_8] : memref<2x1024xf32, #tpu.memory_space<vmem>>, vector<2x1024xf32>
    tpu.vector_store %arg6[%c0_7, %c0_8], %10 {strides = array<i32>} : memref<2x1024xf32, #tpu.memory_space<vmem>>, vector<2x1024xf32>,
    %c0_9 = arith.constant 0 : index
    %c0_10 = arith.constant 0 : index
    %12 = vector.load %arg4[%c0_9, %c0_10] : memref<1x1024xf32, #tpu.memory_space<vmem>>, vector<1x1024xf32>
    %13 = vector.broadcast %12 : vector<1x1024xf32> to vector<2x1024xf32>
    %14 = arith.mulf %10, %13 : vector<2x1024xf32>
    %cst_11 = arith.constant dense<0.000000e+00> : vector<2xf32>
    %15 = vector.multi_reduction <add>, %14, %cst_11 [1] : vector<2x1024xf32> to vector<2xf32>
    %16 = vector.shape_cast %15 : vector<2xf32> to vector<2x1xf32>
    %c0_12 = arith.constant 0 : index
    %c0_13 = arith.constant 0 : index
    %17 = vector.load %arg5[%c0_12, %c0_13] : memref<1x1xf32, #tpu.memory_space<vmem>>, vector<1x1xf32>
    %18 = vector.broadcast %17 : vector<1x1xf32> to vector<2x1xf32>
    %19 = arith.addf %16, %18 : vector<2x1xf32>
    %c0_14 = arith.constant 0 : index
    %c0_15 = arith.constant 0 : index
    %20 = vector.load %arg7[%c0_14, %c0_15] : memref<2x1xf32, #tpu.memory_space<vmem>>, vector<2x1xf32>
    tpu.vector_store %arg7[%c0_14, %c0_15], %19 {strides = array<i32>} : memref<2x1xf32, #tpu.memory_space<vmem>>, vector<2x1xf32>,
    return
  }
  func.func @transform_0(%arg0: i32) -> (i32, i32) {
    %c0_i32 = arith.constant 0 : i32
    %c0_i32_0 = arith.constant 0 : i32
    return %arg0, %c0_i32 : i32, i32
  }
  func.func @transform_1(%arg0: i32) -> (i32, i32) {
    %c0_i32 = arith.constant 0 : i32
    %c0_i32_0 = arith.constant 0 : i32
    %c0_i32_1 = arith.constant 0 : i32
    return %c0_i32, %c0_i32_0 : i32, i32
  }
  func.func @transform_2(%arg0: i32) -> (i32, i32) {
    %c0_i32 = arith.constant 0 : i32
    %c0_i32_0 = arith.constant 0 : i32
    %c0_i32_1 = arith.constant 0 : i32
    return %c0_i32, %c0_i32_0 : i32, i32
  }
  func.func @transform_3(%arg0: i32) -> (i32, i32) {
    %c0_i32 = arith.constant 0 : i32
    %c0_i32_0 = arith.constant 0 : i32
    %c0_i32_1 = arith.constant 0 : i32
    return %c0_i32, %c0_i32_0 : i32, i32
  }
  func.func @transform_4(%arg0: i32) -> (i32, i32) {
    %c0_i32 = arith.constant 0 : i32
    %c0_i32_0 = arith.constant 0 : i32
    %c0_i32_1 = arith.constant 0 : i32
    return %c0_i32, %c0_i32_0 : i32, i32
  }
  func.func @transform_5(%arg0: i32) -> (i32, i32) {
    %c0_i32 = arith.constant 0 : i32
    %c0_i32_0 = arith.constant 0 : i32
    return %arg0, %c0_i32 : i32, i32
  }
  func.func @transform_6(%arg0: i32) -> (i32, i32) {
    %c0_i32 = arith.constant 0 : i32
    %c0_i32_0 = arith.constant 0 : i32
    return %arg0, %c0_i32 : i32, i32
  }
}

</mosaic_0001>

<llo_original>
// kernel: discriminator_forward.3
$region0: #{discriminator_forward.3}
  #allocation0 [shape = 'u32[]', space=smem, size = 0x4, offset = 0x4, fixed_abs, tag = 'smem constant byte address 0x4 - core index']
  #allocation1 [shape = 'u32[144,128]{1,0:T(1,128)}', space=vmem, size = 0x12000, scoped, tag = 'internal scratch']
  %s0 = inlined_call_operand.vmem [shape: bf16[4,288,32], index: 0, kind: input, shape index: {}]
  %s1 = inlined_call_operand.vmem [shape: bf16[32,32], index: 1, kind: input, shape index: {}]
  %s2 = inlined_call_operand.vmem [shape: f32[1,32], index: 2, kind: input, shape index: {}]
  %s3 = inlined_call_operand.vmem [shape: bf16[288,32], index: 3, kind: output, shape index: {}]
  %s4 = sld [smem:[#allocation0]]
  $region22: #{discriminator_forward.3} parent=0
    _
  %s6 = ssub.s32 1, %s4
  %s7 = scalar_select 0, %s6, %s4
  // Predicated region
  $region2: #{discriminator_forward.3} parent=0 // pred_check
    _
  $region3: #{discriminator_forward.3} parent=0 // pred_check_branch
    %9 = sbr.rel (0) target = $region5
  $region4: #{discriminator_forward.3} parent=0 // pred_region
    _
  $region5: #{discriminator_forward.3} parent=0 // pred_fallthru
    _
  // Predicated region
  $region6: #{discriminator_forward.3} parent=0 // pred_check
    _
  $region7: #{discriminator_forward.3} parent=0 // pred_check_branch
    %11 = sbr.rel (0) target = $region9
  $region8: #{discriminator_forward.3} parent=0 // pred_region
    _
  $region9: #{discriminator_forward.3} parent=0 // pred_fallthru
    _
  // Predicated region
  $region10: #{discriminator_forward.3} parent=0 // pred_check
    _
  $region11: #{discriminator_forward.3} parent=0 // pred_check_branch
    %13 = sbr.rel (0) target = $region13
  $region12: #{discriminator_forward.3} parent=0 // pred_region
    _
  $region13: #{discriminator_forward.3} parent=0 // pred_fallthru
    _
  %v15 = vld [vmem:[%s0] sm:$0xf]
  %v16 = vld [vmem:[%s0 + $0x4] sm:$0xf]
  %v17 = vld [vmem:[%s0 + $0x8] sm:$0xf]
  %v18 = vld [vmem:[%s0 + $0xc] sm:$0xf]
  %v19 = vld [vmem:[%s0 + $0x10] sm:$0xf]
  %v20 = vld [vmem:[%s0 + $0x14] sm:$0xf]
  %v21 = vld [vmem:[%s0 + $0x18] sm:$0xf]
  %v22 = vld [vmem:[%s0 + $0x1c] sm:$0xf]
  %v23 = vld [vmem:[%s0 + $0x20] sm:$0xf]
  %v24 = vld [vmem:[%s0 + $0x24] sm:$0xf]
  %v25 = vld [vmem:[%s0 + $0x28] sm:$0xf]
  %v26 = vld [vmem:[%s0 + $0x2c] sm:$0xf]
  %v27 = vld [vmem:[%s0 + $0x30] sm:$0xf]
  %v28 = vld [vmem:[%s0 + $0x34] sm:$0xf]
  %v29 = vld [vmem:[%s0 + $0x38] sm:$0xf]
  %v30 = vld [vmem:[%s0 + $0x3c] sm:$0xf]
  %v31 = vld [vmem:[%s0 + $0x40] sm:$0xf]
  %v32 = vld [vmem:[%s0 + $0x44] sm:$0xf]
  %v33 = vld [vmem:[%s0 + $0x48] sm:$0xf]
  %v34 = vld [vmem:[%s0 + $0x4c] sm:$0xf]
  %v35 = vld [vmem:[%s0 + $0x50] sm:$0xf]
  %v36 = vld [vmem:[%s0 + $0x54] sm:$0xf]
  %v37 = vld [vmem:[%s0 + $0x58] sm:$0xf]
  %v38 = vld [vmem:[%s0 + $0x5c] sm:$0xf]
  %v39 = vld [vmem:[%s0 + $0x60] sm:$0xf]
  %v40 = vld [vmem:[%s0 + $0x64] sm:$0xf]
  %v41 = vld [vmem:[%s0 + $0x68] sm:$0xf]
  %v42 = vld [vmem:[%s0 + $0x6c] sm:$0xf]
  %v43 = vld [vmem:[%s0 + $0x70] sm:$0xf]
  %v44 = vld [vmem:[%s0 + $0x74] sm:$0xf]
  %v45 = vld [vmem:[%s0 + $0x78] sm:$0xf]
  %v46 = vld [vmem:[%s0 + $0x7c] sm:$0xf]
  %v47 = vld [vmem:[%s0 + $0x80] sm:$0xf]
  %v48 = vld [vmem:[%s0 + $0x84] sm:$0xf]
  %v49 = vld [vmem:[%s0 + $0x88] sm:$0xf]
  %v50 = vld [vmem:[%s0 + $0x8c] sm:$0xf]
  %v51 = vld [vmem:[%s1] sm:$0xf]
  %v52 = vld [vmem:[%s1 + $0x4] sm:$0xf]
  %v53 = vld [vmem:[%s1 + $0x8] sm:$0xf]
  %v54 = vld [vmem:[%s1 + $0xc] sm:$0xf]
  %v55 = vld [vmem:[%s2] sm:$0x1]
  %v57 = vlaneseq
  %v58 = vshrl.u32 %v57, 7
  %v59 = vsub.s32 0, %v58
  %v60 = vrot.slane %v55, %v59
  %v98 = vunpack.c.l.b16 %v15
  %v99 = vunpack.c.l.b16 %v16
  %v100 = vunpack.c.l.b16 %v17
  %v101 = vunpack.c.l.b16 %v18
  %v102 = vunpack.c.l.b16 %v19
  %v103 = vunpack.c.l.b16 %v20
  %v104 = vunpack.c.l.b16 %v21
  %v105 = vunpack.c.l.b16 %v22
  %v106 = vunpack.c.l.b16 %v23
  %v107 = vunpack.c.l.b16 %v24
  %v108 = vunpack.c.l.b16 %v25
  %v109 = vunpack.c.l.b16 %v26
  %v110 = vunpack.c.l.b16 %v27
  %v111 = vunpack.c.l.b16 %v28
  %v112 = vunpack.c.l.b16 %v29
  %v113 = vunpack.c.l.b16 %v30
  %v114 = vunpack.c.l.b16 %v31
  %v115 = vunpack.c.l.b16 %v32
  %v116 = vunpack.c.l.b16 %v33
  %v117 = vunpack.c.l.b16 %v34
  %v118 = vunpack.c.l.b16 %v35
  %v119 = vunpack.c.l.b16 %v36
  %v120 = vunpack.c.l.b16 %v37
  %v121 = vunpack.c.l.b16 %v38
  %v122 = vunpack.c.l.b16 %v39
  %v123 = vunpack.c.l.b16 %v40
  %v124 = vunpack.c.l.b16 %v41
  %v125 = vunpack.c.l.b16 %v42
  %v126 = vunpack.c.l.b16 %v43
  %v127 = vunpack.c.l.b16 %v44
  %v128 = vunpack.c.l.b16 %v45
  %v129 = vunpack.c.l.b16 %v46
  %v130 = vunpack.c.l.b16 %v47
  %v131 = vunpack.c.l.b16 %v48
  %v132 = vunpack.c.l.b16 %v49
  %v133 = vunpack.c.l.b16 %v50
  %v134 = vpack.c.b16 %v99, %v98
  %v135 = vpack.c.b16 %v101, %v100
  %v136 = vpack.c.b16 %v103, %v102
  %v137 = vpack.c.b16 %v105, %v104
  %v138 = vpack.c.b16 %v107, %v106
  %v139 = vpack.c.b16 %v109, %v108
  %v140 = vpack.c.b16 %v111, %v110
  %v141 = vpack.c.b16 %v113, %v112
  %v142 = vpack.c.b16 %v115, %v114
  %v143 = vpack.c.b16 %v117, %v116
  %v144 = vpack.c.b16 %v119, %v118
  %v145 = vpack.c.b16 %v121, %v120
  %v146 = vpack.c.b16 %v123, %v122
  %v147 = vpack.c.b16 %v125, %v124
  %v148 = vpack.c.b16 %v127, %v126
  %v149 = vpack.c.b16 %v129, %v128
  %v150 = vpack.c.b16 %v131, %v130
  %v151 = vpack.c.b16 %v133, %v132
  %v156 = vunpack.c.l.b16 %v51
  %v157 = vunpack.c.l.b16 %v52
  %v158 = vunpack.c.l.b16 %v53
  %v159 = vunpack.c.l.b16 %v54
  %v160 = vpack.c.b16 %v157, %v156
  %v161 = vpack.c.b16 %v159, %v158
  %vm164 = vcmask 261120
  %v166 = vsel %vm164, %v134, 0
  %v169 = vsel %vm164, %v135, 0
  %v172 = vsel %vm164, %v136, 0
  %v175 = vsel %vm164, %v137, 0
  %v178 = vsel %vm164, %v138, 0
  %v181 = vsel %vm164, %v139, 0
  %v184 = vsel %vm164, %v140, 0
  %v187 = vsel %vm164, %v141, 0
  %v190 = vsel %vm164, %v142, 0
  %v193 = vsel %vm164, %v143, 0
  %v196 = vsel %vm164, %v144, 0
  %v199 = vsel %vm164, %v145, 0
  %v202 = vsel %vm164, %v146, 0
  %v205 = vsel %vm164, %v147, 0
  %v208 = vsel %vm164, %v148, 0
  %v211 = vsel %vm164, %v149, 0
  %v214 = vsel %vm164, %v150, 0
  %v217 = vsel %vm164, %v151, 0
  %219 = vmatprep.subr.bf16.mxu0 0
  %220 = vmatpush1.bf16.msra.mxu0 %v160
  %221 = vmatprep.subr.bf16.mxu0 0
  %222 = vmatpush1.bf16.msra.mxu0 %v161
  %223 = vmatprep.subr.bf16.mxu0 0
  %224 = vmatpush1.bf16.msra.mxu0 0
  %225 = vmatprep.subr.bf16.mxu0 0
  %226 = vmatpush1.bf16.msra.mxu0 0
  %227 = vmatprep.subr.bf16.mxu0 0
  %228 = vmatpush1.bf16.msra.mxu0 0
  %229 = vmatprep.subr.bf16.mxu0 0
  %230 = vmatpush1.bf16.msra.mxu0 0
  %231 = vmatprep.subr.bf16.mxu0 0
  %232 = vmatpush1.bf16.msra.mxu0 0
  %233 = vmatprep.subr.bf16.mxu0 0
  %234 = vmatpush1.bf16.msra.mxu0 0
  %235 = vmatprep.subr.bf16.mxu0 0
  %236 = vmatpush1.bf16.msra.mxu0 0
  %237 = vmatprep.subr.bf16.mxu0 0
  %238 = vmatpush1.bf16.msra.mxu0 0
  %239 = vmatprep.subr.bf16.mxu0 0
  %240 = vmatpush1.bf16.msra.mxu0 0
  %241 = vmatprep.subr.bf16.mxu0 0
  %242 = vmatpush1.bf16.msra.mxu0 0
  %243 = vmatprep.subr.bf16.mxu0 0
  %244 = vmatpush1.bf16.msra.mxu0 0
  %245 = vmatprep.subr.bf16.mxu0 0
  %246 = vmatpush1.bf16.msra.mxu0 0
  %247 = vmatprep.subr.bf16.mxu0 0
  %248 = vmatpush1.bf16.msra.mxu0 0
  %249 = vmatprep.subr.bf16.mxu0 0
  %250 = vmatpush1.bf16.msra.mxu0 0
  %251 = vmatprep.mubr.bf16.mxu0 0
  %252 = vmatmul.mubr.bf16.gmra.mrb[0].mxu0 %v166
  %v253 = vpop.f32.mrb[0].mxu0
  %v254 = vadd.f32 %v60, %v253
  %v255 = vpop.f32.mrb[0].mxu0
  %v256 = vpop.f32.mrb[0].mxu0
  %v257 = vadd.f32 %v60, %v256
  %v258 = vpop.f32.mrb[0].mxu0
  %259 = vmatprep.mubr.bf16.mxu0 0
  %260 = vmatmul.mubr.bf16.gmra.mrb[0].mxu0 %v169
  %v261 = vpop.f32.mrb[0].mxu0
  %v262 = vadd.f32 %v60, %v261
  %v263 = vpop.f32.mrb[0].mxu0
  %v264 = vpop.f32.mrb[0].mxu0
  %v265 = vadd.f32 %v60, %v264
  %v266 = vpop.f32.mrb[0].mxu0
  %267 = vmatprep.mubr.bf16.mxu0 0
  %268 = vmatmul.mubr.bf16.gmra.mrb[0].mxu0 %v172
  %v269 = vpop.f32.mrb[0].mxu0
  %v270 = vadd.f32 %v60, %v269
  %v271 = vpop.f32.mrb[0].mxu0
  %v272 = vpop.f32.mrb[0].mxu0
  %v273 = vadd.f32 %v60, %v272
  %v274 = vpop.f32.mrb[0].mxu0
  %275 = vmatprep.mubr.bf16.mxu0 0
  %276 = vmatmul.mubr.bf16.gmra.mrb[0].mxu0 %v175
  %v277 = vpop.f32.mrb[0].mxu0
  %v278 = vadd.f32 %v60, %v277
  %v279 = vpop.f32.mrb[0].mxu0
  %v280 = vpop.f32.mrb[0].mxu0
  %v281 = vadd.f32 %v60, %v280
  %v282 = vpop.f32.mrb[0].mxu0
  %283 = vmatprep.mubr.bf16.mxu0 0
  %284 = vmatmul.mubr.bf16.gmra.mrb[0].mxu0 %v178
  %v285 = vpop.f32.mrb[0].mxu0
  %v286 = vadd.f32 %v60, %v285
  %v287 = vpop.f32.mrb[0].mxu0
  %v288 = vpop.f32.mrb[0].mxu0
  %v289 = vadd.f32 %v60, %v288
  %v290 = vpop.f32.mrb[0].mxu0
  %291 = vmatprep.mubr.bf16.mxu0 0
  %292 = vmatmul.mubr.bf16.gmra.mrb[0].mxu0 %v181
  %v293 = vpop.f32.mrb[0].mxu0
  %v294 = vadd.f32 %v60, %v293
  %v295 = vpop.f32.mrb[0].mxu0
  %v296 = vpop.f32.mrb[0].mxu0
  %v297 = vadd.f32 %v60, %v296
  %v298 = vpop.f32.mrb[0].mxu0
  %299 = vmatprep.mubr.bf16.mxu0 0
  %300 = vmatmul.mubr.bf16.gmra.mrb[0].mxu0 %v184
  %v301 = vpop.f32.mrb[0].mxu0
  %v302 = vadd.f32 %v60, %v301
  %v303 = vpop.f32.mrb[0].mxu0
  %v304 = vpop.f32.mrb[0].mxu0
  %v305 = vadd.f32 %v60, %v304
  %v306 = vpop.f32.mrb[0].mxu0
  %307 = vmatprep.mubr.bf16.mxu0 0
  %308 = vmatmul.mubr.bf16.gmra.mrb[0].mxu0 %v187
  %v309 = vpop.f32.mrb[0].mxu0
  %v310 = vadd.f32 %v60, %v309
  %v311 = vpop.f32.mrb[0].mxu0
  %v312 = vpop.f32.mrb[0].mxu0
  %v313 = vadd.f32 %v60, %v312
  %v314 = vpop.f32.mrb[0].mxu0
  %315 = vmatprep.mubr.bf16.mxu0 0
  %316 = vmatmul.mubr.bf16.gmra.mrb[0].mxu0 %v190
  %v317 = vpop.f32.mrb[0].mxu0
  %v318 = vadd.f32 %v60, %v317
  %v319 = vpop.f32.mrb[0].mxu0
  %v320 = vpop.f32.mrb[0].mxu0
  %v321 = vadd.f32 %v60, %v320
  %v322 = vpop.f32.mrb[0].mxu0
  %323 = vmatprep.mubr.bf16.mxu0 0
  %324 = vmatmul.mubr.bf16.gmra.mrb[0].mxu0 %v193
  %v325 = vpop.f32.mrb[0].mxu0
  %v326 = vadd.f32 %v60, %v325
  %v327 = vpop.f32.mrb[0].mxu0
  %v328 = vpop.f32.mrb[0].mxu0
  %v329 = vadd.f32 %v60, %v328
  %v330 = vpop.f32.mrb[0].mxu0
  %331 = vmatprep.mubr.bf16.mxu0 0
  %332 = vmatmul.mubr.bf16.gmra.mrb[0].mxu0 %v196
  %v333 = vpop.f32.mrb[0].mxu0
  %v334 = vadd.f32 %v60, %v333
  %v335 = vpop.f32.mrb[0].mxu0
  %v336 = vpop.f32.mrb[0].mxu0
  %v337 = vadd.f32 %v60, %v336
  %v338 = vpop.f32.mrb[0].mxu0
  %339 = vmatprep.mubr.bf16.mxu0 0
  %340 = vmatmul.mubr.bf16.gmra.mrb[0].mxu0 %v199
  %v341 = vpop.f32.mrb[0].mxu0
  %v342 = vadd.f32 %v60, %v341
  %v343 = vpop.f32.mrb[0].mxu0
  %v344 = vpop.f32.mrb[0].mxu0
  %v345 = vadd.f32 %v60, %v344
  %v346 = vpop.f32.mrb[0].mxu0
  %347 = vmatprep.mubr.bf16.mxu0 0
  %348 = vmatmul.mubr.bf16.gmra.mrb[0].mxu0 %v202
  %v349 = vpop.f32.mrb[0].mxu0
  %v350 = vadd.f32 %v60, %v349
  %v351 = vpop.f32.mrb[0].mxu0
  %v352 = vpop.f32.mrb[0].mxu0
  %v353 = vadd.f32 %v60, %v352
  %v354 = vpop.f32.mrb[0].mxu0
  %355 = vmatprep.mubr.bf16.mxu0 0
  %356 = vmatmul.mubr.bf16.gmra.mrb[0].mxu0 %v205
  %v357 = vpop.f32.mrb[0].mxu0
  %v358 = vadd.f32 %v60, %v357
  %v359 = vpop.f32.mrb[0].mxu0
  %v360 = vpop.f32.mrb[0].mxu0
  %v361 = vadd.f32 %v60, %v360
  %v362 = vpop.f32.mrb[0].mxu0
  %363 = vmatprep.mubr.bf16.mxu0 0
  %364 = vmatmul.mubr.bf16.gmra.mrb[0].mxu0 %v208
  %v365 = vpop.f32.mrb[0].mxu0
  %v366 = vadd.f32 %v60, %v365
  %v367 = vpop.f32.mrb[0].mxu0
  %v368 = vpop.f32.mrb[0].mxu0
  %v369 = vadd.f32 %v60, %v368
  %v370 = vpop.f32.mrb[0].mxu0
  %371 = vmatprep.mubr.bf16.mxu0 0
  %372 = vmatmul.mubr.bf16.gmra.mrb[0].mxu0 %v211
  %v373 = vpop.f32.mrb[0].mxu0
  %v374 = vadd.f32 %v60, %v373
  %v375 = vpop.f32.mrb[0].mxu0
  %v376 = vpop.f32.mrb[0].mxu0
  %v377 = vadd.f32 %v60, %v376
  %v378 = vpop.f32.mrb[0].mxu0
  %379 = vmatprep.mubr.bf16.mxu0 0
  %380 = vmatmul.mubr.bf16.gmra.mrb[0].mxu0 %v214
  %v381 = vpop.f32.mrb[0].mxu0
  %v382 = vadd.f32 %v60, %v381
  %v383 = vpop.f32.mrb[0].mxu0
  %v384 = vpop.f32.mrb[0].mxu0
  %v385 = vadd.f32 %v60, %v384
  %v386 = vpop.f32.mrb[0].mxu0
  %387 = vmatprep.mubr.bf16.mxu0 0
  %388 = vmatmul.mubr.bf16.gmra.mrb[0].mxu0 %v217
  %v389 = vpop.f32.mrb[0].mxu0
  %v390 = vadd.f32 %v60, %v389
  %v391 = vpop.f32.mrb[0].mxu0
  %v392 = vpop.f32.mrb[0].mxu0
  %v393 = vadd.f32 %v60, %v392
  %v394 = vpop.f32.mrb[0].mxu0
  %395 = vdwg.mxu0
  %vm396 = vcmp.ge.f32.partialorder %v254, 0.0
  %vm397 = vcmp.ge.f32.partialorder %v257, 0.0
  %vm398 = vcmp.ge.f32.partialorder %v262, 0.0
  %vm399 = vcmp.ge.f32.partialorder %v265, 0.0
  %vm400 = vcmp.ge.f32.partialorder %v270, 0.0
  %vm401 = vcmp.ge.f32.partialorder %v273, 0.0
  %vm402 = vcmp.ge.f32.partialorder %v278, 0.0
  %vm403 = vcmp.ge.f32.partialorder %v281, 0.0
  %vm404 = vcmp.ge.f32.partialorder %v286, 0.0
  %vm405 = vcmp.ge.f32.partialorder %v289, 0.0
  %vm406 = vcmp.ge.f32.partialorder %v294, 0.0
  %vm407 = vcmp.ge.f32.partialorder %v297, 0.0
  %vm408 = vcmp.ge.f32.partialorder %v302, 0.0
  %vm409 = vcmp.ge.f32.partialorder %v305, 0.0
  %vm410 = vcmp.ge.f32.partialorder %v310, 0.0
  %vm411 = vcmp.ge.f32.partialorder %v313, 0.0
  %vm412 = vcmp.ge.f32.partialorder %v318, 0.0
  %vm413 = vcmp.ge.f32.partialorder %v321, 0.0
  %vm414 = vcmp.ge.f32.partialorder %v326, 0.0
  %vm415 = vcmp.ge.f32.partialorder %v329, 0.0
  %vm416 = vcmp.ge.f32.partialorder %v334, 0.0
  %vm417 = vcmp.ge.f32.partialorder %v337, 0.0
  %vm418 = vcmp.ge.f32.partialorder %v342, 0.0
  %vm419 = vcmp.ge.f32.partialorder %v345, 0.0
  %vm420 = vcmp.ge.f32.partialorder %v350, 0.0
  %vm421 = vcmp.ge.f32.partialorder %v353, 0.0
  %vm422 = vcmp.ge.f32.partialorder %v358, 0.0
  %vm423 = vcmp.ge.f32.partialorder %v361, 0.0
  %vm424 = vcmp.ge.f32.partialorder %v366, 0.0
  %vm425 = vcmp.ge.f32.partialorder %v369, 0.0
  %vm426 = vcmp.ge.f32.partialorder %v374, 0.0
  %vm427 = vcmp.ge.f32.partialorder %v377, 0.0
  %vm428 = vcmp.ge.f32.partialorder %v382, 0.0
  %vm429 = vcmp.ge.f32.partialorder %v385, 0.0
  %vm430 = vcmp.ge.f32.partialorder %v390, 0.0
  %vm431 = vcmp.ge.f32.partialorder %v393, 0.0
  %v432 = vmul.f32 %v254, 0.01
  %v433 = vmul.f32 %v257, 0.01
  %v434 = vmul.f32 %v262, 0.01
  %v435 = vmul.f32 %v265, 0.01
  %v436 = vmul.f32 %v270, 0.01
  %v437 = vmul.f32 %v273, 0.01
  %v438 = vmul.f32 %v278, 0.01
  %v439 = vmul.f32 %v281, 0.01
  %v440 = vmul.f32 %v286, 0.01
  %v441 = vmul.f32 %v289, 0.01
  %v442 = vmul.f32 %v294, 0.01
  %v443 = vmul.f32 %v297, 0.01
  %v444 = vmul.f32 %v302, 0.01
  %v445 = vmul.f32 %v305, 0.01
  %v446 = vmul.f32 %v310, 0.01
  %v447 = vmul.f32 %v313, 0.01
  %v448 = vmul.f32 %v318, 0.01
  %v449 = vmul.f32 %v321, 0.01
  %v450 = vmul.f32 %v326, 0.01
  %v451 = vmul.f32 %v329, 0.01
  %v452 = vmul.f32 %v334, 0.01
  %v453 = vmul.f32 %v337, 0.01
  %v454 = vmul.f32 %v342, 0.01
  %v455 = vmul.f32 %v345, 0.01
  %v456 = vmul.f32 %v350, 0.01
  %v457 = vmul.f32 %v353, 0.01
  %v458 = vmul.f32 %v358, 0.01
  %v459 = vmul.f32 %v361, 0.01
  %v460 = vmul.f32 %v366, 0.01
  %v461 = vmul.f32 %v369, 0.01
  %v462 = vmul.f32 %v374, 0.01
  %v463 = vmul.f32 %v377, 0.01
  %v464 = vmul.f32 %v382, 0.01
  %v465 = vmul.f32 %v385, 0.01
  %v466 = vmul.f32 %v390, 0.01
  %v467 = vmul.f32 %v393, 0.01
  %v468 = vsel %vm396, %v254, %v432
  %v469 = vsel %vm397, %v257, %v433
  %v470 = vsel %vm398, %v262, %v434
  %v471 = vsel %vm399, %v265, %v435
  %v472 = vsel %vm400, %v270, %v436
  %v473 = vsel %vm401, %v273, %v437
  %v474 = vsel %vm402, %v278, %v438
  %v475 = vsel %vm403, %v281, %v439
  %v476 = vsel %vm404, %v286, %v440
  %v477 = vsel %vm405, %v289, %v441
  %v478 = vsel %vm406, %v294, %v442
  %v479 = vsel %vm407, %v297, %v443
  %v480 = vsel %vm408, %v302, %v444
  %v481 = vsel %vm409, %v305, %v445
  %v482 = vsel %vm410, %v310, %v446
  %v483 = vsel %vm411, %v313, %v447
  %v484 = vsel %vm412, %v318, %v448
  %v485 = vsel %vm413, %v321, %v449
  %v486 = vsel %vm414, %v326, %v450
  %v487 = vsel %vm415, %v329, %v451
  %v488 = vsel %vm416, %v334, %v452
  %v489 = vsel %vm417, %v337, %v453
  %v490 = vsel %vm418, %v342, %v454
  %v491 = vsel %vm419, %v345, %v455
  %v492 = vsel %vm420, %v350, %v456
  %v493 = vsel %vm421, %v353, %v457
  %v494 = vsel %vm422, %v358, %v458
  %v495 = vsel %vm423, %v361, %v459
  %v496 = vsel %vm424, %v366, %v460
  %v497 = vsel %vm425, %v369, %v461
  %v498 = vsel %vm426, %v374, %v462
  %v499 = vsel %vm427, %v377, %v463
  %v500 = vsel %vm428, %v382, %v464
  %v501 = vsel %vm429, %v385, %v465
  %v502 = vsel %vm430, %v390, %v466
  %v503 = vsel %vm431, %v393, %v467
  %s504 = scalar_lea.vmem %s0, 144
  %v505 = vld [vmem:[%s504] sm:$0xf]
  %v506 = vld [vmem:[%s504 + $0x4] sm:$0xf]
  %v507 = vld [vmem:[%s504 + $0x8] sm:$0xf]
  %v508 = vld [vmem:[%s504 + $0xc] sm:$0xf]
  %v509 = vld [vmem:[%s504 + $0x10] sm:$0xf]
  %v510 = vld [vmem:[%s504 + $0x14] sm:$0xf]
  %v511 = vld [vmem:[%s504 + $0x18] sm:$0xf]
  %v512 = vld [vmem:[%s504 + $0x1c] sm:$0xf]
  %v513 = vld [vmem:[%s504 + $0x20] sm:$0xf]
  %v514 = vld [vmem:[%s504 + $0x24] sm:$0xf]
  %v515 = vld [vmem:[%s504 + $0x28] sm:$0xf]
  %v516 = vld [vmem:[%s504 + $0x2c] sm:$0xf]
  %v517 = vld [vmem:[%s504 + $0x30] sm:$0xf]
  %v518 = vld [vmem:[%s504 + $0x34] sm:$0xf]
  %v519 = vld [vmem:[%s504 + $0x38] sm:$0xf]
  %v520 = vld [vmem:[%s504 + $0x3c] sm:$0xf]
  %v521 = vld [vmem:[%s504 + $0x40] sm:$0xf]
  %v522 = vld [vmem:[%s504 + $0x44] sm:$0xf]
  %v523 = vld [vmem:[%s504 + $0x48] sm:$0xf]
  %v524 = vld [vmem:[%s504 + $0x4c] sm:$0xf]
  %v525 = vld [vmem:[%s504 + $0x50] sm:$0xf]
  %v526 = vld [vmem:[%s504 + $0x54] sm:$0xf]
  %v527 = vld [vmem:[%s504 + $0x58] sm:$0xf]
  %v528 = vld [vmem:[%s504 + $0x5c] sm:$0xf]
  %v529 = vld [vmem:[%s504 + $0x60] sm:$0xf]
  %v530 = vld [vmem:[%s504 + $0x64] sm:$0xf]
  %v531 = vld [vmem:[%s504 + $0x68] sm:$0xf]
  %v532 = vld [vmem:[%s504 + $0x6c] sm:$0xf]
  %v533 = vld [vmem:[%s504 + $0x70] sm:$0xf]
  %v534 = vld [vmem:[%s504 + $0x74] sm:$0xf]
  %v535 = vld [vmem:[%s504 + $0x78] sm:$0xf]
  %v536 = vld [vmem:[%s504 + $0x7c] sm:$0xf]
  %v537 = vld [vmem:[%s504 + $0x80] sm:$0xf]
  %v538 = vld [vmem:[%s504 + $0x84] sm:$0xf]
  %v539 = vld [vmem:[%s504 + $0x88] sm:$0xf]
  %v540 = vld [vmem:[%s504 + $0x8c] sm:$0xf]
  %v577 = vunpack.c.l.b16 %v505
  %v578 = vunpack.c.l.b16 %v506
  %v579 = vunpack.c.l.b16 %v507
  %v580 = vunpack.c.l.b16 %v508
  %v581 = vunpack.c.l.b16 %v509
  %v582 = vunpack.c.l.b16 %v510
  %v583 = vunpack.c.l.b16 %v511
  %v584 = vunpack.c.l.b16 %v512
  %v585 = vunpack.c.l.b16 %v513
  %v586 = vunpack.c.l.b16 %v514
  %v587 = vunpack.c.l.b16 %v515
  %v588 = vunpack.c.l.b16 %v516
  %v589 = vunpack.c.l.b16 %v517
  %v590 = vunpack.c.l.b16 %v518
  %v591 = vunpack.c.l.b16 %v519
  %v592 = vunpack.c.l.b16 %v520
  %v593 = vunpack.c.l.b16 %v521
  %v594 = vunpack.c.l.b16 %v522
  %v595 = vunpack.c.l.b16 %v523
  %v596 = vunpack.c.l.b16 %v524
  %v597 = vunpack.c.l.b16 %v525
  %v598 = vunpack.c.l.b16 %v526
  %v599 = vunpack.c.l.b16 %v527
  %v600 = vunpack.c.l.b16 %v528
  %v601 = vunpack.c.l.b16 %v529
  %v602 = vunpack.c.l.b16 %v530
  %v603 = vunpack.c.l.b16 %v531
  %v604 = vunpack.c.l.b16 %v532
  %v605 = vunpack.c.l.b16 %v533
  %v606 = vunpack.c.l.b16 %v534
  %v607 = vunpack.c.l.b16 %v535
  %v608 = vunpack.c.l.b16 %v536
  %v609 = vunpack.c.l.b16 %v537
  %v610 = vunpack.c.l.b16 %v538
  %v611 = vunpack.c.l.b16 %v539
  %v612 = vunpack.c.l.b16 %v540
  %v613 = vpack.c.b16 %v578, %v577
  %v614 = vpack.c.b16 %v580, %v579
  %v615 = vpack.c.b16 %v582, %v581
  %v616 = vpack.c.b16 %v584, %v583
  %v617 = vpack.c.b16 %v586, %v585
  %v618 = vpack.c.b16 %v588, %v587
  %v619 = vpack.c.b16 %v590, %v589
  %v620 = vpack.c.b16 %v592, %v591
  %v621 = vpack.c.b16 %v594, %v593
  %v622 = vpack.c.b16 %v596, %v595
  %v623 = vpack.c.b16 %v598, %v597
  %v624 = vpack.c.b16 %v600, %v599
  %v625 = vpack.c.b16 %v602, %v601
  %v626 = vpack.c.b16 %v604, %v603
  %v627 = vpack.c.b16 %v606, %v605
  %v628 = vpack.c.b16 %v608, %v607
  %v629 = vpack.c.b16 %v610, %v609
  %v630 = vpack.c.b16 %v612, %v611
  %v632 = vsel %vm164, %v613, 0
  %v635 = vsel %vm164, %v614, 0
  %v638 = vsel %vm164, %v615, 0
  %v641 = vsel %vm164, %v616, 0
  %v644 = vsel %vm164, %v617, 0
  %v647 = vsel %vm164, %v618, 0
  %v650 = vsel %vm164, %v619, 0
  %v653 = vsel %vm164, %v620, 0
  %v656 = vsel %vm164, %v621, 0
  %v659 = vsel %vm164, %v622, 0
  %v662 = vsel %vm164, %v623, 0
  %v665 = vsel %vm164, %v624, 0
  %v668 = vsel %vm164, %v625, 0
  %v671 = vsel %vm164, %v626, 0
  %v674 = vsel %vm164, %v627, 0
  %v677 = vsel %vm164, %v628, 0
  %v680 = vsel %vm164, %v629, 0
  %v683 = vsel %vm164, %v630, 0
  %685 = vmatprep.subr.bf16.mxu0 0
  %686 = vmatpush1.bf16.msra.mxu0 %v160
  %687 = vmatprep.subr.bf16.mxu0 0
  %688 = vmatpush1.bf16.msra.mxu0 %v161
  %689 = vmatprep.subr.bf16.mxu0 0
  %690 = vmatpush1.bf16.msra.mxu0 0
  %691 = vmatprep.subr.bf16.mxu0 0
  %692 = vmatpush1.bf16.msra.mxu0 0
  %693 = vmatprep.subr.bf16.mxu0 0
  %694 = vmatpush1.bf16.msra.mxu0 0
  %695 = vmatprep.subr.bf16.mxu0 0
  %696 = vmatpush1.bf16.msra.mxu0 0
  %697 = vmatprep.subr.bf16.mxu0 0
  %698 = vmatpush1.bf16.msra.mxu0 0
  %699 = vmatprep.subr.bf16.mxu0 0
  %700 = vmatpush1.bf16.msra.mxu0 0
  %701 = vmatprep.subr.bf16.mxu0 0
  %702 = vmatpush1.bf16.msra.mxu0 0
  %703 = vmatprep.subr.bf16.mxu0 0
  %704 = vmatpush1.bf16.msra.mxu0 0
  %705 = vmatprep.subr.bf16.mxu0 0
  %706 = vmatpush1.bf16.msra.mxu0 0
  %707 = vmatprep.subr.bf16.mxu0 0
  %708 = vmatpush1.bf16.msra.mxu0 0
  %709 = vmatprep.subr.bf16.mxu0 0
  %710 = vmatpush1.bf16.msra.mxu0 0
  %711 = vmatprep.subr.bf16.mxu0 0
  %712 = vmatpush1.bf16.msra.mxu0 0
  %713 = vmatprep.subr.bf16.mxu0 0
  %714 = vmatpush1.bf16.msra.mxu0 0
  %715 = vmatprep.subr.bf16.mxu0 0
  %716 = vmatpush1.bf16.msra.mxu0 0
  %717 = vmatprep.mubr.bf16.mxu0 0
  %718 = vmatmul.mubr.bf16.gmra.mrb[0].mxu0 %v632
  %v719 = vpop.f32.mrb[0].mxu0
  %v720 = vadd.f32 %v60, %v719
  %v721 = vpop.f32.mrb[0].mxu0
  %v722 = vpop.f32.mrb[0].mxu0
  %v723 = vadd.f32 %v60, %v722
  %v724 = vpop.f32.mrb[0].mxu0
  %725 = vmatprep.mubr.bf16.mxu0 0
  %726 = vmatmul.mubr.bf16.gmra.mrb[0].mxu0 %v635
  %v727 = vpop.f32.mrb[0].mxu0
  %v728 = vadd.f32 %v60, %v727
  %v729 = vpop.f32.mrb[0].mxu0
  %v730 = vpop.f32.mrb[0].mxu0
  %v731 = vadd.f32 %v60, %v730
  %v732 = vpop.f32.mrb[0].mxu0
  %733 = vmatprep.mubr.bf16.mxu0 0
  %734 = vmatmul.mubr.bf16.gmra.mrb[0].mxu0 %v638
  %v735 = vpop.f32.mrb[0].mxu0
  %v736 = vadd.f32 %v60, %v735
  %v737 = vpop.f32.mrb[0].mxu0
  %v738 = vpop.f32.mrb[0].mxu0
  %v739 = vadd.f32 %v60, %v738
  %v740 = vpop.f32.mrb[0].mxu0
  %741 = vmatprep.mubr.bf16.mxu0 0
  %742 = vmatmul.mubr.bf16.gmra.mrb[0].mxu0 %v641
  %v743 = vpop.f32.mrb[0].mxu0
  %v744 = vadd.f32 %v60, %v743
  %v745 = vpop.f32.mrb[0].mxu0
  %v746 = vpop.f32.mrb[0].mxu0
  %v747 = vadd.f32 %v60, %v746
  %v748 = vpop.f32.mrb[0].mxu0
  %749 = vmatprep.mubr.bf16.mxu0 0
  %750 = vmatmul.mubr.bf16.gmra.mrb[0].mxu0 %v644
  %v751 = vpop.f32.mrb[0].mxu0
  %v752 = vadd.f32 %v60, %v751
  %v753 = vpop.f32.mrb[0].mxu0
  %v754 = vpop.f32.mrb[0].mxu0
  %v755 = vadd.f32 %v60, %v754
  %v756 = vpop.f32.mrb[0].mxu0
  %757 = vmatprep.mubr.bf16.mxu0 0
  %758 = vmatmul.mubr.bf16.gmra.mrb[0].mxu0 %v647
  %v759 = vpop.f32.mrb[0].mxu0
  %v760 = vadd.f32 %v60, %v759
  %v761 = vpop.f32.mrb[0].mxu0
  %v762 = vpop.f32.mrb[0].mxu0
  %v763 = vadd.f32 %v60, %v762
  %v764 = vpop.f32.mrb[0].mxu0
  %765 = vmatprep.mubr.bf16.mxu0 0
  %766 = vmatmul.mubr.bf16.gmra.mrb[0].mxu0 %v650
  %v767 = vpop.f32.mrb[0].mxu0
  %v768 = vadd.f32 %v60, %v767
  %v769 = vpop.f32.mrb[0].mxu0
  %v770 = vpop.f32.mrb[0].mxu0
  %v771 = vadd.f32 %v60, %v770
  %v772 = vpop.f32.mrb[0].mxu0
  %773 = vmatprep.mubr.bf16.mxu0 0
  %774 = vmatmul.mubr.bf16.gmra.mrb[0].mxu0 %v653
  %v775 = vpop.f32.mrb[0].mxu0
  %v776 = vadd.f32 %v60, %v775
  %v777 = vpop.f32.mrb[0].mxu0
  %v778 = vpop.f32.mrb[0].mxu0
  %v779 = vadd.f32 %v60, %v778
  %v780 = vpop.f32.mrb[0].mxu0
  %781 = vmatprep.mubr.bf16.mxu0 0
  %782 = vmatmul.mubr.bf16.gmra.mrb[0].mxu0 %v656
  %v783 = vpop.f32.mrb[0].mxu0
  %v784 = vadd.f32 %v60, %v783
  %v785 = vpop.f32.mrb[0].mxu0
  %v786 = vpop.f32.mrb[0].mxu0
  %v787 = vadd.f32 %v60, %v786
  %v788 = vpop.f32.mrb[0].mxu0
  %789 = vmatprep.mubr.bf16.mxu0 0
  %790 = vmatmul.mubr.bf16.gmra.mrb[0].mxu0 %v659
  %v791 = vpop.f32.mrb[0].mxu0
  %v792 = vadd.f32 %v60, %v791
  %v793 = vpop.f32.mrb[0].mxu0
  %v794 = vpop.f32.mrb[0].mxu0
  %v795 = vadd.f32 %v60, %v794
  %v796 = vpop.f32.mrb[0].mxu0
  %797 = vmatprep.mubr.bf16.mxu0 0
  %798 = vmatmul.mubr.bf16.gmra.mrb[0].mxu0 %v662
  %v799 = vpop.f32.mrb[0].mxu0
  %v800 = vadd.f32 %v60, %v799
  %v801 = vpop.f32.mrb[0].mxu0
  %v802 = vpop.f32.mrb[0].mxu0
  %v803 = vadd.f32 %v60, %v802
  %v804 = vpop.f32.mrb[0].mxu0
  %805 = vmatprep.mubr.bf16.mxu0 0
  %806 = vmatmul.mubr.bf16.gmra.mrb[0].mxu0 %v665
  %v807 = vpop.f32.mrb[0].mxu0
  %v808 = vadd.f32 %v60, %v807
  %v809 = vpop.f32.mrb[0].mxu0
  %v810 = vpop.f32.mrb[0].mxu0
  %v811 = vadd.f32 %v60, %v810
  %v812 = vpop.f32.mrb[0].mxu0
  %813 = vmatprep.mubr.bf16.mxu0 0
  %814 = vmatmul.mubr.bf16.gmra.mrb[0].mxu0 %v668
  %v815 = vpop.f32.mrb[0].mxu0
  %v816 = vadd.f32 %v60, %v815
  %v817 = vpop.f32.mrb[0].mxu0
  %v818 = vpop.f32.mrb[0].mxu0
  %v819 = vadd.f32 %v60, %v818
  %v820 = vpop.f32.mrb[0].mxu0
  %821 = vmatprep.mubr.bf16.mxu0 0
  %822 = vmatmul.mubr.bf16.gmra.mrb[0].mxu0 %v671
  %v823 = vpop.f32.mrb[0].mxu0
  %v824 = vadd.f32 %v60, %v823
  %v825 = vpop.f32.mrb[0].mxu0
  %v826 = vpop.f32.mrb[0].mxu0
  %v827 = vadd.f32 %v60, %v826
  %v828 = vpop.f32.mrb[0].mxu0
  %829 = vmatprep.mubr.bf16.mxu0 0
  %830 = vmatmul.mubr.bf16.gmra.mrb[0].mxu0 %v674
  %v831 = vpop.f32.mrb[0].mxu0
  %v832 = vadd.f32 %v60, %v831
  %v833 = vpop.f32.mrb[0].mxu0
  %v834 = vpop.f32.mrb[0].mxu0
  %v835 = vadd.f32 %v60, %v834
  %v836 = vpop.f32.mrb[0].mxu0
  %837 = vmatprep.mubr.bf16.mxu0 0
  %838 = vmatmul.mubr.bf16.gmra.mrb[0].mxu0 %v677
  %v839 = vpop.f32.mrb[0].mxu0
  %v840 = vadd.f32 %v60, %v839
  %v841 = vpop.f32.mrb[0].mxu0
  %v842 = vpop.f32.mrb[0].mxu0
  %v843 = vadd.f32 %v60, %v842
  %v844 = vpop.f32.mrb[0].mxu0
  %845 = vmatprep.mubr.bf16.mxu0 0
  %846 = vmatmul.mubr.bf16.gmra.mrb[0].mxu0 %v680
  %v847 = vpop.f32.mrb[0].mxu0
  %v848 = vadd.f32 %v60, %v847
  %v849 = vpop.f32.mrb[0].mxu0
  %v850 = vpop.f32.mrb[0].mxu0
  %v851 = vadd.f32 %v60, %v850
  %v852 = vpop.f32.mrb[0].mxu0
  %853 = vmatprep.mubr.bf16.mxu0 0
  %854 = vmatmul.mubr.bf16.gmra.mrb[0].mxu0 %v683
  %v855 = vpop.f32.mrb[0].mxu0
  %v856 = vadd.f32 %v60, %v855
  %v857 = vpop.f32.mrb[0].mxu0
  %v858 = vpop.f32.mrb[0].mxu0
  %v859 = vadd.f32 %v60, %v858
  %v860 = vpop.f32.mrb[0].mxu0
  %861 = vdwg.mxu0
  %vm862 = vcmp.ge.f32.partialorder %v720, 0.0
  %vm863 = vcmp.ge.f32.partialorder %v723, 0.0
  %vm864 = vcmp.ge.f32.partialorder %v728, 0.0
  %vm865 = vcmp.ge.f32.partialorder %v731, 0.0
  %vm866 = vcmp.ge.f32.partialorder %v736, 0.0
  %vm867 = vcmp.ge.f32.partialorder %v739, 0.0
  %vm868 = vcmp.ge.f32.partialorder %v744, 0.0
  %vm869 = vcmp.ge.f32.partialorder %v747, 0.0
  %vm870 = vcmp.ge.f32.partialorder %v752, 0.0
  %vm871 = vcmp.ge.f32.partialorder %v755, 0.0
  %vm872 = vcmp.ge.f32.partialorder %v760, 0.0
  %vm873 = vcmp.ge.f32.partialorder %v763, 0.0
  %vm874 = vcmp.ge.f32.partialorder %v768, 0.0
  %vm875 = vcmp.ge.f32.partialorder %v771, 0.0
  %vm876 = vcmp.ge.f32.partialorder %v776, 0.0
  %vm877 = vcmp.ge.f32.partialorder %v779, 0.0
  %vm878 = vcmp.ge.f32.partialorder %v784, 0.0
  %vm879 = vcmp.ge.f32.partialorder %v787, 0.0
  %vm880 = vcmp.ge.f32.partialorder %v792, 0.0
  %vm881 = vcmp.ge.f32.partialorder %v795, 0.0
  %vm882 = vcmp.ge.f32.partialorder %v800, 0.0
  %vm883 = vcmp.ge.f32.partialorder %v803, 0.0
  %vm884 = vcmp.ge.f32.partialorder %v808, 0.0
  %vm885 = vcmp.ge.f32.partialorder %v811, 0.0
  %vm886 = vcmp.ge.f32.partialorder %v816, 0.0
  %vm887 = vcmp.ge.f32.partialorder %v819, 0.0
  %vm888 = vcmp.ge.f32.partialorder %v824, 0.0
  %vm889 = vcmp.ge.f32.partialorder %v827, 0.0
  %vm890 = vcmp.ge.f32.partialorder %v832, 0.0
  %vm891 = vcmp.ge.f32.partialorder %v835, 0.0
  %vm892 = vcmp.ge.f32.partialorder %v840, 0.0
  %vm893 = vcmp.ge.f32.partialorder %v843, 0.0
  %vm894 = vcmp.ge.f32.partialorder %v848, 0.0
  %vm895 = vcmp.ge.f32.partialorder %v851, 0.0
  %vm896 = vcmp.ge.f32.partialorder %v856, 0.0
  %vm897 = vcmp.ge.f32.partialorder %v859, 0.0
  %v898 = vmul.f32 %v720, 0.01
  %v899 = vmul.f32 %v723, 0.01
  %v900 = vmul.f32 %v728, 0.01
  %v901 = vmul.f32 %v731, 0.01
  %v902 = vmul.f32 %v736, 0.01
  %v903 = vmul.f32 %v739, 0.01
  %v904 = vmul.f32 %v744, 0.01
  %v905 = vmul.f32 %v747, 0.01
  %v906 = vmul.f32 %v752, 0.01
  %v907 = vmul.f32 %v755, 0.01
  %v908 = vmul.f32 %v760, 0.01
  %v909 = vmul.f32 %v763, 0.01
  %v910 = vmul.f32 %v768, 0.01
  %v911 = vmul.f32 %v771, 0.01
  %v912 = vmul.f32 %v776, 0.01
  %v913 = vmul.f32 %v779, 0.01
  %v914 = vmul.f32 %v784, 0.01
  %v915 = vmul.f32 %v787, 0.01
  %v916 = vmul.f32 %v792, 0.01
  %v917 = vmul.f32 %v795, 0.01
  %v918 = vmul.f32 %v800, 0.01
  %v919 = vmul.f32 %v803, 0.01
  %v920 = vmul.f32 %v808, 0.01
  %v921 = vmul.f32 %v811, 0.01
  %v922 = vmul.f32 %v816, 0.01
  %v923 = vmul.f32 %v819, 0.01
  %v924 = vmul.f32 %v824, 0.01
  %v925 = vmul.f32 %v827, 0.01
  %v926 = vmul.f32 %v832, 0.01
  %v927 = vmul.f32 %v835, 0.01
  %v928 = vmul.f32 %v840, 0.01
  %v929 = vmul.f32 %v843, 0.01
  %v930 = vmul.f32 %v848, 0.01
  %v931 = vmul.f32 %v851, 0.01
  %v932 = vmul.f32 %v856, 0.01
  %v933 = vmul.f32 %v859, 0.01
  %v934 = vsel %vm862, %v720, %v898
  %v935 = vsel %vm863, %v723, %v899
  %v936 = vsel %vm864, %v728, %v900
  %v937 = vsel %vm865, %v731, %v901
  %v938 = vsel %vm866, %v736, %v902
  %v939 = vsel %vm867, %v739, %v903
  %v940 = vsel %vm868, %v744, %v904
  %v941 = vsel %vm869, %v747, %v905
  %v942 = vsel %vm870, %v752, %v906
  %v943 = vsel %vm871, %v755, %v907
  %v944 = vsel %vm872, %v760, %v908
  %v945 = vsel %vm873, %v763, %v909
  %v946 = vsel %vm874, %v768, %v910
  %v947 = vsel %vm875, %v771, %v911
  %v948 = vsel %vm876, %v776, %v912
  %v949 = vsel %vm877, %v779, %v913
  %v950 = vsel %vm878, %v784, %v914
  %v951 = vsel %vm879, %v787, %v915
  %v952 = vsel %vm880, %v792, %v916
  %v953 = vsel %vm881, %v795, %v917
  %v954 = vsel %vm882, %v800, %v918
  %v955 = vsel %vm883, %v803, %v919
  %v956 = vsel %vm884, %v808, %v920
  %v957 = vsel %vm885, %v811, %v921
  %v958 = vsel %vm886, %v816, %v922
  %v959 = vsel %vm887, %v819, %v923
  %v960 = vsel %vm888, %v824, %v924
  %v961 = vsel %vm889, %v827, %v925
  %v962 = vsel %vm890, %v832, %v926
  %v963 = vsel %vm891, %v835, %v927
  %v964 = vsel %vm892, %v840, %v928
  %v965 = vsel %vm893, %v843, %v929
  %v966 = vsel %vm894, %v848, %v930
  %v967 = vsel %vm895, %v851, %v931
  %v968 = vsel %vm896, %v856, %v932
  %v969 = vsel %vm897, %v859, %v933
  %v970 = vmax.f32 %v468, %v934
  %v971 = vmax.f32 %v469, %v935
  %v972 = vmax.f32 %v470, %v936
  %v973 = vmax.f32 %v471, %v937
  %v974 = vmax.f32 %v472, %v938
  %v975 = vmax.f32 %v473, %v939
  %v976 = vmax.f32 %v474, %v940
  %v977 = vmax.f32 %v475, %v941
  %v978 = vmax.f32 %v476, %v942
  %v979 = vmax.f32 %v477, %v943
  %v980 = vmax.f32 %v478, %v944
  %v981 = vmax.f32 %v479, %v945
  %v982 = vmax.f32 %v480, %v946
  %v983 = vmax.f32 %v481, %v947
  %v984 = vmax.f32 %v482, %v948
  %v985 = vmax.f32 %v483, %v949
  %v986 = vmax.f32 %v484, %v950
  %v987 = vmax.f32 %v485, %v951
  %v988 = vmax.f32 %v486, %v952
  %v989 = vmax.f32 %v487, %v953
  %v990 = vmax.f32 %v488, %v954
  %v991 = vmax.f32 %v489, %v955
  %v992 = vmax.f32 %v490, %v956
  %v993 = vmax.f32 %v491, %v957
  %v994 = vmax.f32 %v492, %v958
  %v995 = vmax.f32 %v493, %v959
  %v996 = vmax.f32 %v494, %v960
  %v997 = vmax.f32 %v495, %v961
  %v998 = vmax.f32 %v496, %v962
  %v999 = vmax.f32 %v497, %v963
  %v1000 = vmax.f32 %v498, %v964
  %v1001 = vmax.f32 %v499, %v965
  %v1002 = vmax.f32 %v500, %v966
  %v1003 = vmax.f32 %v501, %v967
  %v1004 = vmax.f32 %v502, %v968
  %v1005 = vmax.f32 %v503, %v969
  %s1006 = scalar_lea.vmem %s0, 288
  %v1007 = vld [vmem:[%s1006] sm:$0xf]
  %v1008 = vld [vmem:[%s1006 + $0x4] sm:$0xf]
  %v1009 = vld [vmem:[%s1006 + $0x8] sm:$0xf]
  %v1010 = vld [vmem:[%s1006 + $0xc] sm:$0xf]
  %v1011 = vld [vmem:[%s1006 + $0x10] sm:$0xf]
  %v1012 = vld [vmem:[%s1006 + $0x14] sm:$0xf]
  %v1013 = vld [vmem:[%s1006 + $0x18] sm:$0xf]
  %v1014 = vld [vmem:[%s1006 + $0x1c] sm:$0xf]
  %v1015 = vld [vmem:[%s1006 + $0x20] sm:$0xf]
  %v1016 = vld [vmem:[%s1006 + $0x24] sm:$0xf]
  %v1017 = vld [vmem:[%s1006 + $0x28] sm:$0xf]
  %v1018 = vld [vmem:[%s1006 + $0x2c] sm:$0xf]
  %v1019 = vld [vmem:[%s1006 + $0x30] sm:$0xf]
  %v1020 = vld [vmem:[%s1006 + $0x34] sm:$0xf]
  %v1021 = vld [vmem:[%s1006 + $0x38] sm:$0xf]
  %v1022 = vld [vmem:[%s1006 + $0x3c] sm:$0xf]
  %v1023 = vld [vmem:[%s1006 + $0x40] sm:$0xf]
  %v1024 = vld [vmem:[%s1006 + $0x44] sm:$0xf]
  %v1025 = vld [vmem:[%s1006 + $0x48] sm:$0xf]
  %v1026 = vld [vmem:[%s1006 + $0x4c] sm:$0xf]
  %v1027 = vld [vmem:[%s1006 + $0x50] sm:$0xf]
  %v1028 = vld [vmem:[%s1006 + $0x54] sm:$0xf]
  %v1029 = vld [vmem:[%s1006 + $0x58] sm:$0xf]
  %v1030 = vld [vmem:[%s1006 + $0x5c] sm:$0xf]
  %v1031 = vld [vmem:[%s1006 + $0x60] sm:$0xf]
  %v1032 = vld [vmem:[%s1006 + $0x64] sm:$0xf]
  %v1033 = vld [vmem:[%s1006 + $0x68] sm:$0xf]
  %v1034 = vld [vmem:[%s1006 + $0x6c] sm:$0xf]
  %v1035 = vld [vmem:[%s1006 + $0x70] sm:$0xf]
  %v1036 = vld [vmem:[%s1006 + $0x74] sm:$0xf]
  %v1037 = vld [vmem:[%s1006 + $0x78] sm:$0xf]
  %v1038 = vld [vmem:[%s1006 + $0x7c] sm:$0xf]
  %v1039 = vld [vmem:[%s1006 + $0x80] sm:$0xf]
  %v1040 = vld [vmem:[%s1006 + $0x84] sm:$0xf]
  %v1041 = vld [vmem:[%s1006 + $0x88] sm:$0xf]
  %v1042 = vld [vmem:[%s1006 + $0x8c] sm:$0xf]
  %v1079 = vunpack.c.l.b16 %v1007
  %v1080 = vunpack.c.l.b16 %v1008
  %v1081 = vunpack.c.l.b16 %v1009
  %v1082 = vunpack.c.l.b16 %v1010
  %v1083 = vunpack.c.l.b16 %v1011
  %v1084 = vunpack.c.l.b16 %v1012
  %v1085 = vunpack.c.l.b16 %v1013
  %v1086 = vunpack.c.l.b16 %v1014
  %v1087 = vunpack.c.l.b16 %v1015
  %v1088 = vunpack.c.l.b16 %v1016
  %v1089 = vunpack.c.l.b16 %v1017
  %v1090 = vunpack.c.l.b16 %v1018
  %v1091 = vunpack.c.l.b16 %v1019
  %v1092 = vunpack.c.l.b16 %v1020
  %v1093 = vunpack.c.l.b16 %v1021
  %v1094 = vunpack.c.l.b16 %v1022
  %v1095 = vunpack.c.l.b16 %v1023
  %v1096 = vunpack.c.l.b16 %v1024
  %v1097 = vunpack.c.l.b16 %v1025
  %v1098 = vunpack.c.l.b16 %v1026
  %v1099 = vunpack.c.l.b16 %v1027
  %v1100 = vunpack.c.l.b16 %v1028
  %v1101 = vunpack.c.l.b16 %v1029
  %v1102 = vunpack.c.l.b16 %v1030
  %v1103 = vunpack.c.l.b16 %v1031
  %v1104 = vunpack.c.l.b16 %v1032
  %v1105 = vunpack.c.l.b16 %v1033
  %v1106 = vunpack.c.l.b16 %v1034
  %v1107 = vunpack.c.l.b16 %v1035
  %v1108 = vunpack.c.l.b16 %v1036
  %v1109 = vunpack.c.l.b16 %v1037
  %v1110 = vunpack.c.l.b16 %v1038
  %v1111 = vunpack.c.l.b16 %v1039
  %v1112 = vunpack.c.l.b16 %v1040
  %v1113 = vunpack.c.l.b16 %v1041
  %v1114 = vunpack.c.l.b16 %v1042
  %v1115 = vpack.c.b16 %v1080, %v1079
  %v1116 = vpack.c.b16 %v1082, %v1081
  %v1117 = vpack.c.b16 %v1084, %v1083
  %v1118 = vpack.c.b16 %v1086, %v1085
  %v1119 = vpack.c.b16 %v1088, %v1087
  %v1120 = vpack.c.b16 %v1090, %v1089
  %v1121 = vpack.c.b16 %v1092, %v1091
  %v1122 = vpack.c.b16 %v1094, %v1093
  %v1123 = vpack.c.b16 %v1096, %v1095
  %v1124 = vpack.c.b16 %v1098, %v1097
  %v1125 = vpack.c.b16 %v1100, %v1099
  %v1126 = vpack.c.b16 %v1102, %v1101
  %v1127 = vpack.c.b16 %v1104, %v1103
  %v1128 = vpack.c.b16 %v1106, %v1105
  %v1129 = vpack.c.b16 %v1108, %v1107
  %v1130 = vpack.c.b16 %v1110, %v1109
  %v1131 = vpack.c.b16 %v1112, %v1111
  %v1132 = vpack.c.b16 %v1114, %v1113
  %v1134 = vsel %vm164, %v1115, 0
  %v1137 = vsel %vm164, %v1116, 0
  %v1140 = vsel %vm164, %v1117, 0
  %v1143 = vsel %vm164, %v1118, 0
  %v1146 = vsel %vm164, %v1119, 0
  %v1149 = vsel %vm164, %v1120, 0
  %v1152 = vsel %vm164, %v1121, 0
  %v1155 = vsel %vm164, %v1122, 0
  %v1158 = vsel %vm164, %v1123, 0
  %v1161 = vsel %vm164, %v1124, 0
  %v1164 = vsel %vm164, %v1125, 0
  %v1167 = vsel %vm164, %v1126, 0
  %v1170 = vsel %vm164, %v1127, 0
  %v1173 = vsel %vm164, %v1128, 0
  %v1176 = vsel %vm164, %v1129, 0
  %v1179 = vsel %vm164, %v1130, 0
  %v1182 = vsel %vm164, %v1131, 0
  %v1185 = vsel %vm164, %v1132, 0
  %1187 = vmatprep.subr.bf16.mxu0 0
  %1188 = vmatpush1.bf16.msra.mxu0 %v160
  %1189 = vmatprep.subr.bf16.mxu0 0
  %1190 = vmatpush1.bf16.msra.mxu0 %v161
  %1191 = vmatprep.subr.bf16.mxu0 0
  %1192 = vmatpush1.bf16.msra.mxu0 0
  %1193 = vmatprep.subr.bf16.mxu0 0
  %1194 = vmatpush1.bf16.msra.mxu0 0
  %1195 = vmatprep.subr.bf16.mxu0 0
  %1196 = vmatpush1.bf16.msra.mxu0 0
  %1197 = vmatprep.subr.bf16.mxu0 0
  %1198 = vmatpush1.bf16.msra.mxu0 0
  %1199 = vmatprep.subr.bf16.mxu0 0
  %1200 = vmatpush1.bf16.msra.mxu0 0
  %1201 = vmatprep.subr.bf16.mxu0 0
  %1202 = vmatpush1.bf16.msra.mxu0 0
  %1203 = vmatprep.subr.bf16.mxu0 0
  %1204 = vmatpush1.bf16.msra.mxu0 0
  %1205 = vmatprep.subr.bf16.mxu0 0
  %1206 = vmatpush1.bf16.msra.mxu0 0
  %1207 = vmatprep.subr.bf16.mxu0 0
  %1208 = vmatpush1.bf16.msra.mxu0 0
  %1209 = vmatprep.subr.bf16.mxu0 0
  %1210 = vmatpush1.bf16.msra.mxu0 0
  %1211 = vmatprep.subr.bf16.mxu0 0
  %1212 = vmatpush1.bf16.msra.mxu0 0
  %1213 = vmatprep.subr.bf16.mxu0 0
  %1214 = vmatpush1.bf16.msra.mxu0 0
  %1215 = vmatprep.subr.bf16.mxu0 0
  %1216 = vmatpush1.bf16.msra.mxu0 0
  %1217 = vmatprep.subr.bf16.mxu0 0
  %1218 = vmatpush1.bf16.msra.mxu0 0
  %1219 = vmatprep.mubr.bf16.mxu0 0
  %1220 = vmatmul.mubr.bf16.gmra.mrb[0].mxu0 %v1134
  %v1221 = vpop.f32.mrb[0].mxu0
  %v1222 = vadd.f32 %v60, %v1221
  %v1223 = vpop.f32.mrb[0].mxu0
  %v1224 = vpop.f32.mrb[0].mxu0
  %v1225 = vadd.f32 %v60, %v1224
  %v1226 = vpop.f32.mrb[0].mxu0
  %1227 = vmatprep.mubr.bf16.mxu0 0
  %1228 = vmatmul.mubr.bf16.gmra.mrb[0].mxu0 %v1137
  %v1229 = vpop.f32.mrb[0].mxu0
  %v1230 = vadd.f32 %v60, %v1229
  %v1231 = vpop.f32.mrb[0].mxu0
  %v1232 = vpop.f32.mrb[0].mxu0
  %v1233 = vadd.f32 %v60, %v1232
  %v1234 = vpop.f32.mrb[0].mxu0
  %1235 = vmatprep.mubr.bf16.mxu0 0
  %1236 = vmatmul.mubr.bf16.gmra.mrb[0].mxu0 %v1140
  %v1237 = vpop.f32.mrb[0].mxu0
  %v1238 = vadd.f32 %v60, %v1237
  %v1239 = vpop.f32.mrb[0].mxu0
  %v1240 = vpop.f32.mrb[0].mxu0
  %v1241 = vadd.f32 %v60, %v1240
  %v1242 = vpop.f32.mrb[0].mxu0
  %1243 = vmatprep.mubr.bf16.mxu0 0
  %1244 = vmatmul.mubr.bf16.gmra.mrb[0].mxu0 %v1143
  %v1245 = vpop.f32.mrb[0].mxu0
  %v1246 = vadd.f32 %v60, %v1245
  %v1247 = vpop.f32.mrb[0].mxu0
  %v1248 = vpop.f32.mrb[0].mxu0
  %v1249 = vadd.f32 %v60, %v1248
  %v1250 = vpop.f32.mrb[0].mxu0
  %1251 = vmatprep.mubr.bf16.mxu0 0
  %1252 = vmatmul.mubr.bf16.gmra.mrb[0].mxu0 %v1146
  %v1253 = vpop.f32.mrb[0].mxu0
  %v1254 = vadd.f32 %v60, %v1253
  %v1255 = vpop.f32.mrb[0].mxu0
  %v1256 = vpop.f32.mrb[0].mxu0
  %v1257 = vadd.f32 %v60, %v1256
  %v1258 = vpop.f32.mrb[0].mxu0
  %1259 = vmatprep.mubr.bf16.mxu0 0
  %1260 = vmatmul.mubr.bf16.gmra.mrb[0].mxu0 %v1149
  %v1261 = vpop.f32.mrb[0].mxu0
  %v1262 = vadd.f32 %v60, %v1261
  %v1263 = vpop.f32.mrb[0].mxu0
  %v1264 = vpop.f32.mrb[0].mxu0
  %v1265 = vadd.f32 %v60, %v1264
  %v1266 = vpop.f32.mrb[0].mxu0
  %1267 = vmatprep.mubr.bf16.mxu0 0
  %1268 = vmatmul.mubr.bf16.gmra.mrb[0].mxu0 %v1152
  %v1269 = vpop.f32.mrb[0].mxu0
  %v1270 = vadd.f32 %v60, %v1269
  %v1271 = vpop.f32.mrb[0].mxu0
  %v1272 = vpop.f32.mrb[0].mxu0
  %v1273 = vadd.f32 %v60, %v1272
  %v1274 = vpop.f32.mrb[0].mxu0
  %1275 = vmatprep.mubr.bf16.mxu0 0
  %1276 = vmatmul.mubr.bf16.gmra.mrb[0].mxu0 %v1155
  %v1277 = vpop.f32.mrb[0].mxu0
  %v1278 = vadd.f32 %v60, %v1277
  %v1279 = vpop.f32.mrb[0].mxu0
  %v1280 = vpop.f32.mrb[0].mxu0
  %v1281 = vadd.f32 %v60, %v1280
  %v1282 = vpop.f32.mrb[0].mxu0
  %1283 = vmatprep.mubr.bf16.mxu0 0
  %1284 = vmatmul.mubr.bf16.gmra.mrb[0].mxu0 %v1158
  %v1285 = vpop.f32.mrb[0].mxu0
  %v1286 = vadd.f32 %v60, %v1285
  %v1287 = vpop.f32.mrb[0].mxu0
  %v1288 = vpop.f32.mrb[0].mxu0
  %v1289 = vadd.f32 %v60, %v1288
  %v1290 = vpop.f32.mrb[0].mxu0
  %1291 = vmatprep.mubr.bf16.mxu0 0
  %1292 = vmatmul.mubr.bf16.gmra.mrb[0].mxu0 %v1161
  %v1293 = vpop.f32.mrb[0].mxu0
  %v1294 = vadd.f32 %v60, %v1293
  %v1295 = vpop.f32.mrb[0].mxu0
  %v1296 = vpop.f32.mrb[0].mxu0
  %v1297 = vadd.f32 %v60, %v1296
  %v1298 = vpop.f32.mrb[0].mxu0
  %1299 = vmatprep.mubr.bf16.mxu0 0
  %1300 = vmatmul.mubr.bf16.gmra.mrb[0].mxu0 %v1164
  %v1301 = vpop.f32.mrb[0].mxu0
  %v1302 = vadd.f32 %v60, %v1301
  %v1303 = vpop.f32.mrb[0].mxu0
  %v1304 = vpop.f32.mrb[0].mxu0
  %v1305 = vadd.f32 %v60, %v1304
  %v1306 = vpop.f32.mrb[0].mxu0
  %1307 = vmatprep.mubr.bf16.mxu0 0
  %1308 = vmatmul.mubr.bf16.gmra.mrb[0].mxu0 %v1167
  %v1309 = vpop.f32.mrb[0].mxu0
  %v1310 = vadd.f32 %v60, %v1309
  %v1311 = vpop.f32.mrb[0].mxu0
  %v1312 = vpop.f32.mrb[0].mxu0
  %v1313 = vadd.f32 %v60, %v1312
  %v1314 = vpop.f32.mrb[0].mxu0
  %1315 = vmatprep.mubr.bf16.mxu0 0
  %1316 = vmatmul.mubr.bf16.gmra.mrb[0].mxu0 %v1170
  %v1317 = vpop.f32.mrb[0].mxu0
  %v1318 = vadd.f32 %v60, %v1317
  %v1319 = vpop.f32.mrb[0].mxu0
  %v1320 = vpop.f32.mrb[0].mxu0
  %v1321 = vadd.f32 %v60, %v1320
  %v1322 = vpop.f32.mrb[0].mxu0
  %1323 = vmatprep.mubr.bf16.mxu0 0
  %1324 = vmatmul.mubr.bf16.gmra.mrb[0].mxu0 %v1173
  %v1325 = vpop.f32.mrb[0].mxu0
  %v1326 = vadd.f32 %v60, %v1325
  %v1327 = vpop.f32.mrb[0].mxu0
  %v1328 = vpop.f32.mrb[0].mxu0
  %v1329 = vadd.f32 %v60, %v1328
  %v1330 = vpop.f32.mrb[0].mxu0
  %1331 = vmatprep.mubr.bf16.mxu0 0
  %1332 = vmatmul.mubr.bf16.gmra.mrb[0].mxu0 %v1176
  %v1333 = vpop.f32.mrb[0].mxu0
  %v1334 = vadd.f32 %v60, %v1333
  %v1335 = vpop.f32.mrb[0].mxu0
  %v1336 = vpop.f32.mrb[0].mxu0
  %v1337 = vadd.f32 %v60, %v1336
  %v1338 = vpop.f32.mrb[0].mxu0
  %1339 = vmatprep.mubr.bf16.mxu0 0
  %1340 = vmatmul.mubr.bf16.gmra.mrb[0].mxu0 %v1179
  %v1341 = vpop.f32.mrb[0].mxu0
  %v1342 = vadd.f32 %v60, %v1341
  %v1343 = vpop.f32.mrb[0].mxu0
  %v1344 = vpop.f32.mrb[0].mxu0
  %v1345 = vadd.f32 %v60, %v1344
  %v1346 = vpop.f32.mrb[0].mxu0
  %1347 = vmatprep.mubr.bf16.mxu0 0
  %1348 = vmatmul.mubr.bf16.gmra.mrb[0].mxu0 %v1182
  %v1349 = vpop.f32.mrb[0].mxu0
  %v1350 = vadd.f32 %v60, %v1349
  %v1351 = vpop.f32.mrb[0].mxu0
  %v1352 = vpop.f32.mrb[0].mxu0
  %v1353 = vadd.f32 %v60, %v1352
  %v1354 = vpop.f32.mrb[0].mxu0
  %1355 = vmatprep.mubr.bf16.mxu0 0
  %1356 = vmatmul.mubr.bf16.gmra.mrb[0].mxu0 %v1185
  %v1357 = vpop.f32.mrb[0].mxu0
  %v1358 = vadd.f32 %v60, %v1357
  %v1359 = vpop.f32.mrb[0].mxu0
  %v1360 = vpop.f32.mrb[0].mxu0
  %v1361 = vadd.f32 %v60, %v1360
  %v1362 = vpop.f32.mrb[0].mxu0
  %1363 = vdwg.mxu0
  %vm1364 = vcmp.ge.f32.partialorder %v1222, 0.0
  %vm1365 = vcmp.ge.f32.partialorder %v1225, 0.0
  %vm1366 = vcmp.ge.f32.partialorder %v1230, 0.0
  %vm1367 = vcmp.ge.f32.partialorder %v1233, 0.0
  %vm1368 = vcmp.ge.f32.partialorder %v1238, 0.0
  %vm1369 = vcmp.ge.f32.partialorder %v1241, 0.0
  %vm1370 = vcmp.ge.f32.partialorder %v1246, 0.0
  %vm1371 = vcmp.ge.f32.partialorder %v1249, 0.0
  %vm1372 = vcmp.ge.f32.partialorder %v1254, 0.0
  %vm1373 = vcmp.ge.f32.partialorder %v1257, 0.0
  %vm1374 = vcmp.ge.f32.partialorder %v1262, 0.0
  %vm1375 = vcmp.ge.f32.partialorder %v1265, 0.0
  %vm1376 = vcmp.ge.f32.partialorder %v1270, 0.0
  %vm1377 = vcmp.ge.f32.partialorder %v1273, 0.0
  %vm1378 = vcmp.ge.f32.partialorder %v1278, 0.0
  %vm1379 = vcmp.ge.f32.partialorder %v1281, 0.0
  %vm1380 = vcmp.ge.f32.partialorder %v1286, 0.0
  %vm1381 = vcmp.ge.f32.partialorder %v1289, 0.0
  %vm1382 = vcmp.ge.f32.partialorder %v1294, 0.0
  %vm1383 = vcmp.ge.f32.partialorder %v1297, 0.0
  %vm1384 = vcmp.ge.f32.partialorder %v1302, 0.0
  %vm1385 = vcmp.ge.f32.partialorder %v1305, 0.0
  %vm1386 = vcmp.ge.f32.partialorder %v1310, 0.0
  %vm1387 = vcmp.ge.f32.partialorder %v1313, 0.0
  %vm1388 = vcmp.ge.f32.partialorder %v1318, 0.0
  %vm1389 = vcmp.ge.f32.partialorder %v1321, 0.0
  %vm1390 = vcmp.ge.f32.partialorder %v1326, 0.0
  %vm1391 = vcmp.ge.f32.partialorder %v1329, 0.0
  %vm1392 = vcmp.ge.f32.partialorder %v1334, 0.0
  %vm1393 = vcmp.ge.f32.partialorder %v1337, 0.0
  %vm1394 = vcmp.ge.f32.partialorder %v1342, 0.0
  %vm1395 = vcmp.ge.f32.partialorder %v1345, 0.0
  %vm1396 = vcmp.ge.f32.partialorder %v1350, 0.0
  %vm1397 = vcmp.ge.f32.partialorder %v1353, 0.0
  %vm1398 = vcmp.ge.f32.partialorder %v1358, 0.0
  %vm1399 = vcmp.ge.f32.partialorder %v1361, 0.0
  %v1400 = vmul.f32 %v1222, 0.01
  %v1401 = vmul.f32 %v1225, 0.01
  %v1402 = vmul.f32 %v1230, 0.01
  %v1403 = vmul.f32 %v1233, 0.01
  %v1404 = vmul.f32 %v1238, 0.01
  %v1405 = vmul.f32 %v1241, 0.01
  %v1406 = vmul.f32 %v1246, 0.01
  %v1407 = vmul.f32 %v1249, 0.01
  %v1408 = vmul.f32 %v1254, 0.01
  %v1409 = vmul.f32 %v1257, 0.01
  %v1410 = vmul.f32 %v1262, 0.01
  %v1411 = vmul.f32 %v1265, 0.01
  %v1412 = vmul.f32 %v1270, 0.01
  %v1413 = vmul.f32 %v1273, 0.01
  %v1414 = vmul.f32 %v1278, 0.01
  %v1415 = vmul.f32 %v1281, 0.01
  %v1416 = vmul.f32 %v1286, 0.01
  %v1417 = vmul.f32 %v1289, 0.01
  %v1418 = vmul.f32 %v1294, 0.01
  %v1419 = vmul.f32 %v1297, 0.01
  %v1420 = vmul.f32 %v1302, 0.01
  %v1421 = vmul.f32 %v1305, 0.01
  %v1422 = vmul.f32 %v1310, 0.01
  %v1423 = vmul.f32 %v1313, 0.01
  %v1424 = vmul.f32 %v1318, 0.01
  %v1425 = vmul.f32 %v1321, 0.01
  %v1426 = vmul.f32 %v1326, 0.01
  %v1427 = vmul.f32 %v1329, 0.01
  %v1428 = vmul.f32 %v1334, 0.01
  %v1429 = vmul.f32 %v1337, 0.01
  %v1430 = vmul.f32 %v1342, 0.01
  %v1431 = vmul.f32 %v1345, 0.01
  %v1432 = vmul.f32 %v1350, 0.01
  %v1433 = vmul.f32 %v1353, 0.01
  %v1434 = vmul.f32 %v1358, 0.01
  %v1435 = vmul.f32 %v1361, 0.01
  %v1436 = vsel %vm1364, %v1222, %v1400
  %v1437 = vsel %vm1365, %v1225, %v1401
  %v1438 = vsel %vm1366, %v1230, %v1402
  %v1439 = vsel %vm1367, %v1233, %v1403
  %v1440 = vsel %vm1368, %v1238, %v1404
  %v1441 = vsel %vm1369, %v1241, %v1405
  %v1442 = vsel %vm1370, %v1246, %v1406
  %v1443 = vsel %vm1371, %v1249, %v1407
  %v1444 = vsel %vm1372, %v1254, %v1408
  %v1445 = vsel %vm1373, %v1257, %v1409
  %v1446 = vsel %vm1374, %v1262, %v1410
  %v1447 = vsel %vm1375, %v1265, %v1411
  %v1448 = vsel %vm1376, %v1270, %v1412
  %v1449 = vsel %vm1377, %v1273, %v1413
  %v1450 = vsel %vm1378, %v1278, %v1414
  %v1451 = vsel %vm1379, %v1281, %v1415
  %v1452 = vsel %vm1380, %v1286, %v1416
  %v1453 = vsel %vm1381, %v1289, %v1417
  %v1454 = vsel %vm1382, %v1294, %v1418
  %v1455 = vsel %vm1383, %v1297, %v1419
  %v1456 = vsel %vm1384, %v1302, %v1420
  %v1457 = vsel %vm1385, %v1305, %v1421
  %v1458 = vsel %vm1386, %v1310, %v1422
  %v1459 = vsel %vm1387, %v1313, %v1423
  %v1460 = vsel %vm1388, %v1318, %v1424
  %v1461 = vsel %vm1389, %v1321, %v1425
  %v1462 = vsel %vm1390, %v1326, %v1426
  %v1463 = vsel %vm1391, %v1329, %v1427
  %v1464 = vsel %vm1392, %v1334, %v1428
  %v1465 = vsel %vm1393, %v1337, %v1429
  %v1466 = vsel %vm1394, %v1342, %v1430
  %v1467 = vsel %vm1395, %v1345, %v1431
  %v1468 = vsel %vm1396, %v1350, %v1432
  %v1469 = vsel %vm1397, %v1353, %v1433
  %v1470 = vsel %vm1398, %v1358, %v1434
  %v1471 = vsel %vm1399, %v1361, %v1435
  %v1472 = vmax.f32 %v970, %v1436
  %v1473 = vmax.f32 %v971, %v1437
  %v1474 = vmax.f32 %v972, %v1438
  %v1475 = vmax.f32 %v973, %v1439
  %v1476 = vmax.f32 %v974, %v1440
  %v1477 = vmax.f32 %v975, %v1441
  %v1478 = vmax.f32 %v976, %v1442
  %v1479 = vmax.f32 %v977, %v1443
  %v1480 = vmax.f32 %v978, %v1444
  %v1481 = vmax.f32 %v979, %v1445
  %v1482 = vmax.f32 %v980, %v1446
  %v1483 = vmax.f32 %v981, %v1447
  %v1484 = vmax.f32 %v982, %v1448
  %v1485 = vmax.f32 %v983, %v1449
  %v1486 = vmax.f32 %v984, %v1450
  %v1487 = vmax.f32 %v985, %v1451
  %v1488 = vmax.f32 %v986, %v1452
  %v1489 = vmax.f32 %v987, %v1453
  %v1490 = vmax.f32 %v988, %v1454
  %v1491 = vmax.f32 %v989, %v1455
  %v1492 = vmax.f32 %v990, %v1456
  %v1493 = vmax.f32 %v991, %v1457
  %v1494 = vmax.f32 %v992, %v1458
  %v1495 = vmax.f32 %v993, %v1459
  %v1496 = vmax.f32 %v994, %v1460
  %v1497 = vmax.f32 %v995, %v1461
  %v1498 = vmax.f32 %v996, %v1462
  %v1499 = vmax.f32 %v997, %v1463
  %v1500 = vmax.f32 %v998, %v1464
  %v1501 = vmax.f32 %v999, %v1465
  %v1502 = vmax.f32 %v1000, %v1466
  %v1503 = vmax.f32 %v1001, %v1467
  %v1504 = vmax.f32 %v1002, %v1468
  %v1505 = vmax.f32 %v1003, %v1469
  %v1506 = vmax.f32 %v1004, %v1470
  %v1507 = vmax.f32 %v1005, %v1471
  %s1508 = scalar_lea.vmem %s0, 432
  %v1509 = vld [vmem:[%s1508] sm:$0xf]
  %v1510 = vld [vmem:[%s1508 + $0x4] sm:$0xf]
  %v1511 = vld [vmem:[%s1508 + $0x8] sm:$0xf]
  %v1512 = vld [vmem:[%s1508 + $0xc] sm:$0xf]
  %v1513 = vld [vmem:[%s1508 + $0x10] sm:$0xf]
  %v1514 = vld [vmem:[%s1508 + $0x14] sm:$0xf]
  %v1515 = vld [vmem:[%s1508 + $0x18] sm:$0xf]
  %v1516 = vld [vmem:[%s1508 + $0x1c] sm:$0xf]
  %v1517 = vld [vmem:[%s1508 + $0x20] sm:$0xf]
  %v1518 = vld [vmem:[%s1508 + $0x24] sm:$0xf]
  %v1519 = vld [vmem:[%s1508 + $0x28] sm:$0xf]
  %v1520 = vld [vmem:[%s1508 + $0x2c] sm:$0xf]
  %v1521 = vld [vmem:[%s1508 + $0x30] sm:$0xf]
  %v1522 = vld [vmem:[%s1508 + $0x34] sm:$0xf]
  %v1523 = vld [vmem:[%s1508 + $0x38] sm:$0xf]
  %v1524 = vld [vmem:[%s1508 + $0x3c] sm:$0xf]
  %v1525 = vld [vmem:[%s1508 + $0x40] sm:$0xf]
  %v1526 = vld [vmem:[%s1508 + $0x44] sm:$0xf]
  %v1527 = vld [vmem:[%s1508 + $0x48] sm:$0xf]
  %v1528 = vld [vmem:[%s1508 + $0x4c] sm:$0xf]
  %v1529 = vld [vmem:[%s1508 + $0x50] sm:$0xf]
  %v1530 = vld [vmem:[%s1508 + $0x54] sm:$0xf]
  %v1531 = vld [vmem:[%s1508 + $0x58] sm:$0xf]
  %v1532 = vld [vmem:[%s1508 + $0x5c] sm:$0xf]
  %v1533 = vld [vmem:[%s1508 + $0x60] sm:$0xf]
  %v1534 = vld [vmem:[%s1508 + $0x64] sm:$0xf]
  %v1535 = vld [vmem:[%s1508 + $0x68] sm:$0xf]
  %v1536 = vld [vmem:[%s1508 + $0x6c] sm:$0xf]
  %v1537 = vld [vmem:[%s1508 + $0x70] sm:$0xf]
  %v1538 = vld [vmem:[%s1508 + $0x74] sm:$0xf]
  %v1539 = vld [vmem:[%s1508 + $0x78] sm:$0xf]
  %v1540 = vld [vmem:[%s1508 + $0x7c] sm:$0xf]
  %v1541 = vld [vmem:[%s1508 + $0x80] sm:$0xf]
  %v1542 = vld [vmem:[%s1508 + $0x84] sm:$0xf]
  %v1543 = vld [vmem:[%s1508 + $0x88] sm:$0xf]
  %v1544 = vld [vmem:[%s1508 + $0x8c] sm:$0xf]
  %v1581 = vunpack.c.l.b16 %v1509
  %v1582 = vunpack.c.l.b16 %v1510
  %v1583 = vunpack.c.l.b16 %v1511
  %v1584 = vunpack.c.l.b16 %v1512
  %v1585 = vunpack.c.l.b16 %v1513
  %v1586 = vunpack.c.l.b16 %v1514
  %v1587 = vunpack.c.l.b16 %v1515
  %v1588 = vunpack.c.l.b16 %v1516
  %v1589 = vunpack.c.l.b16 %v1517
  %v1590 = vunpack.c.l.b16 %v1518
  %v1591 = vunpack.c.l.b16 %v1519
  %v1592 = vunpack.c.l.b16 %v1520
  %v1593 = vunpack.c.l.b16 %v1521
  %v1594 = vunpack.c.l.b16 %v1522
  %v1595 = vunpack.c.l.b16 %v1523
  %v1596 = vunpack.c.l.b16 %v1524
  %v1597 = vunpack.c.l.b16 %v1525
  %v1598 = vunpack.c.l.b16 %v1526
  %v1599 = vunpack.c.l.b16 %v1527
  %v1600 = vunpack.c.l.b16 %v1528
  %v1601 = vunpack.c.l.b16 %v1529
  %v1602 = vunpack.c.l.b16 %v1530
  %v1603 = vunpack.c.l.b16 %v1531
  %v1604 = vunpack.c.l.b16 %v1532
  %v1605 = vunpack.c.l.b16 %v1533
  %v1606 = vunpack.c.l.b16 %v1534
  %v1607 = vunpack.c.l.b16 %v1535
  %v1608 = vunpack.c.l.b16 %v1536
  %v1609 = vunpack.c.l.b16 %v1537
  %v1610 = vunpack.c.l.b16 %v1538
  %v1611 = vunpack.c.l.b16 %v1539
  %v1612 = vunpack.c.l.b16 %v1540
  %v1613 = vunpack.c.l.b16 %v1541
  %v1614 = vunpack.c.l.b16 %v1542
  %v1615 = vunpack.c.l.b16 %v1543
  %v1616 = vunpack.c.l.b16 %v1544
  %v1617 = vpack.c.b16 %v1582, %v1581
  %v1618 = vpack.c.b16 %v1584, %v1583
  %v1619 = vpack.c.b16 %v1586, %v1585
  %v1620 = vpack.c.b16 %v1588, %v1587
  %v1621 = vpack.c.b16 %v1590, %v1589
  %v1622 = vpack.c.b16 %v1592, %v1591
  %v1623 = vpack.c.b16 %v1594, %v1593
  %v1624 = vpack.c.b16 %v1596, %v1595
  %v1625 = vpack.c.b16 %v1598, %v1597
  %v1626 = vpack.c.b16 %v1600, %v1599
  %v1627 = vpack.c.b16 %v1602, %v1601
  %v1628 = vpack.c.b16 %v1604, %v1603
  %v1629 = vpack.c.b16 %v1606, %v1605
  %v1630 = vpack.c.b16 %v1608, %v1607
  %v1631 = vpack.c.b16 %v1610, %v1609
  %v1632 = vpack.c.b16 %v1612, %v1611
  %v1633 = vpack.c.b16 %v1614, %v1613
  %v1634 = vpack.c.b16 %v1616, %v1615
  %v1636 = vsel %vm164, %v1617, 0
  %v1639 = vsel %vm164, %v1618, 0
  %v1642 = vsel %vm164, %v1619, 0
  %v1645 = vsel %vm164, %v1620, 0
  %v1648 = vsel %vm164, %v1621, 0
  %v1651 = vsel %vm164, %v1622, 0
  %v1654 = vsel %vm164, %v1623, 0
  %v1657 = vsel %vm164, %v1624, 0
  %v1660 = vsel %vm164, %v1625, 0
  %v1663 = vsel %vm164, %v1626, 0
  %v1666 = vsel %vm164, %v1627, 0
  %v1669 = vsel %vm164, %v1628, 0
  %v1672 = vsel %vm164, %v1629, 0
  %v1675 = vsel %vm164, %v1630, 0
  %v1678 = vsel %vm164, %v1631, 0
  %v1681 = vsel %vm164, %v1632, 0
  %v1684 = vsel %vm164, %v1633, 0
  %v1687 = vsel %vm164, %v1634, 0
  %1689 = vmatprep.subr.bf16.mxu0 0
  %1690 = vmatpush1.bf16.msra.mxu0 %v160
  %1691 = vmatprep.subr.bf16.mxu0 0
  %1692 = vmatpush1.bf16.msra.mxu0 %v161
  %1693 = vmatprep.subr.bf16.mxu0 0
  %1694 = vmatpush1.bf16.msra.mxu0 0
  %1695 = vmatprep.subr.bf16.mxu0 0
  %1696 = vmatpush1.bf16.msra.mxu0 0
  %1697 = vmatprep.subr.bf16.mxu0 0
  %1698 = vmatpush1.bf16.msra.mxu0 0
  %1699 = vmatprep.subr.bf16.mxu0 0
  %1700 = vmatpush1.bf16.msra.mxu0 0
  %1701 = vmatprep.subr.bf16.mxu0 0
  %1702 = vmatpush1.bf16.msra.mxu0 0
  %1703 = vmatprep.subr.bf16.mxu0 0
  %1704 = vmatpush1.bf16.msra.mxu0 0
  %1705 = vmatprep.subr.bf16.mxu0 0
  %1706 = vmatpush1.bf16.msra.mxu0 0
  %1707 = vmatprep.subr.bf16.mxu0 0
  %1708 = vmatpush1.bf16.msra.mxu0 0
  %1709 = vmatprep.subr.bf16.mxu0 0
  %1710 = vmatpush1.bf16.msra.mxu0 0
  %1711 = vmatprep.subr.bf16.mxu0 0
  %1712 = vmatpush1.bf16.msra.mxu0 0
  %1713 = vmatprep.subr.bf16.mxu0 0
  %1714 = vmatpush1.bf16.msra.mxu0 0
  %1715 = vmatprep.subr.bf16.mxu0 0
  %1716 = vmatpush1.bf16.msra.mxu0 0
  %1717 = vmatprep.subr.bf16.mxu0 0
  %1718 = vmatpush1.bf16.msra.mxu0 0
  %1719 = vmatprep.subr.bf16.mxu0 0
  %1720 = vmatpush1.bf16.msra.mxu0 0
  %1721 = vmatprep.mubr.bf16.mxu0 0
  %1722 = vmatmul.mubr.bf16.gmra.mrb[0].mxu0 %v1636
  %v1723 = vpop.f32.mrb[0].mxu0
  %v1724 = vadd.f32 %v60, %v1723
  %v1725 = vpop.f32.mrb[0].mxu0
  %v1726 = vpop.f32.mrb[0].mxu0
  %v1727 = vadd.f32 %v60, %v1726
  %v1728 = vpop.f32.mrb[0].mxu0
  %1729 = vmatprep.mubr.bf16.mxu0 0
  %1730 = vmatmul.mubr.bf16.gmra.mrb[0].mxu0 %v1639
  %v1731 = vpop.f32.mrb[0].mxu0
  %v1732 = vadd.f32 %v60, %v1731
  %v1733 = vpop.f32.mrb[0].mxu0
  %v1734 = vpop.f32.mrb[0].mxu0
  %v1735 = vadd.f32 %v60, %v1734
  %v1736 = vpop.f32.mrb[0].mxu0
  %1737 = vmatprep.mubr.bf16.mxu0 0
  %1738 = vmatmul.mubr.bf16.gmra.mrb[0].mxu0 %v1642
  %v1739 = vpop.f32.mrb[0].mxu0
  %v1740 = vadd.f32 %v60, %v1739
  %v1741 = vpop.f32.mrb[0].mxu0
  %v1742 = vpop.f32.mrb[0].mxu0
  %v1743 = vadd.f32 %v60, %v1742
  %v1744 = vpop.f32.mrb[0].mxu0
  %1745 = vmatprep.mubr.bf16.mxu0 0
  %1746 = vmatmul.mubr.bf16.gmra.mrb[0].mxu0 %v1645
  %v1747 = vpop.f32.mrb[0].mxu0
  %v1748 = vadd.f32 %v60, %v1747
  %v1749 = vpop.f32.mrb[0].mxu0
  %v1750 = vpop.f32.mrb[0].mxu0
  %v1751 = vadd.f32 %v60, %v1750
  %v1752 = vpop.f32.mrb[0].mxu0
  %1753 = vmatprep.mubr.bf16.mxu0 0
  %1754 = vmatmul.mubr.bf16.gmra.mrb[0].mxu0 %v1648
  %v1755 = vpop.f32.mrb[0].mxu0
  %v1756 = vadd.f32 %v60, %v1755
  %v1757 = vpop.f32.mrb[0].mxu0
  %v1758 = vpop.f32.mrb[0].mxu0
  %v1759 = vadd.f32 %v60, %v1758
  %v1760 = vpop.f32.mrb[0].mxu0
  %1761 = vmatprep.mubr.bf16.mxu0 0
  %1762 = vmatmul.mubr.bf16.gmra.mrb[0].mxu0 %v1651
  %v1763 = vpop.f32.mrb[0].mxu0
  %v1764 = vadd.f32 %v60, %v1763
  %v1765 = vpop.f32.mrb[0].mxu0
  %v1766 = vpop.f32.mrb[0].mxu0
  %v1767 = vadd.f32 %v60, %v1766
  %v1768 = vpop.f32.mrb[0].mxu0
  %1769 = vmatprep.mubr.bf16.mxu0 0
  %1770 = vmatmul.mubr.bf16.gmra.mrb[0].mxu0 %v1654
  %v1771 = vpop.f32.mrb[0].mxu0
  %v1772 = vadd.f32 %v60, %v1771
  %v1773 = vpop.f32.mrb[0].mxu0
  %v1774 = vpop.f32.mrb[0].mxu0
  %v1775 = vadd.f32 %v60, %v1774
  %v1776 = vpop.f32.mrb[0].mxu0
  %1777 = vmatprep.mubr.bf16.mxu0 0
  %1778 = vmatmul.mubr.bf16.gmra.mrb[0].mxu0 %v1657
  %v1779 = vpop.f32.mrb[0].mxu0
  %v1780 = vadd.f32 %v60, %v1779
  %v1781 = vpop.f32.mrb[0].mxu0
  %v1782 = vpop.f32.mrb[0].mxu0
  %v1783 = vadd.f32 %v60, %v1782
  %v1784 = vpop.f32.mrb[0].mxu0
  %1785 = vmatprep.mubr.bf16.mxu0 0
  %1786 = vmatmul.mubr.bf16.gmra.mrb[0].mxu0 %v1660
  %v1787 = vpop.f32.mrb[0].mxu0
  %v1788 = vadd.f32 %v60, %v1787
  %v1789 = vpop.f32.mrb[0].mxu0
  %v1790 = vpop.f32.mrb[0].mxu0
  %v1791 = vadd.f32 %v60, %v1790
  %v1792 = vpop.f32.mrb[0].mxu0
  %1793 = vmatprep.mubr.bf16.mxu0 0
  %1794 = vmatmul.mubr.bf16.gmra.mrb[0].mxu0 %v1663
  %v1795 = vpop.f32.mrb[0].mxu0
  %v1796 = vadd.f32 %v60, %v1795
  %v1797 = vpop.f32.mrb[0].mxu0
  %v1798 = vpop.f32.mrb[0].mxu0
  %v1799 = vadd.f32 %v60, %v1798
  %v1800 = vpop.f32.mrb[0].mxu0
  %1801 = vmatprep.mubr.bf16.mxu0 0
  %1802 = vmatmul.mubr.bf16.gmra.mrb[0].mxu0 %v1666
  %v1803 = vpop.f32.mrb[0].mxu0
  %v1804 = vadd.f32 %v60, %v1803
  %v1805 = vpop.f32.mrb[0].mxu0
  %v1806 = vpop.f32.mrb[0].mxu0
  %v1807 = vadd.f32 %v60, %v1806
  %v1808 = vpop.f32.mrb[0].mxu0
  %1809 = vmatprep.mubr.bf16.mxu0 0
  %1810 = vmatmul.mubr.bf16.gmra.mrb[0].mxu0 %v1669
  %v1811 = vpop.f32.mrb[0].mxu0
  %v1812 = vadd.f32 %v60, %v1811
  %v1813 = vpop.f32.mrb[0].mxu0
  %v1814 = vpop.f32.mrb[0].mxu0
  %v1815 = vadd.f32 %v60, %v1814
  %v1816 = vpop.f32.mrb[0].mxu0
  %1817 = vmatprep.mubr.bf16.mxu0 0
  %1818 = vmatmul.mubr.bf16.gmra.mrb[0].mxu0 %v1672
  %v1819 = vpop.f32.mrb[0].mxu0
  %v1820 = vadd.f32 %v60, %v1819
  %v1821 = vpop.f32.mrb[0].mxu0
  %v1822 = vpop.f32.mrb[0].mxu0
  %v1823 = vadd.f32 %v60, %v1822
  %v1824 = vpop.f32.mrb[0].mxu0
  %1825 = vmatprep.mubr.bf16.mxu0 0
  %1826 = vmatmul.mubr.bf16.gmra.mrb[0].mxu0 %v1675
  %v1827 = vpop.f32.mrb[0].mxu0
  %v1828 = vadd.f32 %v60, %v1827
  %v1829 = vpop.f32.mrb[0].mxu0
  %v1830 = vpop.f32.mrb[0].mxu0
  %v1831 = vadd.f32 %v60, %v1830
  %v1832 = vpop.f32.mrb[0].mxu0
  %1833 = vmatprep.mubr.bf16.mxu0 0
  %1834 = vmatmul.mubr.bf16.gmra.mrb[0].mxu0 %v1678
  %v1835 = vpop.f32.mrb[0].mxu0
  %v1836 = vadd.f32 %v60, %v1835
  %v1837 = vpop.f32.mrb[0].mxu0
  %v1838 = vpop.f32.mrb[0].mxu0
  %v1839 = vadd.f32 %v60, %v1838
  %v1840 = vpop.f32.mrb[0].mxu0
  %1841 = vmatprep.mubr.bf16.mxu0 0
  %1842 = vmatmul.mubr.bf16.gmra.mrb[0].mxu0 %v1681
  %v1843 = vpop.f32.mrb[0].mxu0
  %v1844 = vadd.f32 %v60, %v1843
  %v1845 = vpop.f32.mrb[0].mxu0
  %v1846 = vpop.f32.mrb[0].mxu0
  %v1847 = vadd.f32 %v60, %v1846
  %v1848 = vpop.f32.mrb[0].mxu0
  %1849 = vmatprep.mubr.bf16.mxu0 0
  %1850 = vmatmul.mubr.bf16.gmra.mrb[0].mxu0 %v1684
  %v1851 = vpop.f32.mrb[0].mxu0
  %v1852 = vadd.f32 %v60, %v1851
  %v1853 = vpop.f32.mrb[0].mxu0
  %v1854 = vpop.f32.mrb[0].mxu0
  %v1855 = vadd.f32 %v60, %v1854
  %v1856 = vpop.f32.mrb[0].mxu0
  %1857 = vmatprep.mubr.bf16.mxu0 0
  %1858 = vmatmul.mubr.bf16.gmra.mrb[0].mxu0 %v1687
  %v1859 = vpop.f32.mrb[0].mxu0
  %v1860 = vadd.f32 %v60, %v1859
  %v1861 = vpop.f32.mrb[0].mxu0
  %v1862 = vpop.f32.mrb[0].mxu0
  %v1863 = vadd.f32 %v60, %v1862
  %v1864 = vpop.f32.mrb[0].mxu0
  %1865 = vdwg.mxu0
  %vm1866 = vcmp.ge.f32.partialorder %v1724, 0.0
  %vm1867 = vcmp.ge.f32.partialorder %v1727, 0.0
  %vm1868 = vcmp.ge.f32.partialorder %v1732, 0.0
  %vm1869 = vcmp.ge.f32.partialorder %v1735, 0.0
  %vm1870 = vcmp.ge.f32.partialorder %v1740, 0.0
  %vm1871 = vcmp.ge.f32.partialorder %v1743, 0.0
  %vm1872 = vcmp.ge.f32.partialorder %v1748, 0.0
  %vm1873 = vcmp.ge.f32.partialorder %v1751, 0.0
  %vm1874 = vcmp.ge.f32.partialorder %v1756, 0.0
  %vm1875 = vcmp.ge.f32.partialorder %v1759, 0.0
  %vm1876 = vcmp.ge.f32.partialorder %v1764, 0.0
  %vm1877 = vcmp.ge.f32.partialorder %v1767, 0.0
  %vm1878 = vcmp.ge.f32.partialorder %v1772, 0.0
  %vm1879 = vcmp.ge.f32.partialorder %v1775, 0.0
  %vm1880 = vcmp.ge.f32.partialorder %v1780, 0.0
  %vm1881 = vcmp.ge.f32.partialorder %v1783, 0.0
  %vm1882 = vcmp.ge.f32.partialorder %v1788, 0.0
  %vm1883 = vcmp.ge.f32.partialorder %v1791, 0.0
  %vm1884 = vcmp.ge.f32.partialorder %v1796, 0.0
  %vm1885 = vcmp.ge.f32.partialorder %v1799, 0.0
  %vm1886 = vcmp.ge.f32.partialorder %v1804, 0.0
  %vm1887 = vcmp.ge.f32.partialorder %v1807, 0.0
  %vm1888 = vcmp.ge.f32.partialorder %v1812, 0.0
  %vm1889 = vcmp.ge.f32.partialorder %v1815, 0.0
  %vm1890 = vcmp.ge.f32.partialorder %v1820, 0.0
  %vm1891 = vcmp.ge.f32.partialorder %v1823, 0.0
  %vm1892 = vcmp.ge.f32.partialorder %v1828, 0.0
  %vm1893 = vcmp.ge.f32.partialorder %v1831, 0.0
  %vm1894 = vcmp.ge.f32.partialorder %v1836, 0.0
  %vm1895 = vcmp.ge.f32.partialorder %v1839, 0.0
  %vm1896 = vcmp.ge.f32.partialorder %v1844, 0.0
  %vm1897 = vcmp.ge.f32.partialorder %v1847, 0.0
  %vm1898 = vcmp.ge.f32.partialorder %v1852, 0.0
  %vm1899 = vcmp.ge.f32.partialorder %v1855, 0.0
  %vm1900 = vcmp.ge.f32.partialorder %v1860, 0.0
  %vm1901 = vcmp.ge.f32.partialorder %v1863, 0.0
  %v1902 = vmul.f32 %v1724, 0.01
  %v1903 = vmul.f32 %v1727, 0.01
  %v1904 = vmul.f32 %v1732, 0.01
  %v1905 = vmul.f32 %v1735, 0.01
  %v1906 = vmul.f32 %v1740, 0.01
  %v1907 = vmul.f32 %v1743, 0.01
  %v1908 = vmul.f32 %v1748, 0.01
  %v1909 = vmul.f32 %v1751, 0.01
  %v1910 = vmul.f32 %v1756, 0.01
  %v1911 = vmul.f32 %v1759, 0.01
  %v1912 = vmul.f32 %v1764, 0.01
  %v1913 = vmul.f32 %v1767, 0.01
  %v1914 = vmul.f32 %v1772, 0.01
  %v1915 = vmul.f32 %v1775, 0.01
  %v1916 = vmul.f32 %v1780, 0.01
  %v1917 = vmul.f32 %v1783, 0.01
  %v1918 = vmul.f32 %v1788, 0.01
  %v1919 = vmul.f32 %v1791, 0.01
  %v1920 = vmul.f32 %v1796, 0.01
  %v1921 = vmul.f32 %v1799, 0.01
  %v1922 = vmul.f32 %v1804, 0.01
  %v1923 = vmul.f32 %v1807, 0.01
  %v1924 = vmul.f32 %v1812, 0.01
  %v1925 = vmul.f32 %v1815, 0.01
  %v1926 = vmul.f32 %v1820, 0.01
  %v1927 = vmul.f32 %v1823, 0.01
  %v1928 = vmul.f32 %v1828, 0.01
  %v1929 = vmul.f32 %v1831, 0.01
  %v1930 = vmul.f32 %v1836, 0.01
  %v1931 = vmul.f32 %v1839, 0.01
  %v1932 = vmul.f32 %v1844, 0.01
  %v1933 = vmul.f32 %v1847, 0.01
  %v1934 = vmul.f32 %v1852, 0.01
  %v1935 = vmul.f32 %v1855, 0.01
  %v1936 = vmul.f32 %v1860, 0.01
  %v1937 = vmul.f32 %v1863, 0.01
  %v1938 = vsel %vm1866, %v1724, %v1902
  %v1939 = vsel %vm1867, %v1727, %v1903
  %v1940 = vsel %vm1868, %v1732, %v1904
  %v1941 = vsel %vm1869, %v1735, %v1905
  %v1942 = vsel %vm1870, %v1740, %v1906
  %v1943 = vsel %vm1871, %v1743, %v1907
  %v1944 = vsel %vm1872, %v1748, %v1908
  %v1945 = vsel %vm1873, %v1751, %v1909
  %v1946 = vsel %vm1874, %v1756, %v1910
  %v1947 = vsel %vm1875, %v1759, %v1911
  %v1948 = vsel %vm1876, %v1764, %v1912
  %v1949 = vsel %vm1877, %v1767, %v1913
  %v1950 = vsel %vm1878, %v1772, %v1914
  %v1951 = vsel %vm1879, %v1775, %v1915
  %v1952 = vsel %vm1880, %v1780, %v1916
  %v1953 = vsel %vm1881, %v1783, %v1917
  %v1954 = vsel %vm1882, %v1788, %v1918
  %v1955 = vsel %vm1883, %v1791, %v1919
  %v1956 = vsel %vm1884, %v1796, %v1920
  %v1957 = vsel %vm1885, %v1799, %v1921
  %v1958 = vsel %vm1886, %v1804, %v1922
  %v1959 = vsel %vm1887, %v1807, %v1923
  %v1960 = vsel %vm1888, %v1812, %v1924
  %v1961 = vsel %vm1889, %v1815, %v1925
  %v1962 = vsel %vm1890, %v1820, %v1926
  %v1963 = vsel %vm1891, %v1823, %v1927
  %v1964 = vsel %vm1892, %v1828, %v1928
  %v1965 = vsel %vm1893, %v1831, %v1929
  %v1966 = vsel %vm1894, %v1836, %v1930
  %v1967 = vsel %vm1895, %v1839, %v1931
  %v1968 = vsel %vm1896, %v1844, %v1932
  %v1969 = vsel %vm1897, %v1847, %v1933
  %v1970 = vsel %vm1898, %v1852, %v1934
  %v1971 = vsel %vm1899, %v1855, %v1935
  %v1972 = vsel %vm1900, %v1860, %v1936
  %v1973 = vsel %vm1901, %v1863, %v1937
  %v1974 = vmax.f32 %v1472, %v1938
  %v1975 = vmax.f32 %v1473, %v1939
  %v1976 = vmax.f32 %v1474, %v1940
  %v1977 = vmax.f32 %v1475, %v1941
  %v1978 = vmax.f32 %v1476, %v1942
  %v1979 = vmax.f32 %v1477, %v1943
  %v1980 = vmax.f32 %v1478, %v1944
  %v1981 = vmax.f32 %v1479, %v1945
  %v1982 = vmax.f32 %v1480, %v1946
  %v1983 = vmax.f32 %v1481, %v1947
  %v1984 = vmax.f32 %v1482, %v1948
  %v1985 = vmax.f32 %v1483, %v1949
  %v1986 = vmax.f32 %v1484, %v1950
  %v1987 = vmax.f32 %v1485, %v1951
  %v1988 = vmax.f32 %v1486, %v1952
  %v1989 = vmax.f32 %v1487, %v1953
  %v1990 = vmax.f32 %v1488, %v1954
  %v1991 = vmax.f32 %v1489, %v1955
  %v1992 = vmax.f32 %v1490, %v1956
  %v1993 = vmax.f32 %v1491, %v1957
  %v1994 = vmax.f32 %v1492, %v1958
  %v1995 = vmax.f32 %v1493, %v1959
  %v1996 = vmax.f32 %v1494, %v1960
  %v1997 = vmax.f32 %v1495, %v1961
  %v1998 = vmax.f32 %v1496, %v1962
  %v1999 = vmax.f32 %v1497, %v1963
  %v2000 = vmax.f32 %v1498, %v1964
  %v2001 = vmax.f32 %v1499, %v1965
  %v2002 = vmax.f32 %v1500, %v1966
  %v2003 = vmax.f32 %v1501, %v1967
  %v2004 = vmax.f32 %v1502, %v1968
  %v2005 = vmax.f32 %v1503, %v1969
  %v2006 = vmax.f32 %v1504, %v1970
  %v2007 = vmax.f32 %v1505, %v1971
  %v2008 = vmax.f32 %v1506, %v1972
  %v2009 = vmax.f32 %v1507, %v1973
  %v2010 = vpack.c.bf16 %v1975, %v1974
  %v2011 = vpack.c.bf16 %v1977, %v1976
  %v2012 = vpack.c.bf16 %v1979, %v1978
  %v2013 = vpack.c.bf16 %v1981, %v1980
  %v2014 = vpack.c.bf16 %v1983, %v1982
  %v2015 = vpack.c.bf16 %v1985, %v1984
  %v2016 = vpack.c.bf16 %v1987, %v1986
  %v2017 = vpack.c.bf16 %v1989, %v1988
  %v2018 = vpack.c.bf16 %v1991, %v1990
  %v2019 = vpack.c.bf16 %v1993, %v1992
  %v2020 = vpack.c.bf16 %v1995, %v1994
  %v2021 = vpack.c.bf16 %v1997, %v1996
  %v2022 = vpack.c.bf16 %v1999, %v1998
  %v2023 = vpack.c.bf16 %v2001, %v2000
  %v2024 = vpack.c.bf16 %v2003, %v2002
  %v2025 = vpack.c.bf16 %v2005, %v2004
  %v2026 = vpack.c.bf16 %v2007, %v2006
  %v2027 = vpack.c.bf16 %v2009, %v2008
  %v2046 = vunpack.c.l.b16 %v2010
  %v2047 = vunpack.c.h.b16 %v2010
  %v2048 = vunpack.c.l.b16 %v2011
  %v2049 = vunpack.c.h.b16 %v2011
  %v2050 = vunpack.c.l.b16 %v2012
  %v2051 = vunpack.c.h.b16 %v2012
  %v2052 = vunpack.c.l.b16 %v2013
  %v2053 = vunpack.c.h.b16 %v2013
  %v2054 = vunpack.c.l.b16 %v2014
  %v2055 = vunpack.c.h.b16 %v2014
  %v2056 = vunpack.c.l.b16 %v2015
  %v2057 = vunpack.c.h.b16 %v2015
  %v2058 = vunpack.c.l.b16 %v2016
  %v2059 = vunpack.c.h.b16 %v2016
  %v2060 = vunpack.c.l.b16 %v2017
  %v2061 = vunpack.c.h.b16 %v2017
  %v2062 = vunpack.c.l.b16 %v2018
  %v2063 = vunpack.c.h.b16 %v2018
  %v2064 = vunpack.c.l.b16 %v2019
  %v2065 = vunpack.c.h.b16 %v2019
  %v2066 = vunpack.c.l.b16 %v2020
  %v2067 = vunpack.c.h.b16 %v2020
  %v2068 = vunpack.c.l.b16 %v2021
  %v2069 = vunpack.c.h.b16 %v2021
  %v2070 = vunpack.c.l.b16 %v2022
  %v2071 = vunpack.c.h.b16 %v2022
  %v2072 = vunpack.c.l.b16 %v2023
  %v2073 = vunpack.c.h.b16 %v2023
  %v2074 = vunpack.c.l.b16 %v2024
  %v2075 = vunpack.c.h.b16 %v2024
  %v2076 = vunpack.c.l.b16 %v2025
  %v2077 = vunpack.c.h.b16 %v2025
  %v2078 = vunpack.c.l.b16 %v2026
  %v2079 = vunpack.c.h.b16 %v2026
  %v2080 = vunpack.c.l.b16 %v2027
  %v2081 = vunpack.c.h.b16 %v2027
  %v2082 = vpack.c.b16 %v2046, %v2046
  %v2083 = vpack.c.b16 %v2047, %v2047
  %v2084 = vpack.c.b16 %v2048, %v2048
  %v2085 = vpack.c.b16 %v2049, %v2049
  %v2086 = vpack.c.b16 %v2050, %v2050
  %v2087 = vpack.c.b16 %v2051, %v2051
  %v2088 = vpack.c.b16 %v2052, %v2052
  %v2089 = vpack.c.b16 %v2053, %v2053
  %v2090 = vpack.c.b16 %v2054, %v2054
  %v2091 = vpack.c.b16 %v2055, %v2055
  %v2092 = vpack.c.b16 %v2056, %v2056
  %v2093 = vpack.c.b16 %v2057, %v2057
  %v2094 = vpack.c.b16 %v2058, %v2058
  %v2095 = vpack.c.b16 %v2059, %v2059
  %v2096 = vpack.c.b16 %v2060, %v2060
  %v2097 = vpack.c.b16 %v2061, %v2061
  %v2098 = vpack.c.b16 %v2062, %v2062
  %v2099 = vpack.c.b16 %v2063, %v2063
  %v2100 = vpack.c.b16 %v2064, %v2064
  %v2101 = vpack.c.b16 %v2065, %v2065
  %v2102 = vpack.c.b16 %v2066, %v2066
  %v2103 = vpack.c.b16 %v2067, %v2067
  %v2104 = vpack.c.b16 %v2068, %v2068
  %v2105 = vpack.c.b16 %v2069, %v2069
  %v2106 = vpack.c.b16 %v2070, %v2070
  %v2107 = vpack.c.b16 %v2071, %v2071
  %v2108 = vpack.c.b16 %v2072, %v2072
  %v2109 = vpack.c.b16 %v2073, %v2073
  %v2110 = vpack.c.b16 %v2074, %v2074
  %v2111 = vpack.c.b16 %v2075, %v2075
  %v2112 = vpack.c.b16 %v2076, %v2076
  %v2113 = vpack.c.b16 %v2077, %v2077
  %v2114 = vpack.c.b16 %v2078, %v2078
  %v2115 = vpack.c.b16 %v2079, %v2079
  %v2116 = vpack.c.b16 %v2080, %v2080
  %v2117 = vpack.c.b16 %v2081, %v2081
  %vm2154 = vcmask 257024
  %2155 = vst.msk [vmem:[%s3] sm:$0xf] %vm2154, %v2082
  %2156 = vst.msk [vmem:[%s3 + $0x4] sm:$0xf] %vm2154, %v2083
  %2157 = vst.msk [vmem:[%s3 + $0x8] sm:$0xf] %vm2154, %v2084
  %2158 = vst.msk [vmem:[%s3 + $0xc] sm:$0xf] %vm2154, %v2085
  %2159 = vst.msk [vmem:[%s3 + $0x10] sm:$0xf] %vm2154, %v2086
  %2160 = vst.msk [vmem:[%s3 + $0x14] sm:$0xf] %vm2154, %v2087
  %2161 = vst.msk [vmem:[%s3 + $0x18] sm:$0xf] %vm2154, %v2088
  %2162 = vst.msk [vmem:[%s3 + $0x1c] sm:$0xf] %vm2154, %v2089
  %2163 = vst.msk [vmem:[%s3 + $0x20] sm:$0xf] %vm2154, %v2090
  %2164 = vst.msk [vmem:[%s3 + $0x24] sm:$0xf] %vm2154, %v2091
  %2165 = vst.msk [vmem:[%s3 + $0x28] sm:$0xf] %vm2154, %v2092
  %2166 = vst.msk [vmem:[%s3 + $0x2c] sm:$0xf] %vm2154, %v2093
  %2167 = vst.msk [vmem:[%s3 + $0x30] sm:$0xf] %vm2154, %v2094
  %2168 = vst.msk [vmem:[%s3 + $0x34] sm:$0xf] %vm2154, %v2095
  %2169 = vst.msk [vmem:[%s3 + $0x38] sm:$0xf] %vm2154, %v2096
  %2170 = vst.msk [vmem:[%s3 + $0x3c] sm:$0xf] %vm2154, %v2097
  %2171 = vst.msk [vmem:[%s3 + $0x40] sm:$0xf] %vm2154, %v2098
  %2172 = vst.msk [vmem:[%s3 + $0x44] sm:$0xf] %vm2154, %v2099
  %2173 = vst.msk [vmem:[%s3 + $0x48] sm:$0xf] %vm2154, %v2100
  %2174 = vst.msk [vmem:[%s3 + $0x4c] sm:$0xf] %vm2154, %v2101
  %2175 = vst.msk [vmem:[%s3 + $0x50] sm:$0xf] %vm2154, %v2102
  %2176 = vst.msk [vmem:[%s3 + $0x54] sm:$0xf] %vm2154, %v2103
  %2177 = vst.msk [vmem:[%s3 + $0x58] sm:$0xf] %vm2154, %v2104
  %2178 = vst.msk [vmem:[%s3 + $0x5c] sm:$0xf] %vm2154, %v2105
  %2179 = vst.msk [vmem:[%s3 + $0x60] sm:$0xf] %vm2154, %v2106
  %2180 = vst.msk [vmem:[%s3 + $0x64] sm:$0xf] %vm2154, %v2107
  %2181 = vst.msk [vmem:[%s3 + $0x68] sm:$0xf] %vm2154, %v2108
  %2182 = vst.msk [vmem:[%s3 + $0x6c] sm:$0xf] %vm2154, %v2109
  %2183 = vst.msk [vmem:[%s3 + $0x70] sm:$0xf] %vm2154, %v2110
  %2184 = vst.msk [vmem:[%s3 + $0x74] sm:$0xf] %vm2154, %v2111
  %2185 = vst.msk [vmem:[%s3 + $0x78] sm:$0xf] %vm2154, %v2112
  %2186 = vst.msk [vmem:[%s3 + $0x7c] sm:$0xf] %vm2154, %v2113
  %2187 = vst.msk [vmem:[%s3 + $0x80] sm:$0xf] %vm2154, %v2114
  %2188 = vst.msk [vmem:[%s3 + $0x84] sm:$0xf] %vm2154, %v2115
  %2189 = vst.msk [vmem:[%s3 + $0x88] sm:$0xf] %vm2154, %v2116
  %2190 = vst.msk [vmem:[%s3 + $0x8c] sm:$0xf] %vm2154, %v2117
  // Predicated region
  $region14: #{discriminator_forward.3} parent=0 // pred_check
    _
  $region15: #{discriminator_forward.3} parent=0 // pred_check_branch
    %2192 = sbr.rel (0) target = $region17
  $region16: #{discriminator_forward.3} parent=0 // pred_region
    _
  $region17: #{discriminator_forward.3} parent=0 // pred_fallthru
    _
  // Predicated region
  $region18: #{discriminator_forward.3} parent=0 // pred_check
    _
  $region19: #{discriminator_forward.3} parent=0 // pred_check_branch
    %2194 = sbr.rel (0) target = $region21
  $region20: #{discriminator_forward.3} parent=0 // pred_region
    _
  $region21: #{discriminator_forward.3} parent=0 // pred_fallthru
    _

// kernel: discriminator_forward.5
$region0: #{discriminator_forward.5}
  #allocation0 [shape = 'u32[]', space=smem, size = 0x4, offset = 0x4, fixed_abs, tag = 'smem constant byte address 0x4 - core index']
  #allocation1 [shape = 'u32[144,128]{1,0:T(1,128)}', space=vmem, size = 0x12000, scoped, tag = 'internal scratch']
  #allocation2 [shape = 'f32[1,1]{1,0:T(1,128)S(1)}', space=vmem, size = 0x200, scoped, tag = 'scoped memory for discriminator_forward.5']
  %s0 = inlined_call_operand.vmem [shape: bf16[2,1024], index: 0, kind: input, shape index: {}]
  %s1 = inlined_call_operand.vmem [shape: bf16[1024,1024], index: 1, kind: input, shape index: {}]
  %s2 = inlined_call_operand.vmem [shape: f32[1,1024], index: 2, kind: input, shape index: {}]
  %s3 = inlined_call_operand.vmem [shape: f32[1,1024], index: 3, kind: input, shape index: {}]
  %s4 = inlined_call_operand.<no memory space> [shape: f32[1,1], index: 4, kind: input, shape index: {}]
  %s5 = inlined_call_operand.hbm [shape: f32[2,1024], index: 5, kind: output, shape index: {0}]
  %s6 = inlined_call_operand.vmem [shape: f32[2,1], index: 6, kind: output, shape index: {1}]
  %7 = xla_tuple %s5, %s6
  %s8 = sld [smem:[#allocation0]]
  $region38: #{discriminator_forward.5} parent=0
    _
  %s10 = ssub.s32 1, %s8
  %s11 = scalar_select 0, %s10, %s8
  %v12 = vstv %s4
  %13 = vst [vmem:[#allocation2] sm:$0x1] %v12
  $region1: #{discriminator_forward.5} parent=0
    #allocation3 [shape = 'u8[8192]{0}', space=vmem, size = 0x2000, scoped, tag = 'output window, operand 0, single buffered']
    #allocation4 [shape = 's32[1]{0}', space=sflag, size = 0x4, scoped, tag = 'scoped memory for discriminator_forward.5']
    %14 = vsyncpa [#allocation4], 0
    // Predicated region
    $region2: #{discriminator_forward.5} parent=1 // pred_check
      _
    $region3: #{discriminator_forward.5} parent=1 // pred_check_branch
      %16 = sbr.rel (0) target = $region5
    $region4: #{discriminator_forward.5} parent=1 // pred_region
      _
    $region5: #{discriminator_forward.5} parent=1 // pred_fallthru
      _
    // Predicated region
    $region6: #{discriminator_forward.5} parent=1 // pred_check
      _
    $region7: #{discriminator_forward.5} parent=1 // pred_check_branch
      %18 = sbr.rel (0) target = $region9
    $region8: #{discriminator_forward.5} parent=1 // pred_region
      _
    $region9: #{discriminator_forward.5} parent=1 // pred_fallthru
      _
    // Predicated region
    $region10: #{discriminator_forward.5} parent=1 // pred_check
      _
    $region11: #{discriminator_forward.5} parent=1 // pred_check_branch
      %20 = sbr.rel (0) target = $region13
    $region12: #{discriminator_forward.5} parent=1 // pred_region
      _
    $region13: #{discriminator_forward.5} parent=1 // pred_fallthru
      _
    // Predicated region
    $region14: #{discriminator_forward.5} parent=1 // pred_check
      _
    $region15: #{discriminator_forward.5} parent=1 // pred_check_branch
      %22 = sbr.rel (0) target = $region17
    $region16: #{discriminator_forward.5} parent=1 // pred_region
      _
    $region17: #{discriminator_forward.5} parent=1 // pred_fallthru
      _
    // Predicated region
    $region18: #{discriminator_forward.5} parent=1 // pred_check
      _
    $region19: #{discriminator_forward.5} parent=1 // pred_check_branch
      %24 = sbr.rel (0) target = $region21
    $region20: #{discriminator_forward.5} parent=1 // pred_region
      _
    $region21: #{discriminator_forward.5} parent=1 // pred_fallthru
      _
    %v25 = vld [vmem:[%s0] sm:$0xff]
    %v26 = vld [vmem:[%s1] sm:$0xff]
    %v27 = vld [vmem:[%s1 + $0x8] sm:$0xff]
    %v28 = vld [vmem:[%s1 + $0x10] sm:$0xff]
    %v29 = vld [vmem:[%s1 + $0x18] sm:$0xff]
    %v30 = vld [vmem:[%s1 + $0x20] sm:$0xff]
    %v31 = vld [vmem:[%s1 + $0x28] sm:$0xff]
    %v32 = vld [vmem:[%s1 + $0x30] sm:$0xff]
    %v33 = vld [vmem:[%s1 + $0x38] sm:$0xff]
    %v34 = vld [vmem:[%s1 + $0x40] sm:$0xff]
    %v35 = vld [vmem:[%s1 + $0x48] sm:$0xff]
    %v36 = vld [vmem:[%s1 + $0x50] sm:$0xff]
    %v37 = vld [vmem:[%s1 + $0x58] sm:$0xff]
    %v38 = vld [vmem:[%s1 + $0x60] sm:$0xff]
    %v39 = vld [vmem:[%s1 + $0x68] sm:$0xff]
    %v40 = vld [vmem:[%s1 + $0x70] sm:$0xff]
    %v41 = vld [vmem:[%s1 + $0x78] sm:$0xff]
    %v42 = vld [vmem:[%s1 + $0x80] sm:$0xff]
    %v43 = vld [vmem:[%s1 + $0x88] sm:$0xff]
    %v44 = vld [vmem:[%s1 + $0x90] sm:$0xff]
    %v45 = vld [vmem:[%s1 + $0x98] sm:$0xff]
    %v46 = vld [vmem:[%s1 + $0xa0] sm:$0xff]
    %v47 = vld [vmem:[%s1 + $0xa8] sm:$0xff]
    %v48 = vld [vmem:[%s1 + $0xb0] sm:$0xff]
    %v49 = vld [vmem:[%s1 + $0xb8] sm:$0xff]
    %v50 = vld [vmem:[%s1 + $0xc0] sm:$0xff]
    %v51 = vld [vmem:[%s1 + $0xc8] sm:$0xff]
    %v52 = vld [vmem:[%s1 + $0xd0] sm:$0xff]
    %v53 = vld [vmem:[%s1 + $0xd8] sm:$0xff]
    %v54 = vld [vmem:[%s1 + $0xe0] sm:$0xff]
    %v55 = vld [vmem:[%s1 + $0xe8] sm:$0xff]
    %v56 = vld [vmem:[%s1 + $0xf0] sm:$0xff]
    %v57 = vld [vmem:[%s1 + $0xf8] sm:$0xff]
    %v58 = vld [vmem:[%s1 + $0x100] sm:$0xff]
    %v59 = vld [vmem:[%s1 + $0x108] sm:$0xff]
    %v60 = vld [vmem:[%s1 + $0x110] sm:$0xff]
    %v61 = vld [vmem:[%s1 + $0x118] sm:$0xff]
    %v62 = vld [vmem:[%s1 + $0x120] sm:$0xff]
    %v63 = vld [vmem:[%s1 + $0x128] sm:$0xff]
    %v64 = vld [vmem:[%s1 + $0x130] sm:$0xff]
    %v65 = vld [vmem:[%s1 + $0x138] sm:$0xff]
    %v66 = vld [vmem:[%s1 + $0x140] sm:$0xff]
    %v67 = vld [vmem:[%s1 + $0x148] sm:$0xff]
    %v68 = vld [vmem:[%s1 + $0x150] sm:$0xff]
    %v69 = vld [vmem:[%s1 + $0x158] sm:$0xff]
    %v70 = vld [vmem:[%s1 + $0x160] sm:$0xff]
    %v71 = vld [vmem:[%s1 + $0x168] sm:$0xff]
    %v72 = vld [vmem:[%s1 + $0x170] sm:$0xff]
    %v73 = vld [vmem:[%s1 + $0x178] sm:$0xff]
    %v74 = vld [vmem:[%s1 + $0x180] sm:$0xff]
    %v75 = vld [vmem:[%s1 + $0x188] sm:$0xff]
    %v76 = vld [vmem:[%s1 + $0x190] sm:$0xff]
    %v77 = vld [vmem:[%s1 + $0x198] sm:$0xff]
    %v78 = vld [vmem:[%s1 + $0x1a0] sm:$0xff]
    %v79 = vld [vmem:[%s1 + $0x1a8] sm:$0xff]
    %v80 = vld [vmem:[%s1 + $0x1b0] sm:$0xff]
    %v81 = vld [vmem:[%s1 + $0x1b8] sm:$0xff]
    %v82 = vld [vmem:[%s1 + $0x1c0] sm:$0xff]
    %v83 = vld [vmem:[%s1 + $0x1c8] sm:$0xff]
    %v84 = vld [vmem:[%s1 + $0x1d0] sm:$0xff]
    %v85 = vld [vmem:[%s1 + $0x1d8] sm:$0xff]
    %v86 = vld [vmem:[%s1 + $0x1e0] sm:$0xff]
    %v87 = vld [vmem:[%s1 + $0x1e8] sm:$0xff]
    %v88 = vld [vmem:[%s1 + $0x1f0] sm:$0xff]
    %v89 = vld [vmem:[%s1 + $0x1f8] sm:$0xff]
    %v90 = vld [vmem:[%s1 + $0x200] sm:$0xff]
    %v91 = vld [vmem:[%s1 + $0x208] sm:$0xff]
    %v92 = vld [vmem:[%s1 + $0x210] sm:$0xff]
    %v93 = vld [vmem:[%s1 + $0x218] sm:$0xff]
    %v94 = vld [vmem:[%s1 + $0x220] sm:$0xff]
    %v95 = vld [vmem:[%s1 + $0x228] sm:$0xff]
    %v96 = vld [vmem:[%s1 + $0x230] sm:$0xff]
    %v97 = vld [vmem:[%s1 + $0x238] sm:$0xff]
    %v98 = vld [vmem:[%s1 + $0x240] sm:$0xff]
    %v99 = vld [vmem:[%s1 + $0x248] sm:$0xff]
    %v100 = vld [vmem:[%s1 + $0x250] sm:$0xff]
    %v101 = vld [vmem:[%s1 + $0x258] sm:$0xff]
    %v102 = vld [vmem:[%s1 + $0x260] sm:$0xff]
    %v103 = vld [vmem:[%s1 + $0x268] sm:$0xff]
    %v104 = vld [vmem:[%s1 + $0x270] sm:$0xff]
    %v105 = vld [vmem:[%s1 + $0x278] sm:$0xff]
    %v106 = vld [vmem:[%s1 + $0x280] sm:$0xff]
    %v107 = vld [vmem:[%s1 + $0x288] sm:$0xff]
    %v108 = vld [vmem:[%s1 + $0x290] sm:$0xff]
    %v109 = vld [vmem:[%s1 + $0x298] sm:$0xff]
    %v110 = vld [vmem:[%s1 + $0x2a0] sm:$0xff]
    %v111 = vld [vmem:[%s1 + $0x2a8] sm:$0xff]
    %v112 = vld [vmem:[%s1 + $0x2b0] sm:$0xff]
    %v113 = vld [vmem:[%s1 + $0x2b8] sm:$0xff]
    %v114 = vld [vmem:[%s1 + $0x2c0] sm:$0xff]
    %v115 = vld [vmem:[%s1 + $0x2c8] sm:$0xff]
    %v116 = vld [vmem:[%s1 + $0x2d0] sm:$0xff]
    %v117 = vld [vmem:[%s1 + $0x2d8] sm:$0xff]
    %v118 = vld [vmem:[%s1 + $0x2e0] sm:$0xff]
    %v119 = vld [vmem:[%s1 + $0x2e8] sm:$0xff]
    %v120 = vld [vmem:[%s1 + $0x2f0] sm:$0xff]
    %v121 = vld [vmem:[%s1 + $0x2f8] sm:$0xff]
    %v122 = vld [vmem:[%s1 + $0x300] sm:$0xff]
    %v123 = vld [vmem:[%s1 + $0x308] sm:$0xff]
    %v124 = vld [vmem:[%s1 + $0x310] sm:$0xff]
    %v125 = vld [vmem:[%s1 + $0x318] sm:$0xff]
    %v126 = vld [vmem:[%s1 + $0x320] sm:$0xff]
    %v127 = vld [vmem:[%s1 + $0x328] sm:$0xff]
    %v128 = vld [vmem:[%s1 + $0x330] sm:$0xff]
    %v129 = vld [vmem:[%s1 + $0x338] sm:$0xff]
    %v130 = vld [vmem:[%s1 + $0x340] sm:$0xff]
    %v131 = vld [vmem:[%s1 + $0x348] sm:$0xff]
    %v132 = vld [vmem:[%s1 + $0x350] sm:$0xff]
    %v133 = vld [vmem:[%s1 + $0x358] sm:$0xff]
    %v134 = vld [vmem:[%s1 + $0x360] sm:$0xff]
    %v135 = vld [vmem:[%s1 + $0x368] sm:$0xff]
    %v136 = vld [vmem:[%s1 + $0x370] sm:$0xff]
    %v137 = vld [vmem:[%s1 + $0x378] sm:$0xff]
    %v138 = vld [vmem:[%s1 + $0x380] sm:$0xff]
    %v139 = vld [vmem:[%s1 + $0x388] sm:$0xff]
    %v140 = vld [vmem:[%s1 + $0x390] sm:$0xff]
    %v141 = vld [vmem:[%s1 + $0x398] sm:$0xff]
    %v142 = vld [vmem:[%s1 + $0x3a0] sm:$0xff]
    %v143 = vld [vmem:[%s1 + $0x3a8] sm:$0xff]
    %v144 = vld [vmem:[%s1 + $0x3b0] sm:$0xff]
    %v145 = vld [vmem:[%s1 + $0x3b8] sm:$0xff]
    %v146 = vld [vmem:[%s1 + $0x3c0] sm:$0xff]
    %v147 = vld [vmem:[%s1 + $0x3c8] sm:$0xff]
    %v148 = vld [vmem:[%s1 + $0x3d0] sm:$0xff]
    %v149 = vld [vmem:[%s1 + $0x3d8] sm:$0xff]
    %v150 = vld [vmem:[%s1 + $0x3e0] sm:$0xff]
    %v151 = vld [vmem:[%s1 + $0x3e8] sm:$0xff]
    %v152 = vld [vmem:[%s1 + $0x3f0] sm:$0xff]
    %v153 = vld [vmem:[%s1 + $0x3f8] sm:$0xff]
    %v154 = vld [vmem:[%s1 + $0x400] sm:$0xff]
    %v155 = vld [vmem:[%s1 + $0x408] sm:$0xff]
    %v156 = vld [vmem:[%s1 + $0x410] sm:$0xff]
    %v157 = vld [vmem:[%s1 + $0x418] sm:$0xff]
    %v158 = vld [vmem:[%s1 + $0x420] sm:$0xff]
    %v159 = vld [vmem:[%s1 + $0x428] sm:$0xff]
    %v160 = vld [vmem:[%s1 + $0x430] sm:$0xff]
    %v161 = vld [vmem:[%s1 + $0x438] sm:$0xff]
    %v162 = vld [vmem:[%s1 + $0x440] sm:$0xff]
    %v163 = vld [vmem:[%s1 + $0x448] sm:$0xff]
    %v164 = vld [vmem:[%s1 + $0x450] sm:$0xff]
    %v165 = vld [vmem:[%s1 + $0x458] sm:$0xff]
    %v166 = vld [vmem:[%s1 + $0x460] sm:$0xff]
    %v167 = vld [vmem:[%s1 + $0x468] sm:$0xff]
    %v168 = vld [vmem:[%s1 + $0x470] sm:$0xff]
    %v169 = vld [vmem:[%s1 + $0x478] sm:$0xff]
    %v170 = vld [vmem:[%s1 + $0x480] sm:$0xff]
    %v171 = vld [vmem:[%s1 + $0x488] sm:$0xff]
    %v172 = vld [vmem:[%s1 + $0x490] sm:$0xff]
    %v173 = vld [vmem:[%s1 + $0x498] sm:$0xff]
    %v174 = vld [vmem:[%s1 + $0x4a0] sm:$0xff]
    %v175 = vld [vmem:[%s1 + $0x4a8] sm:$0xff]
    %v176 = vld [vmem:[%s1 + $0x4b0] sm:$0xff]
    %v177 = vld [vmem:[%s1 + $0x4b8] sm:$0xff]
    %v178 = vld [vmem:[%s1 + $0x4c0] sm:$0xff]
    %v179 = vld [vmem:[%s1 + $0x4c8] sm:$0xff]
    %v180 = vld [vmem:[%s1 + $0x4d0] sm:$0xff]
    %v181 = vld [vmem:[%s1 + $0x4d8] sm:$0xff]
    %v182 = vld [vmem:[%s1 + $0x4e0] sm:$0xff]
    %v183 = vld [vmem:[%s1 + $0x4e8] sm:$0xff]
    %v184 = vld [vmem:[%s1 + $0x4f0] sm:$0xff]
    %v185 = vld [vmem:[%s1 + $0x4f8] sm:$0xff]
    %v186 = vld [vmem:[%s1 + $0x500] sm:$0xff]
    %v187 = vld [vmem:[%s1 + $0x508] sm:$0xff]
    %v188 = vld [vmem:[%s1 + $0x510] sm:$0xff]
    %v189 = vld [vmem:[%s1 + $0x518] sm:$0xff]
    %v190 = vld [vmem:[%s1 + $0x520] sm:$0xff]
    %v191 = vld [vmem:[%s1 + $0x528] sm:$0xff]
    %v192 = vld [vmem:[%s1 + $0x530] sm:$0xff]
    %v193 = vld [vmem:[%s1 + $0x538] sm:$0xff]
    %v194 = vld [vmem:[%s1 + $0x540] sm:$0xff]
    %v195 = vld [vmem:[%s1 + $0x548] sm:$0xff]
    %v196 = vld [vmem:[%s1 + $0x550] sm:$0xff]
    %v197 = vld [vmem:[%s1 + $0x558] sm:$0xff]
    %v198 = vld [vmem:[%s1 + $0x560] sm:$0xff]
    %v199 = vld [vmem:[%s1 + $0x568] sm:$0xff]
    %v200 = vld [vmem:[%s1 + $0x570] sm:$0xff]
    %v201 = vld [vmem:[%s1 + $0x578] sm:$0xff]
    %v202 = vld [vmem:[%s1 + $0x580] sm:$0xff]
    %v203 = vld [vmem:[%s1 + $0x588] sm:$0xff]
    %v204 = vld [vmem:[%s1 + $0x590] sm:$0xff]
    %v205 = vld [vmem:[%s1 + $0x598] sm:$0xff]
    %v206 = vld [vmem:[%s1 + $0x5a0] sm:$0xff]
    %v207 = vld [vmem:[%s1 + $0x5a8] sm:$0xff]
    %v208 = vld [vmem:[%s1 + $0x5b0] sm:$0xff]
    %v209 = vld [vmem:[%s1 + $0x5b8] sm:$0xff]
    %v210 = vld [vmem:[%s1 + $0x5c0] sm:$0xff]
    %v211 = vld [vmem:[%s1 + $0x5c8] sm:$0xff]
    %v212 = vld [vmem:[%s1 + $0x5d0] sm:$0xff]
    %v213 = vld [vmem:[%s1 + $0x5d8] sm:$0xff]
    %v214 = vld [vmem:[%s1 + $0x5e0] sm:$0xff]
    %v215 = vld [vmem:[%s1 + $0x5e8] sm:$0xff]
    %v216 = vld [vmem:[%s1 + $0x5f0] sm:$0xff]
    %v217 = vld [vmem:[%s1 + $0x5f8] sm:$0xff]
    %v218 = vld [vmem:[%s1 + $0x600] sm:$0xff]
    %v219 = vld [vmem:[%s1 + $0x608] sm:$0xff]
    %v220 = vld [vmem:[%s1 + $0x610] sm:$0xff]
    %v221 = vld [vmem:[%s1 + $0x618] sm:$0xff]
    %v222 = vld [vmem:[%s1 + $0x620] sm:$0xff]
    %v223 = vld [vmem:[%s1 + $0x628] sm:$0xff]
    %v224 = vld [vmem:[%s1 + $0x630] sm:$0xff]
    %v225 = vld [vmem:[%s1 + $0x638] sm:$0xff]
    %v226 = vld [vmem:[%s1 + $0x640] sm:$0xff]
    %v227 = vld [vmem:[%s1 + $0x648] sm:$0xff]
    %v228 = vld [vmem:[%s1 + $0x650] sm:$0xff]
    %v229 = vld [vmem:[%s1 + $0x658] sm:$0xff]
    %v230 = vld [vmem:[%s1 + $0x660] sm:$0xff]
    %v231 = vld [vmem:[%s1 + $0x668] sm:$0xff]
    %v232 = vld [vmem:[%s1 + $0x670] sm:$0xff]
    %v233 = vld [vmem:[%s1 + $0x678] sm:$0xff]
    %v234 = vld [vmem:[%s1 + $0x680] sm:$0xff]
    %v235 = vld [vmem:[%s1 + $0x688] sm:$0xff]
    %v236 = vld [vmem:[%s1 + $0x690] sm:$0xff]
    %v237 = vld [vmem:[%s1 + $0x698] sm:$0xff]
    %v238 = vld [vmem:[%s1 + $0x6a0] sm:$0xff]
    %v239 = vld [vmem:[%s1 + $0x6a8] sm:$0xff]
    %v240 = vld [vmem:[%s1 + $0x6b0] sm:$0xff]
    %v241 = vld [vmem:[%s1 + $0x6b8] sm:$0xff]
    %v242 = vld [vmem:[%s1 + $0x6c0] sm:$0xff]
    %v243 = vld [vmem:[%s1 + $0x6c8] sm:$0xff]
    %v244 = vld [vmem:[%s1 + $0x6d0] sm:$0xff]
    %v245 = vld [vmem:[%s1 + $0x6d8] sm:$0xff]
    %v246 = vld [vmem:[%s1 + $0x6e0] sm:$0xff]
    %v247 = vld [vmem:[%s1 + $0x6e8] sm:$0xff]
    %v248 = vld [vmem:[%s1 + $0x6f0] sm:$0xff]
    %v249 = vld [vmem:[%s1 + $0x6f8] sm:$0xff]
    %v250 = vld [vmem:[%s1 + $0x700] sm:$0xff]
    %v251 = vld [vmem:[%s1 + $0x708] sm:$0xff]
    %v252 = vld [vmem:[%s1 + $0x710] sm:$0xff]
    %v253 = vld [vmem:[%s1 + $0x718] sm:$0xff]
    %v254 = vld [vmem:[%s1 + $0x720] sm:$0xff]
    %v255 = vld [vmem:[%s1 + $0x728] sm:$0xff]
    %v256 = vld [vmem:[%s1 + $0x730] sm:$0xff]
    %v257 = vld [vmem:[%s1 + $0x738] sm:$0xff]
    %v258 = vld [vmem:[%s1 + $0x740] sm:$0xff]
    %v259 = vld [vmem:[%s1 + $0x748] sm:$0xff]
    %v260 = vld [vmem:[%s1 + $0x750] sm:$0xff]
    %v261 = vld [vmem:[%s1 + $0x758] sm:$0xff]
    %v262 = vld [vmem:[%s1 + $0x760] sm:$0xff]
    %v263 = vld [vmem:[%s1 + $0x768] sm:$0xff]
    %v264 = vld [vmem:[%s1 + $0x770] sm:$0xff]
    %v265 = vld [vmem:[%s1 + $0x778] sm:$0xff]
    %v266 = vld [vmem:[%s1 + $0x780] sm:$0xff]
    %v267 = vld [vmem:[%s1 + $0x788] sm:$0xff]
    %v268 = vld [vmem:[%s1 + $0x790] sm:$0xff]
    %v269 = vld [vmem:[%s1 + $0x798] sm:$0xff]
    %v270 = vld [vmem:[%s1 + $0x7a0] sm:$0xff]
    %v271 = vld [vmem:[%s1 + $0x7a8] sm:$0xff]
    %v272 = vld [vmem:[%s1 + $0x7b0] sm:$0xff]
    %v273 = vld [vmem:[%s1 + $0x7b8] sm:$0xff]
    %v274 = vld [vmem:[%s1 + $0x7c0] sm:$0xff]
    %v275 = vld [vmem:[%s1 + $0x7c8] sm:$0xff]
    %v276 = vld [vmem:[%s1 + $0x7d0] sm:$0xff]
    %v277 = vld [vmem:[%s1 + $0x7d8] sm:$0xff]
    %v278 = vld [vmem:[%s1 + $0x7e0] sm:$0xff]
    %v279 = vld [vmem:[%s1 + $0x7e8] sm:$0xff]
    %v280 = vld [vmem:[%s1 + $0x7f0] sm:$0xff]
    %v281 = vld [vmem:[%s1 + $0x7f8] sm:$0xff]
    %v282 = vld [vmem:[%s1 + $0x800] sm:$0xff]
    %v283 = vld [vmem:[%s1 + $0x808] sm:$0xff]
    %v284 = vld [vmem:[%s1 + $0x810] sm:$0xff]
    %v285 = vld [vmem:[%s1 + $0x818] sm:$0xff]
    %v286 = vld [vmem:[%s1 + $0x820] sm:$0xff]
    %v287 = vld [vmem:[%s1 + $0x828] sm:$0xff]
    %v288 = vld [vmem:[%s1 + $0x830] sm:$0xff]
    %v289 = vld [vmem:[%s1 + $0x838] sm:$0xff]
    %v290 = vld [vmem:[%s1 + $0x840] sm:$0xff]
    %v291 = vld [vmem:[%s1 + $0x848] sm:$0xff]
    %v292 = vld [vmem:[%s1 + $0x850] sm:$0xff]
    %v293 = vld [vmem:[%s1 + $0x858] sm:$0xff]
    %v294 = vld [vmem:[%s1 + $0x860] sm:$0xff]
    %v295 = vld [vmem:[%s1 + $0x868] sm:$0xff]
    %v296 = vld [vmem:[%s1 + $0x870] sm:$0xff]
    %v297 = vld [vmem:[%s1 + $0x878] sm:$0xff]
    %v298 = vld [vmem:[%s1 + $0x880] sm:$0xff]
    %v299 = vld [vmem:[%s1 + $0x888] sm:$0xff]
    %v300 = vld [vmem:[%s1 + $0x890] sm:$0xff]
    %v301 = vld [vmem:[%s1 + $0x898] sm:$0xff]
    %v302 = vld [vmem:[%s1 + $0x8a0] sm:$0xff]
    %v303 = vld [vmem:[%s1 + $0x8a8] sm:$0xff]
    %v304 = vld [vmem:[%s1 + $0x8b0] sm:$0xff]
    %v305 = vld [vmem:[%s1 + $0x8b8] sm:$0xff]
    %v306 = vld [vmem:[%s1 + $0x8c0] sm:$0xff]
    %v307 = vld [vmem:[%s1 + $0x8c8] sm:$0xff]
    %v308 = vld [vmem:[%s1 + $0x8d0] sm:$0xff]
    %v309 = vld [vmem:[%s1 + $0x8d8] sm:$0xff]
    %v310 = vld [vmem:[%s1 + $0x8e0] sm:$0xff]
    %v311 = vld [vmem:[%s1 + $0x8e8] sm:$0xff]
    %v312 = vld [vmem:[%s1 + $0x8f0] sm:$0xff]
    %v313 = vld [vmem:[%s1 + $0x8f8] sm:$0xff]
    %v314 = vld [vmem:[%s1 + $0x900] sm:$0xff]
    %v315 = vld [vmem:[%s1 + $0x908] sm:$0xff]
    %v316 = vld [vmem:[%s1 + $0x910] sm:$0xff]
    %v317 = vld [vmem:[%s1 + $0x918] sm:$0xff]
    %v318 = vld [vmem:[%s1 + $0x920] sm:$0xff]
    %v319 = vld [vmem:[%s1 + $0x928] sm:$0xff]
    %v320 = vld [vmem:[%s1 + $0x930] sm:$0xff]
    %v321 = vld [vmem:[%s1 + $0x938] sm:$0xff]
    %v322 = vld [vmem:[%s1 + $0x940] sm:$0xff]
    %v323 = vld [vmem:[%s1 + $0x948] sm:$0xff]
    %v324 = vld [vmem:[%s1 + $0x950] sm:$0xff]
    %v325 = vld [vmem:[%s1 + $0x958] sm:$0xff]
    %v326 = vld [vmem:[%s1 + $0x960] sm:$0xff]
    %v327 = vld [vmem:[%s1 + $0x968] sm:$0xff]
    %v328 = vld [vmem:[%s1 + $0x970] sm:$0xff]
    %v329 = vld [vmem:[%s1 + $0x978] sm:$0xff]
    %v330 = vld [vmem:[%s1 + $0x980] sm:$0xff]
    %v331 = vld [vmem:[%s1 + $0x988] sm:$0xff]
    %v332 = vld [vmem:[%s1 + $0x990] sm:$0xff]
    %v333 = vld [vmem:[%s1 + $0x998] sm:$0xff]
    %v334 = vld [vmem:[%s1 + $0x9a0] sm:$0xff]
    %v335 = vld [vmem:[%s1 + $0x9a8] sm:$0xff]
    %v336 = vld [vmem:[%s1 + $0x9b0] sm:$0xff]
    %v337 = vld [vmem:[%s1 + $0x9b8] sm:$0xff]
    %v338 = vld [vmem:[%s1 + $0x9c0] sm:$0xff]
    %v339 = vld [vmem:[%s1 + $0x9c8] sm:$0xff]
    %v340 = vld [vmem:[%s1 + $0x9d0] sm:$0xff]
    %v341 = vld [vmem:[%s1 + $0x9d8] sm:$0xff]
    %v342 = vld [vmem:[%s1 + $0x9e0] sm:$0xff]
    %v343 = vld [vmem:[%s1 + $0x9e8] sm:$0xff]
    %v344 = vld [vmem:[%s1 + $0x9f0] sm:$0xff]
    %v345 = vld [vmem:[%s1 + $0x9f8] sm:$0xff]
    %v346 = vld [vmem:[%s1 + $0xa00] sm:$0xff]
    %v347 = vld [vmem:[%s1 + $0xa08] sm:$0xff]
    %v348 = vld [vmem:[%s1 + $0xa10] sm:$0xff]
    %v349 = vld [vmem:[%s1 + $0xa18] sm:$0xff]
    %v350 = vld [vmem:[%s1 + $0xa20] sm:$0xff]
    %v351 = vld [vmem:[%s1 + $0xa28] sm:$0xff]
    %v352 = vld [vmem:[%s1 + $0xa30] sm:$0xff]
    %v353 = vld [vmem:[%s1 + $0xa38] sm:$0xff]
    %v354 = vld [vmem:[%s1 + $0xa40] sm:$0xff]
    %v355 = vld [vmem:[%s1 + $0xa48] sm:$0xff]
    %v356 = vld [vmem:[%s1 + $0xa50] sm:$0xff]
    %v357 = vld [vmem:[%s1 + $0xa58] sm:$0xff]
    %v358 = vld [vmem:[%s1 + $0xa60] sm:$0xff]
    %v359 = vld [vmem:[%s1 + $0xa68] sm:$0xff]
    %v360 = vld [vmem:[%s1 + $0xa70] sm:$0xff]
    %v361 = vld [vmem:[%s1 + $0xa78] sm:$0xff]
    %v362 = vld [vmem:[%s1 + $0xa80] sm:$0xff]
    %v363 = vld [vmem:[%s1 + $0xa88] sm:$0xff]
    %v364 = vld [vmem:[%s1 + $0xa90] sm:$0xff]
    %v365 = vld [vmem:[%s1 + $0xa98] sm:$0xff]
    %v366 = vld [vmem:[%s1 + $0xaa0] sm:$0xff]
    %v367 = vld [vmem:[%s1 + $0xaa8] sm:$0xff]
    %v368 = vld [vmem:[%s1 + $0xab0] sm:$0xff]
    %v369 = vld [vmem:[%s1 + $0xab8] sm:$0xff]
    %v370 = vld [vmem:[%s1 + $0xac0] sm:$0xff]
    %v371 = vld [vmem:[%s1 + $0xac8] sm:$0xff]
    %v372 = vld [vmem:[%s1 + $0xad0] sm:$0xff]
    %v373 = vld [vmem:[%s1 + $0xad8] sm:$0xff]
    %v374 = vld [vmem:[%s1 + $0xae0] sm:$0xff]
    %v375 = vld [vmem:[%s1 + $0xae8] sm:$0xff]
    %v376 = vld [vmem:[%s1 + $0xaf0] sm:$0xff]
    %v377 = vld [vmem:[%s1 + $0xaf8] sm:$0xff]
    %v378 = vld [vmem:[%s1 + $0xb00] sm:$0xff]
    %v379 = vld [vmem:[%s1 + $0xb08] sm:$0xff]
    %v380 = vld [vmem:[%s1 + $0xb10] sm:$0xff]
    %v381 = vld [vmem:[%s1 + $0xb18] sm:$0xff]
    %v382 = vld [vmem:[%s1 + $0xb20] sm:$0xff]
    %v383 = vld [vmem:[%s1 + $0xb28] sm:$0xff]
    %v384 = vld [vmem:[%s1 + $0xb30] sm:$0xff]
    %v385 = vld [vmem:[%s1 + $0xb38] sm:$0xff]
    %v386 = vld [vmem:[%s1 + $0xb40] sm:$0xff]
    %v387 = vld [vmem:[%s1 + $0xb48] sm:$0xff]
    %v388 = vld [vmem:[%s1 + $0xb50] sm:$0xff]
    %v389 = vld [vmem:[%s1 + $0xb58] sm:$0xff]
    %v390 = vld [vmem:[%s1 + $0xb60] sm:$0xff]
    %v391 = vld [vmem:[%s1 + $0xb68] sm:$0xff]
    %v392 = vld [vmem:[%s1 + $0xb70] sm:$0xff]
    %v393 = vld [vmem:[%s1 + $0xb78] sm:$0xff]
    %v394 = vld [vmem:[%s1 + $0xb80] sm:$0xff]
    %v395 = vld [vmem:[%s1 + $0xb88] sm:$0xff]
    %v396 = vld [vmem:[%s1 + $0xb90] sm:$0xff]
    %v397 = vld [vmem:[%s1 + $0xb98] sm:$0xff]
    %v398 = vld [vmem:[%s1 + $0xba0] sm:$0xff]
    %v399 = vld [vmem:[%s1 + $0xba8] sm:$0xff]
    %v400 = vld [vmem:[%s1 + $0xbb0] sm:$0xff]
    %v401 = vld [vmem:[%s1 + $0xbb8] sm:$0xff]
    %v402 = vld [vmem:[%s1 + $0xbc0] sm:$0xff]
    %v403 = vld [vmem:[%s1 + $0xbc8] sm:$0xff]
    %v404 = vld [vmem:[%s1 + $0xbd0] sm:$0xff]
    %v405 = vld [vmem:[%s1 + $0xbd8] sm:$0xff]
    %v406 = vld [vmem:[%s1 + $0xbe0] sm:$0xff]
    %v407 = vld [vmem:[%s1 + $0xbe8] sm:$0xff]
    %v408 = vld [vmem:[%s1 + $0xbf0] sm:$0xff]
    %v409 = vld [vmem:[%s1 + $0xbf8] sm:$0xff]
    %v410 = vld [vmem:[%s1 + $0xc00] sm:$0xff]
    %v411 = vld [vmem:[%s1 + $0xc08] sm:$0xff]
    %v412 = vld [vmem:[%s1 + $0xc10] sm:$0xff]
    %v413 = vld [vmem:[%s1 + $0xc18] sm:$0xff]
    %v414 = vld [vmem:[%s1 + $0xc20] sm:$0xff]
    %v415 = vld [vmem:[%s1 + $0xc28] sm:$0xff]
    %v416 = vld [vmem:[%s1 + $0xc30] sm:$0xff]
    %v417 = vld [vmem:[%s1 + $0xc38] sm:$0xff]
    %v418 = vld [vmem:[%s1 + $0xc40] sm:$0xff]
    %v419 = vld [vmem:[%s1 + $0xc48] sm:$0xff]
    %v420 = vld [vmem:[%s1 + $0xc50] sm:$0xff]
    %v421 = vld [vmem:[%s1 + $0xc58] sm:$0xff]
    %v422 = vld [vmem:[%s1 + $0xc60] sm:$0xff]
    %v423 = vld [vmem:[%s1 + $0xc68] sm:$0xff]
    %v424 = vld [vmem:[%s1 + $0xc70] sm:$0xff]
    %v425 = vld [vmem:[%s1 + $0xc78] sm:$0xff]
    %v426 = vld [vmem:[%s1 + $0xc80] sm:$0xff]
    %v427 = vld [vmem:[%s1 + $0xc88] sm:$0xff]
    %v428 = vld [vmem:[%s1 + $0xc90] sm:$0xff]
    %v429 = vld [vmem:[%s1 + $0xc98] sm:$0xff]
    %v430 = vld [vmem:[%s1 + $0xca0] sm:$0xff]
    %v431 = vld [vmem:[%s1 + $0xca8] sm:$0xff]
    %v432 = vld [vmem:[%s1 + $0xcb0] sm:$0xff]
    %v433 = vld [vmem:[%s1 + $0xcb8] sm:$0xff]
    %v434 = vld [vmem:[%s1 + $0xcc0] sm:$0xff]
    %v435 = vld [vmem:[%s1 + $0xcc8] sm:$0xff]
    %v436 = vld [vmem:[%s1 + $0xcd0] sm:$0xff]
    %v437 = vld [vmem:[%s1 + $0xcd8] sm:$0xff]
    %v438 = vld [vmem:[%s1 + $0xce0] sm:$0xff]
    %v439 = vld [vmem:[%s1 + $0xce8] sm:$0xff]
    %v440 = vld [vmem:[%s1 + $0xcf0] sm:$0xff]
    %v441 = vld [vmem:[%s1 + $0xcf8] sm:$0xff]
    %v442 = vld [vmem:[%s1 + $0xd00] sm:$0xff]
    %v443 = vld [vmem:[%s1 + $0xd08] sm:$0xff]
    %v444 = vld [vmem:[%s1 + $0xd10] sm:$0xff]
    %v445 = vld [vmem:[%s1 + $0xd18] sm:$0xff]
    %v446 = vld [vmem:[%s1 + $0xd20] sm:$0xff]
    %v447 = vld [vmem:[%s1 + $0xd28] sm:$0xff]
    %v448 = vld [vmem:[%s1 + $0xd30] sm:$0xff]
    %v449 = vld [vmem:[%s1 + $0xd38] sm:$0xff]
    %v450 = vld [vmem:[%s1 + $0xd40] sm:$0xff]
    %v451 = vld [vmem:[%s1 + $0xd48] sm:$0xff]
    %v452 = vld [vmem:[%s1 + $0xd50] sm:$0xff]
    %v453 = vld [vmem:[%s1 + $0xd58] sm:$0xff]
    %v454 = vld [vmem:[%s1 + $0xd60] sm:$0xff]
    %v455 = vld [vmem:[%s1 + $0xd68] sm:$0xff]
    %v456 = vld [vmem:[%s1 + $0xd70] sm:$0xff]
    %v457 = vld [vmem:[%s1 + $0xd78] sm:$0xff]
    %v458 = vld [vmem:[%s1 + $0xd80] sm:$0xff]
    %v459 = vld [vmem:[%s1 + $0xd88] sm:$0xff]
    %v460 = vld [vmem:[%s1 + $0xd90] sm:$0xff]
    %v461 = vld [vmem:[%s1 + $0xd98] sm:$0xff]
    %v462 = vld [vmem:[%s1 + $0xda0] sm:$0xff]
    %v463 = vld [vmem:[%s1 + $0xda8] sm:$0xff]
    %v464 = vld [vmem:[%s1 + $0xdb0] sm:$0xff]
    %v465 = vld [vmem:[%s1 + $0xdb8] sm:$0xff]
    %v466 = vld [vmem:[%s1 + $0xdc0] sm:$0xff]
    %v467 = vld [vmem:[%s1 + $0xdc8] sm:$0xff]
    %v468 = vld [vmem:[%s1 + $0xdd0] sm:$0xff]
    %v469 = vld [vmem:[%s1 + $0xdd8] sm:$0xff]
    %v470 = vld [vmem:[%s1 + $0xde0] sm:$0xff]
    %v471 = vld [vmem:[%s1 + $0xde8] sm:$0xff]
    %v472 = vld [vmem:[%s1 + $0xdf0] sm:$0xff]
    %v473 = vld [vmem:[%s1 + $0xdf8] sm:$0xff]
    %v474 = vld [vmem:[%s1 + $0xe00] sm:$0xff]
    %v475 = vld [vmem:[%s1 + $0xe08] sm:$0xff]
    %v476 = vld [vmem:[%s1 + $0xe10] sm:$0xff]
    %v477 = vld [vmem:[%s1 + $0xe18] sm:$0xff]
    %v478 = vld [vmem:[%s1 + $0xe20] sm:$0xff]
    %v479 = vld [vmem:[%s1 + $0xe28] sm:$0xff]
    %v480 = vld [vmem:[%s1 + $0xe30] sm:$0xff]
    %v481 = vld [vmem:[%s1 + $0xe38] sm:$0xff]
    %v482 = vld [vmem:[%s1 + $0xe40] sm:$0xff]
    %v483 = vld [vmem:[%s1 + $0xe48] sm:$0xff]
    %v484 = vld [vmem:[%s1 + $0xe50] sm:$0xff]
    %v485 = vld [vmem:[%s1 + $0xe58] sm:$0xff]
    %v486 = vld [vmem:[%s1 + $0xe60] sm:$0xff]
    %v487 = vld [vmem:[%s1 + $0xe68] sm:$0xff]
    %v488 = vld [vmem:[%s1 + $0xe70] sm:$0xff]
    %v489 = vld [vmem:[%s1 + $0xe78] sm:$0xff]
    %v490 = vld [vmem:[%s1 + $0xe80] sm:$0xff]
    %v491 = vld [vmem:[%s1 + $0xe88] sm:$0xff]
    %v492 = vld [vmem:[%s1 + $0xe90] sm:$0xff]
    %v493 = vld [vmem:[%s1 + $0xe98] sm:$0xff]
    %v494 = vld [vmem:[%s1 + $0xea0] sm:$0xff]
    %v495 = vld [vmem:[%s1 + $0xea8] sm:$0xff]
    %v496 = vld [vmem:[%s1 + $0xeb0] sm:$0xff]
    %v497 = vld [vmem:[%s1 + $0xeb8] sm:$0xff]
    %v498 = vld [vmem:[%s1 + $0xec0] sm:$0xff]
    %v499 = vld [vmem:[%s1 + $0xec8] sm:$0xff]
    %v500 = vld [vmem:[%s1 + $0xed0] sm:$0xff]
    %v501 = vld [vmem:[%s1 + $0xed8] sm:$0xff]
    %v502 = vld [vmem:[%s1 + $0xee0] sm:$0xff]
    %v503 = vld [vmem:[%s1 + $0xee8] sm:$0xff]
    %v504 = vld [vmem:[%s1 + $0xef0] sm:$0xff]
    %v505 = vld [vmem:[%s1 + $0xef8] sm:$0xff]
    %v506 = vld [vmem:[%s1 + $0xf00] sm:$0xff]
    %v507 = vld [vmem:[%s1 + $0xf08] sm:$0xff]
    %v508 = vld [vmem:[%s1 + $0xf10] sm:$0xff]
    %v509 = vld [vmem:[%s1 + $0xf18] sm:$0xff]
    %v510 = vld [vmem:[%s1 + $0xf20] sm:$0xff]
    %v511 = vld [vmem:[%s1 + $0xf28] sm:$0xff]
    %v512 = vld [vmem:[%s1 + $0xf30] sm:$0xff]
    %v513 = vld [vmem:[%s1 + $0xf38] sm:$0xff]
    %v514 = vld [vmem:[%s1 + $0xf40] sm:$0xff]
    %v515 = vld [vmem:[%s1 + $0xf48] sm:$0xff]
    %v516 = vld [vmem:[%s1 + $0xf50] sm:$0xff]
    %v517 = vld [vmem:[%s1 + $0xf58] sm:$0xff]
    %v518 = vld [vmem:[%s1 + $0xf60] sm:$0xff]
    %v519 = vld [vmem:[%s1 + $0xf68] sm:$0xff]
    %v520 = vld [vmem:[%s1 + $0xf70] sm:$0xff]
    %v521 = vld [vmem:[%s1 + $0xf78] sm:$0xff]
    %v522 = vld [vmem:[%s1 + $0xf80] sm:$0xff]
    %v523 = vld [vmem:[%s1 + $0xf88] sm:$0xff]
    %v524 = vld [vmem:[%s1 + $0xf90] sm:$0xff]
    %v525 = vld [vmem:[%s1 + $0xf98] sm:$0xff]
    %v526 = vld [vmem:[%s1 + $0xfa0] sm:$0xff]
    %v527 = vld [vmem:[%s1 + $0xfa8] sm:$0xff]
    %v528 = vld [vmem:[%s1 + $0xfb0] sm:$0xff]
    %v529 = vld [vmem:[%s1 + $0xfb8] sm:$0xff]
    %v530 = vld [vmem:[%s1 + $0xfc0] sm:$0xff]
    %v531 = vld [vmem:[%s1 + $0xfc8] sm:$0xff]
    %v532 = vld [vmem:[%s1 + $0xfd0] sm:$0xff]
    %v533 = vld [vmem:[%s1 + $0xfd8] sm:$0xff]
    %v534 = vld [vmem:[%s1 + $0xfe0] sm:$0xff]
    %v535 = vld [vmem:[%s1 + $0xfe8] sm:$0xff]
    %v536 = vld [vmem:[%s1 + $0xff0] sm:$0xff]
    %v537 = vld [vmem:[%s1 + $0xff8] sm:$0xff]
    %v538 = vld [vmem:[%s2] sm:$0xff]
    %v540 = vlaneseq
    %v541 = vshrl.u32 %v540, 7
    %v542 = vsub.s32 0, %v541
    %v543 = vrot.slane %v538, %v542
    %v544 = vlaneseq
    %v545 = vshrl.u32 %v544, 7
    %v546 = vsub.s32 1, %v545
    %v547 = vrot.slane %v538, %v546
    %v548 = vlaneseq
    %v549 = vshrl.u32 %v548, 7
    %v550 = vsub.s32 2, %v549
    %v551 = vrot.slane %v538, %v550
    %v552 = vlaneseq
    %v553 = vshrl.u32 %v552, 7
    %v554 = vsub.s32 3, %v553
    %v555 = vrot.slane %v538, %v554
    %v556 = vlaneseq
    %v557 = vshrl.u32 %v556, 7
    %v558 = vsub.s32 4, %v557
    %v559 = vrot.slane %v538, %v558
    %v560 = vlaneseq
    %v561 = vshrl.u32 %v560, 7
    %v562 = vsub.s32 5, %v561
    %v563 = vrot.slane %v538, %v562
    %v564 = vlaneseq
    %v565 = vshrl.u32 %v564, 7
    %v566 = vsub.s32 6, %v565
    %v567 = vrot.slane %v538, %v566
    %v568 = vlaneseq
    %v569 = vshrl.u32 %v568, 7
    %v570 = vsub.s32 7, %v569
    %v571 = vrot.slane %v538, %v570
    %v581 = vcombine.high %v25, %v25
    %v583 = vunpack.c.l.s4 1966171168
    %v584 = vunpack.c.0.s8 %v583
    %v585 = vlaneseq
    %v586 = vshrl.u32 %v585, 7
    %v587 = vsub.s32 %v584, %v586
    %v588 = vrot.slane %v25, %v587
    %v590 = vunpack.c.l.s4 1966171168
    %v591 = vunpack.c.0.s8 %v590
    %v592 = vlaneseq
    %v593 = vshrl.u32 %v592, 7
    %v594 = vsub.s32 %v591, %v593
    %v595 = vrot.slane %v581, %v594
    %v596 = vcombine.high %v588, %v588
    %v597 = vcombine.high %v595, %v595
    %v599 = vunpack.c.l.s4 1966171168
    %v600 = vunpack.c.0.s8 %v599
    %v601 = vlaneseq
    %v602 = vshrl.u32 %v601, 7
    %v603 = vsub.s32 %v600, %v602
    %v604 = vrot.slane %v588, %v603
    %v606 = vunpack.c.l.s4 1966171168
    %v607 = vunpack.c.0.s8 %v606
    %v608 = vlaneseq
    %v609 = vshrl.u32 %v608, 7
    %v610 = vsub.s32 %v607, %v609
    %v611 = vrot.slane %v595, %v610
    %v613 = vunpack.c.l.s4 1966171168
    %v614 = vunpack.c.0.s8 %v613
    %v615 = vlaneseq
    %v616 = vshrl.u32 %v615, 7
    %v617 = vsub.s32 %v614, %v616
    %v618 = vrot.slane %v596, %v617
    %v620 = vunpack.c.l.s4 1966171168
    %v621 = vunpack.c.0.s8 %v620
    %v622 = vlaneseq
    %v623 = vshrl.u32 %v622, 7
    %v624 = vsub.s32 %v621, %v623
    %v625 = vrot.slane %v597, %v624
    %v626 = vcombine.high %v604, %v604
    %v627 = vcombine.high %v611, %v611
    %v628 = vcombine.high %v618, %v618
    %v629 = vcombine.high %v625, %v625
    %v1150 = vunpack.c.l.b16 %v26
    %v1151 = vunpack.c.h.b16 %v26
    %v1152 = vunpack.c.l.b16 %v27
    %v1153 = vunpack.c.h.b16 %v27
    %v1154 = vunpack.c.l.b16 %v28
    %v1155 = vunpack.c.h.b16 %v28
    %v1156 = vunpack.c.l.b16 %v29
    %v1157 = vunpack.c.h.b16 %v29
    %v1158 = vunpack.c.l.b16 %v30
    %v1159 = vunpack.c.h.b16 %v30
    %v1160 = vunpack.c.l.b16 %v31
    %v1161 = vunpack.c.h.b16 %v31
    %v1162 = vunpack.c.l.b16 %v32
    %v1163 = vunpack.c.h.b16 %v32
    %v1164 = vunpack.c.l.b16 %v33
    %v1165 = vunpack.c.h.b16 %v33
    %v1166 = vunpack.c.l.b16 %v34
    %v1167 = vunpack.c.h.b16 %v34
    %v1168 = vunpack.c.l.b16 %v35
    %v1169 = vunpack.c.h.b16 %v35
    %v1170 = vunpack.c.l.b16 %v36
    %v1171 = vunpack.c.h.b16 %v36
    %v1172 = vunpack.c.l.b16 %v37
    %v1173 = vunpack.c.h.b16 %v37
    %v1174 = vunpack.c.l.b16 %v38
    %v1175 = vunpack.c.h.b16 %v38
    %v1176 = vunpack.c.l.b16 %v39
    %v1177 = vunpack.c.h.b16 %v39
    %v1178 = vunpack.c.l.b16 %v40
    %v1179 = vunpack.c.h.b16 %v40
    %v1180 = vunpack.c.l.b16 %v41
    %v1181 = vunpack.c.h.b16 %v41
    %v1182 = vunpack.c.l.b16 %v42
    %v1183 = vunpack.c.h.b16 %v42
    %v1184 = vunpack.c.l.b16 %v43
    %v1185 = vunpack.c.h.b16 %v43
    %v1186 = vunpack.c.l.b16 %v44
    %v1187 = vunpack.c.h.b16 %v44
    %v1188 = vunpack.c.l.b16 %v45
    %v1189 = vunpack.c.h.b16 %v45
    %v1190 = vunpack.c.l.b16 %v46
    %v1191 = vunpack.c.h.b16 %v46
    %v1192 = vunpack.c.l.b16 %v47
    %v1193 = vunpack.c.h.b16 %v47
    %v1194 = vunpack.c.l.b16 %v48
    %v1195 = vunpack.c.h.b16 %v48
    %v1196 = vunpack.c.l.b16 %v49
    %v1197 = vunpack.c.h.b16 %v49
    %v1198 = vunpack.c.l.b16 %v50
    %v1199 = vunpack.c.h.b16 %v50
    %v1200 = vunpack.c.l.b16 %v51
    %v1201 = vunpack.c.h.b16 %v51
    %v1202 = vunpack.c.l.b16 %v52
    %v1203 = vunpack.c.h.b16 %v52
    %v1204 = vunpack.c.l.b16 %v53
    %v1205 = vunpack.c.h.b16 %v53
    %v1206 = vunpack.c.l.b16 %v54
    %v1207 = vunpack.c.h.b16 %v54
    %v1208 = vunpack.c.l.b16 %v55
    %v1209 = vunpack.c.h.b16 %v55
    %v1210 = vunpack.c.l.b16 %v56
    %v1211 = vunpack.c.h.b16 %v56
    %v1212 = vunpack.c.l.b16 %v57
    %v1213 = vunpack.c.h.b16 %v57
    %v1214 = vunpack.c.l.b16 %v58
    %v1215 = vunpack.c.h.b16 %v58
    %v1216 = vunpack.c.l.b16 %v59
    %v1217 = vunpack.c.h.b16 %v59
    %v1218 = vunpack.c.l.b16 %v60
    %v1219 = vunpack.c.h.b16 %v60
    %v1220 = vunpack.c.l.b16 %v61
    %v1221 = vunpack.c.h.b16 %v61
    %v1222 = vunpack.c.l.b16 %v62
    %v1223 = vunpack.c.h.b16 %v62
    %v1224 = vunpack.c.l.b16 %v63
    %v1225 = vunpack.c.h.b16 %v63
    %v1226 = vunpack.c.l.b16 %v64
    %v1227 = vunpack.c.h.b16 %v64
    %v1228 = vunpack.c.l.b16 %v65
    %v1229 = vunpack.c.h.b16 %v65
    %v1230 = vunpack.c.l.b16 %v66
    %v1231 = vunpack.c.h.b16 %v66
    %v1232 = vunpack.c.l.b16 %v67
    %v1233 = vunpack.c.h.b16 %v67
    %v1234 = vunpack.c.l.b16 %v68
    %v1235 = vunpack.c.h.b16 %v68
    %v1236 = vunpack.c.l.b16 %v69
    %v1237 = vunpack.c.h.b16 %v69
    %v1238 = vunpack.c.l.b16 %v70
    %v1239 = vunpack.c.h.b16 %v70
    %v1240 = vunpack.c.l.b16 %v71
    %v1241 = vunpack.c.h.b16 %v71
    %v1242 = vunpack.c.l.b16 %v72
    %v1243 = vunpack.c.h.b16 %v72
    %v1244 = vunpack.c.l.b16 %v73
    %v1245 = vunpack.c.h.b16 %v73
    %v1246 = vunpack.c.l.b16 %v74
    %v1247 = vunpack.c.h.b16 %v74
    %v1248 = vunpack.c.l.b16 %v75
    %v1249 = vunpack.c.h.b16 %v75
    %v1250 = vunpack.c.l.b16 %v76
    %v1251 = vunpack.c.h.b16 %v76
    %v1252 = vunpack.c.l.b16 %v77
    %v1253 = vunpack.c.h.b16 %v77
    %v1254 = vunpack.c.l.b16 %v78
    %v1255 = vunpack.c.h.b16 %v78
    %v1256 = vunpack.c.l.b16 %v79
    %v1257 = vunpack.c.h.b16 %v79
    %v1258 = vunpack.c.l.b16 %v80
    %v1259 = vunpack.c.h.b16 %v80
    %v1260 = vunpack.c.l.b16 %v81
    %v1261 = vunpack.c.h.b16 %v81
    %v1262 = vunpack.c.l.b16 %v82
    %v1263 = vunpack.c.h.b16 %v82
    %v1264 = vunpack.c.l.b16 %v83
    %v1265 = vunpack.c.h.b16 %v83
    %v1266 = vunpack.c.l.b16 %v84
    %v1267 = vunpack.c.h.b16 %v84
    %v1268 = vunpack.c.l.b16 %v85
    %v1269 = vunpack.c.h.b16 %v85
    %v1270 = vunpack.c.l.b16 %v86
    %v1271 = vunpack.c.h.b16 %v86
    %v1272 = vunpack.c.l.b16 %v87
    %v1273 = vunpack.c.h.b16 %v87
    %v1274 = vunpack.c.l.b16 %v88
    %v1275 = vunpack.c.h.b16 %v88
    %v1276 = vunpack.c.l.b16 %v89
    %v1277 = vunpack.c.h.b16 %v89
    %v1278 = vunpack.c.l.b16 %v90
    %v1279 = vunpack.c.h.b16 %v90
    %v1280 = vunpack.c.l.b16 %v91
    %v1281 = vunpack.c.h.b16 %v91
    %v1282 = vunpack.c.l.b16 %v92
    %v1283 = vunpack.c.h.b16 %v92
    %v1284 = vunpack.c.l.b16 %v93
    %v1285 = vunpack.c.h.b16 %v93
    %v1286 = vunpack.c.l.b16 %v94
    %v1287 = vunpack.c.h.b16 %v94
    %v1288 = vunpack.c.l.b16 %v95
    %v1289 = vunpack.c.h.b16 %v95
    %v1290 = vunpack.c.l.b16 %v96
    %v1291 = vunpack.c.h.b16 %v96
    %v1292 = vunpack.c.l.b16 %v97
    %v1293 = vunpack.c.h.b16 %v97
    %v1294 = vunpack.c.l.b16 %v98
    %v1295 = vunpack.c.h.b16 %v98
    %v1296 = vunpack.c.l.b16 %v99
    %v1297 = vunpack.c.h.b16 %v99
    %v1298 = vunpack.c.l.b16 %v100
    %v1299 = vunpack.c.h.b16 %v100
    %v1300 = vunpack.c.l.b16 %v101
    %v1301 = vunpack.c.h.b16 %v101
    %v1302 = vunpack.c.l.b16 %v102
    %v1303 = vunpack.c.h.b16 %v102
    %v1304 = vunpack.c.l.b16 %v103
    %v1305 = vunpack.c.h.b16 %v103
    %v1306 = vunpack.c.l.b16 %v104
    %v1307 = vunpack.c.h.b16 %v104
    %v1308 = vunpack.c.l.b16 %v105
    %v1309 = vunpack.c.h.b16 %v105
    %v1310 = vunpack.c.l.b16 %v106
    %v1311 = vunpack.c.h.b16 %v106
    %v1312 = vunpack.c.l.b16 %v107
    %v1313 = vunpack.c.h.b16 %v107
    %v1314 = vunpack.c.l.b16 %v108
    %v1315 = vunpack.c.h.b16 %v108
    %v1316 = vunpack.c.l.b16 %v109
    %v1317 = vunpack.c.h.b16 %v109
    %v1318 = vunpack.c.l.b16 %v110
    %v1319 = vunpack.c.h.b16 %v110
    %v1320 = vunpack.c.l.b16 %v111
    %v1321 = vunpack.c.h.b16 %v111
    %v1322 = vunpack.c.l.b16 %v112
    %v1323 = vunpack.c.h.b16 %v112
    %v1324 = vunpack.c.l.b16 %v113
    %v1325 = vunpack.c.h.b16 %v113
    %v1326 = vunpack.c.l.b16 %v114
    %v1327 = vunpack.c.h.b16 %v114
    %v1328 = vunpack.c.l.b16 %v115
    %v1329 = vunpack.c.h.b16 %v115
    %v1330 = vunpack.c.l.b16 %v116
    %v1331 = vunpack.c.h.b16 %v116
    %v1332 = vunpack.c.l.b16 %v117
    %v1333 = vunpack.c.h.b16 %v117
    %v1334 = vunpack.c.l.b16 %v118
    %v1335 = vunpack.c.h.b16 %v118
    %v1336 = vunpack.c.l.b16 %v119
    %v1337 = vunpack.c.h.b16 %v119
    %v1338 = vunpack.c.l.b16 %v120
    %v1339 = vunpack.c.h.b16 %v120
    %v1340 = vunpack.c.l.b16 %v121
    %v1341 = vunpack.c.h.b16 %v121
    %v1342 = vunpack.c.l.b16 %v122
    %v1343 = vunpack.c.h.b16 %v122
    %v1344 = vunpack.c.l.b16 %v123
    %v1345 = vunpack.c.h.b16 %v123
    %v1346 = vunpack.c.l.b16 %v124
    %v1347 = vunpack.c.h.b16 %v124
    %v1348 = vunpack.c.l.b16 %v125
    %v1349 = vunpack.c.h.b16 %v125
    %v1350 = vunpack.c.l.b16 %v126
    %v1351 = vunpack.c.h.b16 %v126
    %v1352 = vunpack.c.l.b16 %v127
    %v1353 = vunpack.c.h.b16 %v127
    %v1354 = vunpack.c.l.b16 %v128
    %v1355 = vunpack.c.h.b16 %v128
    %v1356 = vunpack.c.l.b16 %v129
    %v1357 = vunpack.c.h.b16 %v129
    %v1358 = vunpack.c.l.b16 %v130
    %v1359 = vunpack.c.h.b16 %v130
    %v1360 = vunpack.c.l.b16 %v131
    %v1361 = vunpack.c.h.b16 %v131
    %v1362 = vunpack.c.l.b16 %v132
    %v1363 = vunpack.c.h.b16 %v132
    %v1364 = vunpack.c.l.b16 %v133
    %v1365 = vunpack.c.h.b16 %v133
    %v1366 = vunpack.c.l.b16 %v134
    %v1367 = vunpack.c.h.b16 %v134
    %v1368 = vunpack.c.l.b16 %v135
    %v1369 = vunpack.c.h.b16 %v135
    %v1370 = vunpack.c.l.b16 %v136
    %v1371 = vunpack.c.h.b16 %v136
    %v1372 = vunpack.c.l.b16 %v137
    %v1373 = vunpack.c.h.b16 %v137
    %v1374 = vunpack.c.l.b16 %v138
    %v1375 = vunpack.c.h.b16 %v138
    %v1376 = vunpack.c.l.b16 %v139
    %v1377 = vunpack.c.h.b16 %v139
    %v1378 = vunpack.c.l.b16 %v140
    %v1379 = vunpack.c.h.b16 %v140
    %v1380 = vunpack.c.l.b16 %v141
    %v1381 = vunpack.c.h.b16 %v141
    %v1382 = vunpack.c.l.b16 %v142
    %v1383 = vunpack.c.h.b16 %v142
    %v1384 = vunpack.c.l.b16 %v143
    %v1385 = vunpack.c.h.b16 %v143
    %v1386 = vunpack.c.l.b16 %v144
    %v1387 = vunpack.c.h.b16 %v144
    %v1388 = vunpack.c.l.b16 %v145
    %v1389 = vunpack.c.h.b16 %v145
    %v1390 = vunpack.c.l.b16 %v146
    %v1391 = vunpack.c.h.b16 %v146
    %v1392 = vunpack.c.l.b16 %v147
    %v1393 = vunpack.c.h.b16 %v147
    %v1394 = vunpack.c.l.b16 %v148
    %v1395 = vunpack.c.h.b16 %v148
    %v1396 = vunpack.c.l.b16 %v149
    %v1397 = vunpack.c.h.b16 %v149
    %v1398 = vunpack.c.l.b16 %v150
    %v1399 = vunpack.c.h.b16 %v150
    %v1400 = vunpack.c.l.b16 %v151
    %v1401 = vunpack.c.h.b16 %v151
    %v1402 = vunpack.c.l.b16 %v152
    %v1403 = vunpack.c.h.b16 %v152
    %v1404 = vunpack.c.l.b16 %v153
    %v1405 = vunpack.c.h.b16 %v153
    %v1406 = vunpack.c.l.b16 %v154
    %v1407 = vunpack.c.h.b16 %v154
    %v1408 = vunpack.c.l.b16 %v155
    %v1409 = vunpack.c.h.b16 %v155
    %v1410 = vunpack.c.l.b16 %v156
    %v1411 = vunpack.c.h.b16 %v156
    %v1412 = vunpack.c.l.b16 %v157
    %v1413 = vunpack.c.h.b16 %v157
    %v1414 = vunpack.c.l.b16 %v158
    %v1415 = vunpack.c.h.b16 %v158
    %v1416 = vunpack.c.l.b16 %v159
    %v1417 = vunpack.c.h.b16 %v159
    %v1418 = vunpack.c.l.b16 %v160
    %v1419 = vunpack.c.h.b16 %v160
    %v1420 = vunpack.c.l.b16 %v161
    %v1421 = vunpack.c.h.b16 %v161
    %v1422 = vunpack.c.l.b16 %v162
    %v1423 = vunpack.c.h.b16 %v162
    %v1424 = vunpack.c.l.b16 %v163
    %v1425 = vunpack.c.h.b16 %v163
    %v1426 = vunpack.c.l.b16 %v164
    %v1427 = vunpack.c.h.b16 %v164
    %v1428 = vunpack.c.l.b16 %v165
    %v1429 = vunpack.c.h.b16 %v165
    %v1430 = vunpack.c.l.b16 %v166
    %v1431 = vunpack.c.h.b16 %v166
    %v1432 = vunpack.c.l.b16 %v167
    %v1433 = vunpack.c.h.b16 %v167
    %v1434 = vunpack.c.l.b16 %v168
    %v1435 = vunpack.c.h.b16 %v168
    %v1436 = vunpack.c.l.b16 %v169
    %v1437 = vunpack.c.h.b16 %v169
    %v1438 = vunpack.c.l.b16 %v170
    %v1439 = vunpack.c.h.b16 %v170
    %v1440 = vunpack.c.l.b16 %v171
    %v1441 = vunpack.c.h.b16 %v171
    %v1442 = vunpack.c.l.b16 %v172
    %v1443 = vunpack.c.h.b16 %v172
    %v1444 = vunpack.c.l.b16 %v173
    %v1445 = vunpack.c.h.b16 %v173
    %v1446 = vunpack.c.l.b16 %v174
    %v1447 = vunpack.c.h.b16 %v174
    %v1448 = vunpack.c.l.b16 %v175
    %v1449 = vunpack.c.h.b16 %v175
    %v1450 = vunpack.c.l.b16 %v176
    %v1451 = vunpack.c.h.b16 %v176
    %v1452 = vunpack.c.l.b16 %v177
    %v1453 = vunpack.c.h.b16 %v177
    %v1454 = vunpack.c.l.b16 %v178
    %v1455 = vunpack.c.h.b16 %v178
    %v1456 = vunpack.c.l.b16 %v179
    %v1457 = vunpack.c.h.b16 %v179
    %v1458 = vunpack.c.l.b16 %v180
    %v1459 = vunpack.c.h.b16 %v180
    %v1460 = vunpack.c.l.b16 %v181
    %v1461 = vunpack.c.h.b16 %v181
    %v1462 = vunpack.c.l.b16 %v182
    %v1463 = vunpack.c.h.b16 %v182
    %v1464 = vunpack.c.l.b16 %v183
    %v1465 = vunpack.c.h.b16 %v183
    %v1466 = vunpack.c.l.b16 %v184
    %v1467 = vunpack.c.h.b16 %v184
    %v1468 = vunpack.c.l.b16 %v185
    %v1469 = vunpack.c.h.b16 %v185
    %v1470 = vunpack.c.l.b16 %v186
    %v1471 = vunpack.c.h.b16 %v186
    %v1472 = vunpack.c.l.b16 %v187
    %v1473 = vunpack.c.h.b16 %v187
    %v1474 = vunpack.c.l.b16 %v188
    %v1475 = vunpack.c.h.b16 %v188
    %v1476 = vunpack.c.l.b16 %v189
    %v1477 = vunpack.c.h.b16 %v189
    %v1478 = vunpack.c.l.b16 %v190
    %v1479 = vunpack.c.h.b16 %v190
    %v1480 = vunpack.c.l.b16 %v191
    %v1481 = vunpack.c.h.b16 %v191
    %v1482 = vunpack.c.l.b16 %v192
    %v1483 = vunpack.c.h.b16 %v192
    %v1484 = vunpack.c.l.b16 %v193
    %v1485 = vunpack.c.h.b16 %v193
    %v1486 = vunpack.c.l.b16 %v194
    %v1487 = vunpack.c.h.b16 %v194
    %v1488 = vunpack.c.l.b16 %v195
    %v1489 = vunpack.c.h.b16 %v195
    %v1490 = vunpack.c.l.b16 %v196
    %v1491 = vunpack.c.h.b16 %v196
    %v1492 = vunpack.c.l.b16 %v197
    %v1493 = vunpack.c.h.b16 %v197
    %v1494 = vunpack.c.l.b16 %v198
    %v1495 = vunpack.c.h.b16 %v198
    %v1496 = vunpack.c.l.b16 %v199
    %v1497 = vunpack.c.h.b16 %v199
    %v1498 = vunpack.c.l.b16 %v200
    %v1499 = vunpack.c.h.b16 %v200
    %v1500 = vunpack.c.l.b16 %v201
    %v1501 = vunpack.c.h.b16 %v201
    %v1502 = vunpack.c.l.b16 %v202
    %v1503 = vunpack.c.h.b16 %v202
    %v1504 = vunpack.c.l.b16 %v203
    %v1505 = vunpack.c.h.b16 %v203
    %v1506 = vunpack.c.l.b16 %v204
    %v1507 = vunpack.c.h.b16 %v204
    %v1508 = vunpack.c.l.b16 %v205
    %v1509 = vunpack.c.h.b16 %v205
    %v1510 = vunpack.c.l.b16 %v206
    %v1511 = vunpack.c.h.b16 %v206
    %v1512 = vunpack.c.l.b16 %v207
    %v1513 = vunpack.c.h.b16 %v207
    %v1514 = vunpack.c.l.b16 %v208
    %v1515 = vunpack.c.h.b16 %v208
    %v1516 = vunpack.c.l.b16 %v209
    %v1517 = vunpack.c.h.b16 %v209
    %v1518 = vunpack.c.l.b16 %v210
    %v1519 = vunpack.c.h.b16 %v210
    %v1520 = vunpack.c.l.b16 %v211
    %v1521 = vunpack.c.h.b16 %v211
    %v1522 = vunpack.c.l.b16 %v212
    %v1523 = vunpack.c.h.b16 %v212
    %v1524 = vunpack.c.l.b16 %v213
    %v1525 = vunpack.c.h.b16 %v213
    %v1526 = vunpack.c.l.b16 %v214
    %v1527 = vunpack.c.h.b16 %v214
    %v1528 = vunpack.c.l.b16 %v215
    %v1529 = vunpack.c.h.b16 %v215
    %v1530 = vunpack.c.l.b16 %v216
    %v1531 = vunpack.c.h.b16 %v216
    %v1532 = vunpack.c.l.b16 %v217
    %v1533 = vunpack.c.h.b16 %v217
    %v1534 = vunpack.c.l.b16 %v218
    %v1535 = vunpack.c.h.b16 %v218
    %v1536 = vunpack.c.l.b16 %v219
    %v1537 = vunpack.c.h.b16 %v219
    %v1538 = vunpack.c.l.b16 %v220
    %v1539 = vunpack.c.h.b16 %v220
    %v1540 = vunpack.c.l.b16 %v221
    %v1541 = vunpack.c.h.b16 %v221
    %v1542 = vunpack.c.l.b16 %v222
    %v1543 = vunpack.c.h.b16 %v222
    %v1544 = vunpack.c.l.b16 %v223
    %v1545 = vunpack.c.h.b16 %v223
    %v1546 = vunpack.c.l.b16 %v224
    %v1547 = vunpack.c.h.b16 %v224
    %v1548 = vunpack.c.l.b16 %v225
    %v1549 = vunpack.c.h.b16 %v225
    %v1550 = vunpack.c.l.b16 %v226
    %v1551 = vunpack.c.h.b16 %v226
    %v1552 = vunpack.c.l.b16 %v227
    %v1553 = vunpack.c.h.b16 %v227
    %v1554 = vunpack.c.l.b16 %v228
    %v1555 = vunpack.c.h.b16 %v228
    %v1556 = vunpack.c.l.b16 %v229
    %v1557 = vunpack.c.h.b16 %v229
    %v1558 = vunpack.c.l.b16 %v230
    %v1559 = vunpack.c.h.b16 %v230
    %v1560 = vunpack.c.l.b16 %v231
    %v1561 = vunpack.c.h.b16 %v231
    %v1562 = vunpack.c.l.b16 %v232
    %v1563 = vunpack.c.h.b16 %v232
    %v1564 = vunpack.c.l.b16 %v233
    %v1565 = vunpack.c.h.b16 %v233
    %v1566 = vunpack.c.l.b16 %v234
    %v1567 = vunpack.c.h.b16 %v234
    %v1568 = vunpack.c.l.b16 %v235
    %v1569 = vunpack.c.h.b16 %v235
    %v1570 = vunpack.c.l.b16 %v236
    %v1571 = vunpack.c.h.b16 %v236
    %v1572 = vunpack.c.l.b16 %v237
    %v1573 = vunpack.c.h.b16 %v237
    %v1574 = vunpack.c.l.b16 %v238
    %v1575 = vunpack.c.h.b16 %v238
    %v1576 = vunpack.c.l.b16 %v239
    %v1577 = vunpack.c.h.b16 %v239
    %v1578 = vunpack.c.l.b16 %v240
    %v1579 = vunpack.c.h.b16 %v240
    %v1580 = vunpack.c.l.b16 %v241
    %v1581 = vunpack.c.h.b16 %v241
    %v1582 = vunpack.c.l.b16 %v242
    %v1583 = vunpack.c.h.b16 %v242
    %v1584 = vunpack.c.l.b16 %v243
    %v1585 = vunpack.c.h.b16 %v243
    %v1586 = vunpack.c.l.b16 %v244
    %v1587 = vunpack.c.h.b16 %v244
    %v1588 = vunpack.c.l.b16 %v245
    %v1589 = vunpack.c.h.b16 %v245
    %v1590 = vunpack.c.l.b16 %v246
    %v1591 = vunpack.c.h.b16 %v246
    %v1592 = vunpack.c.l.b16 %v247
    %v1593 = vunpack.c.h.b16 %v247
    %v1594 = vunpack.c.l.b16 %v248
    %v1595 = vunpack.c.h.b16 %v248
    %v1596 = vunpack.c.l.b16 %v249
    %v1597 = vunpack.c.h.b16 %v249
    %v1598 = vunpack.c.l.b16 %v250
    %v1599 = vunpack.c.h.b16 %v250
    %v1600 = vunpack.c.l.b16 %v251
    %v1601 = vunpack.c.h.b16 %v251
    %v1602 = vunpack.c.l.b16 %v252
    %v1603 = vunpack.c.h.b16 %v252
    %v1604 = vunpack.c.l.b16 %v253
    %v1605 = vunpack.c.h.b16 %v253
    %v1606 = vunpack.c.l.b16 %v254
    %v1607 = vunpack.c.h.b16 %v254
    %v1608 = vunpack.c.l.b16 %v255
    %v1609 = vunpack.c.h.b16 %v255
    %v1610 = vunpack.c.l.b16 %v256
    %v1611 = vunpack.c.h.b16 %v256
    %v1612 = vunpack.c.l.b16 %v257
    %v1613 = vunpack.c.h.b16 %v257
    %v1614 = vunpack.c.l.b16 %v258
    %v1615 = vunpack.c.h.b16 %v258
    %v1616 = vunpack.c.l.b16 %v259
    %v1617 = vunpack.c.h.b16 %v259
    %v1618 = vunpack.c.l.b16 %v260
    %v1619 = vunpack.c.h.b16 %v260
    %v1620 = vunpack.c.l.b16 %v261
    %v1621 = vunpack.c.h.b16 %v261
    %v1622 = vunpack.c.l.b16 %v262
    %v1623 = vunpack.c.h.b16 %v262
    %v1624 = vunpack.c.l.b16 %v263
    %v1625 = vunpack.c.h.b16 %v263
    %v1626 = vunpack.c.l.b16 %v264
    %v1627 = vunpack.c.h.b16 %v264
    %v1628 = vunpack.c.l.b16 %v265
    %v1629 = vunpack.c.h.b16 %v265
    %v1630 = vunpack.c.l.b16 %v266
    %v1631 = vunpack.c.h.b16 %v266
    %v1632 = vunpack.c.l.b16 %v267
    %v1633 = vunpack.c.h.b16 %v267
    %v1634 = vunpack.c.l.b16 %v268
    %v1635 = vunpack.c.h.b16 %v268
    %v1636 = vunpack.c.l.b16 %v269
    %v1637 = vunpack.c.h.b16 %v269
    %v1638 = vunpack.c.l.b16 %v270
    %v1639 = vunpack.c.h.b16 %v270
    %v1640 = vunpack.c.l.b16 %v271
    %v1641 = vunpack.c.h.b16 %v271
    %v1642 = vunpack.c.l.b16 %v272
    %v1643 = vunpack.c.h.b16 %v272
    %v1644 = vunpack.c.l.b16 %v273
    %v1645 = vunpack.c.h.b16 %v273
    %v1646 = vunpack.c.l.b16 %v274
    %v1647 = vunpack.c.h.b16 %v274
    %v1648 = vunpack.c.l.b16 %v275
    %v1649 = vunpack.c.h.b16 %v275
    %v1650 = vunpack.c.l.b16 %v276
    %v1651 = vunpack.c.h.b16 %v276
    %v1652 = vunpack.c.l.b16 %v277
    %v1653 = vunpack.c.h.b16 %v277
    %v1654 = vunpack.c.l.b16 %v278
    %v1655 = vunpack.c.h.b16 %v278
    %v1656 = vunpack.c.l.b16 %v279
    %v1657 = vunpack.c.h.b16 %v279
    %v1658 = vunpack.c.l.b16 %v280
    %v1659 = vunpack.c.h.b16 %v280
    %v1660 = vunpack.c.l.b16 %v281
    %v1661 = vunpack.c.h.b16 %v281
    %v1662 = vunpack.c.l.b16 %v282
    %v1663 = vunpack.c.h.b16 %v282
    %v1664 = vunpack.c.l.b16 %v283
    %v1665 = vunpack.c.h.b16 %v283
    %v1666 = vunpack.c.l.b16 %v284
    %v1667 = vunpack.c.h.b16 %v284
    %v1668 = vunpack.c.l.b16 %v285
    %v1669 = vunpack.c.h.b16 %v285
    %v1670 = vunpack.c.l.b16 %v286
    %v1671 = vunpack.c.h.b16 %v286
    %v1672 = vunpack.c.l.b16 %v287
    %v1673 = vunpack.c.h.b16 %v287
    %v1674 = vunpack.c.l.b16 %v288
    %v1675 = vunpack.c.h.b16 %v288
    %v1676 = vunpack.c.l.b16 %v289
    %v1677 = vunpack.c.h.b16 %v289
    %v1678 = vunpack.c.l.b16 %v290
    %v1679 = vunpack.c.h.b16 %v290
    %v1680 = vunpack.c.l.b16 %v291
    %v1681 = vunpack.c.h.b16 %v291
    %v1682 = vunpack.c.l.b16 %v292
    %v1683 = vunpack.c.h.b16 %v292
    %v1684 = vunpack.c.l.b16 %v293
    %v1685 = vunpack.c.h.b16 %v293
    %v1686 = vunpack.c.l.b16 %v294
    %v1687 = vunpack.c.h.b16 %v294
    %v1688 = vunpack.c.l.b16 %v295
    %v1689 = vunpack.c.h.b16 %v295
    %v1690 = vunpack.c.l.b16 %v296
    %v1691 = vunpack.c.h.b16 %v296
    %v1692 = vunpack.c.l.b16 %v297
    %v1693 = vunpack.c.h.b16 %v297
    %v1694 = vunpack.c.l.b16 %v298
    %v1695 = vunpack.c.h.b16 %v298
    %v1696 = vunpack.c.l.b16 %v299
    %v1697 = vunpack.c.h.b16 %v299
    %v1698 = vunpack.c.l.b16 %v300
    %v1699 = vunpack.c.h.b16 %v300
    %v1700 = vunpack.c.l.b16 %v301
    %v1701 = vunpack.c.h.b16 %v301
    %v1702 = vunpack.c.l.b16 %v302
    %v1703 = vunpack.c.h.b16 %v302
    %v1704 = vunpack.c.l.b16 %v303
    %v1705 = vunpack.c.h.b16 %v303
    %v1706 = vunpack.c.l.b16 %v304
    %v1707 = vunpack.c.h.b16 %v304
    %v1708 = vunpack.c.l.b16 %v305
    %v1709 = vunpack.c.h.b16 %v305
    %v1710 = vunpack.c.l.b16 %v306
    %v1711 = vunpack.c.h.b16 %v306
    %v1712 = vunpack.c.l.b16 %v307
    %v1713 = vunpack.c.h.b16 %v307
    %v1714 = vunpack.c.l.b16 %v308
    %v1715 = vunpack.c.h.b16 %v308
    %v1716 = vunpack.c.l.b16 %v309
    %v1717 = vunpack.c.h.b16 %v309
    %v1718 = vunpack.c.l.b16 %v310
    %v1719 = vunpack.c.h.b16 %v310
    %v1720 = vunpack.c.l.b16 %v311
    %v1721 = vunpack.c.h.b16 %v311
    %v1722 = vunpack.c.l.b16 %v312
    %v1723 = vunpack.c.h.b16 %v312
    %v1724 = vunpack.c.l.b16 %v313
    %v1725 = vunpack.c.h.b16 %v313
    %v1726 = vunpack.c.l.b16 %v314
    %v1727 = vunpack.c.h.b16 %v314
    %v1728 = vunpack.c.l.b16 %v315
    %v1729 = vunpack.c.h.b16 %v315
    %v1730 = vunpack.c.l.b16 %v316
    %v1731 = vunpack.c.h.b16 %v316
    %v1732 = vunpack.c.l.b16 %v317
    %v1733 = vunpack.c.h.b16 %v317
    %v1734 = vunpack.c.l.b16 %v318
    %v1735 = vunpack.c.h.b16 %v318
    %v1736 = vunpack.c.l.b16 %v319
    %v1737 = vunpack.c.h.b16 %v319
    %v1738 = vunpack.c.l.b16 %v320
    %v1739 = vunpack.c.h.b16 %v320
    %v1740 = vunpack.c.l.b16 %v321
    %v1741 = vunpack.c.h.b16 %v321
    %v1742 = vunpack.c.l.b16 %v322
    %v1743 = vunpack.c.h.b16 %v322
    %v1744 = vunpack.c.l.b16 %v323
    %v1745 = vunpack.c.h.b16 %v323
    %v1746 = vunpack.c.l.b16 %v324
    %v1747 = vunpack.c.h.b16 %v324
    %v1748 = vunpack.c.l.b16 %v325
    %v1749 = vunpack.c.h.b16 %v325
    %v1750 = vunpack.c.l.b16 %v326
    %v1751 = vunpack.c.h.b16 %v326
    %v1752 = vunpack.c.l.b16 %v327
    %v1753 = vunpack.c.h.b16 %v327
    %v1754 = vunpack.c.l.b16 %v328
    %v1755 = vunpack.c.h.b16 %v328
    %v1756 = vunpack.c.l.b16 %v329
    %v1757 = vunpack.c.h.b16 %v329
    %v1758 = vunpack.c.l.b16 %v330
    %v1759 = vunpack.c.h.b16 %v330
    %v1760 = vunpack.c.l.b16 %v331
    %v1761 = vunpack.c.h.b16 %v331
    %v1762 = vunpack.c.l.b16 %v332
    %v1763 = vunpack.c.h.b16 %v332
    %v1764 = vunpack.c.l.b16 %v333
    %v1765 = vunpack.c.h.b16 %v333
    %v1766 = vunpack.c.l.b16 %v334
    %v1767 = vunpack.c.h.b16 %v334
    %v1768 = vunpack.c.l.b16 %v335
    %v1769 = vunpack.c.h.b16 %v335
    %v1770 = vunpack.c.l.b16 %v336
    %v1771 = vunpack.c.h.b16 %v336
    %v1772 = vunpack.c.l.b16 %v337
    %v1773 = vunpack.c.h.b16 %v337
    %v1774 = vunpack.c.l.b16 %v338
    %v1775 = vunpack.c.h.b16 %v338
    %v1776 = vunpack.c.l.b16 %v339
    %v1777 = vunpack.c.h.b16 %v339
    %v1778 = vunpack.c.l.b16 %v340
    %v1779 = vunpack.c.h.b16 %v340
    %v1780 = vunpack.c.l.b16 %v341
    %v1781 = vunpack.c.h.b16 %v341
    %v1782 = vunpack.c.l.b16 %v342
    %v1783 = vunpack.c.h.b16 %v342
    %v1784 = vunpack.c.l.b16 %v343
    %v1785 = vunpack.c.h.b16 %v343
    %v1786 = vunpack.c.l.b16 %v344
    %v1787 = vunpack.c.h.b16 %v344
    %v1788 = vunpack.c.l.b16 %v345
    %v1789 = vunpack.c.h.b16 %v345
    %v1790 = vunpack.c.l.b16 %v346
    %v1791 = vunpack.c.h.b16 %v346
    %v1792 = vunpack.c.l.b16 %v347
    %v1793 = vunpack.c.h.b16 %v347
    %v1794 = vunpack.c.l.b16 %v348
    %v1795 = vunpack.c.h.b16 %v348
    %v1796 = vunpack.c.l.b16 %v349
    %v1797 = vunpack.c.h.b16 %v349
    %v1798 = vunpack.c.l.b16 %v350
    %v1799 = vunpack.c.h.b16 %v350
    %v1800 = vunpack.c.l.b16 %v351
    %v1801 = vunpack.c.h.b16 %v351
    %v1802 = vunpack.c.l.b16 %v352
    %v1803 = vunpack.c.h.b16 %v352
    %v1804 = vunpack.c.l.b16 %v353
    %v1805 = vunpack.c.h.b16 %v353
    %v1806 = vunpack.c.l.b16 %v354
    %v1807 = vunpack.c.h.b16 %v354
    %v1808 = vunpack.c.l.b16 %v355
    %v1809 = vunpack.c.h.b16 %v355
    %v1810 = vunpack.c.l.b16 %v356
    %v1811 = vunpack.c.h.b16 %v356
    %v1812 = vunpack.c.l.b16 %v357
    %v1813 = vunpack.c.h.b16 %v357
    %v1814 = vunpack.c.l.b16 %v358
    %v1815 = vunpack.c.h.b16 %v358
    %v1816 = vunpack.c.l.b16 %v359
    %v1817 = vunpack.c.h.b16 %v359
    %v1818 = vunpack.c.l.b16 %v360
    %v1819 = vunpack.c.h.b16 %v360
    %v1820 = vunpack.c.l.b16 %v361
    %v1821 = vunpack.c.h.b16 %v361
    %v1822 = vunpack.c.l.b16 %v362
    %v1823 = vunpack.c.h.b16 %v362
    %v1824 = vunpack.c.l.b16 %v363
    %v1825 = vunpack.c.h.b16 %v363
    %v1826 = vunpack.c.l.b16 %v364
    %v1827 = vunpack.c.h.b16 %v364
    %v1828 = vunpack.c.l.b16 %v365
    %v1829 = vunpack.c.h.b16 %v365
    %v1830 = vunpack.c.l.b16 %v366
    %v1831 = vunpack.c.h.b16 %v366
    %v1832 = vunpack.c.l.b16 %v367
    %v1833 = vunpack.c.h.b16 %v367
    %v1834 = vunpack.c.l.b16 %v368
    %v1835 = vunpack.c.h.b16 %v368
    %v1836 = vunpack.c.l.b16 %v369
    %v1837 = vunpack.c.h.b16 %v369
    %v1838 = vunpack.c.l.b16 %v370
    %v1839 = vunpack.c.h.b16 %v370
    %v1840 = vunpack.c.l.b16 %v371
    %v1841 = vunpack.c.h.b16 %v371
    %v1842 = vunpack.c.l.b16 %v372
    %v1843 = vunpack.c.h.b16 %v372
    %v1844 = vunpack.c.l.b16 %v373
    %v1845 = vunpack.c.h.b16 %v373
    %v1846 = vunpack.c.l.b16 %v374
    %v1847 = vunpack.c.h.b16 %v374
    %v1848 = vunpack.c.l.b16 %v375
    %v1849 = vunpack.c.h.b16 %v375
    %v1850 = vunpack.c.l.b16 %v376
    %v1851 = vunpack.c.h.b16 %v376
    %v1852 = vunpack.c.l.b16 %v377
    %v1853 = vunpack.c.h.b16 %v377
    %v1854 = vunpack.c.l.b16 %v378
    %v1855 = vunpack.c.h.b16 %v378
    %v1856 = vunpack.c.l.b16 %v379
    %v1857 = vunpack.c.h.b16 %v379
    %v1858 = vunpack.c.l.b16 %v380
    %v1859 = vunpack.c.h.b16 %v380
    %v1860 = vunpack.c.l.b16 %v381
    %v1861 = vunpack.c.h.b16 %v381
    %v1862 = vunpack.c.l.b16 %v382
    %v1863 = vunpack.c.h.b16 %v382
    %v1864 = vunpack.c.l.b16 %v383
    %v1865 = vunpack.c.h.b16 %v383
    %v1866 = vunpack.c.l.b16 %v384
    %v1867 = vunpack.c.h.b16 %v384
    %v1868 = vunpack.c.l.b16 %v385
    %v1869 = vunpack.c.h.b16 %v385
    %v1870 = vunpack.c.l.b16 %v386
    %v1871 = vunpack.c.h.b16 %v386
    %v1872 = vunpack.c.l.b16 %v387
    %v1873 = vunpack.c.h.b16 %v387
    %v1874 = vunpack.c.l.b16 %v388
    %v1875 = vunpack.c.h.b16 %v388
    %v1876 = vunpack.c.l.b16 %v389
    %v1877 = vunpack.c.h.b16 %v389
    %v1878 = vunpack.c.l.b16 %v390
    %v1879 = vunpack.c.h.b16 %v390
    %v1880 = vunpack.c.l.b16 %v391
    %v1881 = vunpack.c.h.b16 %v391
    %v1882 = vunpack.c.l.b16 %v392
    %v1883 = vunpack.c.h.b16 %v392
    %v1884 = vunpack.c.l.b16 %v393
    %v1885 = vunpack.c.h.b16 %v393
    %v1886 = vunpack.c.l.b16 %v394
    %v1887 = vunpack.c.h.b16 %v394
    %v1888 = vunpack.c.l.b16 %v395
    %v1889 = vunpack.c.h.b16 %v395
    %v1890 = vunpack.c.l.b16 %v396
    %v1891 = vunpack.c.h.b16 %v396
    %v1892 = vunpack.c.l.b16 %v397
    %v1893 = vunpack.c.h.b16 %v397
    %v1894 = vunpack.c.l.b16 %v398
    %v1895 = vunpack.c.h.b16 %v398
    %v1896 = vunpack.c.l.b16 %v399
    %v1897 = vunpack.c.h.b16 %v399
    %v1898 = vunpack.c.l.b16 %v400
    %v1899 = vunpack.c.h.b16 %v400
    %v1900 = vunpack.c.l.b16 %v401
    %v1901 = vunpack.c.h.b16 %v401
    %v1902 = vunpack.c.l.b16 %v402
    %v1903 = vunpack.c.h.b16 %v402
    %v1904 = vunpack.c.l.b16 %v403
    %v1905 = vunpack.c.h.b16 %v403
    %v1906 = vunpack.c.l.b16 %v404
    %v1907 = vunpack.c.h.b16 %v404
    %v1908 = vunpack.c.l.b16 %v405
    %v1909 = vunpack.c.h.b16 %v405
    %v1910 = vunpack.c.l.b16 %v406
    %v1911 = vunpack.c.h.b16 %v406
    %v1912 = vunpack.c.l.b16 %v407
    %v1913 = vunpack.c.h.b16 %v407
    %v1914 = vunpack.c.l.b16 %v408
    %v1915 = vunpack.c.h.b16 %v408
    %v1916 = vunpack.c.l.b16 %v409
    %v1917 = vunpack.c.h.b16 %v409
    %v1918 = vunpack.c.l.b16 %v410
    %v1919 = vunpack.c.h.b16 %v410
    %v1920 = vunpack.c.l.b16 %v411
    %v1921 = vunpack.c.h.b16 %v411
    %v1922 = vunpack.c.l.b16 %v412
    %v1923 = vunpack.c.h.b16 %v412
    %v1924 = vunpack.c.l.b16 %v413
    %v1925 = vunpack.c.h.b16 %v413
    %v1926 = vunpack.c.l.b16 %v414
    %v1927 = vunpack.c.h.b16 %v414
    %v1928 = vunpack.c.l.b16 %v415
    %v1929 = vunpack.c.h.b16 %v415
    %v1930 = vunpack.c.l.b16 %v416
    %v1931 = vunpack.c.h.b16 %v416
    %v1932 = vunpack.c.l.b16 %v417
    %v1933 = vunpack.c.h.b16 %v417
    %v1934 = vunpack.c.l.b16 %v418
    %v1935 = vunpack.c.h.b16 %v418
    %v1936 = vunpack.c.l.b16 %v419
    %v1937 = vunpack.c.h.b16 %v419
    %v1938 = vunpack.c.l.b16 %v420
    %v1939 = vunpack.c.h.b16 %v420
    %v1940 = vunpack.c.l.b16 %v421
    %v1941 = vunpack.c.h.b16 %v421
    %v1942 = vunpack.c.l.b16 %v422
    %v1943 = vunpack.c.h.b16 %v422
    %v1944 = vunpack.c.l.b16 %v423
    %v1945 = vunpack.c.h.b16 %v423
    %v1946 = vunpack.c.l.b16 %v424
    %v1947 = vunpack.c.h.b16 %v424
    %v1948 = vunpack.c.l.b16 %v425
    %v1949 = vunpack.c.h.b16 %v425
    %v1950 = vunpack.c.l.b16 %v426
    %v1951 = vunpack.c.h.b16 %v426
    %v1952 = vunpack.c.l.b16 %v427
    %v1953 = vunpack.c.h.b16 %v427
    %v1954 = vunpack.c.l.b16 %v428
    %v1955 = vunpack.c.h.b16 %v428
    %v1956 = vunpack.c.l.b16 %v429
    %v1957 = vunpack.c.h.b16 %v429
    %v1958 = vunpack.c.l.b16 %v430
    %v1959 = vunpack.c.h.b16 %v430
    %v1960 = vunpack.c.l.b16 %v431
    %v1961 = vunpack.c.h.b16 %v431
    %v1962 = vunpack.c.l.b16 %v432
    %v1963 = vunpack.c.h.b16 %v432
    %v1964 = vunpack.c.l.b16 %v433
    %v1965 = vunpack.c.h.b16 %v433
    %v1966 = vunpack.c.l.b16 %v434
    %v1967 = vunpack.c.h.b16 %v434
    %v1968 = vunpack.c.l.b16 %v435
    %v1969 = vunpack.c.h.b16 %v435
    %v1970 = vunpack.c.l.b16 %v436
    %v1971 = vunpack.c.h.b16 %v436
    %v1972 = vunpack.c.l.b16 %v437
    %v1973 = vunpack.c.h.b16 %v437
    %v1974 = vunpack.c.l.b16 %v438
    %v1975 = vunpack.c.h.b16 %v438
    %v1976 = vunpack.c.l.b16 %v439
    %v1977 = vunpack.c.h.b16 %v439
    %v1978 = vunpack.c.l.b16 %v440
    %v1979 = vunpack.c.h.b16 %v440
    %v1980 = vunpack.c.l.b16 %v441
    %v1981 = vunpack.c.h.b16 %v441
    %v1982 = vunpack.c.l.b16 %v442
    %v1983 = vunpack.c.h.b16 %v442
    %v1984 = vunpack.c.l.b16 %v443
    %v1985 = vunpack.c.h.b16 %v443
    %v1986 = vunpack.c.l.b16 %v444
    %v1987 = vunpack.c.h.b16 %v444
    %v1988 = vunpack.c.l.b16 %v445
    %v1989 = vunpack.c.h.b16 %v445
    %v1990 = vunpack.c.l.b16 %v446
    %v1991 = vunpack.c.h.b16 %v446
    %v1992 = vunpack.c.l.b16 %v447
    %v1993 = vunpack.c.h.b16 %v447
    %v1994 = vunpack.c.l.b16 %v448
    %v1995 = vunpack.c.h.b16 %v448
    %v1996 = vunpack.c.l.b16 %v449
    %v1997 = vunpack.c.h.b16 %v449
    %v1998 = vunpack.c.l.b16 %v450
    %v1999 = vunpack.c.h.b16 %v450
    %v2000 = vunpack.c.l.b16 %v451
    %v2001 = vunpack.c.h.b16 %v451
    %v2002 = vunpack.c.l.b16 %v452
    %v2003 = vunpack.c.h.b16 %v452
    %v2004 = vunpack.c.l.b16 %v453
    %v2005 = vunpack.c.h.b16 %v453
    %v2006 = vunpack.c.l.b16 %v454
    %v2007 = vunpack.c.h.b16 %v454
    %v2008 = vunpack.c.l.b16 %v455
    %v2009 = vunpack.c.h.b16 %v455
    %v2010 = vunpack.c.l.b16 %v456
    %v2011 = vunpack.c.h.b16 %v456
    %v2012 = vunpack.c.l.b16 %v457
    %v2013 = vunpack.c.h.b16 %v457
    %v2014 = vunpack.c.l.b16 %v458
    %v2015 = vunpack.c.h.b16 %v458
    %v2016 = vunpack.c.l.b16 %v459
    %v2017 = vunpack.c.h.b16 %v459
    %v2018 = vunpack.c.l.b16 %v460
    %v2019 = vunpack.c.h.b16 %v460
    %v2020 = vunpack.c.l.b16 %v461
    %v2021 = vunpack.c.h.b16 %v461
    %v2022 = vunpack.c.l.b16 %v462
    %v2023 = vunpack.c.h.b16 %v462
    %v2024 = vunpack.c.l.b16 %v463
    %v2025 = vunpack.c.h.b16 %v463
    %v2026 = vunpack.c.l.b16 %v464
    %v2027 = vunpack.c.h.b16 %v464
    %v2028 = vunpack.c.l.b16 %v465
    %v2029 = vunpack.c.h.b16 %v465
    %v2030 = vunpack.c.l.b16 %v466
    %v2031 = vunpack.c.h.b16 %v466
    %v2032 = vunpack.c.l.b16 %v467
    %v2033 = vunpack.c.h.b16 %v467
    %v2034 = vunpack.c.l.b16 %v468
    %v2035 = vunpack.c.h.b16 %v468
    %v2036 = vunpack.c.l.b16 %v469
    %v2037 = vunpack.c.h.b16 %v469
    %v2038 = vunpack.c.l.b16 %v470
    %v2039 = vunpack.c.h.b16 %v470
    %v2040 = vunpack.c.l.b16 %v471
    %v2041 = vunpack.c.h.b16 %v471
    %v2042 = vunpack.c.l.b16 %v472
    %v2043 = vunpack.c.h.b16 %v472
    %v2044 = vunpack.c.l.b16 %v473
    %v2045 = vunpack.c.h.b16 %v473
    %v2046 = vunpack.c.l.b16 %v474
    %v2047 = vunpack.c.h.b16 %v474
    %v2048 = vunpack.c.l.b16 %v475
    %v2049 = vunpack.c.h.b16 %v475
    %v2050 = vunpack.c.l.b16 %v476
    %v2051 = vunpack.c.h.b16 %v476
    %v2052 = vunpack.c.l.b16 %v477
    %v2053 = vunpack.c.h.b16 %v477
    %v2054 = vunpack.c.l.b16 %v478
    %v2055 = vunpack.c.h.b16 %v478
    %v2056 = vunpack.c.l.b16 %v479
    %v2057 = vunpack.c.h.b16 %v479
    %v2058 = vunpack.c.l.b16 %v480
    %v2059 = vunpack.c.h.b16 %v480
    %v2060 = vunpack.c.l.b16 %v481
    %v2061 = vunpack.c.h.b16 %v481
    %v2062 = vunpack.c.l.b16 %v482
    %v2063 = vunpack.c.h.b16 %v482
    %v2064 = vunpack.c.l.b16 %v483
    %v2065 = vunpack.c.h.b16 %v483
    %v2066 = vunpack.c.l.b16 %v484
    %v2067 = vunpack.c.h.b16 %v484
    %v2068 = vunpack.c.l.b16 %v485
    %v2069 = vunpack.c.h.b16 %v485
    %v2070 = vunpack.c.l.b16 %v486
    %v2071 = vunpack.c.h.b16 %v486
    %v2072 = vunpack.c.l.b16 %v487
    %v2073 = vunpack.c.h.b16 %v487
    %v2074 = vunpack.c.l.b16 %v488
    %v2075 = vunpack.c.h.b16 %v488
    %v2076 = vunpack.c.l.b16 %v489
    %v2077 = vunpack.c.h.b16 %v489
    %v2078 = vunpack.c.l.b16 %v490
    %v2079 = vunpack.c.h.b16 %v490
    %v2080 = vunpack.c.l.b16 %v491
    %v2081 = vunpack.c.h.b16 %v491
    %v2082 = vunpack.c.l.b16 %v492
    %v2083 = vunpack.c.h.b16 %v492
    %v2084 = vunpack.c.l.b16 %v493
    %v2085 = vunpack.c.h.b16 %v493
    %v2086 = vunpack.c.l.b16 %v494
    %v2087 = vunpack.c.h.b16 %v494
    %v2088 = vunpack.c.l.b16 %v495
    %v2089 = vunpack.c.h.b16 %v495
    %v2090 = vunpack.c.l.b16 %v496
    %v2091 = vunpack.c.h.b16 %v496
    %v2092 = vunpack.c.l.b16 %v497
    %v2093 = vunpack.c.h.b16 %v497
    %v2094 = vunpack.c.l.b16 %v498
    %v2095 = vunpack.c.h.b16 %v498
    %v2096 = vunpack.c.l.b16 %v499
    %v2097 = vunpack.c.h.b16 %v499
    %v2098 = vunpack.c.l.b16 %v500
    %v2099 = vunpack.c.h.b16 %v500
    %v2100 = vunpack.c.l.b16 %v501
    %v2101 = vunpack.c.h.b16 %v501
    %v2102 = vunpack.c.l.b16 %v502
    %v2103 = vunpack.c.h.b16 %v502
    %v2104 = vunpack.c.l.b16 %v503
    %v2105 = vunpack.c.h.b16 %v503
    %v2106 = vunpack.c.l.b16 %v504
    %v2107 = vunpack.c.h.b16 %v504
    %v2108 = vunpack.c.l.b16 %v505
    %v2109 = vunpack.c.h.b16 %v505
    %v2110 = vunpack.c.l.b16 %v506
    %v2111 = vunpack.c.h.b16 %v506
    %v2112 = vunpack.c.l.b16 %v507
    %v2113 = vunpack.c.h.b16 %v507
    %v2114 = vunpack.c.l.b16 %v508
    %v2115 = vunpack.c.h.b16 %v508
    %v2116 = vunpack.c.l.b16 %v509
    %v2117 = vunpack.c.h.b16 %v509
    %v2118 = vunpack.c.l.b16 %v510
    %v2119 = vunpack.c.h.b16 %v510
    %v2120 = vunpack.c.l.b16 %v511
    %v2121 = vunpack.c.h.b16 %v511
    %v2122 = vunpack.c.l.b16 %v512
    %v2123 = vunpack.c.h.b16 %v512
    %v2124 = vunpack.c.l.b16 %v513
    %v2125 = vunpack.c.h.b16 %v513
    %v2126 = vunpack.c.l.b16 %v514
    %v2127 = vunpack.c.h.b16 %v514
    %v2128 = vunpack.c.l.b16 %v515
    %v2129 = vunpack.c.h.b16 %v515
    %v2130 = vunpack.c.l.b16 %v516
    %v2131 = vunpack.c.h.b16 %v516
    %v2132 = vunpack.c.l.b16 %v517
    %v2133 = vunpack.c.h.b16 %v517
    %v2134 = vunpack.c.l.b16 %v518
    %v2135 = vunpack.c.h.b16 %v518
    %v2136 = vunpack.c.l.b16 %v519
    %v2137 = vunpack.c.h.b16 %v519
    %v2138 = vunpack.c.l.b16 %v520
    %v2139 = vunpack.c.h.b16 %v520
    %v2140 = vunpack.c.l.b16 %v521
    %v2141 = vunpack.c.h.b16 %v521
    %v2142 = vunpack.c.l.b16 %v522
    %v2143 = vunpack.c.h.b16 %v522
    %v2144 = vunpack.c.l.b16 %v523
    %v2145 = vunpack.c.h.b16 %v523
    %v2146 = vunpack.c.l.b16 %v524
    %v2147 = vunpack.c.h.b16 %v524
    %v2148 = vunpack.c.l.b16 %v525
    %v2149 = vunpack.c.h.b16 %v525
    %v2150 = vunpack.c.l.b16 %v526
    %v2151 = vunpack.c.h.b16 %v526
    %v2152 = vunpack.c.l.b16 %v527
    %v2153 = vunpack.c.h.b16 %v527
    %v2154 = vunpack.c.l.b16 %v528
    %v2155 = vunpack.c.h.b16 %v528
    %v2156 = vunpack.c.l.b16 %v529
    %v2157 = vunpack.c.h.b16 %v529
    %v2158 = vunpack.c.l.b16 %v530
    %v2159 = vunpack.c.h.b16 %v530
    %v2160 = vunpack.c.l.b16 %v531
    %v2161 = vunpack.c.h.b16 %v531
    %v2162 = vunpack.c.l.b16 %v532
    %v2163 = vunpack.c.h.b16 %v532
    %v2164 = vunpack.c.l.b16 %v533
    %v2165 = vunpack.c.h.b16 %v533
    %v2166 = vunpack.c.l.b16 %v534
    %v2167 = vunpack.c.h.b16 %v534
    %v2168 = vunpack.c.l.b16 %v535
    %v2169 = vunpack.c.h.b16 %v535
    %v2170 = vunpack.c.l.b16 %v536
    %v2171 = vunpack.c.h.b16 %v536
    %v2172 = vunpack.c.l.b16 %v537
    %v2173 = vunpack.c.h.b16 %v537
    %v2174 = vpack.c.b16 %v1158, %v1150
    %v2175 = vpack.c.b16 %v1159, %v1151
    %v2176 = vpack.c.b16 %v1160, %v1152
    %v2177 = vpack.c.b16 %v1161, %v1153
    %v2178 = vpack.c.b16 %v1162, %v1154
    %v2179 = vpack.c.b16 %v1163, %v1155
    %v2180 = vpack.c.b16 %v1164, %v1156
    %v2181 = vpack.c.b16 %v1165, %v1157
    %v2182 = vpack.c.b16 %v1174, %v1166
    %v2183 = vpack.c.b16 %v1175, %v1167
    %v2184 = vpack.c.b16 %v1176, %v1168
    %v2185 = vpack.c.b16 %v1177, %v1169
    %v2186 = vpack.c.b16 %v1178, %v1170
    %v2187 = vpack.c.b16 %v1179, %v1171
    %v2188 = vpack.c.b16 %v1180, %v1172
    %v2189 = vpack.c.b16 %v1181, %v1173
    %v2190 = vpack.c.b16 %v1190, %v1182
    %v2191 = vpack.c.b16 %v1191, %v1183
    %v2192 = vpack.c.b16 %v1192, %v1184
    %v2193 = vpack.c.b16 %v1193, %v1185
    %v2194 = vpack.c.b16 %v1194, %v1186
    %v2195 = vpack.c.b16 %v1195, %v1187
    %v2196 = vpack.c.b16 %v1196, %v1188
    %v2197 = vpack.c.b16 %v1197, %v1189
    %v2198 = vpack.c.b16 %v1206, %v1198
    %v2199 = vpack.c.b16 %v1207, %v1199
    %v2200 = vpack.c.b16 %v1208, %v1200
    %v2201 = vpack.c.b16 %v1209, %v1201
    %v2202 = vpack.c.b16 %v1210, %v1202
    %v2203 = vpack.c.b16 %v1211, %v1203
    %v2204 = vpack.c.b16 %v1212, %v1204
    %v2205 = vpack.c.b16 %v1213, %v1205
    %v2206 = vpack.c.b16 %v1222, %v1214
    %v2207 = vpack.c.b16 %v1223, %v1215
    %v2208 = vpack.c.b16 %v1224, %v1216
    %v2209 = vpack.c.b16 %v1225, %v1217
    %v2210 = vpack.c.b16 %v1226, %v1218
    %v2211 = vpack.c.b16 %v1227, %v1219
    %v2212 = vpack.c.b16 %v1228, %v1220
    %v2213 = vpack.c.b16 %v1229, %v1221
    %v2214 = vpack.c.b16 %v1238, %v1230
    %v2215 = vpack.c.b16 %v1239, %v1231
    %v2216 = vpack.c.b16 %v1240, %v1232
    %v2217 = vpack.c.b16 %v1241, %v1233
    %v2218 = vpack.c.b16 %v1242, %v1234
    %v2219 = vpack.c.b16 %v1243, %v1235
    %v2220 = vpack.c.b16 %v1244, %v1236
    %v2221 = vpack.c.b16 %v1245, %v1237
    %v2222 = vpack.c.b16 %v1254, %v1246
    %v2223 = vpack.c.b16 %v1255, %v1247
    %v2224 = vpack.c.b16 %v1256, %v1248
    %v2225 = vpack.c.b16 %v1257, %v1249
    %v2226 = vpack.c.b16 %v1258, %v1250
    %v2227 = vpack.c.b16 %v1259, %v1251
    %v2228 = vpack.c.b16 %v1260, %v1252
    %v2229 = vpack.c.b16 %v1261, %v1253
    %v2230 = vpack.c.b16 %v1270, %v1262
    %v2231 = vpack.c.b16 %v1271, %v1263
    %v2232 = vpack.c.b16 %v1272, %v1264
    %v2233 = vpack.c.b16 %v1273, %v1265
    %v2234 = vpack.c.b16 %v1274, %v1266
    %v2235 = vpack.c.b16 %v1275, %v1267
    %v2236 = vpack.c.b16 %v1276, %v1268
    %v2237 = vpack.c.b16 %v1277, %v1269
    %v2238 = vpack.c.b16 %v1286, %v1278
    %v2239 = vpack.c.b16 %v1287, %v1279
    %v2240 = vpack.c.b16 %v1288, %v1280
    %v2241 = vpack.c.b16 %v1289, %v1281
    %v2242 = vpack.c.b16 %v1290, %v1282
    %v2243 = vpack.c.b16 %v1291, %v1283
    %v2244 = vpack.c.b16 %v1292, %v1284
    %v2245 = vpack.c.b16 %v1293, %v1285
    %v2246 = vpack.c.b16 %v1302, %v1294
    %v2247 = vpack.c.b16 %v1303, %v1295
    %v2248 = vpack.c.b16 %v1304, %v1296
    %v2249 = vpack.c.b16 %v1305, %v1297
    %v2250 = vpack.c.b16 %v1306, %v1298
    %v2251 = vpack.c.b16 %v1307, %v1299
    %v2252 = vpack.c.b16 %v1308, %v1300
    %v2253 = vpack.c.b16 %v1309, %v1301
    %v2254 = vpack.c.b16 %v1318, %v1310
    %v2255 = vpack.c.b16 %v1319, %v1311
    %v2256 = vpack.c.b16 %v1320, %v1312
    %v2257 = vpack.c.b16 %v1321, %v1313
    %v2258 = vpack.c.b16 %v1322, %v1314
    %v2259 = vpack.c.b16 %v1323, %v1315
    %v2260 = vpack.c.b16 %v1324, %v1316
    %v2261 = vpack.c.b16 %v1325, %v1317
    %v2262 = vpack.c.b16 %v1334, %v1326
    %v2263 = vpack.c.b16 %v1335, %v1327
    %v2264 = vpack.c.b16 %v1336, %v1328
    %v2265 = vpack.c.b16 %v1337, %v1329
    %v2266 = vpack.c.b16 %v1338, %v1330
    %v2267 = vpack.c.b16 %v1339, %v1331
    %v2268 = vpack.c.b16 %v1340, %v1332
    %v2269 = vpack.c.b16 %v1341, %v1333
    %v2270 = vpack.c.b16 %v1350, %v1342
    %v2271 = vpack.c.b16 %v1351, %v1343
    %v2272 = vpack.c.b16 %v1352, %v1344
    %v2273 = vpack.c.b16 %v1353, %v1345
    %v2274 = vpack.c.b16 %v1354, %v1346
    %v2275 = vpack.c.b16 %v1355, %v1347
    %v2276 = vpack.c.b16 %v1356, %v1348
    %v2277 = vpack.c.b16 %v1357, %v1349
    %v2278 = vpack.c.b16 %v1366, %v1358
    %v2279 = vpack.c.b16 %v1367, %v1359
    %v2280 = vpack.c.b16 %v1368, %v1360
    %v2281 = vpack.c.b16 %v1369, %v1361
    %v2282 = vpack.c.b16 %v1370, %v1362
    %v2283 = vpack.c.b16 %v1371, %v1363
    %v2284 = vpack.c.b16 %v1372, %v1364
    %v2285 = vpack.c.b16 %v1373, %v1365
    %v2286 = vpack.c.b16 %v1382, %v1374
    %v2287 = vpack.c.b16 %v1383, %v1375
    %v2288 = vpack.c.b16 %v1384, %v1376
    %v2289 = vpack.c.b16 %v1385, %v1377
    %v2290 = vpack.c.b16 %v1386, %v1378
    %v2291 = vpack.c.b16 %v1387, %v1379
    %v2292 = vpack.c.b16 %v1388, %v1380
    %v2293 = vpack.c.b16 %v1389, %v1381
    %v2294 = vpack.c.b16 %v1398, %v1390
    %v2295 = vpack.c.b16 %v1399, %v1391
    %v2296 = vpack.c.b16 %v1400, %v1392
    %v2297 = vpack.c.b16 %v1401, %v1393
    %v2298 = vpack.c.b16 %v1402, %v1394
    %v2299 = vpack.c.b16 %v1403, %v1395
    %v2300 = vpack.c.b16 %v1404, %v1396
    %v2301 = vpack.c.b16 %v1405, %v1397
    %v2302 = vpack.c.b16 %v1414, %v1406
    %v2303 = vpack.c.b16 %v1415, %v1407
    %v2304 = vpack.c.b16 %v1416, %v1408
    %v2305 = vpack.c.b16 %v1417, %v1409
    %v2306 = vpack.c.b16 %v1418, %v1410
    %v2307 = vpack.c.b16 %v1419, %v1411
    %v2308 = vpack.c.b16 %v1420, %v1412
    %v2309 = vpack.c.b16 %v1421, %v1413
    %v2310 = vpack.c.b16 %v1430, %v1422
    %v2311 = vpack.c.b16 %v1431, %v1423
    %v2312 = vpack.c.b16 %v1432, %v1424
    %v2313 = vpack.c.b16 %v1433, %v1425
    %v2314 = vpack.c.b16 %v1434, %v1426
    %v2315 = vpack.c.b16 %v1435, %v1427
    %v2316 = vpack.c.b16 %v1436, %v1428
    %v2317 = vpack.c.b16 %v1437, %v1429
    %v2318 = vpack.c.b16 %v1446, %v1438
    %v2319 = vpack.c.b16 %v1447, %v1439
    %v2320 = vpack.c.b16 %v1448, %v1440
    %v2321 = vpack.c.b16 %v1449, %v1441
    %v2322 = vpack.c.b16 %v1450, %v1442
    %v2323 = vpack.c.b16 %v1451, %v1443
    %v2324 = vpack.c.b16 %v1452, %v1444
    %v2325 = vpack.c.b16 %v1453, %v1445
    %v2326 = vpack.c.b16 %v1462, %v1454
    %v2327 = vpack.c.b16 %v1463, %v1455
    %v2328 = vpack.c.b16 %v1464, %v1456
    %v2329 = vpack.c.b16 %v1465, %v1457
    %v2330 = vpack.c.b16 %v1466, %v1458
    %v2331 = vpack.c.b16 %v1467, %v1459
    %v2332 = vpack.c.b16 %v1468, %v1460
    %v2333 = vpack.c.b16 %v1469, %v1461
    %v2334 = vpack.c.b16 %v1478, %v1470
    %v2335 = vpack.c.b16 %v1479, %v1471
    %v2336 = vpack.c.b16 %v1480, %v1472
    %v2337 = vpack.c.b16 %v1481, %v1473
    %v2338 = vpack.c.b16 %v1482, %v1474
    %v2339 = vpack.c.b16 %v1483, %v1475
    %v2340 = vpack.c.b16 %v1484, %v1476
    %v2341 = vpack.c.b16 %v1485, %v1477
    %v2342 = vpack.c.b16 %v1494, %v1486
    %v2343 = vpack.c.b16 %v1495, %v1487
    %v2344 = vpack.c.b16 %v1496, %v1488
    %v2345 = vpack.c.b16 %v1497, %v1489
    %v2346 = vpack.c.b16 %v1498, %v1490
    %v2347 = vpack.c.b16 %v1499, %v1491
    %v2348 = vpack.c.b16 %v1500, %v1492
    %v2349 = vpack.c.b16 %v1501, %v1493
    %v2350 = vpack.c.b16 %v1510, %v1502
    %v2351 = vpack.c.b16 %v1511, %v1503
    %v2352 = vpack.c.b16 %v1512, %v1504
    %v2353 = vpack.c.b16 %v1513, %v1505
    %v2354 = vpack.c.b16 %v1514, %v1506
    %v2355 = vpack.c.b16 %v1515, %v1507
    %v2356 = vpack.c.b16 %v1516, %v1508
    %v2357 = vpack.c.b16 %v1517, %v1509
    %v2358 = vpack.c.b16 %v1526, %v1518
    %v2359 = vpack.c.b16 %v1527, %v1519
    %v2360 = vpack.c.b16 %v1528, %v1520
    %v2361 = vpack.c.b16 %v1529, %v1521
    %v2362 = vpack.c.b16 %v1530, %v1522
    %v2363 = vpack.c.b16 %v1531, %v1523
    %v2364 = vpack.c.b16 %v1532, %v1524
    %v2365 = vpack.c.b16 %v1533, %v1525
    %v2366 = vpack.c.b16 %v1542, %v1534
    %v2367 = vpack.c.b16 %v1543, %v1535
    %v2368 = vpack.c.b16 %v1544, %v1536
    %v2369 = vpack.c.b16 %v1545, %v1537
    %v2370 = vpack.c.b16 %v1546, %v1538
    %v2371 = vpack.c.b16 %v1547, %v1539
    %v2372 = vpack.c.b16 %v1548, %v1540
    %v2373 = vpack.c.b16 %v1549, %v1541
    %v2374 = vpack.c.b16 %v1558, %v1550
    %v2375 = vpack.c.b16 %v1559, %v1551
    %v2376 = vpack.c.b16 %v1560, %v1552
    %v2377 = vpack.c.b16 %v1561, %v1553
    %v2378 = vpack.c.b16 %v1562, %v1554
    %v2379 = vpack.c.b16 %v1563, %v1555
    %v2380 = vpack.c.b16 %v1564, %v1556
    %v2381 = vpack.c.b16 %v1565, %v1557
    %v2382 = vpack.c.b16 %v1574, %v1566
    %v2383 = vpack.c.b16 %v1575, %v1567
    %v2384 = vpack.c.b16 %v1576, %v1568
    %v2385 = vpack.c.b16 %v1577, %v1569
    %v2386 = vpack.c.b16 %v1578, %v1570
    %v2387 = vpack.c.b16 %v1579, %v1571
    %v2388 = vpack.c.b16 %v1580, %v1572
    %v2389 = vpack.c.b16 %v1581, %v1573
    %v2390 = vpack.c.b16 %v1590, %v1582
    %v2391 = vpack.c.b16 %v1591, %v1583
    %v2392 = vpack.c.b16 %v1592, %v1584
    %v2393 = vpack.c.b16 %v1593, %v1585
    %v2394 = vpack.c.b16 %v1594, %v1586
    %v2395 = vpack.c.b16 %v1595, %v1587
    %v2396 = vpack.c.b16 %v1596, %v1588
    %v2397 = vpack.c.b16 %v1597, %v1589
    %v2398 = vpack.c.b16 %v1606, %v1598
    %v2399 = vpack.c.b16 %v1607, %v1599
    %v2400 = vpack.c.b16 %v1608, %v1600
    %v2401 = vpack.c.b16 %v1609, %v1601
    %v2402 = vpack.c.b16 %v1610, %v1602
    %v2403 = vpack.c.b16 %v1611, %v1603
    %v2404 = vpack.c.b16 %v1612, %v1604
    %v2405 = vpack.c.b16 %v1613, %v1605
    %v2406 = vpack.c.b16 %v1622, %v1614
    %v2407 = vpack.c.b16 %v1623, %v1615
    %v2408 = vpack.c.b16 %v1624, %v1616
    %v2409 = vpack.c.b16 %v1625, %v1617
    %v2410 = vpack.c.b16 %v1626, %v1618
    %v2411 = vpack.c.b16 %v1627, %v1619
    %v2412 = vpack.c.b16 %v1628, %v1620
    %v2413 = vpack.c.b16 %v1629, %v1621
    %v2414 = vpack.c.b16 %v1638, %v1630
    %v2415 = vpack.c.b16 %v1639, %v1631
    %v2416 = vpack.c.b16 %v1640, %v1632
    %v2417 = vpack.c.b16 %v1641, %v1633
    %v2418 = vpack.c.b16 %v1642, %v1634
    %v2419 = vpack.c.b16 %v1643, %v1635
    %v2420 = vpack.c.b16 %v1644, %v1636
    %v2421 = vpack.c.b16 %v1645, %v1637
    %v2422 = vpack.c.b16 %v1654, %v1646
    %v2423 = vpack.c.b16 %v1655, %v1647
    %v2424 = vpack.c.b16 %v1656, %v1648
    %v2425 = vpack.c.b16 %v1657, %v1649
    %v2426 = vpack.c.b16 %v1658, %v1650
    %v2427 = vpack.c.b16 %v1659, %v1651
    %v2428 = vpack.c.b16 %v1660, %v1652
    %v2429 = vpack.c.b16 %v1661, %v1653
    %v2430 = vpack.c.b16 %v1670, %v1662
    %v2431 = vpack.c.b16 %v1671, %v1663
    %v2432 = vpack.c.b16 %v1672, %v1664
    %v2433 = vpack.c.b16 %v1673, %v1665
    %v2434 = vpack.c.b16 %v1674, %v1666
    %v2435 = vpack.c.b16 %v1675, %v1667
    %v2436 = vpack.c.b16 %v1676, %v1668
    %v2437 = vpack.c.b16 %v1677, %v1669
    %v2438 = vpack.c.b16 %v1686, %v1678
    %v2439 = vpack.c.b16 %v1687, %v1679
    %v2440 = vpack.c.b16 %v1688, %v1680
    %v2441 = vpack.c.b16 %v1689, %v1681
    %v2442 = vpack.c.b16 %v1690, %v1682
    %v2443 = vpack.c.b16 %v1691, %v1683
    %v2444 = vpack.c.b16 %v1692, %v1684
    %v2445 = vpack.c.b16 %v1693, %v1685
    %v2446 = vpack.c.b16 %v1702, %v1694
    %v2447 = vpack.c.b16 %v1703, %v1695
    %v2448 = vpack.c.b16 %v1704, %v1696
    %v2449 = vpack.c.b16 %v1705, %v1697
    %v2450 = vpack.c.b16 %v1706, %v1698
    %v2451 = vpack.c.b16 %v1707, %v1699
    %v2452 = vpack.c.b16 %v1708, %v1700
    %v2453 = vpack.c.b16 %v1709, %v1701
    %v2454 = vpack.c.b16 %v1718, %v1710
    %v2455 = vpack.c.b16 %v1719, %v1711
    %v2456 = vpack.c.b16 %v1720, %v1712
    %v2457 = vpack.c.b16 %v1721, %v1713
    %v2458 = vpack.c.b16 %v1722, %v1714
    %v2459 = vpack.c.b16 %v1723, %v1715
    %v2460 = vpack.c.b16 %v1724, %v1716
    %v2461 = vpack.c.b16 %v1725, %v1717
    %v2462 = vpack.c.b16 %v1734, %v1726
    %v2463 = vpack.c.b16 %v1735, %v1727
    %v2464 = vpack.c.b16 %v1736, %v1728
    %v2465 = vpack.c.b16 %v1737, %v1729
    %v2466 = vpack.c.b16 %v1738, %v1730
    %v2467 = vpack.c.b16 %v1739, %v1731
    %v2468 = vpack.c.b16 %v1740, %v1732
    %v2469 = vpack.c.b16 %v1741, %v1733
    %v2470 = vpack.c.b16 %v1750, %v1742
    %v2471 = vpack.c.b16 %v1751, %v1743
    %v2472 = vpack.c.b16 %v1752, %v1744
    %v2473 = vpack.c.b16 %v1753, %v1745
    %v2474 = vpack.c.b16 %v1754, %v1746
    %v2475 = vpack.c.b16 %v1755, %v1747
    %v2476 = vpack.c.b16 %v1756, %v1748
    %v2477 = vpack.c.b16 %v1757, %v1749
    %v2478 = vpack.c.b16 %v1766, %v1758
    %v2479 = vpack.c.b16 %v1767, %v1759
    %v2480 = vpack.c.b16 %v1768, %v1760
    %v2481 = vpack.c.b16 %v1769, %v1761
    %v2482 = vpack.c.b16 %v1770, %v1762
    %v2483 = vpack.c.b16 %v1771, %v1763
    %v2484 = vpack.c.b16 %v1772, %v1764
    %v2485 = vpack.c.b16 %v1773, %v1765
    %v2486 = vpack.c.b16 %v1782, %v1774
    %v2487 = vpack.c.b16 %v1783, %v1775
    %v2488 = vpack.c.b16 %v1784, %v1776
    %v2489 = vpack.c.b16 %v1785, %v1777
    %v2490 = vpack.c.b16 %v1786, %v1778
    %v2491 = vpack.c.b16 %v1787, %v1779
    %v2492 = vpack.c.b16 %v1788, %v1780
    %v2493 = vpack.c.b16 %v1789, %v1781
    %v2494 = vpack.c.b16 %v1798, %v1790
    %v2495 = vpack.c.b16 %v1799, %v1791
    %v2496 = vpack.c.b16 %v1800, %v1792
    %v2497 = vpack.c.b16 %v1801, %v1793
    %v2498 = vpack.c.b16 %v1802, %v1794
    %v2499 = vpack.c.b16 %v1803, %v1795
    %v2500 = vpack.c.b16 %v1804, %v1796
    %v2501 = vpack.c.b16 %v1805, %v1797
    %v2502 = vpack.c.b16 %v1814, %v1806
    %v2503 = vpack.c.b16 %v1815, %v1807
    %v2504 = vpack.c.b16 %v1816, %v1808
    %v2505 = vpack.c.b16 %v1817, %v1809
    %v2506 = vpack.c.b16 %v1818, %v1810
    %v2507 = vpack.c.b16 %v1819, %v1811
    %v2508 = vpack.c.b16 %v1820, %v1812
    %v2509 = vpack.c.b16 %v1821, %v1813
    %v2510 = vpack.c.b16 %v1830, %v1822
    %v2511 = vpack.c.b16 %v1831, %v1823
    %v2512 = vpack.c.b16 %v1832, %v1824
    %v2513 = vpack.c.b16 %v1833, %v1825
    %v2514 = vpack.c.b16 %v1834, %v1826
    %v2515 = vpack.c.b16 %v1835, %v1827
    %v2516 = vpack.c.b16 %v1836, %v1828
    %v2517 = vpack.c.b16 %v1837, %v1829
    %v2518 = vpack.c.b16 %v1846, %v1838
    %v2519 = vpack.c.b16 %v1847, %v1839
    %v2520 = vpack.c.b16 %v1848, %v1840
    %v2521 = vpack.c.b16 %v1849, %v1841
    %v2522 = vpack.c.b16 %v1850, %v1842
    %v2523 = vpack.c.b16 %v1851, %v1843
    %v2524 = vpack.c.b16 %v1852, %v1844
    %v2525 = vpack.c.b16 %v1853, %v1845
    %v2526 = vpack.c.b16 %v1862, %v1854
    %v2527 = vpack.c.b16 %v1863, %v1855
    %v2528 = vpack.c.b16 %v1864, %v1856
    %v2529 = vpack.c.b16 %v1865, %v1857
    %v2530 = vpack.c.b16 %v1866, %v1858
    %v2531 = vpack.c.b16 %v1867, %v1859
    %v2532 = vpack.c.b16 %v1868, %v1860
    %v2533 = vpack.c.b16 %v1869, %v1861
    %v2534 = vpack.c.b16 %v1878, %v1870
    %v2535 = vpack.c.b16 %v1879, %v1871
    %v2536 = vpack.c.b16 %v1880, %v1872
    %v2537 = vpack.c.b16 %v1881, %v1873
    %v2538 = vpack.c.b16 %v1882, %v1874
    %v2539 = vpack.c.b16 %v1883, %v1875
    %v2540 = vpack.c.b16 %v1884, %v1876
    %v2541 = vpack.c.b16 %v1885, %v1877
    %v2542 = vpack.c.b16 %v1894, %v1886
    %v2543 = vpack.c.b16 %v1895, %v1887
    %v2544 = vpack.c.b16 %v1896, %v1888
    %v2545 = vpack.c.b16 %v1897, %v1889
    %v2546 = vpack.c.b16 %v1898, %v1890
    %v2547 = vpack.c.b16 %v1899, %v1891
    %v2548 = vpack.c.b16 %v1900, %v1892
    %v2549 = vpack.c.b16 %v1901, %v1893
    %v2550 = vpack.c.b16 %v1910, %v1902
    %v2551 = vpack.c.b16 %v1911, %v1903
    %v2552 = vpack.c.b16 %v1912, %v1904
    %v2553 = vpack.c.b16 %v1913, %v1905
    %v2554 = vpack.c.b16 %v1914, %v1906
    %v2555 = vpack.c.b16 %v1915, %v1907
    %v2556 = vpack.c.b16 %v1916, %v1908
    %v2557 = vpack.c.b16 %v1917, %v1909
    %v2558 = vpack.c.b16 %v1926, %v1918
    %v2559 = vpack.c.b16 %v1927, %v1919
    %v2560 = vpack.c.b16 %v1928, %v1920
    %v2561 = vpack.c.b16 %v1929, %v1921
    %v2562 = vpack.c.b16 %v1930, %v1922
    %v2563 = vpack.c.b16 %v1931, %v1923
    %v2564 = vpack.c.b16 %v1932, %v1924
    %v2565 = vpack.c.b16 %v1933, %v1925
    %v2566 = vpack.c.b16 %v1942, %v1934
    %v2567 = vpack.c.b16 %v1943, %v1935
    %v2568 = vpack.c.b16 %v1944, %v1936
    %v2569 = vpack.c.b16 %v1945, %v1937
    %v2570 = vpack.c.b16 %v1946, %v1938
    %v2571 = vpack.c.b16 %v1947, %v1939
    %v2572 = vpack.c.b16 %v1948, %v1940
    %v2573 = vpack.c.b16 %v1949, %v1941
    %v2574 = vpack.c.b16 %v1958, %v1950
    %v2575 = vpack.c.b16 %v1959, %v1951
    %v2576 = vpack.c.b16 %v1960, %v1952
    %v2577 = vpack.c.b16 %v1961, %v1953
    %v2578 = vpack.c.b16 %v1962, %v1954
    %v2579 = vpack.c.b16 %v1963, %v1955
    %v2580 = vpack.c.b16 %v1964, %v1956
    %v2581 = vpack.c.b16 %v1965, %v1957
    %v2582 = vpack.c.b16 %v1974, %v1966
    %v2583 = vpack.c.b16 %v1975, %v1967
    %v2584 = vpack.c.b16 %v1976, %v1968
    %v2585 = vpack.c.b16 %v1977, %v1969
    %v2586 = vpack.c.b16 %v1978, %v1970
    %v2587 = vpack.c.b16 %v1979, %v1971
    %v2588 = vpack.c.b16 %v1980, %v1972
    %v2589 = vpack.c.b16 %v1981, %v1973
    %v2590 = vpack.c.b16 %v1990, %v1982
    %v2591 = vpack.c.b16 %v1991, %v1983
    %v2592 = vpack.c.b16 %v1992, %v1984
    %v2593 = vpack.c.b16 %v1993, %v1985
    %v2594 = vpack.c.b16 %v1994, %v1986
    %v2595 = vpack.c.b16 %v1995, %v1987
    %v2596 = vpack.c.b16 %v1996, %v1988
    %v2597 = vpack.c.b16 %v1997, %v1989
    %v2598 = vpack.c.b16 %v2006, %v1998
    %v2599 = vpack.c.b16 %v2007, %v1999
    %v2600 = vpack.c.b16 %v2008, %v2000
    %v2601 = vpack.c.b16 %v2009, %v2001
    %v2602 = vpack.c.b16 %v2010, %v2002
    %v2603 = vpack.c.b16 %v2011, %v2003
    %v2604 = vpack.c.b16 %v2012, %v2004
    %v2605 = vpack.c.b16 %v2013, %v2005
    %v2606 = vpack.c.b16 %v2022, %v2014
    %v2607 = vpack.c.b16 %v2023, %v2015
    %v2608 = vpack.c.b16 %v2024, %v2016
    %v2609 = vpack.c.b16 %v2025, %v2017
    %v2610 = vpack.c.b16 %v2026, %v2018
    %v2611 = vpack.c.b16 %v2027, %v2019
    %v2612 = vpack.c.b16 %v2028, %v2020
    %v2613 = vpack.c.b16 %v2029, %v2021
    %v2614 = vpack.c.b16 %v2038, %v2030
    %v2615 = vpack.c.b16 %v2039, %v2031
    %v2616 = vpack.c.b16 %v2040, %v2032
    %v2617 = vpack.c.b16 %v2041, %v2033
    %v2618 = vpack.c.b16 %v2042, %v2034
    %v2619 = vpack.c.b16 %v2043, %v2035
    %v2620 = vpack.c.b16 %v2044, %v2036
    %v2621 = vpack.c.b16 %v2045, %v2037
    %v2622 = vpack.c.b16 %v2054, %v2046
    %v2623 = vpack.c.b16 %v2055, %v2047
    %v2624 = vpack.c.b16 %v2056, %v2048
    %v2625 = vpack.c.b16 %v2057, %v2049
    %v2626 = vpack.c.b16 %v2058, %v2050
    %v2627 = vpack.c.b16 %v2059, %v2051
    %v2628 = vpack.c.b16 %v2060, %v2052
    %v2629 = vpack.c.b16 %v2061, %v2053
    %v2630 = vpack.c.b16 %v2070, %v2062
    %v2631 = vpack.c.b16 %v2071, %v2063
    %v2632 = vpack.c.b16 %v2072, %v2064
    %v2633 = vpack.c.b16 %v2073, %v2065
    %v2634 = vpack.c.b16 %v2074, %v2066
    %v2635 = vpack.c.b16 %v2075, %v2067
    %v2636 = vpack.c.b16 %v2076, %v2068
    %v2637 = vpack.c.b16 %v2077, %v2069
    %v2638 = vpack.c.b16 %v2086, %v2078
    %v2639 = vpack.c.b16 %v2087, %v2079
    %v2640 = vpack.c.b16 %v2088, %v2080
    %v2641 = vpack.c.b16 %v2089, %v2081
    %v2642 = vpack.c.b16 %v2090, %v2082
    %v2643 = vpack.c.b16 %v2091, %v2083
    %v2644 = vpack.c.b16 %v2092, %v2084
    %v2645 = vpack.c.b16 %v2093, %v2085
    %v2646 = vpack.c.b16 %v2102, %v2094
    %v2647 = vpack.c.b16 %v2103, %v2095
    %v2648 = vpack.c.b16 %v2104, %v2096
    %v2649 = vpack.c.b16 %v2105, %v2097
    %v2650 = vpack.c.b16 %v2106, %v2098
    %v2651 = vpack.c.b16 %v2107, %v2099
    %v2652 = vpack.c.b16 %v2108, %v2100
    %v2653 = vpack.c.b16 %v2109, %v2101
    %v2654 = vpack.c.b16 %v2118, %v2110
    %v2655 = vpack.c.b16 %v2119, %v2111
    %v2656 = vpack.c.b16 %v2120, %v2112
    %v2657 = vpack.c.b16 %v2121, %v2113
    %v2658 = vpack.c.b16 %v2122, %v2114
    %v2659 = vpack.c.b16 %v2123, %v2115
    %v2660 = vpack.c.b16 %v2124, %v2116
    %v2661 = vpack.c.b16 %v2125, %v2117
    %v2662 = vpack.c.b16 %v2134, %v2126
    %v2663 = vpack.c.b16 %v2135, %v2127
    %v2664 = vpack.c.b16 %v2136, %v2128
    %v2665 = vpack.c.b16 %v2137, %v2129
    %v2666 = vpack.c.b16 %v2138, %v2130
    %v2667 = vpack.c.b16 %v2139, %v2131
    %v2668 = vpack.c.b16 %v2140, %v2132
    %v2669 = vpack.c.b16 %v2141, %v2133
    %v2670 = vpack.c.b16 %v2150, %v2142
    %v2671 = vpack.c.b16 %v2151, %v2143
    %v2672 = vpack.c.b16 %v2152, %v2144
    %v2673 = vpack.c.b16 %v2153, %v2145
    %v2674 = vpack.c.b16 %v2154, %v2146
    %v2675 = vpack.c.b16 %v2155, %v2147
    %v2676 = vpack.c.b16 %v2156, %v2148
    %v2677 = vpack.c.b16 %v2157, %v2149
    %v2678 = vpack.c.b16 %v2166, %v2158
    %v2679 = vpack.c.b16 %v2167, %v2159
    %v2680 = vpack.c.b16 %v2168, %v2160
    %v2681 = vpack.c.b16 %v2169, %v2161
    %v2682 = vpack.c.b16 %v2170, %v2162
    %v2683 = vpack.c.b16 %v2171, %v2163
    %v2684 = vpack.c.b16 %v2172, %v2164
    %v2685 = vpack.c.b16 %v2173, %v2165
    %3198 = vmatprep.subr.bf16.mxu0 %v2175
    %3199 = vmatpush1.bf16.msra.mxu0 %v2174
    %3200 = vmatprep.subr.bf16.mxu0 %v2183
    %3201 = vmatpush1.bf16.msra.mxu0 %v2182
    %3202 = vmatprep.subr.bf16.mxu0 %v2191
    %3203 = vmatpush1.bf16.msra.mxu0 %v2190
    %3204 = vmatprep.subr.bf16.mxu0 %v2199
    %3205 = vmatpush1.bf16.msra.mxu0 %v2198
    %3206 = vmatprep.subr.bf16.mxu0 %v2207
    %3207 = vmatpush1.bf16.msra.mxu0 %v2206
    %3208 = vmatprep.subr.bf16.mxu0 %v2215
    %3209 = vmatpush1.bf16.msra.mxu0 %v2214
    %3210 = vmatprep.subr.bf16.mxu0 %v2223
    %3211 = vmatpush1.bf16.msra.mxu0 %v2222
    %3212 = vmatprep.subr.bf16.mxu0 %v2231
    %3213 = vmatpush1.bf16.msra.mxu0 %v2230
    %3214 = vmatprep.subr.bf16.mxu0 %v2239
    %3215 = vmatpush1.bf16.msra.mxu0 %v2238
    %3216 = vmatprep.subr.bf16.mxu0 %v2247
    %3217 = vmatpush1.bf16.msra.mxu0 %v2246
    %3218 = vmatprep.subr.bf16.mxu0 %v2255
    %3219 = vmatpush1.bf16.msra.mxu0 %v2254
    %3220 = vmatprep.subr.bf16.mxu0 %v2263
    %3221 = vmatpush1.bf16.msra.mxu0 %v2262
    %3222 = vmatprep.subr.bf16.mxu0 %v2271
    %3223 = vmatpush1.bf16.msra.mxu0 %v2270
    %3224 = vmatprep.subr.bf16.mxu0 %v2279
    %3225 = vmatpush1.bf16.msra.mxu0 %v2278
    %3226 = vmatprep.subr.bf16.mxu0 %v2287
    %3227 = vmatpush1.bf16.msra.mxu0 %v2286
    %3228 = vmatprep.subr.bf16.mxu0 %v2295
    %3229 = vmatpush1.bf16.msra.mxu0 %v2294
    %3230 = vmatprep.mubr.bf16.mxu0 %v618
    %3231 = vmatmul.mubr.bf16.gmra.mrb[0].mxu0 %v604
    %v3232 = vpop.f32.mrb[0].mxu0
    %v3233 = vadd.f32 %v543, %v3232
    %v3234 = vpop.f32.mrb[0].mxu0
    %v3235 = vadd.f32 %v547, %v3234
    %v3236 = vpop.f32.mrb[0].mxu0
    %v3237 = vpop.f32.mrb[0].mxu0
    %3238 = vdwg.mxu0
    %3239 = vmatprep.subr.bf16.mxu0 %v2303
    %3240 = vmatpush1.bf16.msra.mxu0 %v2302
    %3241 = vmatprep.subr.bf16.mxu0 %v2311
    %3242 = vmatpush1.bf16.msra.mxu0 %v2310
    %3243 = vmatprep.subr.bf16.mxu0 %v2319
    %3244 = vmatpush1.bf16.msra.mxu0 %v2318
    %3245 = vmatprep.subr.bf16.mxu0 %v2327
    %3246 = vmatpush1.bf16.msra.mxu0 %v2326
    %3247 = vmatprep.subr.bf16.mxu0 %v2335
    %3248 = vmatpush1.bf16.msra.mxu0 %v2334
    %3249 = vmatprep.subr.bf16.mxu0 %v2343
    %3250 = vmatpush1.bf16.msra.mxu0 %v2342
    %3251 = vmatprep.subr.bf16.mxu0 %v2351
    %3252 = vmatpush1.bf16.msra.mxu0 %v2350
    %3253 = vmatprep.subr.bf16.mxu0 %v2359
    %3254 = vmatpush1.bf16.msra.mxu0 %v2358
    %3255 = vmatprep.subr.bf16.mxu0 %v2367
    %3256 = vmatpush1.bf16.msra.mxu0 %v2366
    %3257 = vmatprep.subr.bf16.mxu0 %v2375
    %3258 = vmatpush1.bf16.msra.mxu0 %v2374
    %3259 = vmatprep.subr.bf16.mxu0 %v2383
    %3260 = vmatpush1.bf16.msra.mxu0 %v2382
    %3261 = vmatprep.subr.bf16.mxu0 %v2391
    %3262 = vmatpush1.bf16.msra.mxu0 %v2390
    %3263 = vmatprep.subr.bf16.mxu0 %v2399
    %3264 = vmatpush1.bf16.msra.mxu0 %v2398
    %3265 = vmatprep.subr.bf16.mxu0 %v2407
    %3266 = vmatpush1.bf16.msra.mxu0 %v2406
    %3267 = vmatprep.subr.bf16.mxu0 %v2415
    %3268 = vmatpush1.bf16.msra.mxu0 %v2414
    %3269 = vmatprep.subr.bf16.mxu0 %v2423
    %3270 = vmatpush1.bf16.msra.mxu0 %v2422
    %3271 = vmatprep.mubr.bf16.mxu0 %v628
    %3272 = vmatmul.mubr.bf16.gmra.mrb[0].mxu0 %v626
    %v3273 = vpop.f32.mrb[0].mxu0
    %v3274 = vadd.f32 %v3233, %v3273
    %v3275 = vpop.f32.mrb[0].mxu0
    %v3276 = vadd.f32 %v3235, %v3275
    %v3277 = vpop.f32.mrb[0].mxu0
    %v3278 = vpop.f32.mrb[0].mxu0
    %3279 = vdwg.mxu0
    %3280 = vmatprep.subr.bf16.mxu0 %v2431
    %3281 = vmatpush1.bf16.msra.mxu0 %v2430
    %3282 = vmatprep.subr.bf16.mxu0 %v2439
    %3283 = vmatpush1.bf16.msra.mxu0 %v2438
    %3284 = vmatprep.subr.bf16.mxu0 %v2447
    %3285 = vmatpush1.bf16.msra.mxu0 %v2446
    %3286 = vmatprep.subr.bf16.mxu0 %v2455
    %3287 = vmatpush1.bf16.msra.mxu0 %v2454
    %3288 = vmatprep.subr.bf16.mxu0 %v2463
    %3289 = vmatpush1.bf16.msra.mxu0 %v2462
    %3290 = vmatprep.subr.bf16.mxu0 %v2471
    %3291 = vmatpush1.bf16.msra.mxu0 %v2470
    %3292 = vmatprep.subr.bf16.mxu0 %v2479
    %3293 = vmatpush1.bf16.msra.mxu0 %v2478
    %3294 = vmatprep.subr.bf16.mxu0 %v2487
    %3295 = vmatpush1.bf16.msra.mxu0 %v2486
    %3296 = vmatprep.subr.bf16.mxu0 %v2495
    %3297 = vmatpush1.bf16.msra.mxu0 %v2494
    %3298 = vmatprep.subr.bf16.mxu0 %v2503
    %3299 = vmatpush1.bf16.msra.mxu0 %v2502
    %3300 = vmatprep.subr.bf16.mxu0 %v2511
    %3301 = vmatpush1.bf16.msra.mxu0 %v2510
    %3302 = vmatprep.subr.bf16.mxu0 %v2519
    %3303 = vmatpush1.bf16.msra.mxu0 %v2518
    %3304 = vmatprep.subr.bf16.mxu0 %v2527
    %3305 = vmatpush1.bf16.msra.mxu0 %v2526
    %3306 = vmatprep.subr.bf16.mxu0 %v2535
    %3307 = vmatpush1.bf16.msra.mxu0 %v2534
    %3308 = vmatprep.subr.bf16.mxu0 %v2543
    %3309 = vmatpush1.bf16.msra.mxu0 %v2542
    %3310 = vmatprep.subr.bf16.mxu0 %v2551
    %3311 = vmatpush1.bf16.msra.mxu0 %v2550
    %3312 = vmatprep.mubr.bf16.mxu0 %v625
    %3313 = vmatmul.mubr.bf16.gmra.mrb[0].mxu0 %v611
    %v3314 = vpop.f32.mrb[0].mxu0
    %v3315 = vadd.f32 %v3274, %v3314
    %v3316 = vpop.f32.mrb[0].mxu0
    %v3317 = vadd.f32 %v3276, %v3316
    %v3318 = vpop.f32.mrb[0].mxu0
    %v3319 = vpop.f32.mrb[0].mxu0
    %3320 = vdwg.mxu0
    %3321 = vmatprep.subr.bf16.mxu0 %v2559
    %3322 = vmatpush1.bf16.msra.mxu0 %v2558
    %3323 = vmatprep.subr.bf16.mxu0 %v2567
    %3324 = vmatpush1.bf16.msra.mxu0 %v2566
    %3325 = vmatprep.subr.bf16.mxu0 %v2575
    %3326 = vmatpush1.bf16.msra.mxu0 %v2574
    %3327 = vmatprep.subr.bf16.mxu0 %v2583
    %3328 = vmatpush1.bf16.msra.mxu0 %v2582
    %3329 = vmatprep.subr.bf16.mxu0 %v2591
    %3330 = vmatpush1.bf16.msra.mxu0 %v2590
    %3331 = vmatprep.subr.bf16.mxu0 %v2599
    %3332 = vmatpush1.bf16.msra.mxu0 %v2598
    %3333 = vmatprep.subr.bf16.mxu0 %v2607
    %3334 = vmatpush1.bf16.msra.mxu0 %v2606
    %3335 = vmatprep.subr.bf16.mxu0 %v2615
    %3336 = vmatpush1.bf16.msra.mxu0 %v2614
    %3337 = vmatprep.subr.bf16.mxu0 %v2623
    %3338 = vmatpush1.bf16.msra.mxu0 %v2622
    %3339 = vmatprep.subr.bf16.mxu0 %v2631
    %3340 = vmatpush1.bf16.msra.mxu0 %v2630
    %3341 = vmatprep.subr.bf16.mxu0 %v2639
    %3342 = vmatpush1.bf16.msra.mxu0 %v2638
    %3343 = vmatprep.subr.bf16.mxu0 %v2647
    %3344 = vmatpush1.bf16.msra.mxu0 %v2646
    %3345 = vmatprep.subr.bf16.mxu0 %v2655
    %3346 = vmatpush1.bf16.msra.mxu0 %v2654
    %3347 = vmatprep.subr.bf16.mxu0 %v2663
    %3348 = vmatpush1.bf16.msra.mxu0 %v2662
    %3349 = vmatprep.subr.bf16.mxu0 %v2671
    %3350 = vmatpush1.bf16.msra.mxu0 %v2670
    %3351 = vmatprep.subr.bf16.mxu0 %v2679
    %3352 = vmatpush1.bf16.msra.mxu0 %v2678
    %3353 = vmatprep.mubr.bf16.mxu0 %v629
    %3354 = vmatmul.mubr.bf16.gmra.mrb[0].mxu0 %v627
    %v3355 = vpop.f32.mrb[0].mxu0
    %v3356 = vadd.f32 %v3315, %v3355
    %v3357 = vpop.f32.mrb[0].mxu0
    %v3358 = vadd.f32 %v3317, %v3357
    %v3359 = vpop.f32.mrb[0].mxu0
    %v3360 = vpop.f32.mrb[0].mxu0
    %3361 = vdwg.mxu0
    %3362 = vmatprep.subr.bf16.mxu0 %v2177
    %3363 = vmatpush1.bf16.msra.mxu0 %v2176
    %3364 = vmatprep.subr.bf16.mxu0 %v2185
    %3365 = vmatpush1.bf16.msra.mxu0 %v2184
    %3366 = vmatprep.subr.bf16.mxu0 %v2193
    %3367 = vmatpush1.bf16.msra.mxu0 %v2192
    %3368 = vmatprep.subr.bf16.mxu0 %v2201
    %3369 = vmatpush1.bf16.msra.mxu0 %v2200
    %3370 = vmatprep.subr.bf16.mxu0 %v2209
    %3371 = vmatpush1.bf16.msra.mxu0 %v2208
    %3372 = vmatprep.subr.bf16.mxu0 %v2217
    %3373 = vmatpush1.bf16.msra.mxu0 %v2216
    %3374 = vmatprep.subr.bf16.mxu0 %v2225
    %3375 = vmatpush1.bf16.msra.mxu0 %v2224
    %3376 = vmatprep.subr.bf16.mxu0 %v2233
    %3377 = vmatpush1.bf16.msra.mxu0 %v2232
    %3378 = vmatprep.subr.bf16.mxu0 %v2241
    %3379 = vmatpush1.bf16.msra.mxu0 %v2240
    %3380 = vmatprep.subr.bf16.mxu0 %v2249
    %3381 = vmatpush1.bf16.msra.mxu0 %v2248
    %3382 = vmatprep.subr.bf16.mxu0 %v2257
    %3383 = vmatpush1.bf16.msra.mxu0 %v2256
    %3384 = vmatprep.subr.bf16.mxu0 %v2265
    %3385 = vmatpush1.bf16.msra.mxu0 %v2264
    %3386 = vmatprep.subr.bf16.mxu0 %v2273
    %3387 = vmatpush1.bf16.msra.mxu0 %v2272
    %3388 = vmatprep.subr.bf16.mxu0 %v2281
    %3389 = vmatpush1.bf16.msra.mxu0 %v2280
    %3390 = vmatprep.subr.bf16.mxu0 %v2289
    %3391 = vmatpush1.bf16.msra.mxu0 %v2288
    %3392 = vmatprep.subr.bf16.mxu0 %v2297
    %3393 = vmatpush1.bf16.msra.mxu0 %v2296
    %3394 = vmatprep.mubr.bf16.mxu0 %v618
    %3395 = vmatmul.mubr.bf16.gmra.mrb[0].mxu0 %v604
    %v3396 = vpop.f32.mrb[0].mxu0
    %v3397 = vadd.f32 %v551, %v3396
    %v3398 = vpop.f32.mrb[0].mxu0
    %v3399 = vadd.f32 %v555, %v3398
    %v3400 = vpop.f32.mrb[0].mxu0
    %v3401 = vpop.f32.mrb[0].mxu0
    %3402 = vdwg.mxu0
    %3403 = vmatprep.subr.bf16.mxu0 %v2305
    %3404 = vmatpush1.bf16.msra.mxu0 %v2304
    %3405 = vmatprep.subr.bf16.mxu0 %v2313
    %3406 = vmatpush1.bf16.msra.mxu0 %v2312
    %3407 = vmatprep.subr.bf16.mxu0 %v2321
    %3408 = vmatpush1.bf16.msra.mxu0 %v2320
    %3409 = vmatprep.subr.bf16.mxu0 %v2329
    %3410 = vmatpush1.bf16.msra.mxu0 %v2328
    %3411 = vmatprep.subr.bf16.mxu0 %v2337
    %3412 = vmatpush1.bf16.msra.mxu0 %v2336
    %3413 = vmatprep.subr.bf16.mxu0 %v2345
    %3414 = vmatpush1.bf16.msra.mxu0 %v2344
    %3415 = vmatprep.subr.bf16.mxu0 %v2353
    %3416 = vmatpush1.bf16.msra.mxu0 %v2352
    %3417 = vmatprep.subr.bf16.mxu0 %v2361
    %3418 = vmatpush1.bf16.msra.mxu0 %v2360
    %3419 = vmatprep.subr.bf16.mxu0 %v2369
    %3420 = vmatpush1.bf16.msra.mxu0 %v2368
    %3421 = vmatprep.subr.bf16.mxu0 %v2377
    %3422 = vmatpush1.bf16.msra.mxu0 %v2376
    %3423 = vmatprep.subr.bf16.mxu0 %v2385
    %3424 = vmatpush1.bf16.msra.mxu0 %v2384
    %3425 = vmatprep.subr.bf16.mxu0 %v2393
    %3426 = vmatpush1.bf16.msra.mxu0 %v2392
    %3427 = vmatprep.subr.bf16.mxu0 %v2401
    %3428 = vmatpush1.bf16.msra.mxu0 %v2400
    %3429 = vmatprep.subr.bf16.mxu0 %v2409
    %3430 = vmatpush1.bf16.msra.mxu0 %v2408
    %3431 = vmatprep.subr.bf16.mxu0 %v2417
    %3432 = vmatpush1.bf16.msra.mxu0 %v2416
    %3433 = vmatprep.subr.bf16.mxu0 %v2425
    %3434 = vmatpush1.bf16.msra.mxu0 %v2424
    %3435 = vmatprep.mubr.bf16.mxu0 %v628
    %3436 = vmatmul.mubr.bf16.gmra.mrb[0].mxu0 %v626
    %v3437 = vpop.f32.mrb[0].mxu0
    %v3438 = vadd.f32 %v3397, %v3437
    %v3439 = vpop.f32.mrb[0].mxu0
    %v3440 = vadd.f32 %v3399, %v3439
    %v3441 = vpop.f32.mrb[0].mxu0
    %v3442 = vpop.f32.mrb[0].mxu0
    %3443 = vdwg.mxu0
    %3444 = vmatprep.subr.bf16.mxu0 %v2433
    %3445 = vmatpush1.bf16.msra.mxu0 %v2432
    %3446 = vmatprep.subr.bf16.mxu0 %v2441
    %3447 = vmatpush1.bf16.msra.mxu0 %v2440
    %3448 = vmatprep.subr.bf16.mxu0 %v2449
    %3449 = vmatpush1.bf16.msra.mxu0 %v2448
    %3450 = vmatprep.subr.bf16.mxu0 %v2457
    %3451 = vmatpush1.bf16.msra.mxu0 %v2456
    %3452 = vmatprep.subr.bf16.mxu0 %v2465
    %3453 = vmatpush1.bf16.msra.mxu0 %v2464
    %3454 = vmatprep.subr.bf16.mxu0 %v2473
    %3455 = vmatpush1.bf16.msra.mxu0 %v2472
    %3456 = vmatprep.subr.bf16.mxu0 %v2481
    %3457 = vmatpush1.bf16.msra.mxu0 %v2480
    %3458 = vmatprep.subr.bf16.mxu0 %v2489
    %3459 = vmatpush1.bf16.msra.mxu0 %v2488
    %3460 = vmatprep.subr.bf16.mxu0 %v2497
    %3461 = vmatpush1.bf16.msra.mxu0 %v2496
    %3462 = vmatprep.subr.bf16.mxu0 %v2505
    %3463 = vmatpush1.bf16.msra.mxu0 %v2504
    %3464 = vmatprep.subr.bf16.mxu0 %v2513
    %3465 = vmatpush1.bf16.msra.mxu0 %v2512
    %3466 = vmatprep.subr.bf16.mxu0 %v2521
    %3467 = vmatpush1.bf16.msra.mxu0 %v2520
    %3468 = vmatprep.subr.bf16.mxu0 %v2529
    %3469 = vmatpush1.bf16.msra.mxu0 %v2528
    %3470 = vmatprep.subr.bf16.mxu0 %v2537
    %3471 = vmatpush1.bf16.msra.mxu0 %v2536
    %3472 = vmatprep.subr.bf16.mxu0 %v2545
    %3473 = vmatpush1.bf16.msra.mxu0 %v2544
    %3474 = vmatprep.subr.bf16.mxu0 %v2553
    %3475 = vmatpush1.bf16.msra.mxu0 %v2552
    %3476 = vmatprep.mubr.bf16.mxu0 %v625
    %3477 = vmatmul.mubr.bf16.gmra.mrb[0].mxu0 %v611
    %v3478 = vpop.f32.mrb[0].mxu0
    %v3479 = vadd.f32 %v3438, %v3478
    %v3480 = vpop.f32.mrb[0].mxu0
    %v3481 = vadd.f32 %v3440, %v3480
    %v3482 = vpop.f32.mrb[0].mxu0
    %v3483 = vpop.f32.mrb[0].mxu0
    %3484 = vdwg.mxu0
    %3485 = vmatprep.subr.bf16.mxu0 %v2561
    %3486 = vmatpush1.bf16.msra.mxu0 %v2560
    %3487 = vmatprep.subr.bf16.mxu0 %v2569
    %3488 = vmatpush1.bf16.msra.mxu0 %v2568
    %3489 = vmatprep.subr.bf16.mxu0 %v2577
    %3490 = vmatpush1.bf16.msra.mxu0 %v2576
    %3491 = vmatprep.subr.bf16.mxu0 %v2585
    %3492 = vmatpush1.bf16.msra.mxu0 %v2584
    %3493 = vmatprep.subr.bf16.mxu0 %v2593
    %3494 = vmatpush1.bf16.msra.mxu0 %v2592
    %3495 = vmatprep.subr.bf16.mxu0 %v2601
    %3496 = vmatpush1.bf16.msra.mxu0 %v2600
    %3497 = vmatprep.subr.bf16.mxu0 %v2609
    %3498 = vmatpush1.bf16.msra.mxu0 %v2608
    %3499 = vmatprep.subr.bf16.mxu0 %v2617
    %3500 = vmatpush1.bf16.msra.mxu0 %v2616
    %3501 = vmatprep.subr.bf16.mxu0 %v2625
    %3502 = vmatpush1.bf16.msra.mxu0 %v2624
    %3503 = vmatprep.subr.bf16.mxu0 %v2633
    %3504 = vmatpush1.bf16.msra.mxu0 %v2632
    %3505 = vmatprep.subr.bf16.mxu0 %v2641
    %3506 = vmatpush1.bf16.msra.mxu0 %v2640
    %3507 = vmatprep.subr.bf16.mxu0 %v2649
    %3508 = vmatpush1.bf16.msra.mxu0 %v2648
    %3509 = vmatprep.subr.bf16.mxu0 %v2657
    %3510 = vmatpush1.bf16.msra.mxu0 %v2656
    %3511 = vmatprep.subr.bf16.mxu0 %v2665
    %3512 = vmatpush1.bf16.msra.mxu0 %v2664
    %3513 = vmatprep.subr.bf16.mxu0 %v2673
    %3514 = vmatpush1.bf16.msra.mxu0 %v2672
    %3515 = vmatprep.subr.bf16.mxu0 %v2681
    %3516 = vmatpush1.bf16.msra.mxu0 %v2680
    %3517 = vmatprep.mubr.bf16.mxu0 %v629
    %3518 = vmatmul.mubr.bf16.gmra.mrb[0].mxu0 %v627
    %v3519 = vpop.f32.mrb[0].mxu0
    %v3520 = vadd.f32 %v3479, %v3519
    %v3521 = vpop.f32.mrb[0].mxu0
    %v3522 = vadd.f32 %v3481, %v3521
    %v3523 = vpop.f32.mrb[0].mxu0
    %v3524 = vpop.f32.mrb[0].mxu0
    %3525 = vdwg.mxu0
    %3526 = vmatprep.subr.bf16.mxu0 %v2179
    %3527 = vmatpush1.bf16.msra.mxu0 %v2178
    %3528 = vmatprep.subr.bf16.mxu0 %v2187
    %3529 = vmatpush1.bf16.msra.mxu0 %v2186
    %3530 = vmatprep.subr.bf16.mxu0 %v2195
    %3531 = vmatpush1.bf16.msra.mxu0 %v2194
    %3532 = vmatprep.subr.bf16.mxu0 %v2203
    %3533 = vmatpush1.bf16.msra.mxu0 %v2202
    %3534 = vmatprep.subr.bf16.mxu0 %v2211
    %3535 = vmatpush1.bf16.msra.mxu0 %v2210
    %3536 = vmatprep.subr.bf16.mxu0 %v2219
    %3537 = vmatpush1.bf16.msra.mxu0 %v2218
    %3538 = vmatprep.subr.bf16.mxu0 %v2227
    %3539 = vmatpush1.bf16.msra.mxu0 %v2226
    %3540 = vmatprep.subr.bf16.mxu0 %v2235
    %3541 = vmatpush1.bf16.msra.mxu0 %v2234
    %3542 = vmatprep.subr.bf16.mxu0 %v2243
    %3543 = vmatpush1.bf16.msra.mxu0 %v2242
    %3544 = vmatprep.subr.bf16.mxu0 %v2251
    %3545 = vmatpush1.bf16.msra.mxu0 %v2250
    %3546 = vmatprep.subr.bf16.mxu0 %v2259
    %3547 = vmatpush1.bf16.msra.mxu0 %v2258
    %3548 = vmatprep.subr.bf16.mxu0 %v2267
    %3549 = vmatpush1.bf16.msra.mxu0 %v2266
    %3550 = vmatprep.subr.bf16.mxu0 %v2275
    %3551 = vmatpush1.bf16.msra.mxu0 %v2274
    %3552 = vmatprep.subr.bf16.mxu0 %v2283
    %3553 = vmatpush1.bf16.msra.mxu0 %v2282
    %3554 = vmatprep.subr.bf16.mxu0 %v2291
    %3555 = vmatpush1.bf16.msra.mxu0 %v2290
    %3556 = vmatprep.subr.bf16.mxu0 %v2299
    %3557 = vmatpush1.bf16.msra.mxu0 %v2298
    %3558 = vmatprep.mubr.bf16.mxu0 %v618
    %3559 = vmatmul.mubr.bf16.gmra.mrb[0].mxu0 %v604
    %v3560 = vpop.f32.mrb[0].mxu0
    %v3561 = vadd.f32 %v559, %v3560
    %v3562 = vpop.f32.mrb[0].mxu0
    %v3563 = vadd.f32 %v563, %v3562
    %v3564 = vpop.f32.mrb[0].mxu0
    %v3565 = vpop.f32.mrb[0].mxu0
    %3566 = vdwg.mxu0
    %3567 = vmatprep.subr.bf16.mxu0 %v2307
    %3568 = vmatpush1.bf16.msra.mxu0 %v2306
    %3569 = vmatprep.subr.bf16.mxu0 %v2315
    %3570 = vmatpush1.bf16.msra.mxu0 %v2314
    %3571 = vmatprep.subr.bf16.mxu0 %v2323
    %3572 = vmatpush1.bf16.msra.mxu0 %v2322
    %3573 = vmatprep.subr.bf16.mxu0 %v2331
    %3574 = vmatpush1.bf16.msra.mxu0 %v2330
    %3575 = vmatprep.subr.bf16.mxu0 %v2339
    %3576 = vmatpush1.bf16.msra.mxu0 %v2338
    %3577 = vmatprep.subr.bf16.mxu0 %v2347
    %3578 = vmatpush1.bf16.msra.mxu0 %v2346
    %3579 = vmatprep.subr.bf16.mxu0 %v2355
    %3580 = vmatpush1.bf16.msra.mxu0 %v2354
    %3581 = vmatprep.subr.bf16.mxu0 %v2363
    %3582 = vmatpush1.bf16.msra.mxu0 %v2362
    %3583 = vmatprep.subr.bf16.mxu0 %v2371
    %3584 = vmatpush1.bf16.msra.mxu0 %v2370
    %3585 = vmatprep.subr.bf16.mxu0 %v2379
    %3586 = vmatpush1.bf16.msra.mxu0 %v2378
    %3587 = vmatprep.subr.bf16.mxu0 %v2387
    %3588 = vmatpush1.bf16.msra.mxu0 %v2386
    %3589 = vmatprep.subr.bf16.mxu0 %v2395
    %3590 = vmatpush1.bf16.msra.mxu0 %v2394
    %3591 = vmatprep.subr.bf16.mxu0 %v2403
    %3592 = vmatpush1.bf16.msra.mxu0 %v2402
    %3593 = vmatprep.subr.bf16.mxu0 %v2411
    %3594 = vmatpush1.bf16.msra.mxu0 %v2410
    %3595 = vmatprep.subr.bf16.mxu0 %v2419
    %3596 = vmatpush1.bf16.msra.mxu0 %v2418
    %3597 = vmatprep.subr.bf16.mxu0 %v2427
    %3598 = vmatpush1.bf16.msra.mxu0 %v2426
    %3599 = vmatprep.mubr.bf16.mxu0 %v628
    %3600 = vmatmul.mubr.bf16.gmra.mrb[0].mxu0 %v626
    %v3601 = vpop.f32.mrb[0].mxu0
    %v3602 = vadd.f32 %v3561, %v3601
    %v3603 = vpop.f32.mrb[0].mxu0
    %v3604 = vadd.f32 %v3563, %v3603
    %v3605 = vpop.f32.mrb[0].mxu0
    %v3606 = vpop.f32.mrb[0].mxu0
    %3607 = vdwg.mxu0
    %3608 = vmatprep.subr.bf16.mxu0 %v2435
    %3609 = vmatpush1.bf16.msra.mxu0 %v2434
    %3610 = vmatprep.subr.bf16.mxu0 %v2443
    %3611 = vmatpush1.bf16.msra.mxu0 %v2442
    %3612 = vmatprep.subr.bf16.mxu0 %v2451
    %3613 = vmatpush1.bf16.msra.mxu0 %v2450
    %3614 = vmatprep.subr.bf16.mxu0 %v2459
    %3615 = vmatpush1.bf16.msra.mxu0 %v2458
    %3616 = vmatprep.subr.bf16.mxu0 %v2467
    %3617 = vmatpush1.bf16.msra.mxu0 %v2466
    %3618 = vmatprep.subr.bf16.mxu0 %v2475
    %3619 = vmatpush1.bf16.msra.mxu0 %v2474
    %3620 = vmatprep.subr.bf16.mxu0 %v2483
    %3621 = vmatpush1.bf16.msra.mxu0 %v2482
    %3622 = vmatprep.subr.bf16.mxu0 %v2491
    %3623 = vmatpush1.bf16.msra.mxu0 %v2490
    %3624 = vmatprep.subr.bf16.mxu0 %v2499
    %3625 = vmatpush1.bf16.msra.mxu0 %v2498
    %3626 = vmatprep.subr.bf16.mxu0 %v2507
    %3627 = vmatpush1.bf16.msra.mxu0 %v2506
    %3628 = vmatprep.subr.bf16.mxu0 %v2515
    %3629 = vmatpush1.bf16.msra.mxu0 %v2514
    %3630 = vmatprep.subr.bf16.mxu0 %v2523
    %3631 = vmatpush1.bf16.msra.mxu0 %v2522
    %3632 = vmatprep.subr.bf16.mxu0 %v2531
    %3633 = vmatpush1.bf16.msra.mxu0 %v2530
    %3634 = vmatprep.subr.bf16.mxu0 %v2539
    %3635 = vmatpush1.bf16.msra.mxu0 %v2538
    %3636 = vmatprep.subr.bf16.mxu0 %v2547
    %3637 = vmatpush1.bf16.msra.mxu0 %v2546
    %3638 = vmatprep.subr.bf16.mxu0 %v2555
    %3639 = vmatpush1.bf16.msra.mxu0 %v2554
    %3640 = vmatprep.mubr.bf16.mxu0 %v625
    %3641 = vmatmul.mubr.bf16.gmra.mrb[0].mxu0 %v611
    %v3642 = vpop.f32.mrb[0].mxu0
    %v3643 = vadd.f32 %v3602, %v3642
    %v3644 = vpop.f32.mrb[0].mxu0
    %v3645 = vadd.f32 %v3604, %v3644
    %v3646 = vpop.f32.mrb[0].mxu0
    %v3647 = vpop.f32.mrb[0].mxu0
    %3648 = vdwg.mxu0
    %3649 = vmatprep.subr.bf16.mxu0 %v2563
    %3650 = vmatpush1.bf16.msra.mxu0 %v2562
    %3651 = vmatprep.subr.bf16.mxu0 %v2571
    %3652 = vmatpush1.bf16.msra.mxu0 %v2570
    %3653 = vmatprep.subr.bf16.mxu0 %v2579
    %3654 = vmatpush1.bf16.msra.mxu0 %v2578
    %3655 = vmatprep.subr.bf16.mxu0 %v2587
    %3656 = vmatpush1.bf16.msra.mxu0 %v2586
    %3657 = vmatprep.subr.bf16.mxu0 %v2595
    %3658 = vmatpush1.bf16.msra.mxu0 %v2594
    %3659 = vmatprep.subr.bf16.mxu0 %v2603
    %3660 = vmatpush1.bf16.msra.mxu0 %v2602
    %3661 = vmatprep.subr.bf16.mxu0 %v2611
    %3662 = vmatpush1.bf16.msra.mxu0 %v2610
    %3663 = vmatprep.subr.bf16.mxu0 %v2619
    %3664 = vmatpush1.bf16.msra.mxu0 %v2618
    %3665 = vmatprep.subr.bf16.mxu0 %v2627
    %3666 = vmatpush1.bf16.msra.mxu0 %v2626
    %3667 = vmatprep.subr.bf16.mxu0 %v2635
    %3668 = vmatpush1.bf16.msra.mxu0 %v2634
    %3669 = vmatprep.subr.bf16.mxu0 %v2643
    %3670 = vmatpush1.bf16.msra.mxu0 %v2642
    %3671 = vmatprep.subr.bf16.mxu0 %v2651
    %3672 = vmatpush1.bf16.msra.mxu0 %v2650
    %3673 = vmatprep.subr.bf16.mxu0 %v2659
    %3674 = vmatpush1.bf16.msra.mxu0 %v2658
    %3675 = vmatprep.subr.bf16.mxu0 %v2667
    %3676 = vmatpush1.bf16.msra.mxu0 %v2666
    %3677 = vmatprep.subr.bf16.mxu0 %v2675
    %3678 = vmatpush1.bf16.msra.mxu0 %v2674
    %3679 = vmatprep.subr.bf16.mxu0 %v2683
    %3680 = vmatpush1.bf16.msra.mxu0 %v2682
    %3681 = vmatprep.mubr.bf16.mxu0 %v629
    %3682 = vmatmul.mubr.bf16.gmra.mrb[0].mxu0 %v627
    %v3683 = vpop.f32.mrb[0].mxu0
    %v3684 = vadd.f32 %v3643, %v3683
    %v3685 = vpop.f32.mrb[0].mxu0
    %v3686 = vadd.f32 %v3645, %v3685
    %v3687 = vpop.f32.mrb[0].mxu0
    %v3688 = vpop.f32.mrb[0].mxu0
    %3689 = vdwg.mxu0
    %3690 = vmatprep.subr.bf16.mxu0 %v2181
    %3691 = vmatpush1.bf16.msra.mxu0 %v2180
    %3692 = vmatprep.subr.bf16.mxu0 %v2189
    %3693 = vmatpush1.bf16.msra.mxu0 %v2188
    %3694 = vmatprep.subr.bf16.mxu0 %v2197
    %3695 = vmatpush1.bf16.msra.mxu0 %v2196
    %3696 = vmatprep.subr.bf16.mxu0 %v2205
    %3697 = vmatpush1.bf16.msra.mxu0 %v2204
    %3698 = vmatprep.subr.bf16.mxu0 %v2213
    %3699 = vmatpush1.bf16.msra.mxu0 %v2212
    %3700 = vmatprep.subr.bf16.mxu0 %v2221
    %3701 = vmatpush1.bf16.msra.mxu0 %v2220
    %3702 = vmatprep.subr.bf16.mxu0 %v2229
    %3703 = vmatpush1.bf16.msra.mxu0 %v2228
    %3704 = vmatprep.subr.bf16.mxu0 %v2237
    %3705 = vmatpush1.bf16.msra.mxu0 %v2236
    %3706 = vmatprep.subr.bf16.mxu0 %v2245
    %3707 = vmatpush1.bf16.msra.mxu0 %v2244
    %3708 = vmatprep.subr.bf16.mxu0 %v2253
    %3709 = vmatpush1.bf16.msra.mxu0 %v2252
    %3710 = vmatprep.subr.bf16.mxu0 %v2261
    %3711 = vmatpush1.bf16.msra.mxu0 %v2260
    %3712 = vmatprep.subr.bf16.mxu0 %v2269
    %3713 = vmatpush1.bf16.msra.mxu0 %v2268
    %3714 = vmatprep.subr.bf16.mxu0 %v2277
    %3715 = vmatpush1.bf16.msra.mxu0 %v2276
    %3716 = vmatprep.subr.bf16.mxu0 %v2285
    %3717 = vmatpush1.bf16.msra.mxu0 %v2284
    %3718 = vmatprep.subr.bf16.mxu0 %v2293
    %3719 = vmatpush1.bf16.msra.mxu0 %v2292
    %3720 = vmatprep.subr.bf16.mxu0 %v2301
    %3721 = vmatpush1.bf16.msra.mxu0 %v2300
    %3722 = vmatprep.mubr.bf16.mxu0 %v618
    %3723 = vmatmul.mubr.bf16.gmra.mrb[0].mxu0 %v604
    %v3724 = vpop.f32.mrb[0].mxu0
    %v3725 = vadd.f32 %v567, %v3724
    %v3726 = vpop.f32.mrb[0].mxu0
    %v3727 = vadd.f32 %v571, %v3726
    %v3728 = vpop.f32.mrb[0].mxu0
    %v3729 = vpop.f32.mrb[0].mxu0
    %3730 = vdwg.mxu0
    %3731 = vmatprep.subr.bf16.mxu0 %v2309
    %3732 = vmatpush1.bf16.msra.mxu0 %v2308
    %3733 = vmatprep.subr.bf16.mxu0 %v2317
    %3734 = vmatpush1.bf16.msra.mxu0 %v2316
    %3735 = vmatprep.subr.bf16.mxu0 %v2325
    %3736 = vmatpush1.bf16.msra.mxu0 %v2324
    %3737 = vmatprep.subr.bf16.mxu0 %v2333
    %3738 = vmatpush1.bf16.msra.mxu0 %v2332
    %3739 = vmatprep.subr.bf16.mxu0 %v2341
    %3740 = vmatpush1.bf16.msra.mxu0 %v2340
    %3741 = vmatprep.subr.bf16.mxu0 %v2349
    %3742 = vmatpush1.bf16.msra.mxu0 %v2348
    %3743 = vmatprep.subr.bf16.mxu0 %v2357
    %3744 = vmatpush1.bf16.msra.mxu0 %v2356
    %3745 = vmatprep.subr.bf16.mxu0 %v2365
    %3746 = vmatpush1.bf16.msra.mxu0 %v2364
    %3747 = vmatprep.subr.bf16.mxu0 %v2373
    %3748 = vmatpush1.bf16.msra.mxu0 %v2372
    %3749 = vmatprep.subr.bf16.mxu0 %v2381
    %3750 = vmatpush1.bf16.msra.mxu0 %v2380
    %3751 = vmatprep.subr.bf16.mxu0 %v2389
    %3752 = vmatpush1.bf16.msra.mxu0 %v2388
    %3753 = vmatprep.subr.bf16.mxu0 %v2397
    %3754 = vmatpush1.bf16.msra.mxu0 %v2396
    %3755 = vmatprep.subr.bf16.mxu0 %v2405
    %3756 = vmatpush1.bf16.msra.mxu0 %v2404
    %3757 = vmatprep.subr.bf16.mxu0 %v2413
    %3758 = vmatpush1.bf16.msra.mxu0 %v2412
    %3759 = vmatprep.subr.bf16.mxu0 %v2421
    %3760 = vmatpush1.bf16.msra.mxu0 %v2420
    %3761 = vmatprep.subr.bf16.mxu0 %v2429
    %3762 = vmatpush1.bf16.msra.mxu0 %v2428
    %3763 = vmatprep.mubr.bf16.mxu0 %v628
    %3764 = vmatmul.mubr.bf16.gmra.mrb[0].mxu0 %v626
    %v3765 = vpop.f32.mrb[0].mxu0
    %v3766 = vadd.f32 %v3725, %v3765
    %v3767 = vpop.f32.mrb[0].mxu0
    %v3768 = vadd.f32 %v3727, %v3767
    %v3769 = vpop.f32.mrb[0].mxu0
    %v3770 = vpop.f32.mrb[0].mxu0
    %3771 = vdwg.mxu0
    %3772 = vmatprep.subr.bf16.mxu0 %v2437
    %3773 = vmatpush1.bf16.msra.mxu0 %v2436
    %3774 = vmatprep.subr.bf16.mxu0 %v2445
    %3775 = vmatpush1.bf16.msra.mxu0 %v2444
    %3776 = vmatprep.subr.bf16.mxu0 %v2453
    %3777 = vmatpush1.bf16.msra.mxu0 %v2452
    %3778 = vmatprep.subr.bf16.mxu0 %v2461
    %3779 = vmatpush1.bf16.msra.mxu0 %v2460
    %3780 = vmatprep.subr.bf16.mxu0 %v2469
    %3781 = vmatpush1.bf16.msra.mxu0 %v2468
    %3782 = vmatprep.subr.bf16.mxu0 %v2477
    %3783 = vmatpush1.bf16.msra.mxu0 %v2476
    %3784 = vmatprep.subr.bf16.mxu0 %v2485
    %3785 = vmatpush1.bf16.msra.mxu0 %v2484
    %3786 = vmatprep.subr.bf16.mxu0 %v2493
    %3787 = vmatpush1.bf16.msra.mxu0 %v2492
    %3788 = vmatprep.subr.bf16.mxu0 %v2501
    %3789 = vmatpush1.bf16.msra.mxu0 %v2500
    %3790 = vmatprep.subr.bf16.mxu0 %v2509
    %3791 = vmatpush1.bf16.msra.mxu0 %v2508
    %3792 = vmatprep.subr.bf16.mxu0 %v2517
    %3793 = vmatpush1.bf16.msra.mxu0 %v2516
    %3794 = vmatprep.subr.bf16.mxu0 %v2525
    %3795 = vmatpush1.bf16.msra.mxu0 %v2524
    %3796 = vmatprep.subr.bf16.mxu0 %v2533
    %3797 = vmatpush1.bf16.msra.mxu0 %v2532
    %3798 = vmatprep.subr.bf16.mxu0 %v2541
    %3799 = vmatpush1.bf16.msra.mxu0 %v2540
    %3800 = vmatprep.subr.bf16.mxu0 %v2549
    %3801 = vmatpush1.bf16.msra.mxu0 %v2548
    %3802 = vmatprep.subr.bf16.mxu0 %v2557
    %3803 = vmatpush1.bf16.msra.mxu0 %v2556
    %3804 = vmatprep.mubr.bf16.mxu0 %v625
    %3805 = vmatmul.mubr.bf16.gmra.mrb[0].mxu0 %v611
    %v3806 = vpop.f32.mrb[0].mxu0
    %v3807 = vadd.f32 %v3766, %v3806
    %v3808 = vpop.f32.mrb[0].mxu0
    %v3809 = vadd.f32 %v3768, %v3808
    %v3810 = vpop.f32.mrb[0].mxu0
    %v3811 = vpop.f32.mrb[0].mxu0
    %3812 = vdwg.mxu0
    %3813 = vmatprep.subr.bf16.mxu0 %v2565
    %3814 = vmatpush1.bf16.msra.mxu0 %v2564
    %3815 = vmatprep.subr.bf16.mxu0 %v2573
    %3816 = vmatpush1.bf16.msra.mxu0 %v2572
    %3817 = vmatprep.subr.bf16.mxu0 %v2581
    %3818 = vmatpush1.bf16.msra.mxu0 %v2580
    %3819 = vmatprep.subr.bf16.mxu0 %v2589
    %3820 = vmatpush1.bf16.msra.mxu0 %v2588
    %3821 = vmatprep.subr.bf16.mxu0 %v2597
    %3822 = vmatpush1.bf16.msra.mxu0 %v2596
    %3823 = vmatprep.subr.bf16.mxu0 %v2605
    %3824 = vmatpush1.bf16.msra.mxu0 %v2604
    %3825 = vmatprep.subr.bf16.mxu0 %v2613
    %3826 = vmatpush1.bf16.msra.mxu0 %v2612
    %3827 = vmatprep.subr.bf16.mxu0 %v2621
    %3828 = vmatpush1.bf16.msra.mxu0 %v2620
    %3829 = vmatprep.subr.bf16.mxu0 %v2629
    %3830 = vmatpush1.bf16.msra.mxu0 %v2628
    %3831 = vmatprep.subr.bf16.mxu0 %v2637
    %3832 = vmatpush1.bf16.msra.mxu0 %v2636
    %3833 = vmatprep.subr.bf16.mxu0 %v2645
    %3834 = vmatpush1.bf16.msra.mxu0 %v2644
    %3835 = vmatprep.subr.bf16.mxu0 %v2653
    %3836 = vmatpush1.bf16.msra.mxu0 %v2652
    %3837 = vmatprep.subr.bf16.mxu0 %v2661
    %3838 = vmatpush1.bf16.msra.mxu0 %v2660
    %3839 = vmatprep.subr.bf16.mxu0 %v2669
    %3840 = vmatpush1.bf16.msra.mxu0 %v2668
    %3841 = vmatprep.subr.bf16.mxu0 %v2677
    %3842 = vmatpush1.bf16.msra.mxu0 %v2676
    %3843 = vmatprep.subr.bf16.mxu0 %v2685
    %3844 = vmatpush1.bf16.msra.mxu0 %v2684
    %3845 = vmatprep.mubr.bf16.mxu0 %v629
    %3846 = vmatmul.mubr.bf16.gmra.mrb[0].mxu0 %v627
    %v3847 = vpop.f32.mrb[0].mxu0
    %v3848 = vadd.f32 %v3807, %v3847
    %v3849 = vpop.f32.mrb[0].mxu0
    %v3850 = vadd.f32 %v3809, %v3849
    %v3851 = vpop.f32.mrb[0].mxu0
    %v3852 = vpop.f32.mrb[0].mxu0
    %3853 = vdwg.mxu0
    %vm3854 = vcmp.ge.f32.partialorder %v3356, 0.0
    %vm3855 = vcmp.ge.f32.partialorder %v3358, 0.0
    %vm3856 = vcmp.ge.f32.partialorder %v3520, 0.0
    %vm3857 = vcmp.ge.f32.partialorder %v3522, 0.0
    %vm3858 = vcmp.ge.f32.partialorder %v3684, 0.0
    %vm3859 = vcmp.ge.f32.partialorder %v3686, 0.0
    %vm3860 = vcmp.ge.f32.partialorder %v3848, 0.0
    %vm3861 = vcmp.ge.f32.partialorder %v3850, 0.0
    %v3862 = vmul.f32 %v3356, 0.01
    %v3863 = vmul.f32 %v3358, 0.01
    %v3864 = vmul.f32 %v3520, 0.01
    %v3865 = vmul.f32 %v3522, 0.01
    %v3866 = vmul.f32 %v3684, 0.01
    %v3867 = vmul.f32 %v3686, 0.01
    %v3868 = vmul.f32 %v3848, 0.01
    %v3869 = vmul.f32 %v3850, 0.01
    %v3870 = vsel %vm3854, %v3356, %v3862
    %v3871 = vsel %vm3855, %v3358, %v3863
    %v3872 = vsel %vm3856, %v3520, %v3864
    %v3873 = vsel %vm3857, %v3522, %v3865
    %v3874 = vsel %vm3858, %v3684, %v3866
    %v3875 = vsel %vm3859, %v3686, %v3867
    %v3876 = vsel %vm3860, %v3848, %v3868
    %v3877 = vsel %vm3861, %v3850, %v3869
    %v3886 = vcombine.low %v3870, %v3871
    %v3887 = vcombine.low %v3872, %v3873
    %v3889 = vunpack.c.l.s4 1983009808
    %v3890 = vunpack.c.0.s8 %v3889
    %v3891 = vlaneseq
    %v3892 = vshrl.u32 %v3891, 7
    %v3893 = vsub.s32 %v3890, %v3892
    %v3894 = vrot.slane %v3886, %v3893
    %v3896 = vunpack.c.l.s4 1983009808
    %v3897 = vunpack.c.0.s8 %v3896
    %v3898 = vlaneseq
    %v3899 = vshrl.u32 %v3898, 7
    %v3900 = vsub.s32 %v3897, %v3899
    %v3901 = vrot.slane %v3887, %v3900
    %v3902 = vcombine.low %v3894, %v3901
    %v3903 = vcombine.low %v3874, %v3875
    %v3904 = vcombine.low %v3876, %v3877
    %v3906 = vunpack.c.l.s4 1983009808
    %v3907 = vunpack.c.0.s8 %v3906
    %v3908 = vlaneseq
    %v3909 = vshrl.u32 %v3908, 7
    %v3910 = vsub.s32 %v3907, %v3909
    %v3911 = vrot.slane %v3903, %v3910
    %v3913 = vunpack.c.l.s4 1983009808
    %v3914 = vunpack.c.0.s8 %v3913
    %v3915 = vlaneseq
    %v3916 = vshrl.u32 %v3915, 7
    %v3917 = vsub.s32 %v3914, %v3916
    %v3918 = vrot.slane %v3904, %v3917
    %v3919 = vcombine.low %v3911, %v3918
    %3922 = vst [vmem:[#allocation3] sm:$0xff] %v3902
    %3923 = vst [vmem:[#allocation3 + $0x8] sm:$0xff] %v3919
    %v3924 = vld [vmem:[%s3] sm:$0xff]
    %v3926 = vlaneseq
    %v3927 = vshrl.u32 %v3926, 7
    %v3928 = vsub.s32 0, %v3927
    %v3929 = vrot.slane %v3924, %v3928
    %v3930 = vlaneseq
    %v3931 = vshrl.u32 %v3930, 7
    %v3932 = vsub.s32 1, %v3931
    %v3933 = vrot.slane %v3924, %v3932
    %v3934 = vlaneseq
    %v3935 = vshrl.u32 %v3934, 7
    %v3936 = vsub.s32 2, %v3935
    %v3937 = vrot.slane %v3924, %v3936
    %v3938 = vlaneseq
    %v3939 = vshrl.u32 %v3938, 7
    %v3940 = vsub.s32 3, %v3939
    %v3941 = vrot.slane %v3924, %v3940
    %v3942 = vlaneseq
    %v3943 = vshrl.u32 %v3942, 7
    %v3944 = vsub.s32 4, %v3943
    %v3945 = vrot.slane %v3924, %v3944
    %v3946 = vlaneseq
    %v3947 = vshrl.u32 %v3946, 7
    %v3948 = vsub.s32 5, %v3947
    %v3949 = vrot.slane %v3924, %v3948
    %v3950 = vlaneseq
    %v3951 = vshrl.u32 %v3950, 7
    %v3952 = vsub.s32 6, %v3951
    %v3953 = vrot.slane %v3924, %v3952
    %v3954 = vlaneseq
    %v3955 = vshrl.u32 %v3954, 7
    %v3956 = vsub.s32 7, %v3955
    %v3957 = vrot.slane %v3924, %v3956
    %v3966 = vmul.f32 %v3870, %v3929
    %v3967 = vmul.f32 %v3871, %v3933
    %v3968 = vmul.f32 %v3872, %v3937
    %v3969 = vmul.f32 %v3873, %v3941
    %v3970 = vmul.f32 %v3874, %v3945
    %v3971 = vmul.f32 %v3875, %v3949
    %v3972 = vmul.f32 %v3876, %v3953
    %v3973 = vmul.f32 %v3877, %v3957
    %vm3974 = vcmask 1041408
    %v3975 = vsel %vm3974, %v3966, 0.0
    %v3976 = vsel %vm3974, %v3967, 0.0
    %v3977 = vadd.f32 %v3975, %v3976
    %v3978 = vsel %vm3974, %v3968, 0.0
    %v3979 = vadd.f32 %v3977, %v3978
    %v3980 = vsel %vm3974, %v3969, 0.0
    %v3981 = vadd.f32 %v3979, %v3980
    %v3982 = vsel %vm3974, %v3970, 0.0
    %v3983 = vadd.f32 %v3981, %v3982
    %v3984 = vsel %vm3974, %v3971, 0.0
    %v3985 = vadd.f32 %v3983, %v3984
    %v3986 = vsel %vm3974, %v3972, 0.0
    %v3987 = vadd.f32 %v3985, %v3986
    %v3988 = vsel %vm3974, %v3973, 0.0
    %v3989 = vadd.f32 %v3987, %v3988
    %3990 = vadd.xlane.f32.xlu0 %v3989
    %v3991 = vpop.xlane.xlu0 %3990
    %v3992 = vld [vmem:[#allocation2] sm:$0x1]
    %v3994 = vlaneseq
    %v3995 = vshrl.u32 %v3994, 7
    %v3996 = vsub.s32 0, %v3995
    %v3997 = vrot.slane %v3992, %v3996
    %v3999 = vadd.f32 %v3991, %v3997
    %vm4000 = vcmask 1024
    %4001 = vst.msk [vmem:[%s6] sm:$0x3] %vm4000, %v3999
    // Predicated region
    $region22: #{discriminator_forward.5} parent=1 // pred_check
      _
    $region23: #{discriminator_forward.5} parent=1 // pred_check_branch
      %4003 = sbr.rel (0) target = $region25
    $region24: #{discriminator_forward.5} parent=1 // pred_region
      %s4005 = ssub.s32 256, 256
      %4006 = vsyncadd [#allocation4], %s4005
      %s4008 = sshll.u32 [#allocation3], 4
      %s4009 = int_to_ptr.vmem [resolvable:$true] %s4008
      %4011 = dma.vmem_to_hbm [thread:$0]  %s4009, 256, %s5, [#allocation4]
    $region25: #{discriminator_forward.5} parent=1 // pred_fallthru
      _
    // Predicated region
    $region26: #{discriminator_forward.5} parent=1 // pred_check
      _
    $region27: #{discriminator_forward.5} parent=1 // pred_check_branch
      %4013 = sbr.rel (0) target = $region29
    $region28: #{discriminator_forward.5} parent=1 // pred_region
      _
    $region29: #{discriminator_forward.5} parent=1 // pred_fallthru
      _
    // Predicated region
    $region30: #{discriminator_forward.5} parent=1 // pred_check
      _
    $region31: #{discriminator_forward.5} parent=1 // pred_check_branch
      %4015 = sbr.rel (0) target = $region33
    $region32: #{discriminator_forward.5} parent=1 // pred_region
      %4016 = dma.done [#allocation4], 256
    $region33: #{discriminator_forward.5} parent=1 // pred_fallthru
      _
    // Predicated region
    $region34: #{discriminator_forward.5} parent=1 // pred_check
      _
    $region35: #{discriminator_forward.5} parent=1 // pred_check_branch
      %4018 = sbr.rel (0) target = $region37
    $region36: #{discriminator_forward.5} parent=1 // pred_region
      _
    $region37: #{discriminator_forward.5} parent=1 // pred_fallthru
      _
    %4019 = vsyncpa [#allocation4], 1

// kernel: discriminator_forward.4
$region0: #{discriminator_forward.4}
  #allocation0 [shape = 'u32[]', space=smem, size = 0x4, offset = 0x4, fixed_abs, tag = 'smem constant byte address 0x4 - core index']
  #allocation1 [shape = 'u32[144,128]{1,0:T(1,128)}', space=vmem, size = 0x12000, scoped, tag = 'internal scratch']
  %s0 = inlined_call_operand.vmem [shape: bf16[2,12,12,32], index: 0, kind: input, shape index: {}]
  %s1 = inlined_call_operand.vmem [shape: bf16[25,32,64], index: 1, kind: input, shape index: {}]
  %s2 = inlined_call_operand.vmem [shape: f32[1,64], index: 2, kind: input, shape index: {}]
  %s3 = inlined_call_operand.vmem [shape: bf16[2,32,64], index: 3, kind: output, shape index: {}]
  %s4 = sld [smem:[#allocation0]]
  $region22: #{discriminator_forward.4} parent=0
    _
  %s6 = ssub.s32 1, %s4
  %s7 = scalar_select 0, %s6, %s4
  // Predicated region
  $region2: #{discriminator_forward.4} parent=0 // pred_check
    _
  $region3: #{discriminator_forward.4} parent=0 // pred_check_branch
    %9 = sbr.rel (0) target = $region5
  $region4: #{discriminator_forward.4} parent=0 // pred_region
    _
  $region5: #{discriminator_forward.4} parent=0 // pred_fallthru
    _
  // Predicated region
  $region6: #{discriminator_forward.4} parent=0 // pred_check
    _
  $region7: #{discriminator_forward.4} parent=0 // pred_check_branch
    %11 = sbr.rel (0) target = $region9
  $region8: #{discriminator_forward.4} parent=0 // pred_region
    _
  $region9: #{discriminator_forward.4} parent=0 // pred_fallthru
    _
  // Predicated region
  $region10: #{discriminator_forward.4} parent=0 // pred_check
    _
  $region11: #{discriminator_forward.4} parent=0 // pred_check_branch
    %13 = sbr.rel (0) target = $region13
  $region12: #{discriminator_forward.4} parent=0 // pred_region
    _
  $region13: #{discriminator_forward.4} parent=0 // pred_fallthru
    _
  %v15 = vld [vmem:[%s0] sm:$0xf]
  %v16 = vld [vmem:[%s0 + $0x8] sm:$0xf]
  %v17 = vld [vmem:[%s0 + $0x10] sm:$0xf]
  %v18 = vld [vmem:[%s0 + $0x18] sm:$0xf]
  %v19 = vld [vmem:[%s0 + $0x20] sm:$0xf]
  %v20 = vld [vmem:[%s0 + $0x28] sm:$0xf]
  %v21 = vld [vmem:[%s0 + $0x30] sm:$0xf]
  %v22 = vld [vmem:[%s0 + $0x38] sm:$0xf]
  %v23 = vld [vmem:[%s0 + $0x60] sm:$0xf]
  %v24 = vld [vmem:[%s0 + $0x68] sm:$0xf]
  %v25 = vld [vmem:[%s0 + $0x70] sm:$0xf]
  %v26 = vld [vmem:[%s0 + $0x78] sm:$0xf]
  %v27 = vld [vmem:[%s0 + $0x80] sm:$0xf]
  %v28 = vld [vmem:[%s0 + $0x88] sm:$0xf]
  %v29 = vld [vmem:[%s0 + $0x90] sm:$0xf]
  %v30 = vld [vmem:[%s0 + $0x98] sm:$0xf]
  %v31 = vld [vmem:[%s1] sm:$0xf]
  %v32 = vld [vmem:[%s1 + $0x4] sm:$0xf]
  %v33 = vld [vmem:[%s1 + $0x8] sm:$0xf]
  %v34 = vld [vmem:[%s1 + $0xc] sm:$0xf]
  %v35 = vld [vmem:[%s0 + $0x4] sm:$0x1]
  %v36 = vld [vmem:[%s0 + $0xc] sm:$0x1]
  %v37 = vld [vmem:[%s0 + $0x14] sm:$0x1]
  %v38 = vld [vmem:[%s0 + $0x1c] sm:$0x1]
  %v39 = vld [vmem:[%s0 + $0x24] sm:$0x1]
  %v40 = vld [vmem:[%s0 + $0x2c] sm:$0x1]
  %v41 = vld [vmem:[%s0 + $0x34] sm:$0x1]
  %v42 = vld [vmem:[%s0 + $0x3c] sm:$0x1]
  %v43 = vld [vmem:[%s0 + $0x64] sm:$0x1]
  %v44 = vld [vmem:[%s0 + $0x6c] sm:$0x1]
  %v45 = vld [vmem:[%s0 + $0x74] sm:$0x1]
  %v46 = vld [vmem:[%s0 + $0x7c] sm:$0x1]
  %v47 = vld [vmem:[%s0 + $0x84] sm:$0x1]
  %v48 = vld [vmem:[%s0 + $0x8c] sm:$0x1]
  %v49 = vld [vmem:[%s0 + $0x94] sm:$0x1]
  %v50 = vld [vmem:[%s0 + $0x9c] sm:$0x1]
  %vm51 = vsmask.f32 3328
  %vm52 = vsmask.f32 7440
  %vm53 = vmor %vm51, %vm52
  %v55 = vshrl.u32 %v15, 16
  %v57 = vrot.slane %v55, 4
  %v58 = vshll.u32 %v15, 16
  %v60 = vrot.slane %v58, 5
  %v61 = vor.u32 %v57, %v60
  %v62 = vrot.slane %v61, 4
  %v64 = vshll.u32 %v35, 16
  %v66 = vrot.slane %v64, 5
  %v67 = vsel %vm53, %v62, %v66
  %v69 = vshrl.u32 %v16, 16
  %v71 = vrot.slane %v69, 4
  %v72 = vshll.u32 %v16, 16
  %v74 = vrot.slane %v72, 5
  %v75 = vor.u32 %v71, %v74
  %v76 = vrot.slane %v75, 4
  %v78 = vshll.u32 %v36, 16
  %v80 = vrot.slane %v78, 5
  %v81 = vsel %vm53, %v76, %v80
  %v83 = vshrl.u32 %v17, 16
  %v85 = vrot.slane %v83, 4
  %v86 = vshll.u32 %v17, 16
  %v88 = vrot.slane %v86, 5
  %v89 = vor.u32 %v85, %v88
  %v90 = vrot.slane %v89, 4
  %v92 = vshll.u32 %v37, 16
  %v94 = vrot.slane %v92, 5
  %v95 = vsel %vm53, %v90, %v94
  %v97 = vshrl.u32 %v18, 16
  %v99 = vrot.slane %v97, 4
  %v100 = vshll.u32 %v18, 16
  %v102 = vrot.slane %v100, 5
  %v103 = vor.u32 %v99, %v102
  %v104 = vrot.slane %v103, 4
  %v106 = vshll.u32 %v38, 16
  %v108 = vrot.slane %v106, 5
  %v109 = vsel %vm53, %v104, %v108
  %v111 = vshrl.u32 %v19, 16
  %v113 = vrot.slane %v111, 4
  %v114 = vshll.u32 %v19, 16
  %v116 = vrot.slane %v114, 5
  %v117 = vor.u32 %v113, %v116
  %v118 = vrot.slane %v117, 4
  %v120 = vshll.u32 %v39, 16
  %v122 = vrot.slane %v120, 5
  %v123 = vsel %vm53, %v118, %v122
  %v125 = vshrl.u32 %v20, 16
  %v127 = vrot.slane %v125, 4
  %v128 = vshll.u32 %v20, 16
  %v130 = vrot.slane %v128, 5
  %v131 = vor.u32 %v127, %v130
  %v132 = vrot.slane %v131, 4
  %v134 = vshll.u32 %v40, 16
  %v136 = vrot.slane %v134, 5
  %v137 = vsel %vm53, %v132, %v136
  %v139 = vshrl.u32 %v21, 16
  %v141 = vrot.slane %v139, 4
  %v142 = vshll.u32 %v21, 16
  %v144 = vrot.slane %v142, 5
  %v145 = vor.u32 %v141, %v144
  %v146 = vrot.slane %v145, 4
  %v148 = vshll.u32 %v41, 16
  %v150 = vrot.slane %v148, 5
  %v151 = vsel %vm53, %v146, %v150
  %v153 = vshrl.u32 %v22, 16
  %v155 = vrot.slane %v153, 4
  %v156 = vshll.u32 %v22, 16
  %v158 = vrot.slane %v156, 5
  %v159 = vor.u32 %v155, %v158
  %v160 = vrot.slane %v159, 4
  %v162 = vshll.u32 %v42, 16
  %v164 = vrot.slane %v162, 5
  %v165 = vsel %vm53, %v160, %v164
  %v167 = vshrl.u32 %v23, 16
  %v169 = vrot.slane %v167, 4
  %v170 = vshll.u32 %v23, 16
  %v172 = vrot.slane %v170, 5
  %v173 = vor.u32 %v169, %v172
  %v174 = vrot.slane %v173, 4
  %v176 = vshll.u32 %v43, 16
  %v178 = vrot.slane %v176, 5
  %v179 = vsel %vm53, %v174, %v178
  %v181 = vshrl.u32 %v24, 16
  %v183 = vrot.slane %v181, 4
  %v184 = vshll.u32 %v24, 16
  %v186 = vrot.slane %v184, 5
  %v187 = vor.u32 %v183, %v186
  %v188 = vrot.slane %v187, 4
  %v190 = vshll.u32 %v44, 16
  %v192 = vrot.slane %v190, 5
  %v193 = vsel %vm53, %v188, %v192
  %v195 = vshrl.u32 %v25, 16
  %v197 = vrot.slane %v195, 4
  %v198 = vshll.u32 %v25, 16
  %v200 = vrot.slane %v198, 5
  %v201 = vor.u32 %v197, %v200
  %v202 = vrot.slane %v201, 4
  %v204 = vshll.u32 %v45, 16
  %v206 = vrot.slane %v204, 5
  %v207 = vsel %vm53, %v202, %v206
  %v209 = vshrl.u32 %v26, 16
  %v211 = vrot.slane %v209, 4
  %v212 = vshll.u32 %v26, 16
  %v214 = vrot.slane %v212, 5
  %v215 = vor.u32 %v211, %v214
  %v216 = vrot.slane %v215, 4
  %v218 = vshll.u32 %v46, 16
  %v220 = vrot.slane %v218, 5
  %v221 = vsel %vm53, %v216, %v220
  %v223 = vshrl.u32 %v27, 16
  %v225 = vrot.slane %v223, 4
  %v226 = vshll.u32 %v27, 16
  %v228 = vrot.slane %v226, 5
  %v229 = vor.u32 %v225, %v228
  %v230 = vrot.slane %v229, 4
  %v232 = vshll.u32 %v47, 16
  %v234 = vrot.slane %v232, 5
  %v235 = vsel %vm53, %v230, %v234
  %v237 = vshrl.u32 %v28, 16
  %v239 = vrot.slane %v237, 4
  %v240 = vshll.u32 %v28, 16
  %v242 = vrot.slane %v240, 5
  %v243 = vor.u32 %v239, %v242
  %v244 = vrot.slane %v243, 4
  %v246 = vshll.u32 %v48, 16
  %v248 = vrot.slane %v246, 5
  %v249 = vsel %vm53, %v244, %v248
  %v251 = vshrl.u32 %v29, 16
  %v253 = vrot.slane %v251, 4
  %v254 = vshll.u32 %v29, 16
  %v256 = vrot.slane %v254, 5
  %v257 = vor.u32 %v253, %v256
  %v258 = vrot.slane %v257, 4
  %v260 = vshll.u32 %v49, 16
  %v262 = vrot.slane %v260, 5
  %v263 = vsel %vm53, %v258, %v262
  %v265 = vshrl.u32 %v30, 16
  %v267 = vrot.slane %v265, 4
  %v268 = vshll.u32 %v30, 16
  %v270 = vrot.slane %v268, 5
  %v271 = vor.u32 %v267, %v270
  %v272 = vrot.slane %v271, 4
  %v274 = vshll.u32 %v50, 16
  %v276 = vrot.slane %v274, 5
  %v277 = vsel %vm53, %v272, %v276
  %s278 = scalar_lea.vmem %s1, 16
  %v279 = vld [vmem:[%s278] sm:$0xf]
  %v280 = vld [vmem:[%s278 + $0x4] sm:$0xf]
  %v281 = vld [vmem:[%s278 + $0x8] sm:$0xf]
  %v282 = vld [vmem:[%s278 + $0xc] sm:$0xf]
  %v283 = vunpack.c.l.b16 %v67
  %v284 = vunpack.c.l.b16 %v81
  %v285 = vunpack.c.l.b16 %v95
  %v286 = vunpack.c.l.b16 %v109
  %v287 = vunpack.c.l.b16 %v123
  %v288 = vunpack.c.l.b16 %v137
  %v289 = vunpack.c.l.b16 %v151
  %v290 = vunpack.c.l.b16 %v165
  %v291 = vunpack.c.l.b16 %v179
  %v292 = vunpack.c.l.b16 %v193
  %v293 = vunpack.c.l.b16 %v207
  %v294 = vunpack.c.l.b16 %v221
  %v295 = vunpack.c.l.b16 %v235
  %v296 = vunpack.c.l.b16 %v249
  %v297 = vunpack.c.l.b16 %v263
  %v298 = vunpack.c.l.b16 %v277
  %v299 = vpack.c.b16 %v284, %v283
  %v300 = vpack.c.b16 %v286, %v285
  %v301 = vpack.c.b16 %v288, %v287
  %v302 = vpack.c.b16 %v290, %v289
  %v303 = vpack.c.b16 %v292, %v291
  %v304 = vpack.c.b16 %v294, %v293
  %v305 = vpack.c.b16 %v296, %v295
  %v306 = vpack.c.b16 %v298, %v297
  %v311 = vunpack.c.l.b16 %v279
  %v312 = vunpack.c.l.b16 %v280
  %v313 = vunpack.c.l.b16 %v281
  %v314 = vunpack.c.l.b16 %v282
  %v315 = vpack.c.b16 %v312, %v311
  %v316 = vpack.c.b16 %v314, %v313
  %vm319 = vcmask 261120
  %v321 = vsel %vm319, %v299, 0
  %v324 = vsel %vm319, %v300, 0
  %v327 = vsel %vm319, %v301, 0
  %v330 = vsel %vm319, %v302, 0
  %v333 = vsel %vm319, %v303, 0
  %v336 = vsel %vm319, %v304, 0
  %v339 = vsel %vm319, %v305, 0
  %v342 = vsel %vm319, %v306, 0
  %344 = vmatprep.subr.bf16.mxu0 0
  %345 = vmatpush1.bf16.msra.mxu0 %v315
  %346 = vmatprep.subr.bf16.mxu0 0
  %347 = vmatpush1.bf16.msra.mxu0 %v316
  %348 = vmatprep.subr.bf16.mxu0 0
  %349 = vmatpush1.bf16.msra.mxu0 0
  %350 = vmatprep.subr.bf16.mxu0 0
  %351 = vmatpush1.bf16.msra.mxu0 0
  %352 = vmatprep.subr.bf16.mxu0 0
  %353 = vmatpush1.bf16.msra.mxu0 0
  %354 = vmatprep.subr.bf16.mxu0 0
  %355 = vmatpush1.bf16.msra.mxu0 0
  %356 = vmatprep.subr.bf16.mxu0 0
  %357 = vmatpush1.bf16.msra.mxu0 0
  %358 = vmatprep.subr.bf16.mxu0 0
  %359 = vmatpush1.bf16.msra.mxu0 0
  %360 = vmatprep.subr.bf16.mxu0 0
  %361 = vmatpush1.bf16.msra.mxu0 0
  %362 = vmatprep.subr.bf16.mxu0 0
  %363 = vmatpush1.bf16.msra.mxu0 0
  %364 = vmatprep.subr.bf16.mxu0 0
  %365 = vmatpush1.bf16.msra.mxu0 0
  %366 = vmatprep.subr.bf16.mxu0 0
  %367 = vmatpush1.bf16.msra.mxu0 0
  %368 = vmatprep.subr.bf16.mxu0 0
  %369 = vmatpush1.bf16.msra.mxu0 0
  %370 = vmatprep.subr.bf16.mxu0 0
  %371 = vmatpush1.bf16.msra.mxu0 0
  %372 = vmatprep.subr.bf16.mxu0 0
  %373 = vmatpush1.bf16.msra.mxu0 0
  %374 = vmatprep.subr.bf16.mxu0 0
  %375 = vmatpush1.bf16.msra.mxu0 0
  %376 = vmatprep.mubr.bf16.mxu0 0
  %377 = vmatmul.mubr.bf16.gmra.mrb[0].mxu0 %v321
  %v378 = vpop.f32.mrb[0].mxu0
  %v379 = vadd.f32 0.0, %v378
  %v380 = vpop.f32.mrb[0].mxu0
  %v381 = vpop.f32.mrb[0].mxu0
  %v382 = vadd.f32 0.0, %v381
  %v383 = vpop.f32.mrb[0].mxu0
  %384 = vmatprep.mubr.bf16.mxu0 0
  %385 = vmatmul.mubr.bf16.gmra.mrb[0].mxu0 %v324
  %v386 = vpop.f32.mrb[0].mxu0
  %v387 = vadd.f32 0.0, %v386
  %v388 = vpop.f32.mrb[0].mxu0
  %v389 = vpop.f32.mrb[0].mxu0
  %v390 = vadd.f32 0.0, %v389
  %v391 = vpop.f32.mrb[0].mxu0
  %392 = vmatprep.mubr.bf16.mxu0 0
  %393 = vmatmul.mubr.bf16.gmra.mrb[0].mxu0 %v327
  %v394 = vpop.f32.mrb[0].mxu0
  %v395 = vadd.f32 0.0, %v394
  %v396 = vpop.f32.mrb[0].mxu0
  %v397 = vpop.f32.mrb[0].mxu0
  %v398 = vadd.f32 0.0, %v397
  %v399 = vpop.f32.mrb[0].mxu0
  %400 = vmatprep.mubr.bf16.mxu0 0
  %401 = vmatmul.mubr.bf16.gmra.mrb[0].mxu0 %v330
  %v402 = vpop.f32.mrb[0].mxu0
  %v403 = vadd.f32 0.0, %v402
  %v404 = vpop.f32.mrb[0].mxu0
  %v405 = vpop.f32.mrb[0].mxu0
  %v406 = vadd.f32 0.0, %v405
  %v407 = vpop.f32.mrb[0].mxu0
  %408 = vmatprep.mubr.bf16.mxu0 0
  %409 = vmatmul.mubr.bf16.gmra.mrb[0].mxu0 %v333
  %v410 = vpop.f32.mrb[0].mxu0
  %v411 = vadd.f32 0.0, %v410
  %v412 = vpop.f32.mrb[0].mxu0
  %v413 = vpop.f32.mrb[0].mxu0
  %v414 = vadd.f32 0.0, %v413
  %v415 = vpop.f32.mrb[0].mxu0
  %416 = vmatprep.mubr.bf16.mxu0 0
  %417 = vmatmul.mubr.bf16.gmra.mrb[0].mxu0 %v336
  %v418 = vpop.f32.mrb[0].mxu0
  %v419 = vadd.f32 0.0, %v418
  %v420 = vpop.f32.mrb[0].mxu0
  %v421 = vpop.f32.mrb[0].mxu0
  %v422 = vadd.f32 0.0, %v421
  %v423 = vpop.f32.mrb[0].mxu0
  %424 = vmatprep.mubr.bf16.mxu0 0
  %425 = vmatmul.mubr.bf16.gmra.mrb[0].mxu0 %v339
  %v426 = vpop.f32.mrb[0].mxu0
  %v427 = vadd.f32 0.0, %v426
  %v428 = vpop.f32.mrb[0].mxu0
  %v429 = vpop.f32.mrb[0].mxu0
  %v430 = vadd.f32 0.0, %v429
  %v431 = vpop.f32.mrb[0].mxu0
  %432 = vmatprep.mubr.bf16.mxu0 0
  %433 = vmatmul.mubr.bf16.gmra.mrb[0].mxu0 %v342
  %v434 = vpop.f32.mrb[0].mxu0
  %v435 = vadd.f32 0.0, %v434
  %v436 = vpop.f32.mrb[0].mxu0
  %v437 = vpop.f32.mrb[0].mxu0
  %v438 = vadd.f32 0.0, %v437
  %v439 = vpop.f32.mrb[0].mxu0
  %440 = vdwg.mxu0
  %v457 = vunpack.c.l.b16 %v15
  %v458 = vunpack.c.l.b16 %v16
  %v459 = vunpack.c.l.b16 %v17
  %v460 = vunpack.c.l.b16 %v18
  %v461 = vunpack.c.l.b16 %v19
  %v462 = vunpack.c.l.b16 %v20
  %v463 = vunpack.c.l.b16 %v21
  %v464 = vunpack.c.l.b16 %v22
  %v465 = vunpack.c.l.b16 %v23
  %v466 = vunpack.c.l.b16 %v24
  %v467 = vunpack.c.l.b16 %v25
  %v468 = vunpack.c.l.b16 %v26
  %v469 = vunpack.c.l.b16 %v27
  %v470 = vunpack.c.l.b16 %v28
  %v471 = vunpack.c.l.b16 %v29
  %v472 = vunpack.c.l.b16 %v30
  %v473 = vpack.c.b16 %v458, %v457
  %v474 = vpack.c.b16 %v460, %v459
  %v475 = vpack.c.b16 %v462, %v461
  %v476 = vpack.c.b16 %v464, %v463
  %v477 = vpack.c.b16 %v466, %v465
  %v478 = vpack.c.b16 %v468, %v467
  %v479 = vpack.c.b16 %v470, %v469
  %v480 = vpack.c.b16 %v472, %v471
  %v485 = vunpack.c.l.b16 %v31
  %v486 = vunpack.c.l.b16 %v32
  %v487 = vunpack.c.l.b16 %v33
  %v488 = vunpack.c.l.b16 %v34
  %v489 = vpack.c.b16 %v486, %v485
  %v490 = vpack.c.b16 %v488, %v487
  %v494 = vsel %vm319, %v473, 0
  %v497 = vsel %vm319, %v474, 0
  %v500 = vsel %vm319, %v475, 0
  %v503 = vsel %vm319, %v476, 0
  %v506 = vsel %vm319, %v477, 0
  %v509 = vsel %vm319, %v478, 0
  %v512 = vsel %vm319, %v479, 0
  %v515 = vsel %vm319, %v480, 0
  %517 = vmatprep.subr.bf16.mxu0 0
  %518 = vmatpush1.bf16.msra.mxu0 %v489
  %519 = vmatprep.subr.bf16.mxu0 0
  %520 = vmatpush1.bf16.msra.mxu0 %v490
  %521 = vmatprep.subr.bf16.mxu0 0
  %522 = vmatpush1.bf16.msra.mxu0 0
  %523 = vmatprep.subr.bf16.mxu0 0
  %524 = vmatpush1.bf16.msra.mxu0 0
  %525 = vmatprep.subr.bf16.mxu0 0
  %526 = vmatpush1.bf16.msra.mxu0 0
  %527 = vmatprep.subr.bf16.mxu0 0
  %528 = vmatpush1.bf16.msra.mxu0 0
  %529 = vmatprep.subr.bf16.mxu0 0
  %530 = vmatpush1.bf16.msra.mxu0 0
  %531 = vmatprep.subr.bf16.mxu0 0
  %532 = vmatpush1.bf16.msra.mxu0 0
  %533 = vmatprep.subr.bf16.mxu0 0
  %534 = vmatpush1.bf16.msra.mxu0 0
  %535 = vmatprep.subr.bf16.mxu0 0
  %536 = vmatpush1.bf16.msra.mxu0 0
  %537 = vmatprep.subr.bf16.mxu0 0
  %538 = vmatpush1.bf16.msra.mxu0 0
  %539 = vmatprep.subr.bf16.mxu0 0
  %540 = vmatpush1.bf16.msra.mxu0 0
  %541 = vmatprep.subr.bf16.mxu0 0
  %542 = vmatpush1.bf16.msra.mxu0 0
  %543 = vmatprep.subr.bf16.mxu0 0
  %544 = vmatpush1.bf16.msra.mxu0 0
  %545 = vmatprep.subr.bf16.mxu0 0
  %546 = vmatpush1.bf16.msra.mxu0 0
  %547 = vmatprep.subr.bf16.mxu0 0
  %548 = vmatpush1.bf16.msra.mxu0 0
  %549 = vmatprep.mubr.bf16.mxu0 0
  %550 = vmatmul.mubr.bf16.gmra.mrb[0].mxu0 %v494
  %v551 = vpop.f32.mrb[0].mxu0
  %v552 = vadd.f32 %v379, %v551
  %v553 = vpop.f32.mrb[0].mxu0
  %v554 = vpop.f32.mrb[0].mxu0
  %v555 = vadd.f32 %v382, %v554
  %v556 = vpop.f32.mrb[0].mxu0
  %557 = vmatprep.mubr.bf16.mxu0 0
  %558 = vmatmul.mubr.bf16.gmra.mrb[0].mxu0 %v497
  %v559 = vpop.f32.mrb[0].mxu0
  %v560 = vadd.f32 %v387, %v559
  %v561 = vpop.f32.mrb[0].mxu0
  %v562 = vpop.f32.mrb[0].mxu0
  %v563 = vadd.f32 %v390, %v562
  %v564 = vpop.f32.mrb[0].mxu0
  %565 = vmatprep.mubr.bf16.mxu0 0
  %566 = vmatmul.mubr.bf16.gmra.mrb[0].mxu0 %v500
  %v567 = vpop.f32.mrb[0].mxu0
  %v568 = vadd.f32 %v395, %v567
  %v569 = vpop.f32.mrb[0].mxu0
  %v570 = vpop.f32.mrb[0].mxu0
  %v571 = vadd.f32 %v398, %v570
  %v572 = vpop.f32.mrb[0].mxu0
  %573 = vmatprep.mubr.bf16.mxu0 0
  %574 = vmatmul.mubr.bf16.gmra.mrb[0].mxu0 %v503
  %v575 = vpop.f32.mrb[0].mxu0
  %v576 = vadd.f32 %v403, %v575
  %v577 = vpop.f32.mrb[0].mxu0
  %v578 = vpop.f32.mrb[0].mxu0
  %v579 = vadd.f32 %v406, %v578
  %v580 = vpop.f32.mrb[0].mxu0
  %581 = vmatprep.mubr.bf16.mxu0 0
  %582 = vmatmul.mubr.bf16.gmra.mrb[0].mxu0 %v506
  %v583 = vpop.f32.mrb[0].mxu0
  %v584 = vadd.f32 %v411, %v583
  %v585 = vpop.f32.mrb[0].mxu0
  %v586 = vpop.f32.mrb[0].mxu0
  %v587 = vadd.f32 %v414, %v586
  %v588 = vpop.f32.mrb[0].mxu0
  %589 = vmatprep.mubr.bf16.mxu0 0
  %590 = vmatmul.mubr.bf16.gmra.mrb[0].mxu0 %v509
  %v591 = vpop.f32.mrb[0].mxu0
  %v592 = vadd.f32 %v419, %v591
  %v593 = vpop.f32.mrb[0].mxu0
  %v594 = vpop.f32.mrb[0].mxu0
  %v595 = vadd.f32 %v422, %v594
  %v596 = vpop.f32.mrb[0].mxu0
  %597 = vmatprep.mubr.bf16.mxu0 0
  %598 = vmatmul.mubr.bf16.gmra.mrb[0].mxu0 %v512
  %v599 = vpop.f32.mrb[0].mxu0
  %v600 = vadd.f32 %v427, %v599
  %v601 = vpop.f32.mrb[0].mxu0
  %v602 = vpop.f32.mrb[0].mxu0
  %v603 = vadd.f32 %v430, %v602
  %v604 = vpop.f32.mrb[0].mxu0
  %605 = vmatprep.mubr.bf16.mxu0 0
  %606 = vmatmul.mubr.bf16.gmra.mrb[0].mxu0 %v515
  %v607 = vpop.f32.mrb[0].mxu0
  %v608 = vadd.f32 %v435, %v607
  %v609 = vpop.f32.mrb[0].mxu0
  %v610 = vpop.f32.mrb[0].mxu0
  %v611 = vadd.f32 %v438, %v610
  %v612 = vpop.f32.mrb[0].mxu0
  %613 = vdwg.mxu0
  %v614 = vld [vmem:[%s0] sm:$0xe]
  %v615 = vld [vmem:[%s0 + $0x8] sm:$0xe]
  %v616 = vld [vmem:[%s0 + $0x10] sm:$0xe]
  %v617 = vld [vmem:[%s0 + $0x18] sm:$0xe]
  %v618 = vld [vmem:[%s0 + $0x20] sm:$0xe]
  %v619 = vld [vmem:[%s0 + $0x28] sm:$0xe]
  %v620 = vld [vmem:[%s0 + $0x30] sm:$0xe]
  %v621 = vld [vmem:[%s0 + $0x38] sm:$0xe]
  %v622 = vld [vmem:[%s0 + $0x60] sm:$0xe]
  %v623 = vld [vmem:[%s0 + $0x68] sm:$0xe]
  %v624 = vld [vmem:[%s0 + $0x70] sm:$0xe]
  %v625 = vld [vmem:[%s0 + $0x78] sm:$0xe]
  %v626 = vld [vmem:[%s0 + $0x80] sm:$0xe]
  %v627 = vld [vmem:[%s0 + $0x88] sm:$0xe]
  %v628 = vld [vmem:[%s0 + $0x90] sm:$0xe]
  %v629 = vld [vmem:[%s0 + $0x98] sm:$0xe]
  %vm662 = vcmask 1042432
  %vm663 = vcmask 1046532
  %vm664 = vmor %vm662, %vm663
  %v665 = vrot.slane %v614, 5
  %v666 = vrot.slane %v665, 4
  %v667 = vrot.slane %v35, 5
  %v668 = vsel %vm664, %v666, %v667
  %v669 = vrot.slane %v615, 5
  %v670 = vrot.slane %v669, 4
  %v671 = vrot.slane %v36, 5
  %v672 = vsel %vm664, %v670, %v671
  %v673 = vrot.slane %v616, 5
  %v674 = vrot.slane %v673, 4
  %v675 = vrot.slane %v37, 5
  %v676 = vsel %vm664, %v674, %v675
  %v677 = vrot.slane %v617, 5
  %v678 = vrot.slane %v677, 4
  %v679 = vrot.slane %v38, 5
  %v680 = vsel %vm664, %v678, %v679
  %v681 = vrot.slane %v618, 5
  %v682 = vrot.slane %v681, 4
  %v683 = vrot.slane %v39, 5
  %v684 = vsel %vm664, %v682, %v683
  %v685 = vrot.slane %v619, 5
  %v686 = vrot.slane %v685, 4
  %v687 = vrot.slane %v40, 5
  %v688 = vsel %vm664, %v686, %v687
  %v689 = vrot.slane %v620, 5
  %v690 = vrot.slane %v689, 4
  %v691 = vrot.slane %v41, 5
  %v692 = vsel %vm664, %v690, %v691
  %v693 = vrot.slane %v621, 5
  %v694 = vrot.slane %v693, 4
  %v695 = vrot.slane %v42, 5
  %v696 = vsel %vm664, %v694, %v695
  %v697 = vrot.slane %v622, 5
  %v698 = vrot.slane %v697, 4
  %v699 = vrot.slane %v43, 5
  %v700 = vsel %vm664, %v698, %v699
  %v701 = vrot.slane %v623, 5
  %v702 = vrot.slane %v701, 4
  %v703 = vrot.slane %v44, 5
  %v704 = vsel %vm664, %v702, %v703
  %v705 = vrot.slane %v624, 5
  %v706 = vrot.slane %v705, 4
  %v707 = vrot.slane %v45, 5
  %v708 = vsel %vm664, %v706, %v707
  %v709 = vrot.slane %v625, 5
  %v710 = vrot.slane %v709, 4
  %v711 = vrot.slane %v46, 5
  %v712 = vsel %vm664, %v710, %v711
  %v713 = vrot.slane %v626, 5
  %v714 = vrot.slane %v713, 4
  %v715 = vrot.slane %v47, 5
  %v716 = vsel %vm664, %v714, %v715
  %v717 = vrot.slane %v627, 5
  %v718 = vrot.slane %v717, 4
  %v719 = vrot.slane %v48, 5
  %v720 = vsel %vm664, %v718, %v719
  %v721 = vrot.slane %v628, 5
  %v722 = vrot.slane %v721, 4
  %v723 = vrot.slane %v49, 5
  %v724 = vsel %vm664, %v722, %v723
  %v725 = vrot.slane %v629, 5
  %v726 = vrot.slane %v725, 4
  %v727 = vrot.slane %v50, 5
  %v728 = vsel %vm664, %v726, %v727
  %s729 = scalar_lea.vmem %s1, 32
  %v730 = vld [vmem:[%s729] sm:$0xf]
  %v731 = vld [vmem:[%s729 + $0x4] sm:$0xf]
  %v732 = vld [vmem:[%s729 + $0x8] sm:$0xf]
  %v733 = vld [vmem:[%s729 + $0xc] sm:$0xf]
  %v734 = vunpack.c.l.b16 %v668
  %v735 = vunpack.c.l.b16 %v672
  %v736 = vunpack.c.l.b16 %v676
  %v737 = vunpack.c.l.b16 %v680
  %v738 = vunpack.c.l.b16 %v684
  %v739 = vunpack.c.l.b16 %v688
  %v740 = vunpack.c.l.b16 %v692
  %v741 = vunpack.c.l.b16 %v696
  %v742 = vunpack.c.l.b16 %v700
  %v743 = vunpack.c.l.b16 %v704
  %v744 = vunpack.c.l.b16 %v708
  %v745 = vunpack.c.l.b16 %v712
  %v746 = vunpack.c.l.b16 %v716
  %v747 = vunpack.c.l.b16 %v720
  %v748 = vunpack.c.l.b16 %v724
  %v749 = vunpack.c.l.b16 %v728
  %v750 = vpack.c.b16 %v735, %v734
  %v751 = vpack.c.b16 %v737, %v736
  %v752 = vpack.c.b16 %v739, %v738
  %v753 = vpack.c.b16 %v741, %v740
  %v754 = vpack.c.b16 %v743, %v742
  %v755 = vpack.c.b16 %v745, %v744
  %v756 = vpack.c.b16 %v747, %v746
  %v757 = vpack.c.b16 %v749, %v748
  %v762 = vunpack.c.l.b16 %v730
  %v763 = vunpack.c.l.b16 %v731
  %v764 = vunpack.c.l.b16 %v732
  %v765 = vunpack.c.l.b16 %v733
  %v766 = vpack.c.b16 %v763, %v762
  %v767 = vpack.c.b16 %v765, %v764
  %v771 = vsel %vm319, %v750, 0
  %v774 = vsel %vm319, %v751, 0
  %v777 = vsel %vm319, %v752, 0
  %v780 = vsel %vm319, %v753, 0
  %v783 = vsel %vm319, %v754, 0
  %v786 = vsel %vm319, %v755, 0
  %v789 = vsel %vm319, %v756, 0
  %v792 = vsel %vm319, %v757, 0
  %794 = vmatprep.subr.bf16.mxu0 0
  %795 = vmatpush1.bf16.msra.mxu0 %v766
  %796 = vmatprep.subr.bf16.mxu0 0
  %797 = vmatpush1.bf16.msra.mxu0 %v767
  %798 = vmatprep.subr.bf16.mxu0 0
  %799 = vmatpush1.bf16.msra.mxu0 0
  %800 = vmatprep.subr.bf16.mxu0 0
  %801 = vmatpush1.bf16.msra.mxu0 0
  %802 = vmatprep.subr.bf16.mxu0 0
  %803 = vmatpush1.bf16.msra.mxu0 0
  %804 = vmatprep.subr.bf16.mxu0 0
  %805 = vmatpush1.bf16.msra.mxu0 0
  %806 = vmatprep.subr.bf16.mxu0 0
  %807 = vmatpush1.bf16.msra.mxu0 0
  %808 = vmatprep.subr.bf16.mxu0 0
  %809 = vmatpush1.bf16.msra.mxu0 0
  %810 = vmatprep.subr.bf16.mxu0 0
  %811 = vmatpush1.bf16.msra.mxu0 0
  %812 = vmatprep.subr.bf16.mxu0 0
  %813 = vmatpush1.bf16.msra.mxu0 0
  %814 = vmatprep.subr.bf16.mxu0 0
  %815 = vmatpush1.bf16.msra.mxu0 0
  %816 = vmatprep.subr.bf16.mxu0 0
  %817 = vmatpush1.bf16.msra.mxu0 0
  %818 = vmatprep.subr.bf16.mxu0 0
  %819 = vmatpush1.bf16.msra.mxu0 0
  %820 = vmatprep.subr.bf16.mxu0 0
  %821 = vmatpush1.bf16.msra.mxu0 0
  %822 = vmatprep.subr.bf16.mxu0 0
  %823 = vmatpush1.bf16.msra.mxu0 0
  %824 = vmatprep.subr.bf16.mxu0 0
  %825 = vmatpush1.bf16.msra.mxu0 0
  %826 = vmatprep.mubr.bf16.mxu0 0
  %827 = vmatmul.mubr.bf16.gmra.mrb[0].mxu0 %v771
  %v828 = vpop.f32.mrb[0].mxu0
  %v829 = vadd.f32 0.0, %v828
  %v830 = vpop.f32.mrb[0].mxu0
  %v831 = vpop.f32.mrb[0].mxu0
  %v832 = vadd.f32 0.0, %v831
  %v833 = vpop.f32.mrb[0].mxu0
  %834 = vmatprep.mubr.bf16.mxu0 0
  %835 = vmatmul.mubr.bf16.gmra.mrb[0].mxu0 %v774
  %v836 = vpop.f32.mrb[0].mxu0
  %v837 = vadd.f32 0.0, %v836
  %v838 = vpop.f32.mrb[0].mxu0
  %v839 = vpop.f32.mrb[0].mxu0
  %v840 = vadd.f32 0.0, %v839
  %v841 = vpop.f32.mrb[0].mxu0
  %842 = vmatprep.mubr.bf16.mxu0 0
  %843 = vmatmul.mubr.bf16.gmra.mrb[0].mxu0 %v777
  %v844 = vpop.f32.mrb[0].mxu0
  %v845 = vadd.f32 0.0, %v844
  %v846 = vpop.f32.mrb[0].mxu0
  %v847 = vpop.f32.mrb[0].mxu0
  %v848 = vadd.f32 0.0, %v847
  %v849 = vpop.f32.mrb[0].mxu0
  %850 = vmatprep.mubr.bf16.mxu0 0
  %851 = vmatmul.mubr.bf16.gmra.mrb[0].mxu0 %v780
  %v852 = vpop.f32.mrb[0].mxu0
  %v853 = vadd.f32 0.0, %v852
  %v854 = vpop.f32.mrb[0].mxu0
  %v855 = vpop.f32.mrb[0].mxu0
  %v856 = vadd.f32 0.0, %v855
  %v857 = vpop.f32.mrb[0].mxu0
  %858 = vmatprep.mubr.bf16.mxu0 0
  %859 = vmatmul.mubr.bf16.gmra.mrb[0].mxu0 %v783
  %v860 = vpop.f32.mrb[0].mxu0
  %v861 = vadd.f32 0.0, %v860
  %v862 = vpop.f32.mrb[0].mxu0
  %v863 = vpop.f32.mrb[0].mxu0
  %v864 = vadd.f32 0.0, %v863
  %v865 = vpop.f32.mrb[0].mxu0
  %866 = vmatprep.mubr.bf16.mxu0 0
  %867 = vmatmul.mubr.bf16.gmra.mrb[0].mxu0 %v786
  %v868 = vpop.f32.mrb[0].mxu0
  %v869 = vadd.f32 0.0, %v868
  %v870 = vpop.f32.mrb[0].mxu0
  %v871 = vpop.f32.mrb[0].mxu0
  %v872 = vadd.f32 0.0, %v871
  %v873 = vpop.f32.mrb[0].mxu0
  %874 = vmatprep.mubr.bf16.mxu0 0
  %875 = vmatmul.mubr.bf16.gmra.mrb[0].mxu0 %v789
  %v876 = vpop.f32.mrb[0].mxu0
  %v877 = vadd.f32 0.0, %v876
  %v878 = vpop.f32.mrb[0].mxu0
  %v879 = vpop.f32.mrb[0].mxu0
  %v880 = vadd.f32 0.0, %v879
  %v881 = vpop.f32.mrb[0].mxu0
  %882 = vmatprep.mubr.bf16.mxu0 0
  %883 = vmatmul.mubr.bf16.gmra.mrb[0].mxu0 %v792
  %v884 = vpop.f32.mrb[0].mxu0
  %v885 = vadd.f32 0.0, %v884
  %v886 = vpop.f32.mrb[0].mxu0
  %v887 = vpop.f32.mrb[0].mxu0
  %v888 = vadd.f32 0.0, %v887
  %v889 = vpop.f32.mrb[0].mxu0
  %890 = vdwg.mxu0
  %v891 = vadd.f32 %v552, %v829
  %v892 = vadd.f32 %v555, %v832
  %v893 = vadd.f32 %v560, %v837
  %v894 = vadd.f32 %v563, %v840
  %v895 = vadd.f32 %v568, %v845
  %v896 = vadd.f32 %v571, %v848
  %v897 = vadd.f32 %v576, %v853
  %v898 = vadd.f32 %v579, %v856
  %v899 = vadd.f32 %v584, %v861
  %v900 = vadd.f32 %v587, %v864
  %v901 = vadd.f32 %v592, %v869
  %v902 = vadd.f32 %v595, %v872
  %v903 = vadd.f32 %v600, %v877
  %v904 = vadd.f32 %v603, %v880
  %v905 = vadd.f32 %v608, %v885
  %v906 = vadd.f32 %v611, %v888
  %v907 = vld [vmem:[%s0 + $0x4] sm:$0x3]
  %v908 = vld [vmem:[%s0 + $0xc] sm:$0x3]
  %v909 = vld [vmem:[%s0 + $0x14] sm:$0x3]
  %v910 = vld [vmem:[%s0 + $0x1c] sm:$0x3]
  %v911 = vld [vmem:[%s0 + $0x24] sm:$0x3]
  %v912 = vld [vmem:[%s0 + $0x2c] sm:$0x3]
  %v913 = vld [vmem:[%s0 + $0x34] sm:$0x3]
  %v914 = vld [vmem:[%s0 + $0x3c] sm:$0x3]
  %v915 = vld [vmem:[%s0 + $0x64] sm:$0x3]
  %v916 = vld [vmem:[%s0 + $0x6c] sm:$0x3]
  %v917 = vld [vmem:[%s0 + $0x74] sm:$0x3]
  %v918 = vld [vmem:[%s0 + $0x7c] sm:$0x3]
  %v919 = vld [vmem:[%s0 + $0x84] sm:$0x3]
  %v920 = vld [vmem:[%s0 + $0x8c] sm:$0x3]
  %v921 = vld [vmem:[%s0 + $0x94] sm:$0x3]
  %v922 = vld [vmem:[%s0 + $0x9c] sm:$0x3]
  %vm923 = vsmask.f32 2304
  %vm924 = vsmask.f32 6416
  %vm925 = vmor %vm923, %vm924
  %v927 = vshrl.u32 %v614, 16
  %v929 = vrot.slane %v927, 5
  %v930 = vshll.u32 %v614, 16
  %v932 = vrot.slane %v930, 6
  %v933 = vor.u32 %v929, %v932
  %v934 = vrot.slane %v933, 4
  %v936 = vshrl.u32 %v907, 16
  %v938 = vrot.slane %v936, 5
  %v939 = vshll.u32 %v907, 16
  %v941 = vrot.slane %v939, 6
  %v942 = vor.u32 %v938, %v941
  %v943 = vsel %vm925, %v934, %v942
  %v945 = vshrl.u32 %v615, 16
  %v947 = vrot.slane %v945, 5
  %v948 = vshll.u32 %v615, 16
  %v950 = vrot.slane %v948, 6
  %v951 = vor.u32 %v947, %v950
  %v952 = vrot.slane %v951, 4
  %v954 = vshrl.u32 %v908, 16
  %v956 = vrot.slane %v954, 5
  %v957 = vshll.u32 %v908, 16
  %v959 = vrot.slane %v957, 6
  %v960 = vor.u32 %v956, %v959
  %v961 = vsel %vm925, %v952, %v960
  %v963 = vshrl.u32 %v616, 16
  %v965 = vrot.slane %v963, 5
  %v966 = vshll.u32 %v616, 16
  %v968 = vrot.slane %v966, 6
  %v969 = vor.u32 %v965, %v968
  %v970 = vrot.slane %v969, 4
  %v972 = vshrl.u32 %v909, 16
  %v974 = vrot.slane %v972, 5
  %v975 = vshll.u32 %v909, 16
  %v977 = vrot.slane %v975, 6
  %v978 = vor.u32 %v974, %v977
  %v979 = vsel %vm925, %v970, %v978
  %v981 = vshrl.u32 %v617, 16
  %v983 = vrot.slane %v981, 5
  %v984 = vshll.u32 %v617, 16
  %v986 = vrot.slane %v984, 6
  %v987 = vor.u32 %v983, %v986
  %v988 = vrot.slane %v987, 4
  %v990 = vshrl.u32 %v910, 16
  %v992 = vrot.slane %v990, 5
  %v993 = vshll.u32 %v910, 16
  %v995 = vrot.slane %v993, 6
  %v996 = vor.u32 %v992, %v995
  %v997 = vsel %vm925, %v988, %v996
  %v999 = vshrl.u32 %v618, 16
  %v1001 = vrot.slane %v999, 5
  %v1002 = vshll.u32 %v618, 16
  %v1004 = vrot.slane %v1002, 6
  %v1005 = vor.u32 %v1001, %v1004
  %v1006 = vrot.slane %v1005, 4
  %v1008 = vshrl.u32 %v911, 16
  %v1010 = vrot.slane %v1008, 5
  %v1011 = vshll.u32 %v911, 16
  %v1013 = vrot.slane %v1011, 6
  %v1014 = vor.u32 %v1010, %v1013
  %v1015 = vsel %vm925, %v1006, %v1014
  %v1017 = vshrl.u32 %v619, 16
  %v1019 = vrot.slane %v1017, 5
  %v1020 = vshll.u32 %v619, 16
  %v1022 = vrot.slane %v1020, 6
  %v1023 = vor.u32 %v1019, %v1022
  %v1024 = vrot.slane %v1023, 4
  %v1026 = vshrl.u32 %v912, 16
  %v1028 = vrot.slane %v1026, 5
  %v1029 = vshll.u32 %v912, 16
  %v1031 = vrot.slane %v1029, 6
  %v1032 = vor.u32 %v1028, %v1031
  %v1033 = vsel %vm925, %v1024, %v1032
  %v1035 = vshrl.u32 %v620, 16
  %v1037 = vrot.slane %v1035, 5
  %v1038 = vshll.u32 %v620, 16
  %v1040 = vrot.slane %v1038, 6
  %v1041 = vor.u32 %v1037, %v1040
  %v1042 = vrot.slane %v1041, 4
  %v1044 = vshrl.u32 %v913, 16
  %v1046 = vrot.slane %v1044, 5
  %v1047 = vshll.u32 %v913, 16
  %v1049 = vrot.slane %v1047, 6
  %v1050 = vor.u32 %v1046, %v1049
  %v1051 = vsel %vm925, %v1042, %v1050
  %v1053 = vshrl.u32 %v621, 16
  %v1055 = vrot.slane %v1053, 5
  %v1056 = vshll.u32 %v621, 16
  %v1058 = vrot.slane %v1056, 6
  %v1059 = vor.u32 %v1055, %v1058
  %v1060 = vrot.slane %v1059, 4
  %v1062 = vshrl.u32 %v914, 16
  %v1064 = vrot.slane %v1062, 5
  %v1065 = vshll.u32 %v914, 16
  %v1067 = vrot.slane %v1065, 6
  %v1068 = vor.u32 %v1064, %v1067
  %v1069 = vsel %vm925, %v1060, %v1068
  %v1071 = vshrl.u32 %v622, 16
  %v1073 = vrot.slane %v1071, 5
  %v1074 = vshll.u32 %v622, 16
  %v1076 = vrot.slane %v1074, 6
  %v1077 = vor.u32 %v1073, %v1076
  %v1078 = vrot.slane %v1077, 4
  %v1080 = vshrl.u32 %v915, 16
  %v1082 = vrot.slane %v1080, 5
  %v1083 = vshll.u32 %v915, 16
  %v1085 = vrot.slane %v1083, 6
  %v1086 = vor.u32 %v1082, %v1085
  %v1087 = vsel %vm925, %v1078, %v1086
  %v1089 = vshrl.u32 %v623, 16
  %v1091 = vrot.slane %v1089, 5
  %v1092 = vshll.u32 %v623, 16
  %v1094 = vrot.slane %v1092, 6
  %v1095 = vor.u32 %v1091, %v1094
  %v1096 = vrot.slane %v1095, 4
  %v1098 = vshrl.u32 %v916, 16
  %v1100 = vrot.slane %v1098, 5
  %v1101 = vshll.u32 %v916, 16
  %v1103 = vrot.slane %v1101, 6
  %v1104 = vor.u32 %v1100, %v1103
  %v1105 = vsel %vm925, %v1096, %v1104
  %v1107 = vshrl.u32 %v624, 16
  %v1109 = vrot.slane %v1107, 5
  %v1110 = vshll.u32 %v624, 16
  %v1112 = vrot.slane %v1110, 6
  %v1113 = vor.u32 %v1109, %v1112
  %v1114 = vrot.slane %v1113, 4
  %v1116 = vshrl.u32 %v917, 16
  %v1118 = vrot.slane %v1116, 5
  %v1119 = vshll.u32 %v917, 16
  %v1121 = vrot.slane %v1119, 6
  %v1122 = vor.u32 %v1118, %v1121
  %v1123 = vsel %vm925, %v1114, %v1122
  %v1125 = vshrl.u32 %v625, 16
  %v1127 = vrot.slane %v1125, 5
  %v1128 = vshll.u32 %v625, 16
  %v1130 = vrot.slane %v1128, 6
  %v1131 = vor.u32 %v1127, %v1130
  %v1132 = vrot.slane %v1131, 4
  %v1134 = vshrl.u32 %v918, 16
  %v1136 = vrot.slane %v1134, 5
  %v1137 = vshll.u32 %v918, 16
  %v1139 = vrot.slane %v1137, 6
  %v1140 = vor.u32 %v1136, %v1139
  %v1141 = vsel %vm925, %v1132, %v1140
  %v1143 = vshrl.u32 %v626, 16
  %v1145 = vrot.slane %v1143, 5
  %v1146 = vshll.u32 %v626, 16
  %v1148 = vrot.slane %v1146, 6
  %v1149 = vor.u32 %v1145, %v1148
  %v1150 = vrot.slane %v1149, 4
  %v1152 = vshrl.u32 %v919, 16
  %v1154 = vrot.slane %v1152, 5
  %v1155 = vshll.u32 %v919, 16
  %v1157 = vrot.slane %v1155, 6
  %v1158 = vor.u32 %v1154, %v1157
  %v1159 = vsel %vm925, %v1150, %v1158
  %v1161 = vshrl.u32 %v627, 16
  %v1163 = vrot.slane %v1161, 5
  %v1164 = vshll.u32 %v627, 16
  %v1166 = vrot.slane %v1164, 6
  %v1167 = vor.u32 %v1163, %v1166
  %v1168 = vrot.slane %v1167, 4
  %v1170 = vshrl.u32 %v920, 16
  %v1172 = vrot.slane %v1170, 5
  %v1173 = vshll.u32 %v920, 16
  %v1175 = vrot.slane %v1173, 6
  %v1176 = vor.u32 %v1172, %v1175
  %v1177 = vsel %vm925, %v1168, %v1176
  %v1179 = vshrl.u32 %v628, 16
  %v1181 = vrot.slane %v1179, 5
  %v1182 = vshll.u32 %v628, 16
  %v1184 = vrot.slane %v1182, 6
  %v1185 = vor.u32 %v1181, %v1184
  %v1186 = vrot.slane %v1185, 4
  %v1188 = vshrl.u32 %v921, 16
  %v1190 = vrot.slane %v1188, 5
  %v1191 = vshll.u32 %v921, 16
  %v1193 = vrot.slane %v1191, 6
  %v1194 = vor.u32 %v1190, %v1193
  %v1195 = vsel %vm925, %v1186, %v1194
  %v1197 = vshrl.u32 %v629, 16
  %v1199 = vrot.slane %v1197, 5
  %v1200 = vshll.u32 %v629, 16
  %v1202 = vrot.slane %v1200, 6
  %v1203 = vor.u32 %v1199, %v1202
  %v1204 = vrot.slane %v1203, 4
  %v1206 = vshrl.u32 %v922, 16
  %v1208 = vrot.slane %v1206, 5
  %v1209 = vshll.u32 %v922, 16
  %v1211 = vrot.slane %v1209, 6
  %v1212 = vor.u32 %v1208, %v1211
  %v1213 = vsel %vm925, %v1204, %v1212
  %s1214 = scalar_lea.vmem %s1, 48
  %v1215 = vld [vmem:[%s1214] sm:$0xf]
  %v1216 = vld [vmem:[%s1214 + $0x4] sm:$0xf]
  %v1217 = vld [vmem:[%s1214 + $0x8] sm:$0xf]
  %v1218 = vld [vmem:[%s1214 + $0xc] sm:$0xf]
  %v1219 = vunpack.c.l.b16 %v943
  %v1220 = vunpack.c.l.b16 %v961
  %v1221 = vunpack.c.l.b16 %v979
  %v1222 = vunpack.c.l.b16 %v997
  %v1223 = vunpack.c.l.b16 %v1015
  %v1224 = vunpack.c.l.b16 %v1033
  %v1225 = vunpack.c.l.b16 %v1051
  %v1226 = vunpack.c.l.b16 %v1069
  %v1227 = vunpack.c.l.b16 %v1087
  %v1228 = vunpack.c.l.b16 %v1105
  %v1229 = vunpack.c.l.b16 %v1123
  %v1230 = vunpack.c.l.b16 %v1141
  %v1231 = vunpack.c.l.b16 %v1159
  %v1232 = vunpack.c.l.b16 %v1177
  %v1233 = vunpack.c.l.b16 %v1195
  %v1234 = vunpack.c.l.b16 %v1213
  %v1235 = vpack.c.b16 %v1220, %v1219
  %v1236 = vpack.c.b16 %v1222, %v1221
  %v1237 = vpack.c.b16 %v1224, %v1223
  %v1238 = vpack.c.b16 %v1226, %v1225
  %v1239 = vpack.c.b16 %v1228, %v1227
  %v1240 = vpack.c.b16 %v1230, %v1229
  %v1241 = vpack.c.b16 %v1232, %v1231
  %v1242 = vpack.c.b16 %v1234, %v1233
  %v1247 = vunpack.c.l.b16 %v1215
  %v1248 = vunpack.c.l.b16 %v1216
  %v1249 = vunpack.c.l.b16 %v1217
  %v1250 = vunpack.c.l.b16 %v1218
  %v1251 = vpack.c.b16 %v1248, %v1247
  %v1252 = vpack.c.b16 %v1250, %v1249
  %v1256 = vsel %vm319, %v1235, 0
  %v1259 = vsel %vm319, %v1236, 0
  %v1262 = vsel %vm319, %v1237, 0
  %v1265 = vsel %vm319, %v1238, 0
  %v1268 = vsel %vm319, %v1239, 0
  %v1271 = vsel %vm319, %v1240, 0
  %v1274 = vsel %vm319, %v1241, 0
  %v1277 = vsel %vm319, %v1242, 0
  %1279 = vmatprep.subr.bf16.mxu0 0
  %1280 = vmatpush1.bf16.msra.mxu0 %v1251
  %1281 = vmatprep.subr.bf16.mxu0 0
  %1282 = vmatpush1.bf16.msra.mxu0 %v1252
  %1283 = vmatprep.subr.bf16.mxu0 0
  %1284 = vmatpush1.bf16.msra.mxu0 0
  %1285 = vmatprep.subr.bf16.mxu0 0
  %1286 = vmatpush1.bf16.msra.mxu0 0
  %1287 = vmatprep.subr.bf16.mxu0 0
  %1288 = vmatpush1.bf16.msra.mxu0 0
  %1289 = vmatprep.subr.bf16.mxu0 0
  %1290 = vmatpush1.bf16.msra.mxu0 0
  %1291 = vmatprep.subr.bf16.mxu0 0
  %1292 = vmatpush1.bf16.msra.mxu0 0
  %1293 = vmatprep.subr.bf16.mxu0 0
  %1294 = vmatpush1.bf16.msra.mxu0 0
  %1295 = vmatprep.subr.bf16.mxu0 0
  %1296 = vmatpush1.bf16.msra.mxu0 0
  %1297 = vmatprep.subr.bf16.mxu0 0
  %1298 = vmatpush1.bf16.msra.mxu0 0
  %1299 = vmatprep.subr.bf16.mxu0 0
  %1300 = vmatpush1.bf16.msra.mxu0 0
  %1301 = vmatprep.subr.bf16.mxu0 0
  %1302 = vmatpush1.bf16.msra.mxu0 0
  %1303 = vmatprep.subr.bf16.mxu0 0
  %1304 = vmatpush1.bf16.msra.mxu0 0
  %1305 = vmatprep.subr.bf16.mxu0 0
  %1306 = vmatpush1.bf16.msra.mxu0 0
  %1307 = vmatprep.subr.bf16.mxu0 0
  %1308 = vmatpush1.bf16.msra.mxu0 0
  %1309 = vmatprep.subr.bf16.mxu0 0
  %1310 = vmatpush1.bf16.msra.mxu0 0
  %1311 = vmatprep.mubr.bf16.mxu0 0
  %1312 = vmatmul.mubr.bf16.gmra.mrb[0].mxu0 %v1256
  %v1313 = vpop.f32.mrb[0].mxu0
  %v1314 = vadd.f32 0.0, %v1313
  %v1315 = vpop.f32.mrb[0].mxu0
  %v1316 = vpop.f32.mrb[0].mxu0
  %v1317 = vadd.f32 0.0, %v1316
  %v1318 = vpop.f32.mrb[0].mxu0
  %1319 = vmatprep.mubr.bf16.mxu0 0
  %1320 = vmatmul.mubr.bf16.gmra.mrb[0].mxu0 %v1259
  %v1321 = vpop.f32.mrb[0].mxu0
  %v1322 = vadd.f32 0.0, %v1321
  %v1323 = vpop.f32.mrb[0].mxu0
  %v1324 = vpop.f32.mrb[0].mxu0
  %v1325 = vadd.f32 0.0, %v1324
  %v1326 = vpop.f32.mrb[0].mxu0
  %1327 = vmatprep.mubr.bf16.mxu0 0
  %1328 = vmatmul.mubr.bf16.gmra.mrb[0].mxu0 %v1262
  %v1329 = vpop.f32.mrb[0].mxu0
  %v1330 = vadd.f32 0.0, %v1329
  %v1331 = vpop.f32.mrb[0].mxu0
  %v1332 = vpop.f32.mrb[0].mxu0
  %v1333 = vadd.f32 0.0, %v1332
  %v1334 = vpop.f32.mrb[0].mxu0
  %1335 = vmatprep.mubr.bf16.mxu0 0
  %1336 = vmatmul.mubr.bf16.gmra.mrb[0].mxu0 %v1265
  %v1337 = vpop.f32.mrb[0].mxu0
  %v1338 = vadd.f32 0.0, %v1337
  %v1339 = vpop.f32.mrb[0].mxu0
  %v1340 = vpop.f32.mrb[0].mxu0
  %v1341 = vadd.f32 0.0, %v1340
  %v1342 = vpop.f32.mrb[0].mxu0
  %1343 = vmatprep.mubr.bf16.mxu0 0
  %1344 = vmatmul.mubr.bf16.gmra.mrb[0].mxu0 %v1268
  %v1345 = vpop.f32.mrb[0].mxu0
  %v1346 = vadd.f32 0.0, %v1345
  %v1347 = vpop.f32.mrb[0].mxu0
  %v1348 = vpop.f32.mrb[0].mxu0
  %v1349 = vadd.f32 0.0, %v1348
  %v1350 = vpop.f32.mrb[0].mxu0
  %1351 = vmatprep.mubr.bf16.mxu0 0
  %1352 = vmatmul.mubr.bf16.gmra.mrb[0].mxu0 %v1271
  %v1353 = vpop.f32.mrb[0].mxu0
  %v1354 = vadd.f32 0.0, %v1353
  %v1355 = vpop.f32.mrb[0].mxu0
  %v1356 = vpop.f32.mrb[0].mxu0
  %v1357 = vadd.f32 0.0, %v1356
  %v1358 = vpop.f32.mrb[0].mxu0
  %1359 = vmatprep.mubr.bf16.mxu0 0
  %1360 = vmatmul.mubr.bf16.gmra.mrb[0].mxu0 %v1274
  %v1361 = vpop.f32.mrb[0].mxu0
  %v1362 = vadd.f32 0.0, %v1361
  %v1363 = vpop.f32.mrb[0].mxu0
  %v1364 = vpop.f32.mrb[0].mxu0
  %v1365 = vadd.f32 0.0, %v1364
  %v1366 = vpop.f32.mrb[0].mxu0
  %1367 = vmatprep.mubr.bf16.mxu0 0
  %1368 = vmatmul.mubr.bf16.gmra.mrb[0].mxu0 %v1277
  %v1369 = vpop.f32.mrb[0].mxu0
  %v1370 = vadd.f32 0.0, %v1369
  %v1371 = vpop.f32.mrb[0].mxu0
  %v1372 = vpop.f32.mrb[0].mxu0
  %v1373 = vadd.f32 0.0, %v1372
  %v1374 = vpop.f32.mrb[0].mxu0
  %1375 = vdwg.mxu0
  %v1376 = vadd.f32 %v891, %v1314
  %v1377 = vadd.f32 %v892, %v1317
  %v1378 = vadd.f32 %v893, %v1322
  %v1379 = vadd.f32 %v894, %v1325
  %v1380 = vadd.f32 %v895, %v1330
  %v1381 = vadd.f32 %v896, %v1333
  %v1382 = vadd.f32 %v897, %v1338
  %v1383 = vadd.f32 %v898, %v1341
  %v1384 = vadd.f32 %v899, %v1346
  %v1385 = vadd.f32 %v900, %v1349
  %v1386 = vadd.f32 %v901, %v1354
  %v1387 = vadd.f32 %v902, %v1357
  %v1388 = vadd.f32 %v903, %v1362
  %v1389 = vadd.f32 %v904, %v1365
  %v1390 = vadd.f32 %v905, %v1370
  %v1391 = vadd.f32 %v906, %v1373
  %v1392 = vld [vmem:[%s0] sm:$0xc]
  %v1393 = vld [vmem:[%s0 + $0x8] sm:$0xc]
  %v1394 = vld [vmem:[%s0 + $0x10] sm:$0xc]
  %v1395 = vld [vmem:[%s0 + $0x18] sm:$0xc]
  %v1396 = vld [vmem:[%s0 + $0x20] sm:$0xc]
  %v1397 = vld [vmem:[%s0 + $0x28] sm:$0xc]
  %v1398 = vld [vmem:[%s0 + $0x30] sm:$0xc]
  %v1399 = vld [vmem:[%s0 + $0x38] sm:$0xc]
  %v1400 = vld [vmem:[%s0 + $0x60] sm:$0xc]
  %v1401 = vld [vmem:[%s0 + $0x68] sm:$0xc]
  %v1402 = vld [vmem:[%s0 + $0x70] sm:$0xc]
  %v1403 = vld [vmem:[%s0 + $0x78] sm:$0xc]
  %v1404 = vld [vmem:[%s0 + $0x80] sm:$0xc]
  %v1405 = vld [vmem:[%s0 + $0x88] sm:$0xc]
  %v1406 = vld [vmem:[%s0 + $0x90] sm:$0xc]
  %v1407 = vld [vmem:[%s0 + $0x98] sm:$0xc]
  %vm1440 = vcmask 1041408
  %vm1441 = vcmask 1045508
  %vm1442 = vmor %vm1440, %vm1441
  %v1443 = vrot.slane %v1392, 6
  %v1444 = vrot.slane %v1443, 4
  %v1445 = vrot.slane %v907, 6
  %v1446 = vsel %vm1442, %v1444, %v1445
  %v1447 = vrot.slane %v1393, 6
  %v1448 = vrot.slane %v1447, 4
  %v1449 = vrot.slane %v908, 6
  %v1450 = vsel %vm1442, %v1448, %v1449
  %v1451 = vrot.slane %v1394, 6
  %v1452 = vrot.slane %v1451, 4
  %v1453 = vrot.slane %v909, 6
  %v1454 = vsel %vm1442, %v1452, %v1453
  %v1455 = vrot.slane %v1395, 6
  %v1456 = vrot.slane %v1455, 4
  %v1457 = vrot.slane %v910, 6
  %v1458 = vsel %vm1442, %v1456, %v1457
  %v1459 = vrot.slane %v1396, 6
  %v1460 = vrot.slane %v1459, 4
  %v1461 = vrot.slane %v911, 6
  %v1462 = vsel %vm1442, %v1460, %v1461
  %v1463 = vrot.slane %v1397, 6
  %v1464 = vrot.slane %v1463, 4
  %v1465 = vrot.slane %v912, 6
  %v1466 = vsel %vm1442, %v1464, %v1465
  %v1467 = vrot.slane %v1398, 6
  %v1468 = vrot.slane %v1467, 4
  %v1469 = vrot.slane %v913, 6
  %v1470 = vsel %vm1442, %v1468, %v1469
  %v1471 = vrot.slane %v1399, 6
  %v1472 = vrot.slane %v1471, 4
  %v1473 = vrot.slane %v914, 6
  %v1474 = vsel %vm1442, %v1472, %v1473
  %v1475 = vrot.slane %v1400, 6
  %v1476 = vrot.slane %v1475, 4
  %v1477 = vrot.slane %v915, 6
  %v1478 = vsel %vm1442, %v1476, %v1477
  %v1479 = vrot.slane %v1401, 6
  %v1480 = vrot.slane %v1479, 4
  %v1481 = vrot.slane %v916, 6
  %v1482 = vsel %vm1442, %v1480, %v1481
  %v1483 = vrot.slane %v1402, 6
  %v1484 = vrot.slane %v1483, 4
  %v1485 = vrot.slane %v917, 6
  %v1486 = vsel %vm1442, %v1484, %v1485
  %v1487 = vrot.slane %v1403, 6
  %v1488 = vrot.slane %v1487, 4
  %v1489 = vrot.slane %v918, 6
  %v1490 = vsel %vm1442, %v1488, %v1489
  %v1491 = vrot.slane %v1404, 6
  %v1492 = vrot.slane %v1491, 4
  %v1493 = vrot.slane %v919, 6
  %v1494 = vsel %vm1442, %v1492, %v1493
  %v1495 = vrot.slane %v1405, 6
  %v1496 = vrot.slane %v1495, 4
  %v1497 = vrot.slane %v920, 6
  %v1498 = vsel %vm1442, %v1496, %v1497
  %v1499 = vrot.slane %v1406, 6
  %v1500 = vrot.slane %v1499, 4
  %v1501 = vrot.slane %v921, 6
  %v1502 = vsel %vm1442, %v1500, %v1501
  %v1503 = vrot.slane %v1407, 6
  %v1504 = vrot.slane %v1503, 4
  %v1505 = vrot.slane %v922, 6
  %v1506 = vsel %vm1442, %v1504, %v1505
  %s1507 = scalar_lea.vmem %s1, 64
  %v1508 = vld [vmem:[%s1507] sm:$0xf]
  %v1509 = vld [vmem:[%s1507 + $0x4] sm:$0xf]
  %v1510 = vld [vmem:[%s1507 + $0x8] sm:$0xf]
  %v1511 = vld [vmem:[%s1507 + $0xc] sm:$0xf]
  %v1512 = vunpack.c.l.b16 %v1446
  %v1513 = vunpack.c.l.b16 %v1450
  %v1514 = vunpack.c.l.b16 %v1454
  %v1515 = vunpack.c.l.b16 %v1458
  %v1516 = vunpack.c.l.b16 %v1462
  %v1517 = vunpack.c.l.b16 %v1466
  %v1518 = vunpack.c.l.b16 %v1470
  %v1519 = vunpack.c.l.b16 %v1474
  %v1520 = vunpack.c.l.b16 %v1478
  %v1521 = vunpack.c.l.b16 %v1482
  %v1522 = vunpack.c.l.b16 %v1486
  %v1523 = vunpack.c.l.b16 %v1490
  %v1524 = vunpack.c.l.b16 %v1494
  %v1525 = vunpack.c.l.b16 %v1498
  %v1526 = vunpack.c.l.b16 %v1502
  %v1527 = vunpack.c.l.b16 %v1506
  %v1528 = vpack.c.b16 %v1513, %v1512
  %v1529 = vpack.c.b16 %v1515, %v1514
  %v1530 = vpack.c.b16 %v1517, %v1516
  %v1531 = vpack.c.b16 %v1519, %v1518
  %v1532 = vpack.c.b16 %v1521, %v1520
  %v1533 = vpack.c.b16 %v1523, %v1522
  %v1534 = vpack.c.b16 %v1525, %v1524
  %v1535 = vpack.c.b16 %v1527, %v1526
  %v1540 = vunpack.c.l.b16 %v1508
  %v1541 = vunpack.c.l.b16 %v1509
  %v1542 = vunpack.c.l.b16 %v1510
  %v1543 = vunpack.c.l.b16 %v1511
  %v1544 = vpack.c.b16 %v1541, %v1540
  %v1545 = vpack.c.b16 %v1543, %v1542
  %v1549 = vsel %vm319, %v1528, 0
  %v1552 = vsel %vm319, %v1529, 0
  %v1555 = vsel %vm319, %v1530, 0
  %v1558 = vsel %vm319, %v1531, 0
  %v1561 = vsel %vm319, %v1532, 0
  %v1564 = vsel %vm319, %v1533, 0
  %v1567 = vsel %vm319, %v1534, 0
  %v1570 = vsel %vm319, %v1535, 0
  %1572 = vmatprep.subr.bf16.mxu0 0
  %1573 = vmatpush1.bf16.msra.mxu0 %v1544
  %1574 = vmatprep.subr.bf16.mxu0 0
  %1575 = vmatpush1.bf16.msra.mxu0 %v1545
  %1576 = vmatprep.subr.bf16.mxu0 0
  %1577 = vmatpush1.bf16.msra.mxu0 0
  %1578 = vmatprep.subr.bf16.mxu0 0
  %1579 = vmatpush1.bf16.msra.mxu0 0
  %1580 = vmatprep.subr.bf16.mxu0 0
  %1581 = vmatpush1.bf16.msra.mxu0 0
  %1582 = vmatprep.subr.bf16.mxu0 0
  %1583 = vmatpush1.bf16.msra.mxu0 0
  %1584 = vmatprep.subr.bf16.mxu0 0
  %1585 = vmatpush1.bf16.msra.mxu0 0
  %1586 = vmatprep.subr.bf16.mxu0 0
  %1587 = vmatpush1.bf16.msra.mxu0 0
  %1588 = vmatprep.subr.bf16.mxu0 0
  %1589 = vmatpush1.bf16.msra.mxu0 0
  %1590 = vmatprep.subr.bf16.mxu0 0
  %1591 = vmatpush1.bf16.msra.mxu0 0
  %1592 = vmatprep.subr.bf16.mxu0 0
  %1593 = vmatpush1.bf16.msra.mxu0 0
  %1594 = vmatprep.subr.bf16.mxu0 0
  %1595 = vmatpush1.bf16.msra.mxu0 0
  %1596 = vmatprep.subr.bf16.mxu0 0
  %1597 = vmatpush1.bf16.msra.mxu0 0
  %1598 = vmatprep.subr.bf16.mxu0 0
  %1599 = vmatpush1.bf16.msra.mxu0 0
  %1600 = vmatprep.subr.bf16.mxu0 0
  %1601 = vmatpush1.bf16.msra.mxu0 0
  %1602 = vmatprep.subr.bf16.mxu0 0
  %1603 = vmatpush1.bf16.msra.mxu0 0
  %1604 = vmatprep.mubr.bf16.mxu0 0
  %1605 = vmatmul.mubr.bf16.gmra.mrb[0].mxu0 %v1549
  %v1606 = vpop.f32.mrb[0].mxu0
  %v1607 = vadd.f32 0.0, %v1606
  %v1608 = vpop.f32.mrb[0].mxu0
  %v1609 = vpop.f32.mrb[0].mxu0
  %v1610 = vadd.f32 0.0, %v1609
  %v1611 = vpop.f32.mrb[0].mxu0
  %1612 = vmatprep.mubr.bf16.mxu0 0
  %1613 = vmatmul.mubr.bf16.gmra.mrb[0].mxu0 %v1552
  %v1614 = vpop.f32.mrb[0].mxu0
  %v1615 = vadd.f32 0.0, %v1614
  %v1616 = vpop.f32.mrb[0].mxu0
  %v1617 = vpop.f32.mrb[0].mxu0
  %v1618 = vadd.f32 0.0, %v1617
  %v1619 = vpop.f32.mrb[0].mxu0
  %1620 = vmatprep.mubr.bf16.mxu0 0
  %1621 = vmatmul.mubr.bf16.gmra.mrb[0].mxu0 %v1555
  %v1622 = vpop.f32.mrb[0].mxu0
  %v1623 = vadd.f32 0.0, %v1622
  %v1624 = vpop.f32.mrb[0].mxu0
  %v1625 = vpop.f32.mrb[0].mxu0
  %v1626 = vadd.f32 0.0, %v1625
  %v1627 = vpop.f32.mrb[0].mxu0
  %1628 = vmatprep.mubr.bf16.mxu0 0
  %1629 = vmatmul.mubr.bf16.gmra.mrb[0].mxu0 %v1558
  %v1630 = vpop.f32.mrb[0].mxu0
  %v1631 = vadd.f32 0.0, %v1630
  %v1632 = vpop.f32.mrb[0].mxu0
  %v1633 = vpop.f32.mrb[0].mxu0
  %v1634 = vadd.f32 0.0, %v1633
  %v1635 = vpop.f32.mrb[0].mxu0
  %1636 = vmatprep.mubr.bf16.mxu0 0
  %1637 = vmatmul.mubr.bf16.gmra.mrb[0].mxu0 %v1561
  %v1638 = vpop.f32.mrb[0].mxu0
  %v1639 = vadd.f32 0.0, %v1638
  %v1640 = vpop.f32.mrb[0].mxu0
  %v1641 = vpop.f32.mrb[0].mxu0
  %v1642 = vadd.f32 0.0, %v1641
  %v1643 = vpop.f32.mrb[0].mxu0
  %1644 = vmatprep.mubr.bf16.mxu0 0
  %1645 = vmatmul.mubr.bf16.gmra.mrb[0].mxu0 %v1564
  %v1646 = vpop.f32.mrb[0].mxu0
  %v1647 = vadd.f32 0.0, %v1646
  %v1648 = vpop.f32.mrb[0].mxu0
  %v1649 = vpop.f32.mrb[0].mxu0
  %v1650 = vadd.f32 0.0, %v1649
  %v1651 = vpop.f32.mrb[0].mxu0
  %1652 = vmatprep.mubr.bf16.mxu0 0
  %1653 = vmatmul.mubr.bf16.gmra.mrb[0].mxu0 %v1567
  %v1654 = vpop.f32.mrb[0].mxu0
  %v1655 = vadd.f32 0.0, %v1654
  %v1656 = vpop.f32.mrb[0].mxu0
  %v1657 = vpop.f32.mrb[0].mxu0
  %v1658 = vadd.f32 0.0, %v1657
  %v1659 = vpop.f32.mrb[0].mxu0
  %1660 = vmatprep.mubr.bf16.mxu0 0
  %1661 = vmatmul.mubr.bf16.gmra.mrb[0].mxu0 %v1570
  %v1662 = vpop.f32.mrb[0].mxu0
  %v1663 = vadd.f32 0.0, %v1662
  %v1664 = vpop.f32.mrb[0].mxu0
  %v1665 = vpop.f32.mrb[0].mxu0
  %v1666 = vadd.f32 0.0, %v1665
  %v1667 = vpop.f32.mrb[0].mxu0
  %1668 = vdwg.mxu0
  %v1669 = vadd.f32 %v1376, %v1607
  %v1670 = vadd.f32 %v1377, %v1610
  %v1671 = vadd.f32 %v1378, %v1615
  %v1672 = vadd.f32 %v1379, %v1618
  %v1673 = vadd.f32 %v1380, %v1623
  %v1674 = vadd.f32 %v1381, %v1626
  %v1675 = vadd.f32 %v1382, %v1631
  %v1676 = vadd.f32 %v1383, %v1634
  %v1677 = vadd.f32 %v1384, %v1639
  %v1678 = vadd.f32 %v1385, %v1642
  %v1679 = vadd.f32 %v1386, %v1647
  %v1680 = vadd.f32 %v1387, %v1650
  %v1681 = vadd.f32 %v1388, %v1655
  %v1682 = vadd.f32 %v1389, %v1658
  %v1683 = vadd.f32 %v1390, %v1663
  %v1684 = vadd.f32 %v1391, %v1666
  %s1685 = scalar_lea.vmem %s0, 8
  %v1686 = vld [vmem:[%s1685] sm:$0xf]
  %v1687 = vld [vmem:[%s1685 + $0x8] sm:$0xf]
  %v1688 = vld [vmem:[%s1685 + $0x10] sm:$0xf]
  %v1689 = vld [vmem:[%s1685 + $0x18] sm:$0xf]
  %v1690 = vld [vmem:[%s1685 + $0x20] sm:$0xf]
  %v1691 = vld [vmem:[%s1685 + $0x28] sm:$0xf]
  %v1692 = vld [vmem:[%s1685 + $0x30] sm:$0xf]
  %v1693 = vld [vmem:[%s1685 + $0x38] sm:$0xf]
  %v1694 = vld [vmem:[%s1685 + $0x60] sm:$0xf]
  %v1695 = vld [vmem:[%s1685 + $0x68] sm:$0xf]
  %v1696 = vld [vmem:[%s1685 + $0x70] sm:$0xf]
  %v1697 = vld [vmem:[%s1685 + $0x78] sm:$0xf]
  %v1698 = vld [vmem:[%s1685 + $0x80] sm:$0xf]
  %v1699 = vld [vmem:[%s1685 + $0x88] sm:$0xf]
  %v1700 = vld [vmem:[%s1685 + $0x90] sm:$0xf]
  %v1701 = vld [vmem:[%s1685 + $0x98] sm:$0xf]
  %s1702 = scalar_lea.vmem %s1, 80
  %v1703 = vld [vmem:[%s1702] sm:$0xf]
  %v1704 = vld [vmem:[%s1702 + $0x4] sm:$0xf]
  %v1705 = vld [vmem:[%s1702 + $0x8] sm:$0xf]
  %v1706 = vld [vmem:[%s1702 + $0xc] sm:$0xf]
  %v1723 = vunpack.c.l.b16 %v1686
  %v1724 = vunpack.c.l.b16 %v1687
  %v1725 = vunpack.c.l.b16 %v1688
  %v1726 = vunpack.c.l.b16 %v1689
  %v1727 = vunpack.c.l.b16 %v1690
  %v1728 = vunpack.c.l.b16 %v1691
  %v1729 = vunpack.c.l.b16 %v1692
  %v1730 = vunpack.c.l.b16 %v1693
  %v1731 = vunpack.c.l.b16 %v1694
  %v1732 = vunpack.c.l.b16 %v1695
  %v1733 = vunpack.c.l.b16 %v1696
  %v1734 = vunpack.c.l.b16 %v1697
  %v1735 = vunpack.c.l.b16 %v1698
  %v1736 = vunpack.c.l.b16 %v1699
  %v1737 = vunpack.c.l.b16 %v1700
  %v1738 = vunpack.c.l.b16 %v1701
  %v1739 = vpack.c.b16 %v1724, %v1723
  %v1740 = vpack.c.b16 %v1726, %v1725
  %v1741 = vpack.c.b16 %v1728, %v1727
  %v1742 = vpack.c.b16 %v1730, %v1729
  %v1743 = vpack.c.b16 %v1732, %v1731
  %v1744 = vpack.c.b16 %v1734, %v1733
  %v1745 = vpack.c.b16 %v1736, %v1735
  %v1746 = vpack.c.b16 %v1738, %v1737
  %v1751 = vunpack.c.l.b16 %v1703
  %v1752 = vunpack.c.l.b16 %v1704
  %v1753 = vunpack.c.l.b16 %v1705
  %v1754 = vunpack.c.l.b16 %v1706
  %v1755 = vpack.c.b16 %v1752, %v1751
  %v1756 = vpack.c.b16 %v1754, %v1753
  %v1760 = vsel %vm319, %v1739, 0
  %v1763 = vsel %vm319, %v1740, 0
  %v1766 = vsel %vm319, %v1741, 0
  %v1769 = vsel %vm319, %v1742, 0
  %v1772 = vsel %vm319, %v1743, 0
  %v1775 = vsel %vm319, %v1744, 0
  %v1778 = vsel %vm319, %v1745, 0
  %v1781 = vsel %vm319, %v1746, 0
  %1783 = vmatprep.subr.bf16.mxu0 0
  %1784 = vmatpush1.bf16.msra.mxu0 %v1755
  %1785 = vmatprep.subr.bf16.mxu0 0
  %1786 = vmatpush1.bf16.msra.mxu0 %v1756
  %1787 = vmatprep.subr.bf16.mxu0 0
  %1788 = vmatpush1.bf16.msra.mxu0 0
  %1789 = vmatprep.subr.bf16.mxu0 0
  %1790 = vmatpush1.bf16.msra.mxu0 0
  %1791 = vmatprep.subr.bf16.mxu0 0
  %1792 = vmatpush1.bf16.msra.mxu0 0
  %1793 = vmatprep.subr.bf16.mxu0 0
  %1794 = vmatpush1.bf16.msra.mxu0 0
  %1795 = vmatprep.subr.bf16.mxu0 0
  %1796 = vmatpush1.bf16.msra.mxu0 0
  %1797 = vmatprep.subr.bf16.mxu0 0
  %1798 = vmatpush1.bf16.msra.mxu0 0
  %1799 = vmatprep.subr.bf16.mxu0 0
  %1800 = vmatpush1.bf16.msra.mxu0 0
  %1801 = vmatprep.subr.bf16.mxu0 0
  %1802 = vmatpush1.bf16.msra.mxu0 0
  %1803 = vmatprep.subr.bf16.mxu0 0
  %1804 = vmatpush1.bf16.msra.mxu0 0
  %1805 = vmatprep.subr.bf16.mxu0 0
  %1806 = vmatpush1.bf16.msra.mxu0 0
  %1807 = vmatprep.subr.bf16.mxu0 0
  %1808 = vmatpush1.bf16.msra.mxu0 0
  %1809 = vmatprep.subr.bf16.mxu0 0
  %1810 = vmatpush1.bf16.msra.mxu0 0
  %1811 = vmatprep.subr.bf16.mxu0 0
  %1812 = vmatpush1.bf16.msra.mxu0 0
  %1813 = vmatprep.subr.bf16.mxu0 0
  %1814 = vmatpush1.bf16.msra.mxu0 0
  %1815 = vmatprep.mubr.bf16.mxu0 0
  %1816 = vmatmul.mubr.bf16.gmra.mrb[0].mxu0 %v1760
  %v1817 = vpop.f32.mrb[0].mxu0
  %v1818 = vadd.f32 0.0, %v1817
  %v1819 = vpop.f32.mrb[0].mxu0
  %v1820 = vpop.f32.mrb[0].mxu0
  %v1821 = vadd.f32 0.0, %v1820
  %v1822 = vpop.f32.mrb[0].mxu0
  %1823 = vmatprep.mubr.bf16.mxu0 0
  %1824 = vmatmul.mubr.bf16.gmra.mrb[0].mxu0 %v1763
  %v1825 = vpop.f32.mrb[0].mxu0
  %v1826 = vadd.f32 0.0, %v1825
  %v1827 = vpop.f32.mrb[0].mxu0
  %v1828 = vpop.f32.mrb[0].mxu0
  %v1829 = vadd.f32 0.0, %v1828
  %v1830 = vpop.f32.mrb[0].mxu0
  %1831 = vmatprep.mubr.bf16.mxu0 0
  %1832 = vmatmul.mubr.bf16.gmra.mrb[0].mxu0 %v1766
  %v1833 = vpop.f32.mrb[0].mxu0
  %v1834 = vadd.f32 0.0, %v1833
  %v1835 = vpop.f32.mrb[0].mxu0
  %v1836 = vpop.f32.mrb[0].mxu0
  %v1837 = vadd.f32 0.0, %v1836
  %v1838 = vpop.f32.mrb[0].mxu0
  %1839 = vmatprep.mubr.bf16.mxu0 0
  %1840 = vmatmul.mubr.bf16.gmra.mrb[0].mxu0 %v1769
  %v1841 = vpop.f32.mrb[0].mxu0
  %v1842 = vadd.f32 0.0, %v1841
  %v1843 = vpop.f32.mrb[0].mxu0
  %v1844 = vpop.f32.mrb[0].mxu0
  %v1845 = vadd.f32 0.0, %v1844
  %v1846 = vpop.f32.mrb[0].mxu0
  %1847 = vmatprep.mubr.bf16.mxu0 0
  %1848 = vmatmul.mubr.bf16.gmra.mrb[0].mxu0 %v1772
  %v1849 = vpop.f32.mrb[0].mxu0
  %v1850 = vadd.f32 0.0, %v1849
  %v1851 = vpop.f32.mrb[0].mxu0
  %v1852 = vpop.f32.mrb[0].mxu0
  %v1853 = vadd.f32 0.0, %v1852
  %v1854 = vpop.f32.mrb[0].mxu0
  %1855 = vmatprep.mubr.bf16.mxu0 0
  %1856 = vmatmul.mubr.bf16.gmra.mrb[0].mxu0 %v1775
  %v1857 = vpop.f32.mrb[0].mxu0
  %v1858 = vadd.f32 0.0, %v1857
  %v1859 = vpop.f32.mrb[0].mxu0
  %v1860 = vpop.f32.mrb[0].mxu0
  %v1861 = vadd.f32 0.0, %v1860
  %v1862 = vpop.f32.mrb[0].mxu0
  %1863 = vmatprep.mubr.bf16.mxu0 0
  %1864 = vmatmul.mubr.bf16.gmra.mrb[0].mxu0 %v1778
  %v1865 = vpop.f32.mrb[0].mxu0
  %v1866 = vadd.f32 0.0, %v1865
  %v1867 = vpop.f32.mrb[0].mxu0
  %v1868 = vpop.f32.mrb[0].mxu0
  %v1869 = vadd.f32 0.0, %v1868
  %v1870 = vpop.f32.mrb[0].mxu0
  %1871 = vmatprep.mubr.bf16.mxu0 0
  %1872 = vmatmul.mubr.bf16.gmra.mrb[0].mxu0 %v1781
  %v1873 = vpop.f32.mrb[0].mxu0
  %v1874 = vadd.f32 0.0, %v1873
  %v1875 = vpop.f32.mrb[0].mxu0
  %v1876 = vpop.f32.mrb[0].mxu0
  %v1877 = vadd.f32 0.0, %v1876
  %v1878 = vpop.f32.mrb[0].mxu0
  %1879 = vdwg.mxu0
  %v1880 = vadd.f32 %v1669, %v1818
  %v1881 = vadd.f32 %v1670, %v1821
  %v1882 = vadd.f32 %v1671, %v1826
  %v1883 = vadd.f32 %v1672, %v1829
  %v1884 = vadd.f32 %v1673, %v1834
  %v1885 = vadd.f32 %v1674, %v1837
  %v1886 = vadd.f32 %v1675, %v1842
  %v1887 = vadd.f32 %v1676, %v1845
  %v1888 = vadd.f32 %v1677, %v1850
  %v1889 = vadd.f32 %v1678, %v1853
  %v1890 = vadd.f32 %v1679, %v1858
  %v1891 = vadd.f32 %v1680, %v1861
  %v1892 = vadd.f32 %v1681, %v1866
  %v1893 = vadd.f32 %v1682, %v1869
  %v1894 = vadd.f32 %v1683, %v1874
  %v1895 = vadd.f32 %v1684, %v1877
  %v1896 = vld [vmem:[%s1685] sm:$0xf]
  %v1897 = vld [vmem:[%s1685 + $0x4] sm:$0x1]
  %v1898 = vld [vmem:[%s1685 + $0x8] sm:$0xf]
  %v1899 = vld [vmem:[%s1685 + $0xc] sm:$0x1]
  %v1900 = vld [vmem:[%s1685 + $0x10] sm:$0xf]
  %v1901 = vld [vmem:[%s1685 + $0x14] sm:$0x1]
  %v1902 = vld [vmem:[%s1685 + $0x18] sm:$0xf]
  %v1903 = vld [vmem:[%s1685 + $0x1c] sm:$0x1]
  %v1904 = vld [vmem:[%s1685 + $0x20] sm:$0xf]
  %v1905 = vld [vmem:[%s1685 + $0x24] sm:$0x1]
  %v1906 = vld [vmem:[%s1685 + $0x28] sm:$0xf]
  %v1907 = vld [vmem:[%s1685 + $0x2c] sm:$0x1]
  %v1908 = vld [vmem:[%s1685 + $0x30] sm:$0xf]
  %v1909 = vld [vmem:[%s1685 + $0x34] sm:$0x1]
  %v1910 = vld [vmem:[%s1685 + $0x38] sm:$0xf]
  %v1911 = vld [vmem:[%s1685 + $0x3c] sm:$0x1]
  %v1912 = vld [vmem:[%s1685 + $0x60] sm:$0xf]
  %v1913 = vld [vmem:[%s1685 + $0x64] sm:$0x1]
  %v1914 = vld [vmem:[%s1685 + $0x68] sm:$0xf]
  %v1915 = vld [vmem:[%s1685 + $0x6c] sm:$0x1]
  %v1916 = vld [vmem:[%s1685 + $0x70] sm:$0xf]
  %v1917 = vld [vmem:[%s1685 + $0x74] sm:$0x1]
  %v1918 = vld [vmem:[%s1685 + $0x78] sm:$0xf]
  %v1919 = vld [vmem:[%s1685 + $0x7c] sm:$0x1]
  %v1920 = vld [vmem:[%s1685 + $0x80] sm:$0xf]
  %v1921 = vld [vmem:[%s1685 + $0x84] sm:$0x1]
  %v1922 = vld [vmem:[%s1685 + $0x88] sm:$0xf]
  %v1923 = vld [vmem:[%s1685 + $0x8c] sm:$0x1]
  %v1924 = vld [vmem:[%s1685 + $0x90] sm:$0xf]
  %v1925 = vld [vmem:[%s1685 + $0x94] sm:$0x1]
  %v1926 = vld [vmem:[%s1685 + $0x98] sm:$0xf]
  %v1927 = vld [vmem:[%s1685 + $0x9c] sm:$0x1]
  %v1929 = vshrl.u32 %v1896, 16
  %v1931 = vrot.slane %v1929, 4
  %v1932 = vshll.u32 %v1896, 16
  %v1934 = vrot.slane %v1932, 5
  %v1935 = vor.u32 %v1931, %v1934
  %v1936 = vrot.slane %v1935, 4
  %v1938 = vshll.u32 %v1897, 16
  %v1940 = vrot.slane %v1938, 5
  %v1941 = vsel %vm53, %v1936, %v1940
  %v1943 = vshrl.u32 %v1898, 16
  %v1945 = vrot.slane %v1943, 4
  %v1946 = vshll.u32 %v1898, 16
  %v1948 = vrot.slane %v1946, 5
  %v1949 = vor.u32 %v1945, %v1948
  %v1950 = vrot.slane %v1949, 4
  %v1952 = vshll.u32 %v1899, 16
  %v1954 = vrot.slane %v1952, 5
  %v1955 = vsel %vm53, %v1950, %v1954
  %v1957 = vshrl.u32 %v1900, 16
  %v1959 = vrot.slane %v1957, 4
  %v1960 = vshll.u32 %v1900, 16
  %v1962 = vrot.slane %v1960, 5
  %v1963 = vor.u32 %v1959, %v1962
  %v1964 = vrot.slane %v1963, 4
  %v1966 = vshll.u32 %v1901, 16
  %v1968 = vrot.slane %v1966, 5
  %v1969 = vsel %vm53, %v1964, %v1968
  %v1971 = vshrl.u32 %v1902, 16
  %v1973 = vrot.slane %v1971, 4
  %v1974 = vshll.u32 %v1902, 16
  %v1976 = vrot.slane %v1974, 5
  %v1977 = vor.u32 %v1973, %v1976
  %v1978 = vrot.slane %v1977, 4
  %v1980 = vshll.u32 %v1903, 16
  %v1982 = vrot.slane %v1980, 5
  %v1983 = vsel %vm53, %v1978, %v1982
  %v1985 = vshrl.u32 %v1904, 16
  %v1987 = vrot.slane %v1985, 4
  %v1988 = vshll.u32 %v1904, 16
  %v1990 = vrot.slane %v1988, 5
  %v1991 = vor.u32 %v1987, %v1990
  %v1992 = vrot.slane %v1991, 4
  %v1994 = vshll.u32 %v1905, 16
  %v1996 = vrot.slane %v1994, 5
  %v1997 = vsel %vm53, %v1992, %v1996
  %v1999 = vshrl.u32 %v1906, 16
  %v2001 = vrot.slane %v1999, 4
  %v2002 = vshll.u32 %v1906, 16
  %v2004 = vrot.slane %v2002, 5
  %v2005 = vor.u32 %v2001, %v2004
  %v2006 = vrot.slane %v2005, 4
  %v2008 = vshll.u32 %v1907, 16
  %v2010 = vrot.slane %v2008, 5
  %v2011 = vsel %vm53, %v2006, %v2010
  %v2013 = vshrl.u32 %v1908, 16
  %v2015 = vrot.slane %v2013, 4
  %v2016 = vshll.u32 %v1908, 16
  %v2018 = vrot.slane %v2016, 5
  %v2019 = vor.u32 %v2015, %v2018
  %v2020 = vrot.slane %v2019, 4
  %v2022 = vshll.u32 %v1909, 16
  %v2024 = vrot.slane %v2022, 5
  %v2025 = vsel %vm53, %v2020, %v2024
  %v2027 = vshrl.u32 %v1910, 16
  %v2029 = vrot.slane %v2027, 4
  %v2030 = vshll.u32 %v1910, 16
  %v2032 = vrot.slane %v2030, 5
  %v2033 = vor.u32 %v2029, %v2032
  %v2034 = vrot.slane %v2033, 4
  %v2036 = vshll.u32 %v1911, 16
  %v2038 = vrot.slane %v2036, 5
  %v2039 = vsel %vm53, %v2034, %v2038
  %v2041 = vshrl.u32 %v1912, 16
  %v2043 = vrot.slane %v2041, 4
  %v2044 = vshll.u32 %v1912, 16
  %v2046 = vrot.slane %v2044, 5
  %v2047 = vor.u32 %v2043, %v2046
  %v2048 = vrot.slane %v2047, 4
  %v2050 = vshll.u32 %v1913, 16
  %v2052 = vrot.slane %v2050, 5
  %v2053 = vsel %vm53, %v2048, %v2052
  %v2055 = vshrl.u32 %v1914, 16
  %v2057 = vrot.slane %v2055, 4
  %v2058 = vshll.u32 %v1914, 16
  %v2060 = vrot.slane %v2058, 5
  %v2061 = vor.u32 %v2057, %v2060
  %v2062 = vrot.slane %v2061, 4
  %v2064 = vshll.u32 %v1915, 16
  %v2066 = vrot.slane %v2064, 5
  %v2067 = vsel %vm53, %v2062, %v2066
  %v2069 = vshrl.u32 %v1916, 16
  %v2071 = vrot.slane %v2069, 4
  %v2072 = vshll.u32 %v1916, 16
  %v2074 = vrot.slane %v2072, 5
  %v2075 = vor.u32 %v2071, %v2074
  %v2076 = vrot.slane %v2075, 4
  %v2078 = vshll.u32 %v1917, 16
  %v2080 = vrot.slane %v2078, 5
  %v2081 = vsel %vm53, %v2076, %v2080
  %v2083 = vshrl.u32 %v1918, 16
  %v2085 = vrot.slane %v2083, 4
  %v2086 = vshll.u32 %v1918, 16
  %v2088 = vrot.slane %v2086, 5
  %v2089 = vor.u32 %v2085, %v2088
  %v2090 = vrot.slane %v2089, 4
  %v2092 = vshll.u32 %v1919, 16
  %v2094 = vrot.slane %v2092, 5
  %v2095 = vsel %vm53, %v2090, %v2094
  %v2097 = vshrl.u32 %v1920, 16
  %v2099 = vrot.slane %v2097, 4
  %v2100 = vshll.u32 %v1920, 16
  %v2102 = vrot.slane %v2100, 5
  %v2103 = vor.u32 %v2099, %v2102
  %v2104 = vrot.slane %v2103, 4
  %v2106 = vshll.u32 %v1921, 16
  %v2108 = vrot.slane %v2106, 5
  %v2109 = vsel %vm53, %v2104, %v2108
  %v2111 = vshrl.u32 %v1922, 16
  %v2113 = vrot.slane %v2111, 4
  %v2114 = vshll.u32 %v1922, 16
  %v2116 = vrot.slane %v2114, 5
  %v2117 = vor.u32 %v2113, %v2116
  %v2118 = vrot.slane %v2117, 4
  %v2120 = vshll.u32 %v1923, 16
  %v2122 = vrot.slane %v2120, 5
  %v2123 = vsel %vm53, %v2118, %v2122
  %v2125 = vshrl.u32 %v1924, 16
  %v2127 = vrot.slane %v2125, 4
  %v2128 = vshll.u32 %v1924, 16
  %v2130 = vrot.slane %v2128, 5
  %v2131 = vor.u32 %v2127, %v2130
  %v2132 = vrot.slane %v2131, 4
  %v2134 = vshll.u32 %v1925, 16
  %v2136 = vrot.slane %v2134, 5
  %v2137 = vsel %vm53, %v2132, %v2136
  %v2139 = vshrl.u32 %v1926, 16
  %v2141 = vrot.slane %v2139, 4
  %v2142 = vshll.u32 %v1926, 16
  %v2144 = vrot.slane %v2142, 5
  %v2145 = vor.u32 %v2141, %v2144
  %v2146 = vrot.slane %v2145, 4
  %v2148 = vshll.u32 %v1927, 16
  %v2150 = vrot.slane %v2148, 5
  %v2151 = vsel %vm53, %v2146, %v2150
  %s2152 = scalar_lea.vmem %s1, 96
  %v2153 = vld [vmem:[%s2152] sm:$0xf]
  %v2154 = vld [vmem:[%s2152 + $0x4] sm:$0xf]
  %v2155 = vld [vmem:[%s2152 + $0x8] sm:$0xf]
  %v2156 = vld [vmem:[%s2152 + $0xc] sm:$0xf]
  %v2157 = vunpack.c.l.b16 %v1941
  %v2158 = vunpack.c.l.b16 %v1955
  %v2159 = vunpack.c.l.b16 %v1969
  %v2160 = vunpack.c.l.b16 %v1983
  %v2161 = vunpack.c.l.b16 %v1997
  %v2162 = vunpack.c.l.b16 %v2011
  %v2163 = vunpack.c.l.b16 %v2025
  %v2164 = vunpack.c.l.b16 %v2039
  %v2165 = vunpack.c.l.b16 %v2053
  %v2166 = vunpack.c.l.b16 %v2067
  %v2167 = vunpack.c.l.b16 %v2081
  %v2168 = vunpack.c.l.b16 %v2095
  %v2169 = vunpack.c.l.b16 %v2109
  %v2170 = vunpack.c.l.b16 %v2123
  %v2171 = vunpack.c.l.b16 %v2137
  %v2172 = vunpack.c.l.b16 %v2151
  %v2173 = vpack.c.b16 %v2158, %v2157
  %v2174 = vpack.c.b16 %v2160, %v2159
  %v2175 = vpack.c.b16 %v2162, %v2161
  %v2176 = vpack.c.b16 %v2164, %v2163
  %v2177 = vpack.c.b16 %v2166, %v2165
  %v2178 = vpack.c.b16 %v2168, %v2167
  %v2179 = vpack.c.b16 %v2170, %v2169
  %v2180 = vpack.c.b16 %v2172, %v2171
  %v2185 = vunpack.c.l.b16 %v2153
  %v2186 = vunpack.c.l.b16 %v2154
  %v2187 = vunpack.c.l.b16 %v2155
  %v2188 = vunpack.c.l.b16 %v2156
  %v2189 = vpack.c.b16 %v2186, %v2185
  %v2190 = vpack.c.b16 %v2188, %v2187
  %v2194 = vsel %vm319, %v2173, 0
  %v2197 = vsel %vm319, %v2174, 0
  %v2200 = vsel %vm319, %v2175, 0
  %v2203 = vsel %vm319, %v2176, 0
  %v2206 = vsel %vm319, %v2177, 0
  %v2209 = vsel %vm319, %v2178, 0
  %v2212 = vsel %vm319, %v2179, 0
  %v2215 = vsel %vm319, %v2180, 0
  %2217 = vmatprep.subr.bf16.mxu0 0
  %2218 = vmatpush1.bf16.msra.mxu0 %v2189
  %2219 = vmatprep.subr.bf16.mxu0 0
  %2220 = vmatpush1.bf16.msra.mxu0 %v2190
  %2221 = vmatprep.subr.bf16.mxu0 0
  %2222 = vmatpush1.bf16.msra.mxu0 0
  %2223 = vmatprep.subr.bf16.mxu0 0
  %2224 = vmatpush1.bf16.msra.mxu0 0
  %2225 = vmatprep.subr.bf16.mxu0 0
  %2226 = vmatpush1.bf16.msra.mxu0 0
  %2227 = vmatprep.subr.bf16.mxu0 0
  %2228 = vmatpush1.bf16.msra.mxu0 0
  %2229 = vmatprep.subr.bf16.mxu0 0
  %2230 = vmatpush1.bf16.msra.mxu0 0
  %2231 = vmatprep.subr.bf16.mxu0 0
  %2232 = vmatpush1.bf16.msra.mxu0 0
  %2233 = vmatprep.subr.bf16.mxu0 0
  %2234 = vmatpush1.bf16.msra.mxu0 0
  %2235 = vmatprep.subr.bf16.mxu0 0
  %2236 = vmatpush1.bf16.msra.mxu0 0
  %2237 = vmatprep.subr.bf16.mxu0 0
  %2238 = vmatpush1.bf16.msra.mxu0 0
  %2239 = vmatprep.subr.bf16.mxu0 0
  %2240 = vmatpush1.bf16.msra.mxu0 0
  %2241 = vmatprep.subr.bf16.mxu0 0
  %2242 = vmatpush1.bf16.msra.mxu0 0
  %2243 = vmatprep.subr.bf16.mxu0 0
  %2244 = vmatpush1.bf16.msra.mxu0 0
  %2245 = vmatprep.subr.bf16.mxu0 0
  %2246 = vmatpush1.bf16.msra.mxu0 0
  %2247 = vmatprep.subr.bf16.mxu0 0
  %2248 = vmatpush1.bf16.msra.mxu0 0
  %2249 = vmatprep.mubr.bf16.mxu0 0
  %2250 = vmatmul.mubr.bf16.gmra.mrb[0].mxu0 %v2194
  %v2251 = vpop.f32.mrb[0].mxu0
  %v2252 = vadd.f32 0.0, %v2251
  %v2253 = vpop.f32.mrb[0].mxu0
  %v2254 = vpop.f32.mrb[0].mxu0
  %v2255 = vadd.f32 0.0, %v2254
  %v2256 = vpop.f32.mrb[0].mxu0
  %2257 = vmatprep.mubr.bf16.mxu0 0
  %2258 = vmatmul.mubr.bf16.gmra.mrb[0].mxu0 %v2197
  %v2259 = vpop.f32.mrb[0].mxu0
  %v2260 = vadd.f32 0.0, %v2259
  %v2261 = vpop.f32.mrb[0].mxu0
  %v2262 = vpop.f32.mrb[0].mxu0
  %v2263 = vadd.f32 0.0, %v2262
  %v2264 = vpop.f32.mrb[0].mxu0
  %2265 = vmatprep.mubr.bf16.mxu0 0
  %2266 = vmatmul.mubr.bf16.gmra.mrb[0].mxu0 %v2200
  %v2267 = vpop.f32.mrb[0].mxu0
  %v2268 = vadd.f32 0.0, %v2267
  %v2269 = vpop.f32.mrb[0].mxu0
  %v2270 = vpop.f32.mrb[0].mxu0
  %v2271 = vadd.f32 0.0, %v2270
  %v2272 = vpop.f32.mrb[0].mxu0
  %2273 = vmatprep.mubr.bf16.mxu0 0
  %2274 = vmatmul.mubr.bf16.gmra.mrb[0].mxu0 %v2203
  %v2275 = vpop.f32.mrb[0].mxu0
  %v2276 = vadd.f32 0.0, %v2275
  %v2277 = vpop.f32.mrb[0].mxu0
  %v2278 = vpop.f32.mrb[0].mxu0
  %v2279 = vadd.f32 0.0, %v2278
  %v2280 = vpop.f32.mrb[0].mxu0
  %2281 = vmatprep.mubr.bf16.mxu0 0
  %2282 = vmatmul.mubr.bf16.gmra.mrb[0].mxu0 %v2206
  %v2283 = vpop.f32.mrb[0].mxu0
  %v2284 = vadd.f32 0.0, %v2283
  %v2285 = vpop.f32.mrb[0].mxu0
  %v2286 = vpop.f32.mrb[0].mxu0
  %v2287 = vadd.f32 0.0, %v2286
  %v2288 = vpop.f32.mrb[0].mxu0
  %2289 = vmatprep.mubr.bf16.mxu0 0
  %2290 = vmatmul.mubr.bf16.gmra.mrb[0].mxu0 %v2209
  %v2291 = vpop.f32.mrb[0].mxu0
  %v2292 = vadd.f32 0.0, %v2291
  %v2293 = vpop.f32.mrb[0].mxu0
  %v2294 = vpop.f32.mrb[0].mxu0
  %v2295 = vadd.f32 0.0, %v2294
  %v2296 = vpop.f32.mrb[0].mxu0
  %2297 = vmatprep.mubr.bf16.mxu0 0
  %2298 = vmatmul.mubr.bf16.gmra.mrb[0].mxu0 %v2212
  %v2299 = vpop.f32.mrb[0].mxu0
  %v2300 = vadd.f32 0.0, %v2299
  %v2301 = vpop.f32.mrb[0].mxu0
  %v2302 = vpop.f32.mrb[0].mxu0
  %v2303 = vadd.f32 0.0, %v2302
  %v2304 = vpop.f32.mrb[0].mxu0
  %2305 = vmatprep.mubr.bf16.mxu0 0
  %2306 = vmatmul.mubr.bf16.gmra.mrb[0].mxu0 %v2215
  %v2307 = vpop.f32.mrb[0].mxu0
  %v2308 = vadd.f32 0.0, %v2307
  %v2309 = vpop.f32.mrb[0].mxu0
  %v2310 = vpop.f32.mrb[0].mxu0
  %v2311 = vadd.f32 0.0, %v2310
  %v2312 = vpop.f32.mrb[0].mxu0
  %2313 = vdwg.mxu0
  %v2314 = vadd.f32 %v1880, %v2252
  %v2315 = vadd.f32 %v1881, %v2255
  %v2316 = vadd.f32 %v1882, %v2260
  %v2317 = vadd.f32 %v1883, %v2263
  %v2318 = vadd.f32 %v1884, %v2268
  %v2319 = vadd.f32 %v1885, %v2271
  %v2320 = vadd.f32 %v1886, %v2276
  %v2321 = vadd.f32 %v1887, %v2279
  %v2322 = vadd.f32 %v1888, %v2284
  %v2323 = vadd.f32 %v1889, %v2287
  %v2324 = vadd.f32 %v1890, %v2292
  %v2325 = vadd.f32 %v1891, %v2295
  %v2326 = vadd.f32 %v1892, %v2300
  %v2327 = vadd.f32 %v1893, %v2303
  %v2328 = vadd.f32 %v1894, %v2308
  %v2329 = vadd.f32 %v1895, %v2311
  %v2330 = vld [vmem:[%s1685] sm:$0xe]
  %v2331 = vld [vmem:[%s1685 + $0x8] sm:$0xe]
  %v2332 = vld [vmem:[%s1685 + $0x10] sm:$0xe]
  %v2333 = vld [vmem:[%s1685 + $0x18] sm:$0xe]
  %v2334 = vld [vmem:[%s1685 + $0x20] sm:$0xe]
  %v2335 = vld [vmem:[%s1685 + $0x28] sm:$0xe]
  %v2336 = vld [vmem:[%s1685 + $0x30] sm:$0xe]
  %v2337 = vld [vmem:[%s1685 + $0x38] sm:$0xe]
  %v2338 = vld [vmem:[%s1685 + $0x60] sm:$0xe]
  %v2339 = vld [vmem:[%s1685 + $0x68] sm:$0xe]
  %v2340 = vld [vmem:[%s1685 + $0x70] sm:$0xe]
  %v2341 = vld [vmem:[%s1685 + $0x78] sm:$0xe]
  %v2342 = vld [vmem:[%s1685 + $0x80] sm:$0xe]
  %v2343 = vld [vmem:[%s1685 + $0x88] sm:$0xe]
  %v2344 = vld [vmem:[%s1685 + $0x90] sm:$0xe]
  %v2345 = vld [vmem:[%s1685 + $0x98] sm:$0xe]
  %v2378 = vrot.slane %v2330, 5
  %v2379 = vrot.slane %v2378, 4
  %v2380 = vrot.slane %v1897, 5
  %v2381 = vsel %vm664, %v2379, %v2380
  %v2382 = vrot.slane %v2331, 5
  %v2383 = vrot.slane %v2382, 4
  %v2384 = vrot.slane %v1899, 5
  %v2385 = vsel %vm664, %v2383, %v2384
  %v2386 = vrot.slane %v2332, 5
  %v2387 = vrot.slane %v2386, 4
  %v2388 = vrot.slane %v1901, 5
  %v2389 = vsel %vm664, %v2387, %v2388
  %v2390 = vrot.slane %v2333, 5
  %v2391 = vrot.slane %v2390, 4
  %v2392 = vrot.slane %v1903, 5
  %v2393 = vsel %vm664, %v2391, %v2392
  %v2394 = vrot.slane %v2334, 5
  %v2395 = vrot.slane %v2394, 4
  %v2396 = vrot.slane %v1905, 5
  %v2397 = vsel %vm664, %v2395, %v2396
  %v2398 = vrot.slane %v2335, 5
  %v2399 = vrot.slane %v2398, 4
  %v2400 = vrot.slane %v1907, 5
  %v2401 = vsel %vm664, %v2399, %v2400
  %v2402 = vrot.slane %v2336, 5
  %v2403 = vrot.slane %v2402, 4
  %v2404 = vrot.slane %v1909, 5
  %v2405 = vsel %vm664, %v2403, %v2404
  %v2406 = vrot.slane %v2337, 5
  %v2407 = vrot.slane %v2406, 4
  %v2408 = vrot.slane %v1911, 5
  %v2409 = vsel %vm664, %v2407, %v2408
  %v2410 = vrot.slane %v2338, 5
  %v2411 = vrot.slane %v2410, 4
  %v2412 = vrot.slane %v1913, 5
  %v2413 = vsel %vm664, %v2411, %v2412
  %v2414 = vrot.slane %v2339, 5
  %v2415 = vrot.slane %v2414, 4
  %v2416 = vrot.slane %v1915, 5
  %v2417 = vsel %vm664, %v2415, %v2416
  %v2418 = vrot.slane %v2340, 5
  %v2419 = vrot.slane %v2418, 4
  %v2420 = vrot.slane %v1917, 5
  %v2421 = vsel %vm664, %v2419, %v2420
  %v2422 = vrot.slane %v2341, 5
  %v2423 = vrot.slane %v2422, 4
  %v2424 = vrot.slane %v1919, 5
  %v2425 = vsel %vm664, %v2423, %v2424
  %v2426 = vrot.slane %v2342, 5
  %v2427 = vrot.slane %v2426, 4
  %v2428 = vrot.slane %v1921, 5
  %v2429 = vsel %vm664, %v2427, %v2428
  %v2430 = vrot.slane %v2343, 5
  %v2431 = vrot.slane %v2430, 4
  %v2432 = vrot.slane %v1923, 5
  %v2433 = vsel %vm664, %v2431, %v2432
  %v2434 = vrot.slane %v2344, 5
  %v2435 = vrot.slane %v2434, 4
  %v2436 = vrot.slane %v1925, 5
  %v2437 = vsel %vm664, %v2435, %v2436
  %v2438 = vrot.slane %v2345, 5
  %v2439 = vrot.slane %v2438, 4
  %v2440 = vrot.slane %v1927, 5
  %v2441 = vsel %vm664, %v2439, %v2440
  %s2442 = scalar_lea.vmem %s1, 112
  %v2443 = vld [vmem:[%s2442] sm:$0xf]
  %v2444 = vld [vmem:[%s2442 + $0x4] sm:$0xf]
  %v2445 = vld [vmem:[%s2442 + $0x8] sm:$0xf]
  %v2446 = vld [vmem:[%s2442 + $0xc] sm:$0xf]
  %v2447 = vunpack.c.l.b16 %v2381
  %v2448 = vunpack.c.l.b16 %v2385
  %v2449 = vunpack.c.l.b16 %v2389
  %v2450 = vunpack.c.l.b16 %v2393
  %v2451 = vunpack.c.l.b16 %v2397
  %v2452 = vunpack.c.l.b16 %v2401
  %v2453 = vunpack.c.l.b16 %v2405
  %v2454 = vunpack.c.l.b16 %v2409
  %v2455 = vunpack.c.l.b16 %v2413
  %v2456 = vunpack.c.l.b16 %v2417
  %v2457 = vunpack.c.l.b16 %v2421
  %v2458 = vunpack.c.l.b16 %v2425
  %v2459 = vunpack.c.l.b16 %v2429
  %v2460 = vunpack.c.l.b16 %v2433
  %v2461 = vunpack.c.l.b16 %v2437
  %v2462 = vunpack.c.l.b16 %v2441
  %v2463 = vpack.c.b16 %v2448, %v2447
  %v2464 = vpack.c.b16 %v2450, %v2449
  %v2465 = vpack.c.b16 %v2452, %v2451
  %v2466 = vpack.c.b16 %v2454, %v2453
  %v2467 = vpack.c.b16 %v2456, %v2455
  %v2468 = vpack.c.b16 %v2458, %v2457
  %v2469 = vpack.c.b16 %v2460, %v2459
  %v2470 = vpack.c.b16 %v2462, %v2461
  %v2475 = vunpack.c.l.b16 %v2443
  %v2476 = vunpack.c.l.b16 %v2444
  %v2477 = vunpack.c.l.b16 %v2445
  %v2478 = vunpack.c.l.b16 %v2446
  %v2479 = vpack.c.b16 %v2476, %v2475
  %v2480 = vpack.c.b16 %v2478, %v2477
  %v2484 = vsel %vm319, %v2463, 0
  %v2487 = vsel %vm319, %v2464, 0
  %v2490 = vsel %vm319, %v2465, 0
  %v2493 = vsel %vm319, %v2466, 0
  %v2496 = vsel %vm319, %v2467, 0
  %v2499 = vsel %vm319, %v2468, 0
  %v2502 = vsel %vm319, %v2469, 0
  %v2505 = vsel %vm319, %v2470, 0
  %2507 = vmatprep.subr.bf16.mxu0 0
  %2508 = vmatpush1.bf16.msra.mxu0 %v2479
  %2509 = vmatprep.subr.bf16.mxu0 0
  %2510 = vmatpush1.bf16.msra.mxu0 %v2480
  %2511 = vmatprep.subr.bf16.mxu0 0
  %2512 = vmatpush1.bf16.msra.mxu0 0
  %2513 = vmatprep.subr.bf16.mxu0 0
  %2514 = vmatpush1.bf16.msra.mxu0 0
  %2515 = vmatprep.subr.bf16.mxu0 0
  %2516 = vmatpush1.bf16.msra.mxu0 0
  %2517 = vmatprep.subr.bf16.mxu0 0
  %2518 = vmatpush1.bf16.msra.mxu0 0
  %2519 = vmatprep.subr.bf16.mxu0 0
  %2520 = vmatpush1.bf16.msra.mxu0 0
  %2521 = vmatprep.subr.bf16.mxu0 0
  %2522 = vmatpush1.bf16.msra.mxu0 0
  %2523 = vmatprep.subr.bf16.mxu0 0
  %2524 = vmatpush1.bf16.msra.mxu0 0
  %2525 = vmatprep.subr.bf16.mxu0 0
  %2526 = vmatpush1.bf16.msra.mxu0 0
  %2527 = vmatprep.subr.bf16.mxu0 0
  %2528 = vmatpush1.bf16.msra.mxu0 0
  %2529 = vmatprep.subr.bf16.mxu0 0
  %2530 = vmatpush1.bf16.msra.mxu0 0
  %2531 = vmatprep.subr.bf16.mxu0 0
  %2532 = vmatpush1.bf16.msra.mxu0 0
  %2533 = vmatprep.subr.bf16.mxu0 0
  %2534 = vmatpush1.bf16.msra.mxu0 0
  %2535 = vmatprep.subr.bf16.mxu0 0
  %2536 = vmatpush1.bf16.msra.mxu0 0
  %2537 = vmatprep.subr.bf16.mxu0 0
  %2538 = vmatpush1.bf16.msra.mxu0 0
  %2539 = vmatprep.mubr.bf16.mxu0 0
  %2540 = vmatmul.mubr.bf16.gmra.mrb[0].mxu0 %v2484
  %v2541 = vpop.f32.mrb[0].mxu0
  %v2542 = vadd.f32 0.0, %v2541
  %v2543 = vpop.f32.mrb[0].mxu0
  %v2544 = vpop.f32.mrb[0].mxu0
  %v2545 = vadd.f32 0.0, %v2544
  %v2546 = vpop.f32.mrb[0].mxu0
  %2547 = vmatprep.mubr.bf16.mxu0 0
  %2548 = vmatmul.mubr.bf16.gmra.mrb[0].mxu0 %v2487
  %v2549 = vpop.f32.mrb[0].mxu0
  %v2550 = vadd.f32 0.0, %v2549
  %v2551 = vpop.f32.mrb[0].mxu0
  %v2552 = vpop.f32.mrb[0].mxu0
  %v2553 = vadd.f32 0.0, %v2552
  %v2554 = vpop.f32.mrb[0].mxu0
  %2555 = vmatprep.mubr.bf16.mxu0 0
  %2556 = vmatmul.mubr.bf16.gmra.mrb[0].mxu0 %v2490
  %v2557 = vpop.f32.mrb[0].mxu0
  %v2558 = vadd.f32 0.0, %v2557
  %v2559 = vpop.f32.mrb[0].mxu0
  %v2560 = vpop.f32.mrb[0].mxu0
  %v2561 = vadd.f32 0.0, %v2560
  %v2562 = vpop.f32.mrb[0].mxu0
  %2563 = vmatprep.mubr.bf16.mxu0 0
  %2564 = vmatmul.mubr.bf16.gmra.mrb[0].mxu0 %v2493
  %v2565 = vpop.f32.mrb[0].mxu0
  %v2566 = vadd.f32 0.0, %v2565
  %v2567 = vpop.f32.mrb[0].mxu0
  %v2568 = vpop.f32.mrb[0].mxu0
  %v2569 = vadd.f32 0.0, %v2568
  %v2570 = vpop.f32.mrb[0].mxu0
  %2571 = vmatprep.mubr.bf16.mxu0 0
  %2572 = vmatmul.mubr.bf16.gmra.mrb[0].mxu0 %v2496
  %v2573 = vpop.f32.mrb[0].mxu0
  %v2574 = vadd.f32 0.0, %v2573
  %v2575 = vpop.f32.mrb[0].mxu0
  %v2576 = vpop.f32.mrb[0].mxu0
  %v2577 = vadd.f32 0.0, %v2576
  %v2578 = vpop.f32.mrb[0].mxu0
  %2579 = vmatprep.mubr.bf16.mxu0 0
  %2580 = vmatmul.mubr.bf16.gmra.mrb[0].mxu0 %v2499
  %v2581 = vpop.f32.mrb[0].mxu0
  %v2582 = vadd.f32 0.0, %v2581
  %v2583 = vpop.f32.mrb[0].mxu0
  %v2584 = vpop.f32.mrb[0].mxu0
  %v2585 = vadd.f32 0.0, %v2584
  %v2586 = vpop.f32.mrb[0].mxu0
  %2587 = vmatprep.mubr.bf16.mxu0 0
  %2588 = vmatmul.mubr.bf16.gmra.mrb[0].mxu0 %v2502
  %v2589 = vpop.f32.mrb[0].mxu0
  %v2590 = vadd.f32 0.0, %v2589
  %v2591 = vpop.f32.mrb[0].mxu0
  %v2592 = vpop.f32.mrb[0].mxu0
  %v2593 = vadd.f32 0.0, %v2592
  %v2594 = vpop.f32.mrb[0].mxu0
  %2595 = vmatprep.mubr.bf16.mxu0 0
  %2596 = vmatmul.mubr.bf16.gmra.mrb[0].mxu0 %v2505
  %v2597 = vpop.f32.mrb[0].mxu0
  %v2598 = vadd.f32 0.0, %v2597
  %v2599 = vpop.f32.mrb[0].mxu0
  %v2600 = vpop.f32.mrb[0].mxu0
  %v2601 = vadd.f32 0.0, %v2600
  %v2602 = vpop.f32.mrb[0].mxu0
  %2603 = vdwg.mxu0
  %v2604 = vadd.f32 %v2314, %v2542
  %v2605 = vadd.f32 %v2315, %v2545
  %v2606 = vadd.f32 %v2316, %v2550
  %v2607 = vadd.f32 %v2317, %v2553
  %v2608 = vadd.f32 %v2318, %v2558
  %v2609 = vadd.f32 %v2319, %v2561
  %v2610 = vadd.f32 %v2320, %v2566
  %v2611 = vadd.f32 %v2321, %v2569
  %v2612 = vadd.f32 %v2322, %v2574
  %v2613 = vadd.f32 %v2323, %v2577
  %v2614 = vadd.f32 %v2324, %v2582
  %v2615 = vadd.f32 %v2325, %v2585
  %v2616 = vadd.f32 %v2326, %v2590
  %v2617 = vadd.f32 %v2327, %v2593
  %v2618 = vadd.f32 %v2328, %v2598
  %v2619 = vadd.f32 %v2329, %v2601
  %v2620 = vld [vmem:[%s1685 + $0x4] sm:$0x3]
  %v2621 = vld [vmem:[%s1685 + $0xc] sm:$0x3]
  %v2622 = vld [vmem:[%s1685 + $0x14] sm:$0x3]
  %v2623 = vld [vmem:[%s1685 + $0x1c] sm:$0x3]
  %v2624 = vld [vmem:[%s1685 + $0x24] sm:$0x3]
  %v2625 = vld [vmem:[%s1685 + $0x2c] sm:$0x3]
  %v2626 = vld [vmem:[%s1685 + $0x34] sm:$0x3]
  %v2627 = vld [vmem:[%s1685 + $0x3c] sm:$0x3]
  %v2628 = vld [vmem:[%s1685 + $0x64] sm:$0x3]
  %v2629 = vld [vmem:[%s1685 + $0x6c] sm:$0x3]
  %v2630 = vld [vmem:[%s1685 + $0x74] sm:$0x3]
  %v2631 = vld [vmem:[%s1685 + $0x7c] sm:$0x3]
  %v2632 = vld [vmem:[%s1685 + $0x84] sm:$0x3]
  %v2633 = vld [vmem:[%s1685 + $0x8c] sm:$0x3]
  %v2634 = vld [vmem:[%s1685 + $0x94] sm:$0x3]
  %v2635 = vld [vmem:[%s1685 + $0x9c] sm:$0x3]
  %v2637 = vshrl.u32 %v2330, 16
  %v2639 = vrot.slane %v2637, 5
  %v2640 = vshll.u32 %v2330, 16
  %v2642 = vrot.slane %v2640, 6
  %v2643 = vor.u32 %v2639, %v2642
  %v2644 = vrot.slane %v2643, 4
  %v2646 = vshrl.u32 %v2620, 16
  %v2648 = vrot.slane %v2646, 5
  %v2649 = vshll.u32 %v2620, 16
  %v2651 = vrot.slane %v2649, 6
  %v2652 = vor.u32 %v2648, %v2651
  %v2653 = vsel %vm925, %v2644, %v2652
  %v2655 = vshrl.u32 %v2331, 16
  %v2657 = vrot.slane %v2655, 5
  %v2658 = vshll.u32 %v2331, 16
  %v2660 = vrot.slane %v2658, 6
  %v2661 = vor.u32 %v2657, %v2660
  %v2662 = vrot.slane %v2661, 4
  %v2664 = vshrl.u32 %v2621, 16
  %v2666 = vrot.slane %v2664, 5
  %v2667 = vshll.u32 %v2621, 16
  %v2669 = vrot.slane %v2667, 6
  %v2670 = vor.u32 %v2666, %v2669
  %v2671 = vsel %vm925, %v2662, %v2670
  %v2673 = vshrl.u32 %v2332, 16
  %v2675 = vrot.slane %v2673, 5
  %v2676 = vshll.u32 %v2332, 16
  %v2678 = vrot.slane %v2676, 6
  %v2679 = vor.u32 %v2675, %v2678
  %v2680 = vrot.slane %v2679, 4
  %v2682 = vshrl.u32 %v2622, 16
  %v2684 = vrot.slane %v2682, 5
  %v2685 = vshll.u32 %v2622, 16
  %v2687 = vrot.slane %v2685, 6
  %v2688 = vor.u32 %v2684, %v2687
  %v2689 = vsel %vm925, %v2680, %v2688
  %v2691 = vshrl.u32 %v2333, 16
  %v2693 = vrot.slane %v2691, 5
  %v2694 = vshll.u32 %v2333, 16
  %v2696 = vrot.slane %v2694, 6
  %v2697 = vor.u32 %v2693, %v2696
  %v2698 = vrot.slane %v2697, 4
  %v2700 = vshrl.u32 %v2623, 16
  %v2702 = vrot.slane %v2700, 5
  %v2703 = vshll.u32 %v2623, 16
  %v2705 = vrot.slane %v2703, 6
  %v2706 = vor.u32 %v2702, %v2705
  %v2707 = vsel %vm925, %v2698, %v2706
  %v2709 = vshrl.u32 %v2334, 16
  %v2711 = vrot.slane %v2709, 5
  %v2712 = vshll.u32 %v2334, 16
  %v2714 = vrot.slane %v2712, 6
  %v2715 = vor.u32 %v2711, %v2714
  %v2716 = vrot.slane %v2715, 4
  %v2718 = vshrl.u32 %v2624, 16
  %v2720 = vrot.slane %v2718, 5
  %v2721 = vshll.u32 %v2624, 16
  %v2723 = vrot.slane %v2721, 6
  %v2724 = vor.u32 %v2720, %v2723
  %v2725 = vsel %vm925, %v2716, %v2724
  %v2727 = vshrl.u32 %v2335, 16
  %v2729 = vrot.slane %v2727, 5
  %v2730 = vshll.u32 %v2335, 16
  %v2732 = vrot.slane %v2730, 6
  %v2733 = vor.u32 %v2729, %v2732
  %v2734 = vrot.slane %v2733, 4
  %v2736 = vshrl.u32 %v2625, 16
  %v2738 = vrot.slane %v2736, 5
  %v2739 = vshll.u32 %v2625, 16
  %v2741 = vrot.slane %v2739, 6
  %v2742 = vor.u32 %v2738, %v2741
  %v2743 = vsel %vm925, %v2734, %v2742
  %v2745 = vshrl.u32 %v2336, 16
  %v2747 = vrot.slane %v2745, 5
  %v2748 = vshll.u32 %v2336, 16
  %v2750 = vrot.slane %v2748, 6
  %v2751 = vor.u32 %v2747, %v2750
  %v2752 = vrot.slane %v2751, 4
  %v2754 = vshrl.u32 %v2626, 16
  %v2756 = vrot.slane %v2754, 5
  %v2757 = vshll.u32 %v2626, 16
  %v2759 = vrot.slane %v2757, 6
  %v2760 = vor.u32 %v2756, %v2759
  %v2761 = vsel %vm925, %v2752, %v2760
  %v2763 = vshrl.u32 %v2337, 16
  %v2765 = vrot.slane %v2763, 5
  %v2766 = vshll.u32 %v2337, 16
  %v2768 = vrot.slane %v2766, 6
  %v2769 = vor.u32 %v2765, %v2768
  %v2770 = vrot.slane %v2769, 4
  %v2772 = vshrl.u32 %v2627, 16
  %v2774 = vrot.slane %v2772, 5
  %v2775 = vshll.u32 %v2627, 16
  %v2777 = vrot.slane %v2775, 6
  %v2778 = vor.u32 %v2774, %v2777
  %v2779 = vsel %vm925, %v2770, %v2778
  %v2781 = vshrl.u32 %v2338, 16
  %v2783 = vrot.slane %v2781, 5
  %v2784 = vshll.u32 %v2338, 16
  %v2786 = vrot.slane %v2784, 6
  %v2787 = vor.u32 %v2783, %v2786
  %v2788 = vrot.slane %v2787, 4
  %v2790 = vshrl.u32 %v2628, 16
  %v2792 = vrot.slane %v2790, 5
  %v2793 = vshll.u32 %v2628, 16
  %v2795 = vrot.slane %v2793, 6
  %v2796 = vor.u32 %v2792, %v2795
  %v2797 = vsel %vm925, %v2788, %v2796
  %v2799 = vshrl.u32 %v2339, 16
  %v2801 = vrot.slane %v2799, 5
  %v2802 = vshll.u32 %v2339, 16
  %v2804 = vrot.slane %v2802, 6
  %v2805 = vor.u32 %v2801, %v2804
  %v2806 = vrot.slane %v2805, 4
  %v2808 = vshrl.u32 %v2629, 16
  %v2810 = vrot.slane %v2808, 5
  %v2811 = vshll.u32 %v2629, 16
  %v2813 = vrot.slane %v2811, 6
  %v2814 = vor.u32 %v2810, %v2813
  %v2815 = vsel %vm925, %v2806, %v2814
  %v2817 = vshrl.u32 %v2340, 16
  %v2819 = vrot.slane %v2817, 5
  %v2820 = vshll.u32 %v2340, 16
  %v2822 = vrot.slane %v2820, 6
  %v2823 = vor.u32 %v2819, %v2822
  %v2824 = vrot.slane %v2823, 4
  %v2826 = vshrl.u32 %v2630, 16
  %v2828 = vrot.slane %v2826, 5
  %v2829 = vshll.u32 %v2630, 16
  %v2831 = vrot.slane %v2829, 6
  %v2832 = vor.u32 %v2828, %v2831
  %v2833 = vsel %vm925, %v2824, %v2832
  %v2835 = vshrl.u32 %v2341, 16
  %v2837 = vrot.slane %v2835, 5
  %v2838 = vshll.u32 %v2341, 16
  %v2840 = vrot.slane %v2838, 6
  %v2841 = vor.u32 %v2837, %v2840
  %v2842 = vrot.slane %v2841, 4
  %v2844 = vshrl.u32 %v2631, 16
  %v2846 = vrot.slane %v2844, 5
  %v2847 = vshll.u32 %v2631, 16
  %v2849 = vrot.slane %v2847, 6
  %v2850 = vor.u32 %v2846, %v2849
  %v2851 = vsel %vm925, %v2842, %v2850
  %v2853 = vshrl.u32 %v2342, 16
  %v2855 = vrot.slane %v2853, 5
  %v2856 = vshll.u32 %v2342, 16
  %v2858 = vrot.slane %v2856, 6
  %v2859 = vor.u32 %v2855, %v2858
  %v2860 = vrot.slane %v2859, 4
  %v2862 = vshrl.u32 %v2632, 16
  %v2864 = vrot.slane %v2862, 5
  %v2865 = vshll.u32 %v2632, 16
  %v2867 = vrot.slane %v2865, 6
  %v2868 = vor.u32 %v2864, %v2867
  %v2869 = vsel %vm925, %v2860, %v2868
  %v2871 = vshrl.u32 %v2343, 16
  %v2873 = vrot.slane %v2871, 5
  %v2874 = vshll.u32 %v2343, 16
  %v2876 = vrot.slane %v2874, 6
  %v2877 = vor.u32 %v2873, %v2876
  %v2878 = vrot.slane %v2877, 4
  %v2880 = vshrl.u32 %v2633, 16
  %v2882 = vrot.slane %v2880, 5
  %v2883 = vshll.u32 %v2633, 16
  %v2885 = vrot.slane %v2883, 6
  %v2886 = vor.u32 %v2882, %v2885
  %v2887 = vsel %vm925, %v2878, %v2886
  %v2889 = vshrl.u32 %v2344, 16
  %v2891 = vrot.slane %v2889, 5
  %v2892 = vshll.u32 %v2344, 16
  %v2894 = vrot.slane %v2892, 6
  %v2895 = vor.u32 %v2891, %v2894
  %v2896 = vrot.slane %v2895, 4
  %v2898 = vshrl.u32 %v2634, 16
  %v2900 = vrot.slane %v2898, 5
  %v2901 = vshll.u32 %v2634, 16
  %v2903 = vrot.slane %v2901, 6
  %v2904 = vor.u32 %v2900, %v2903
  %v2905 = vsel %vm925, %v2896, %v2904
  %v2907 = vshrl.u32 %v2345, 16
  %v2909 = vrot.slane %v2907, 5
  %v2910 = vshll.u32 %v2345, 16
  %v2912 = vrot.slane %v2910, 6
  %v2913 = vor.u32 %v2909, %v2912
  %v2914 = vrot.slane %v2913, 4
  %v2916 = vshrl.u32 %v2635, 16
  %v2918 = vrot.slane %v2916, 5
  %v2919 = vshll.u32 %v2635, 16
  %v2921 = vrot.slane %v2919, 6
  %v2922 = vor.u32 %v2918, %v2921
  %v2923 = vsel %vm925, %v2914, %v2922
  %s2924 = scalar_lea.vmem %s1, 128
  %v2925 = vld [vmem:[%s2924] sm:$0xf]
  %v2926 = vld [vmem:[%s2924 + $0x4] sm:$0xf]
  %v2927 = vld [vmem:[%s2924 + $0x8] sm:$0xf]
  %v2928 = vld [vmem:[%s2924 + $0xc] sm:$0xf]
  %v2929 = vunpack.c.l.b16 %v2653
  %v2930 = vunpack.c.l.b16 %v2671
  %v2931 = vunpack.c.l.b16 %v2689
  %v2932 = vunpack.c.l.b16 %v2707
  %v2933 = vunpack.c.l.b16 %v2725
  %v2934 = vunpack.c.l.b16 %v2743
  %v2935 = vunpack.c.l.b16 %v2761
  %v2936 = vunpack.c.l.b16 %v2779
  %v2937 = vunpack.c.l.b16 %v2797
  %v2938 = vunpack.c.l.b16 %v2815
  %v2939 = vunpack.c.l.b16 %v2833
  %v2940 = vunpack.c.l.b16 %v2851
  %v2941 = vunpack.c.l.b16 %v2869
  %v2942 = vunpack.c.l.b16 %v2887
  %v2943 = vunpack.c.l.b16 %v2905
  %v2944 = vunpack.c.l.b16 %v2923
  %v2945 = vpack.c.b16 %v2930, %v2929
  %v2946 = vpack.c.b16 %v2932, %v2931
  %v2947 = vpack.c.b16 %v2934, %v2933
  %v2948 = vpack.c.b16 %v2936, %v2935
  %v2949 = vpack.c.b16 %v2938, %v2937
  %v2950 = vpack.c.b16 %v2940, %v2939
  %v2951 = vpack.c.b16 %v2942, %v2941
  %v2952 = vpack.c.b16 %v2944, %v2943
  %v2957 = vunpack.c.l.b16 %v2925
  %v2958 = vunpack.c.l.b16 %v2926
  %v2959 = vunpack.c.l.b16 %v2927
  %v2960 = vunpack.c.l.b16 %v2928
  %v2961 = vpack.c.b16 %v2958, %v2957
  %v2962 = vpack.c.b16 %v2960, %v2959
  %v2966 = vsel %vm319, %v2945, 0
  %v2969 = vsel %vm319, %v2946, 0
  %v2972 = vsel %vm319, %v2947, 0
  %v2975 = vsel %vm319, %v2948, 0
  %v2978 = vsel %vm319, %v2949, 0
  %v2981 = vsel %vm319, %v2950, 0
  %v2984 = vsel %vm319, %v2951, 0
  %v2987 = vsel %vm319, %v2952, 0
  %2989 = vmatprep.subr.bf16.mxu0 0
  %2990 = vmatpush1.bf16.msra.mxu0 %v2961
  %2991 = vmatprep.subr.bf16.mxu0 0
  %2992 = vmatpush1.bf16.msra.mxu0 %v2962
  %2993 = vmatprep.subr.bf16.mxu0 0
  %2994 = vmatpush1.bf16.msra.mxu0 0
  %2995 = vmatprep.subr.bf16.mxu0 0
  %2996 = vmatpush1.bf16.msra.mxu0 0
  %2997 = vmatprep.subr.bf16.mxu0 0
  %2998 = vmatpush1.bf16.msra.mxu0 0
  %2999 = vmatprep.subr.bf16.mxu0 0
  %3000 = vmatpush1.bf16.msra.mxu0 0
  %3001 = vmatprep.subr.bf16.mxu0 0
  %3002 = vmatpush1.bf16.msra.mxu0 0
  %3003 = vmatprep.subr.bf16.mxu0 0
  %3004 = vmatpush1.bf16.msra.mxu0 0
  %3005 = vmatprep.subr.bf16.mxu0 0
  %3006 = vmatpush1.bf16.msra.mxu0 0
  %3007 = vmatprep.subr.bf16.mxu0 0
  %3008 = vmatpush1.bf16.msra.mxu0 0
  %3009 = vmatprep.subr.bf16.mxu0 0
  %3010 = vmatpush1.bf16.msra.mxu0 0
  %3011 = vmatprep.subr.bf16.mxu0 0
  %3012 = vmatpush1.bf16.msra.mxu0 0
  %3013 = vmatprep.subr.bf16.mxu0 0
  %3014 = vmatpush1.bf16.msra.mxu0 0
  %3015 = vmatprep.subr.bf16.mxu0 0
  %3016 = vmatpush1.bf16.msra.mxu0 0
  %3017 = vmatprep.subr.bf16.mxu0 0
  %3018 = vmatpush1.bf16.msra.mxu0 0
  %3019 = vmatprep.subr.bf16.mxu0 0
  %3020 = vmatpush1.bf16.msra.mxu0 0
  %3021 = vmatprep.mubr.bf16.mxu0 0
  %3022 = vmatmul.mubr.bf16.gmra.mrb[0].mxu0 %v2966
  %v3023 = vpop.f32.mrb[0].mxu0
  %v3024 = vadd.f32 0.0, %v3023
  %v3025 = vpop.f32.mrb[0].mxu0
  %v3026 = vpop.f32.mrb[0].mxu0
  %v3027 = vadd.f32 0.0, %v3026
  %v3028 = vpop.f32.mrb[0].mxu0
  %3029 = vmatprep.mubr.bf16.mxu0 0
  %3030 = vmatmul.mubr.bf16.gmra.mrb[0].mxu0 %v2969
  %v3031 = vpop.f32.mrb[0].mxu0
  %v3032 = vadd.f32 0.0, %v3031
  %v3033 = vpop.f32.mrb[0].mxu0
  %v3034 = vpop.f32.mrb[0].mxu0
  %v3035 = vadd.f32 0.0, %v3034
  %v3036 = vpop.f32.mrb[0].mxu0
  %3037 = vmatprep.mubr.bf16.mxu0 0
  %3038 = vmatmul.mubr.bf16.gmra.mrb[0].mxu0 %v2972
  %v3039 = vpop.f32.mrb[0].mxu0
  %v3040 = vadd.f32 0.0, %v3039
  %v3041 = vpop.f32.mrb[0].mxu0
  %v3042 = vpop.f32.mrb[0].mxu0
  %v3043 = vadd.f32 0.0, %v3042
  %v3044 = vpop.f32.mrb[0].mxu0
  %3045 = vmatprep.mubr.bf16.mxu0 0
  %3046 = vmatmul.mubr.bf16.gmra.mrb[0].mxu0 %v2975
  %v3047 = vpop.f32.mrb[0].mxu0
  %v3048 = vadd.f32 0.0, %v3047
  %v3049 = vpop.f32.mrb[0].mxu0
  %v3050 = vpop.f32.mrb[0].mxu0
  %v3051 = vadd.f32 0.0, %v3050
  %v3052 = vpop.f32.mrb[0].mxu0
  %3053 = vmatprep.mubr.bf16.mxu0 0
  %3054 = vmatmul.mubr.bf16.gmra.mrb[0].mxu0 %v2978
  %v3055 = vpop.f32.mrb[0].mxu0
  %v3056 = vadd.f32 0.0, %v3055
  %v3057 = vpop.f32.mrb[0].mxu0
  %v3058 = vpop.f32.mrb[0].mxu0
  %v3059 = vadd.f32 0.0, %v3058
  %v3060 = vpop.f32.mrb[0].mxu0
  %3061 = vmatprep.mubr.bf16.mxu0 0
  %3062 = vmatmul.mubr.bf16.gmra.mrb[0].mxu0 %v2981
  %v3063 = vpop.f32.mrb[0].mxu0
  %v3064 = vadd.f32 0.0, %v3063
  %v3065 = vpop.f32.mrb[0].mxu0
  %v3066 = vpop.f32.mrb[0].mxu0
  %v3067 = vadd.f32 0.0, %v3066
  %v3068 = vpop.f32.mrb[0].mxu0
  %3069 = vmatprep.mubr.bf16.mxu0 0
  %3070 = vmatmul.mubr.bf16.gmra.mrb[0].mxu0 %v2984
  %v3071 = vpop.f32.mrb[0].mxu0
  %v3072 = vadd.f32 0.0, %v3071
  %v3073 = vpop.f32.mrb[0].mxu0
  %v3074 = vpop.f32.mrb[0].mxu0
  %v3075 = vadd.f32 0.0, %v3074
  %v3076 = vpop.f32.mrb[0].mxu0
  %3077 = vmatprep.mubr.bf16.mxu0 0
  %3078 = vmatmul.mubr.bf16.gmra.mrb[0].mxu0 %v2987
  %v3079 = vpop.f32.mrb[0].mxu0
  %v3080 = vadd.f32 0.0, %v3079
  %v3081 = vpop.f32.mrb[0].mxu0
  %v3082 = vpop.f32.mrb[0].mxu0
  %v3083 = vadd.f32 0.0, %v3082
  %v3084 = vpop.f32.mrb[0].mxu0
  %3085 = vdwg.mxu0
  %v3086 = vadd.f32 %v2604, %v3024
  %v3087 = vadd.f32 %v2605, %v3027
  %v3088 = vadd.f32 %v2606, %v3032
  %v3089 = vadd.f32 %v2607, %v3035
  %v3090 = vadd.f32 %v2608, %v3040
  %v3091 = vadd.f32 %v2609, %v3043
  %v3092 = vadd.f32 %v2610, %v3048
  %v3093 = vadd.f32 %v2611, %v3051
  %v3094 = vadd.f32 %v2612, %v3056
  %v3095 = vadd.f32 %v2613, %v3059
  %v3096 = vadd.f32 %v2614, %v3064
  %v3097 = vadd.f32 %v2615, %v3067
  %v3098 = vadd.f32 %v2616, %v3072
  %v3099 = vadd.f32 %v2617, %v3075
  %v3100 = vadd.f32 %v2618, %v3080
  %v3101 = vadd.f32 %v2619, %v3083
  %v3102 = vld [vmem:[%s1685] sm:$0xc]
  %v3103 = vld [vmem:[%s1685 + $0x8] sm:$0xc]
  %v3104 = vld [vmem:[%s1685 + $0x10] sm:$0xc]
  %v3105 = vld [vmem:[%s1685 + $0x18] sm:$0xc]
  %v3106 = vld [vmem:[%s1685 + $0x20] sm:$0xc]
  %v3107 = vld [vmem:[%s1685 + $0x28] sm:$0xc]
  %v3108 = vld [vmem:[%s1685 + $0x30] sm:$0xc]
  %v3109 = vld [vmem:[%s1685 + $0x38] sm:$0xc]
  %v3110 = vld [vmem:[%s1685 + $0x60] sm:$0xc]
  %v3111 = vld [vmem:[%s1685 + $0x68] sm:$0xc]
  %v3112 = vld [vmem:[%s1685 + $0x70] sm:$0xc]
  %v3113 = vld [vmem:[%s1685 + $0x78] sm:$0xc]
  %v3114 = vld [vmem:[%s1685 + $0x80] sm:$0xc]
  %v3115 = vld [vmem:[%s1685 + $0x88] sm:$0xc]
  %v3116 = vld [vmem:[%s1685 + $0x90] sm:$0xc]
  %v3117 = vld [vmem:[%s1685 + $0x98] sm:$0xc]
  %v3150 = vrot.slane %v3102, 6
  %v3151 = vrot.slane %v3150, 4
  %v3152 = vrot.slane %v2620, 6
  %v3153 = vsel %vm1442, %v3151, %v3152
  %v3154 = vrot.slane %v3103, 6
  %v3155 = vrot.slane %v3154, 4
  %v3156 = vrot.slane %v2621, 6
  %v3157 = vsel %vm1442, %v3155, %v3156
  %v3158 = vrot.slane %v3104, 6
  %v3159 = vrot.slane %v3158, 4
  %v3160 = vrot.slane %v2622, 6
  %v3161 = vsel %vm1442, %v3159, %v3160
  %v3162 = vrot.slane %v3105, 6
  %v3163 = vrot.slane %v3162, 4
  %v3164 = vrot.slane %v2623, 6
  %v3165 = vsel %vm1442, %v3163, %v3164
  %v3166 = vrot.slane %v3106, 6
  %v3167 = vrot.slane %v3166, 4
  %v3168 = vrot.slane %v2624, 6
  %v3169 = vsel %vm1442, %v3167, %v3168
  %v3170 = vrot.slane %v3107, 6
  %v3171 = vrot.slane %v3170, 4
  %v3172 = vrot.slane %v2625, 6
  %v3173 = vsel %vm1442, %v3171, %v3172
  %v3174 = vrot.slane %v3108, 6
  %v3175 = vrot.slane %v3174, 4
  %v3176 = vrot.slane %v2626, 6
  %v3177 = vsel %vm1442, %v3175, %v3176
  %v3178 = vrot.slane %v3109, 6
  %v3179 = vrot.slane %v3178, 4
  %v3180 = vrot.slane %v2627, 6
  %v3181 = vsel %vm1442, %v3179, %v3180
  %v3182 = vrot.slane %v3110, 6
  %v3183 = vrot.slane %v3182, 4
  %v3184 = vrot.slane %v2628, 6
  %v3185 = vsel %vm1442, %v3183, %v3184
  %v3186 = vrot.slane %v3111, 6
  %v3187 = vrot.slane %v3186, 4
  %v3188 = vrot.slane %v2629, 6
  %v3189 = vsel %vm1442, %v3187, %v3188
  %v3190 = vrot.slane %v3112, 6
  %v3191 = vrot.slane %v3190, 4
  %v3192 = vrot.slane %v2630, 6
  %v3193 = vsel %vm1442, %v3191, %v3192
  %v3194 = vrot.slane %v3113, 6
  %v3195 = vrot.slane %v3194, 4
  %v3196 = vrot.slane %v2631, 6
  %v3197 = vsel %vm1442, %v3195, %v3196
  %v3198 = vrot.slane %v3114, 6
  %v3199 = vrot.slane %v3198, 4
  %v3200 = vrot.slane %v2632, 6
  %v3201 = vsel %vm1442, %v3199, %v3200
  %v3202 = vrot.slane %v3115, 6
  %v3203 = vrot.slane %v3202, 4
  %v3204 = vrot.slane %v2633, 6
  %v3205 = vsel %vm1442, %v3203, %v3204
  %v3206 = vrot.slane %v3116, 6
  %v3207 = vrot.slane %v3206, 4
  %v3208 = vrot.slane %v2634, 6
  %v3209 = vsel %vm1442, %v3207, %v3208
  %v3210 = vrot.slane %v3117, 6
  %v3211 = vrot.slane %v3210, 4
  %v3212 = vrot.slane %v2635, 6
  %v3213 = vsel %vm1442, %v3211, %v3212
  %s3214 = scalar_lea.vmem %s1, 144
  %v3215 = vld [vmem:[%s3214] sm:$0xf]
  %v3216 = vld [vmem:[%s3214 + $0x4] sm:$0xf]
  %v3217 = vld [vmem:[%s3214 + $0x8] sm:$0xf]
  %v3218 = vld [vmem:[%s3214 + $0xc] sm:$0xf]
  %v3219 = vunpack.c.l.b16 %v3153
  %v3220 = vunpack.c.l.b16 %v3157
  %v3221 = vunpack.c.l.b16 %v3161
  %v3222 = vunpack.c.l.b16 %v3165
  %v3223 = vunpack.c.l.b16 %v3169
  %v3224 = vunpack.c.l.b16 %v3173
  %v3225 = vunpack.c.l.b16 %v3177
  %v3226 = vunpack.c.l.b16 %v3181
  %v3227 = vunpack.c.l.b16 %v3185
  %v3228 = vunpack.c.l.b16 %v3189
  %v3229 = vunpack.c.l.b16 %v3193
  %v3230 = vunpack.c.l.b16 %v3197
  %v3231 = vunpack.c.l.b16 %v3201
  %v3232 = vunpack.c.l.b16 %v3205
  %v3233 = vunpack.c.l.b16 %v3209
  %v3234 = vunpack.c.l.b16 %v3213
  %v3235 = vpack.c.b16 %v3220, %v3219
  %v3236 = vpack.c.b16 %v3222, %v3221
  %v3237 = vpack.c.b16 %v3224, %v3223
  %v3238 = vpack.c.b16 %v3226, %v3225
  %v3239 = vpack.c.b16 %v3228, %v3227
  %v3240 = vpack.c.b16 %v3230, %v3229
  %v3241 = vpack.c.b16 %v3232, %v3231
  %v3242 = vpack.c.b16 %v3234, %v3233
  %v3247 = vunpack.c.l.b16 %v3215
  %v3248 = vunpack.c.l.b16 %v3216
  %v3249 = vunpack.c.l.b16 %v3217
  %v3250 = vunpack.c.l.b16 %v3218
  %v3251 = vpack.c.b16 %v3248, %v3247
  %v3252 = vpack.c.b16 %v3250, %v3249
  %v3256 = vsel %vm319, %v3235, 0
  %v3259 = vsel %vm319, %v3236, 0
  %v3262 = vsel %vm319, %v3237, 0
  %v3265 = vsel %vm319, %v3238, 0
  %v3268 = vsel %vm319, %v3239, 0
  %v3271 = vsel %vm319, %v3240, 0
  %v3274 = vsel %vm319, %v3241, 0
  %v3277 = vsel %vm319, %v3242, 0
  %3279 = vmatprep.subr.bf16.mxu0 0
  %3280 = vmatpush1.bf16.msra.mxu0 %v3251
  %3281 = vmatprep.subr.bf16.mxu0 0
  %3282 = vmatpush1.bf16.msra.mxu0 %v3252
  %3283 = vmatprep.subr.bf16.mxu0 0
  %3284 = vmatpush1.bf16.msra.mxu0 0
  %3285 = vmatprep.subr.bf16.mxu0 0
  %3286 = vmatpush1.bf16.msra.mxu0 0
  %3287 = vmatprep.subr.bf16.mxu0 0
  %3288 = vmatpush1.bf16.msra.mxu0 0
  %3289 = vmatprep.subr.bf16.mxu0 0
  %3290 = vmatpush1.bf16.msra.mxu0 0
  %3291 = vmatprep.subr.bf16.mxu0 0
  %3292 = vmatpush1.bf16.msra.mxu0 0
  %3293 = vmatprep.subr.bf16.mxu0 0
  %3294 = vmatpush1.bf16.msra.mxu0 0
  %3295 = vmatprep.subr.bf16.mxu0 0
  %3296 = vmatpush1.bf16.msra.mxu0 0
  %3297 = vmatprep.subr.bf16.mxu0 0
  %3298 = vmatpush1.bf16.msra.mxu0 0
  %3299 = vmatprep.subr.bf16.mxu0 0
  %3300 = vmatpush1.bf16.msra.mxu0 0
  %3301 = vmatprep.subr.bf16.mxu0 0
  %3302 = vmatpush1.bf16.msra.mxu0 0
  %3303 = vmatprep.subr.bf16.mxu0 0
  %3304 = vmatpush1.bf16.msra.mxu0 0
  %3305 = vmatprep.subr.bf16.mxu0 0
  %3306 = vmatpush1.bf16.msra.mxu0 0
  %3307 = vmatprep.subr.bf16.mxu0 0
  %3308 = vmatpush1.bf16.msra.mxu0 0
  %3309 = vmatprep.subr.bf16.mxu0 0
  %3310 = vmatpush1.bf16.msra.mxu0 0
  %3311 = vmatprep.mubr.bf16.mxu0 0
  %3312 = vmatmul.mubr.bf16.gmra.mrb[0].mxu0 %v3256
  %v3313 = vpop.f32.mrb[0].mxu0
  %v3314 = vadd.f32 0.0, %v3313
  %v3315 = vpop.f32.mrb[0].mxu0
  %v3316 = vpop.f32.mrb[0].mxu0
  %v3317 = vadd.f32 0.0, %v3316
  %v3318 = vpop.f32.mrb[0].mxu0
  %3319 = vmatprep.mubr.bf16.mxu0 0
  %3320 = vmatmul.mubr.bf16.gmra.mrb[0].mxu0 %v3259
  %v3321 = vpop.f32.mrb[0].mxu0
  %v3322 = vadd.f32 0.0, %v3321
  %v3323 = vpop.f32.mrb[0].mxu0
  %v3324 = vpop.f32.mrb[0].mxu0
  %v3325 = vadd.f32 0.0, %v3324
  %v3326 = vpop.f32.mrb[0].mxu0
  %3327 = vmatprep.mubr.bf16.mxu0 0
  %3328 = vmatmul.mubr.bf16.gmra.mrb[0].mxu0 %v3262
  %v3329 = vpop.f32.mrb[0].mxu0
  %v3330 = vadd.f32 0.0, %v3329
  %v3331 = vpop.f32.mrb[0].mxu0
  %v3332 = vpop.f32.mrb[0].mxu0
  %v3333 = vadd.f32 0.0, %v3332
  %v3334 = vpop.f32.mrb[0].mxu0
  %3335 = vmatprep.mubr.bf16.mxu0 0
  %3336 = vmatmul.mubr.bf16.gmra.mrb[0].mxu0 %v3265
  %v3337 = vpop.f32.mrb[0].mxu0
  %v3338 = vadd.f32 0.0, %v3337
  %v3339 = vpop.f32.mrb[0].mxu0
  %v3340 = vpop.f32.mrb[0].mxu0
  %v3341 = vadd.f32 0.0, %v3340
  %v3342 = vpop.f32.mrb[0].mxu0
  %3343 = vmatprep.mubr.bf16.mxu0 0
  %3344 = vmatmul.mubr.bf16.gmra.mrb[0].mxu0 %v3268
  %v3345 = vpop.f32.mrb[0].mxu0
  %v3346 = vadd.f32 0.0, %v3345
  %v3347 = vpop.f32.mrb[0].mxu0
  %v3348 = vpop.f32.mrb[0].mxu0
  %v3349 = vadd.f32 0.0, %v3348
  %v3350 = vpop.f32.mrb[0].mxu0
  %3351 = vmatprep.mubr.bf16.mxu0 0
  %3352 = vmatmul.mubr.bf16.gmra.mrb[0].mxu0 %v3271
  %v3353 = vpop.f32.mrb[0].mxu0
  %v3354 = vadd.f32 0.0, %v3353
  %v3355 = vpop.f32.mrb[0].mxu0
  %v3356 = vpop.f32.mrb[0].mxu0
  %v3357 = vadd.f32 0.0, %v3356
  %v3358 = vpop.f32.mrb[0].mxu0
  %3359 = vmatprep.mubr.bf16.mxu0 0
  %3360 = vmatmul.mubr.bf16.gmra.mrb[0].mxu0 %v3274
  %v3361 = vpop.f32.mrb[0].mxu0
  %v3362 = vadd.f32 0.0, %v3361
  %v3363 = vpop.f32.mrb[0].mxu0
  %v3364 = vpop.f32.mrb[0].mxu0
  %v3365 = vadd.f32 0.0, %v3364
  %v3366 = vpop.f32.mrb[0].mxu0
  %3367 = vmatprep.mubr.bf16.mxu0 0
  %3368 = vmatmul.mubr.bf16.gmra.mrb[0].mxu0 %v3277
  %v3369 = vpop.f32.mrb[0].mxu0
  %v3370 = vadd.f32 0.0, %v3369
  %v3371 = vpop.f32.mrb[0].mxu0
  %v3372 = vpop.f32.mrb[0].mxu0
  %v3373 = vadd.f32 0.0, %v3372
  %v3374 = vpop.f32.mrb[0].mxu0
  %3375 = vdwg.mxu0
  %v3376 = vadd.f32 %v3086, %v3314
  %v3377 = vadd.f32 %v3087, %v3317
  %v3378 = vadd.f32 %v3088, %v3322
  %v3379 = vadd.f32 %v3089, %v3325
  %v3380 = vadd.f32 %v3090, %v3330
  %v3381 = vadd.f32 %v3091, %v3333
  %v3382 = vadd.f32 %v3092, %v3338
  %v3383 = vadd.f32 %v3093, %v3341
  %v3384 = vadd.f32 %v3094, %v3346
  %v3385 = vadd.f32 %v3095, %v3349
  %v3386 = vadd.f32 %v3096, %v3354
  %v3387 = vadd.f32 %v3097, %v3357
  %v3388 = vadd.f32 %v3098, %v3362
  %v3389 = vadd.f32 %v3099, %v3365
  %v3390 = vadd.f32 %v3100, %v3370
  %v3391 = vadd.f32 %v3101, %v3373
  %s3392 = scalar_lea.vmem %s0, 16
  %v3393 = vld [vmem:[%s3392] sm:$0xf]
  %v3394 = vld [vmem:[%s3392 + $0x8] sm:$0xf]
  %v3395 = vld [vmem:[%s3392 + $0x10] sm:$0xf]
  %v3396 = vld [vmem:[%s3392 + $0x18] sm:$0xf]
  %v3397 = vld [vmem:[%s3392 + $0x20] sm:$0xf]
  %v3398 = vld [vmem:[%s3392 + $0x28] sm:$0xf]
  %v3399 = vld [vmem:[%s3392 + $0x30] sm:$0xf]
  %v3400 = vld [vmem:[%s3392 + $0x38] sm:$0xf]
  %v3401 = vld [vmem:[%s3392 + $0x60] sm:$0xf]
  %v3402 = vld [vmem:[%s3392 + $0x68] sm:$0xf]
  %v3403 = vld [vmem:[%s3392 + $0x70] sm:$0xf]
  %v3404 = vld [vmem:[%s3392 + $0x78] sm:$0xf]
  %v3405 = vld [vmem:[%s3392 + $0x80] sm:$0xf]
  %v3406 = vld [vmem:[%s3392 + $0x88] sm:$0xf]
  %v3407 = vld [vmem:[%s3392 + $0x90] sm:$0xf]
  %v3408 = vld [vmem:[%s3392 + $0x98] sm:$0xf]
  %s3409 = scalar_lea.vmem %s1, 160
  %v3410 = vld [vmem:[%s3409] sm:$0xf]
  %v3411 = vld [vmem:[%s3409 + $0x4] sm:$0xf]
  %v3412 = vld [vmem:[%s3409 + $0x8] sm:$0xf]
  %v3413 = vld [vmem:[%s3409 + $0xc] sm:$0xf]
  %v3430 = vunpack.c.l.b16 %v3393
  %v3431 = vunpack.c.l.b16 %v3394
  %v3432 = vunpack.c.l.b16 %v3395
  %v3433 = vunpack.c.l.b16 %v3396
  %v3434 = vunpack.c.l.b16 %v3397
  %v3435 = vunpack.c.l.b16 %v3398
  %v3436 = vunpack.c.l.b16 %v3399
  %v3437 = vunpack.c.l.b16 %v3400
  %v3438 = vunpack.c.l.b16 %v3401
  %v3439 = vunpack.c.l.b16 %v3402
  %v3440 = vunpack.c.l.b16 %v3403
  %v3441 = vunpack.c.l.b16 %v3404
  %v3442 = vunpack.c.l.b16 %v3405
  %v3443 = vunpack.c.l.b16 %v3406
  %v3444 = vunpack.c.l.b16 %v3407
  %v3445 = vunpack.c.l.b16 %v3408
  %v3446 = vpack.c.b16 %v3431, %v3430
  %v3447 = vpack.c.b16 %v3433, %v3432
  %v3448 = vpack.c.b16 %v3435, %v3434
  %v3449 = vpack.c.b16 %v3437, %v3436
  %v3450 = vpack.c.b16 %v3439, %v3438
  %v3451 = vpack.c.b16 %v3441, %v3440
  %v3452 = vpack.c.b16 %v3443, %v3442
  %v3453 = vpack.c.b16 %v3445, %v3444
  %v3458 = vunpack.c.l.b16 %v3410
  %v3459 = vunpack.c.l.b16 %v3411
  %v3460 = vunpack.c.l.b16 %v3412
  %v3461 = vunpack.c.l.b16 %v3413
  %v3462 = vpack.c.b16 %v3459, %v3458
  %v3463 = vpack.c.b16 %v3461, %v3460
  %v3467 = vsel %vm319, %v3446, 0
  %v3470 = vsel %vm319, %v3447, 0
  %v3473 = vsel %vm319, %v3448, 0
  %v3476 = vsel %vm319, %v3449, 0
  %v3479 = vsel %vm319, %v3450, 0
  %v3482 = vsel %vm319, %v3451, 0
  %v3485 = vsel %vm319, %v3452, 0
  %v3488 = vsel %vm319, %v3453, 0
  %3490 = vmatprep.subr.bf16.mxu0 0
  %3491 = vmatpush1.bf16.msra.mxu0 %v3462
  %3492 = vmatprep.subr.bf16.mxu0 0
  %3493 = vmatpush1.bf16.msra.mxu0 %v3463
  %3494 = vmatprep.subr.bf16.mxu0 0
  %3495 = vmatpush1.bf16.msra.mxu0 0
  %3496 = vmatprep.subr.bf16.mxu0 0
  %3497 = vmatpush1.bf16.msra.mxu0 0
  %3498 = vmatprep.subr.bf16.mxu0 0
  %3499 = vmatpush1.bf16.msra.mxu0 0
  %3500 = vmatprep.subr.bf16.mxu0 0
  %3501 = vmatpush1.bf16.msra.mxu0 0
  %3502 = vmatprep.subr.bf16.mxu0 0
  %3503 = vmatpush1.bf16.msra.mxu0 0
  %3504 = vmatprep.subr.bf16.mxu0 0
  %3505 = vmatpush1.bf16.msra.mxu0 0
  %3506 = vmatprep.subr.bf16.mxu0 0
  %3507 = vmatpush1.bf16.msra.mxu0 0
  %3508 = vmatprep.subr.bf16.mxu0 0
  %3509 = vmatpush1.bf16.msra.mxu0 0
  %3510 = vmatprep.subr.bf16.mxu0 0
  %3511 = vmatpush1.bf16.msra.mxu0 0
  %3512 = vmatprep.subr.bf16.mxu0 0
  %3513 = vmatpush1.bf16.msra.mxu0 0
  %3514 = vmatprep.subr.bf16.mxu0 0
  %3515 = vmatpush1.bf16.msra.mxu0 0
  %3516 = vmatprep.subr.bf16.mxu0 0
  %3517 = vmatpush1.bf16.msra.mxu0 0
  %3518 = vmatprep.subr.bf16.mxu0 0
  %3519 = vmatpush1.bf16.msra.mxu0 0
  %3520 = vmatprep.subr.bf16.mxu0 0
  %3521 = vmatpush1.bf16.msra.mxu0 0
  %3522 = vmatprep.mubr.bf16.mxu0 0
  %3523 = vmatmul.mubr.bf16.gmra.mrb[0].mxu0 %v3467
  %v3524 = vpop.f32.mrb[0].mxu0
  %v3525 = vadd.f32 0.0, %v3524
  %v3526 = vpop.f32.mrb[0].mxu0
  %v3527 = vpop.f32.mrb[0].mxu0
  %v3528 = vadd.f32 0.0, %v3527
  %v3529 = vpop.f32.mrb[0].mxu0
  %3530 = vmatprep.mubr.bf16.mxu0 0
  %3531 = vmatmul.mubr.bf16.gmra.mrb[0].mxu0 %v3470
  %v3532 = vpop.f32.mrb[0].mxu0
  %v3533 = vadd.f32 0.0, %v3532
  %v3534 = vpop.f32.mrb[0].mxu0
  %v3535 = vpop.f32.mrb[0].mxu0
  %v3536 = vadd.f32 0.0, %v3535
  %v3537 = vpop.f32.mrb[0].mxu0
  %3538 = vmatprep.mubr.bf16.mxu0 0
  %3539 = vmatmul.mubr.bf16.gmra.mrb[0].mxu0 %v3473
  %v3540 = vpop.f32.mrb[0].mxu0
  %v3541 = vadd.f32 0.0, %v3540
  %v3542 = vpop.f32.mrb[0].mxu0
  %v3543 = vpop.f32.mrb[0].mxu0
  %v3544 = vadd.f32 0.0, %v3543
  %v3545 = vpop.f32.mrb[0].mxu0
  %3546 = vmatprep.mubr.bf16.mxu0 0
  %3547 = vmatmul.mubr.bf16.gmra.mrb[0].mxu0 %v3476
  %v3548 = vpop.f32.mrb[0].mxu0
  %v3549 = vadd.f32 0.0, %v3548
  %v3550 = vpop.f32.mrb[0].mxu0
  %v3551 = vpop.f32.mrb[0].mxu0
  %v3552 = vadd.f32 0.0, %v3551
  %v3553 = vpop.f32.mrb[0].mxu0
  %3554 = vmatprep.mubr.bf16.mxu0 0
  %3555 = vmatmul.mubr.bf16.gmra.mrb[0].mxu0 %v3479
  %v3556 = vpop.f32.mrb[0].mxu0
  %v3557 = vadd.f32 0.0, %v3556
  %v3558 = vpop.f32.mrb[0].mxu0
  %v3559 = vpop.f32.mrb[0].mxu0
  %v3560 = vadd.f32 0.0, %v3559
  %v3561 = vpop.f32.mrb[0].mxu0
  %3562 = vmatprep.mubr.bf16.mxu0 0
  %3563 = vmatmul.mubr.bf16.gmra.mrb[0].mxu0 %v3482
  %v3564 = vpop.f32.mrb[0].mxu0
  %v3565 = vadd.f32 0.0, %v3564
  %v3566 = vpop.f32.mrb[0].mxu0
  %v3567 = vpop.f32.mrb[0].mxu0
  %v3568 = vadd.f32 0.0, %v3567
  %v3569 = vpop.f32.mrb[0].mxu0
  %3570 = vmatprep.mubr.bf16.mxu0 0
  %3571 = vmatmul.mubr.bf16.gmra.mrb[0].mxu0 %v3485
  %v3572 = vpop.f32.mrb[0].mxu0
  %v3573 = vadd.f32 0.0, %v3572
  %v3574 = vpop.f32.mrb[0].mxu0
  %v3575 = vpop.f32.mrb[0].mxu0
  %v3576 = vadd.f32 0.0, %v3575
  %v3577 = vpop.f32.mrb[0].mxu0
  %3578 = vmatprep.mubr.bf16.mxu0 0
  %3579 = vmatmul.mubr.bf16.gmra.mrb[0].mxu0 %v3488
  %v3580 = vpop.f32.mrb[0].mxu0
  %v3581 = vadd.f32 0.0, %v3580
  %v3582 = vpop.f32.mrb[0].mxu0
  %v3583 = vpop.f32.mrb[0].mxu0
  %v3584 = vadd.f32 0.0, %v3583
  %v3585 = vpop.f32.mrb[0].mxu0
  %3586 = vdwg.mxu0
  %v3587 = vadd.f32 %v3376, %v3525
  %v3588 = vadd.f32 %v3377, %v3528
  %v3589 = vadd.f32 %v3378, %v3533
  %v3590 = vadd.f32 %v3379, %v3536
  %v3591 = vadd.f32 %v3380, %v3541
  %v3592 = vadd.f32 %v3381, %v3544
  %v3593 = vadd.f32 %v3382, %v3549
  %v3594 = vadd.f32 %v3383, %v3552
  %v3595 = vadd.f32 %v3384, %v3557
  %v3596 = vadd.f32 %v3385, %v3560
  %v3597 = vadd.f32 %v3386, %v3565
  %v3598 = vadd.f32 %v3387, %v3568
  %v3599 = vadd.f32 %v3388, %v3573
  %v3600 = vadd.f32 %v3389, %v3576
  %v3601 = vadd.f32 %v3390, %v3581
  %v3602 = vadd.f32 %v3391, %v3584
  %v3603 = vld [vmem:[%s3392] sm:$0xf]
  %v3604 = vld [vmem:[%s3392 + $0x4] sm:$0x1]
  %v3605 = vld [vmem:[%s3392 + $0x8] sm:$0xf]
  %v3606 = vld [vmem:[%s3392 + $0xc] sm:$0x1]
  %v3607 = vld [vmem:[%s3392 + $0x10] sm:$0xf]
  %v3608 = vld [vmem:[%s3392 + $0x14] sm:$0x1]
  %v3609 = vld [vmem:[%s3392 + $0x18] sm:$0xf]
  %v3610 = vld [vmem:[%s3392 + $0x1c] sm:$0x1]
  %v3611 = vld [vmem:[%s3392 + $0x20] sm:$0xf]
  %v3612 = vld [vmem:[%s3392 + $0x24] sm:$0x1]
  %v3613 = vld [vmem:[%s3392 + $0x28] sm:$0xf]
  %v3614 = vld [vmem:[%s3392 + $0x2c] sm:$0x1]
  %v3615 = vld [vmem:[%s3392 + $0x30] sm:$0xf]
  %v3616 = vld [vmem:[%s3392 + $0x34] sm:$0x1]
  %v3617 = vld [vmem:[%s3392 + $0x38] sm:$0xf]
  %v3618 = vld [vmem:[%s3392 + $0x3c] sm:$0x1]
  %v3619 = vld [vmem:[%s3392 + $0x60] sm:$0xf]
  %v3620 = vld [vmem:[%s3392 + $0x64] sm:$0x1]
  %v3621 = vld [vmem:[%s3392 + $0x68] sm:$0xf]
  %v3622 = vld [vmem:[%s3392 + $0x6c] sm:$0x1]
  %v3623 = vld [vmem:[%s3392 + $0x70] sm:$0xf]
  %v3624 = vld [vmem:[%s3392 + $0x74] sm:$0x1]
  %v3625 = vld [vmem:[%s3392 + $0x78] sm:$0xf]
  %v3626 = vld [vmem:[%s3392 + $0x7c] sm:$0x1]
  %v3627 = vld [vmem:[%s3392 + $0x80] sm:$0xf]
  %v3628 = vld [vmem:[%s3392 + $0x84] sm:$0x1]
  %v3629 = vld [vmem:[%s3392 + $0x88] sm:$0xf]
  %v3630 = vld [vmem:[%s3392 + $0x8c] sm:$0x1]
  %v3631 = vld [vmem:[%s3392 + $0x90] sm:$0xf]
  %v3632 = vld [vmem:[%s3392 + $0x94] sm:$0x1]
  %v3633 = vld [vmem:[%s3392 + $0x98] sm:$0xf]
  %v3634 = vld [vmem:[%s3392 + $0x9c] sm:$0x1]
  %v3636 = vshrl.u32 %v3603, 16
  %v3638 = vrot.slane %v3636, 4
  %v3639 = vshll.u32 %v3603, 16
  %v3641 = vrot.slane %v3639, 5
  %v3642 = vor.u32 %v3638, %v3641
  %v3643 = vrot.slane %v3642, 4
  %v3645 = vshll.u32 %v3604, 16
  %v3647 = vrot.slane %v3645, 5
  %v3648 = vsel %vm53, %v3643, %v3647
  %v3650 = vshrl.u32 %v3605, 16
  %v3652 = vrot.slane %v3650, 4
  %v3653 = vshll.u32 %v3605, 16
  %v3655 = vrot.slane %v3653, 5
  %v3656 = vor.u32 %v3652, %v3655
  %v3657 = vrot.slane %v3656, 4
  %v3659 = vshll.u32 %v3606, 16
  %v3661 = vrot.slane %v3659, 5
  %v3662 = vsel %vm53, %v3657, %v3661
  %v3664 = vshrl.u32 %v3607, 16
  %v3666 = vrot.slane %v3664, 4
  %v3667 = vshll.u32 %v3607, 16
  %v3669 = vrot.slane %v3667, 5
  %v3670 = vor.u32 %v3666, %v3669
  %v3671 = vrot.slane %v3670, 4
  %v3673 = vshll.u32 %v3608, 16
  %v3675 = vrot.slane %v3673, 5
  %v3676 = vsel %vm53, %v3671, %v3675
  %v3678 = vshrl.u32 %v3609, 16
  %v3680 = vrot.slane %v3678, 4
  %v3681 = vshll.u32 %v3609, 16
  %v3683 = vrot.slane %v3681, 5
  %v3684 = vor.u32 %v3680, %v3683
  %v3685 = vrot.slane %v3684, 4
  %v3687 = vshll.u32 %v3610, 16
  %v3689 = vrot.slane %v3687, 5
  %v3690 = vsel %vm53, %v3685, %v3689
  %v3692 = vshrl.u32 %v3611, 16
  %v3694 = vrot.slane %v3692, 4
  %v3695 = vshll.u32 %v3611, 16
  %v3697 = vrot.slane %v3695, 5
  %v3698 = vor.u32 %v3694, %v3697
  %v3699 = vrot.slane %v3698, 4
  %v3701 = vshll.u32 %v3612, 16
  %v3703 = vrot.slane %v3701, 5
  %v3704 = vsel %vm53, %v3699, %v3703
  %v3706 = vshrl.u32 %v3613, 16
  %v3708 = vrot.slane %v3706, 4
  %v3709 = vshll.u32 %v3613, 16
  %v3711 = vrot.slane %v3709, 5
  %v3712 = vor.u32 %v3708, %v3711
  %v3713 = vrot.slane %v3712, 4
  %v3715 = vshll.u32 %v3614, 16
  %v3717 = vrot.slane %v3715, 5
  %v3718 = vsel %vm53, %v3713, %v3717
  %v3720 = vshrl.u32 %v3615, 16
  %v3722 = vrot.slane %v3720, 4
  %v3723 = vshll.u32 %v3615, 16
  %v3725 = vrot.slane %v3723, 5
  %v3726 = vor.u32 %v3722, %v3725
  %v3727 = vrot.slane %v3726, 4
  %v3729 = vshll.u32 %v3616, 16
  %v3731 = vrot.slane %v3729, 5
  %v3732 = vsel %vm53, %v3727, %v3731
  %v3734 = vshrl.u32 %v3617, 16
  %v3736 = vrot.slane %v3734, 4
  %v3737 = vshll.u32 %v3617, 16
  %v3739 = vrot.slane %v3737, 5
  %v3740 = vor.u32 %v3736, %v3739
  %v3741 = vrot.slane %v3740, 4
  %v3743 = vshll.u32 %v3618, 16
  %v3745 = vrot.slane %v3743, 5
  %v3746 = vsel %vm53, %v3741, %v3745
  %v3748 = vshrl.u32 %v3619, 16
  %v3750 = vrot.slane %v3748, 4
  %v3751 = vshll.u32 %v3619, 16
  %v3753 = vrot.slane %v3751, 5
  %v3754 = vor.u32 %v3750, %v3753
  %v3755 = vrot.slane %v3754, 4
  %v3757 = vshll.u32 %v3620, 16
  %v3759 = vrot.slane %v3757, 5
  %v3760 = vsel %vm53, %v3755, %v3759
  %v3762 = vshrl.u32 %v3621, 16
  %v3764 = vrot.slane %v3762, 4
  %v3765 = vshll.u32 %v3621, 16
  %v3767 = vrot.slane %v3765, 5
  %v3768 = vor.u32 %v3764, %v3767
  %v3769 = vrot.slane %v3768, 4
  %v3771 = vshll.u32 %v3622, 16
  %v3773 = vrot.slane %v3771, 5
  %v3774 = vsel %vm53, %v3769, %v3773
  %v3776 = vshrl.u32 %v3623, 16
  %v3778 = vrot.slane %v3776, 4
  %v3779 = vshll.u32 %v3623, 16
  %v3781 = vrot.slane %v3779, 5
  %v3782 = vor.u32 %v3778, %v3781
  %v3783 = vrot.slane %v3782, 4
  %v3785 = vshll.u32 %v3624, 16
  %v3787 = vrot.slane %v3785, 5
  %v3788 = vsel %vm53, %v3783, %v3787
  %v3790 = vshrl.u32 %v3625, 16
  %v3792 = vrot.slane %v3790, 4
  %v3793 = vshll.u32 %v3625, 16
  %v3795 = vrot.slane %v3793, 5
  %v3796 = vor.u32 %v3792, %v3795
  %v3797 = vrot.slane %v3796, 4
  %v3799 = vshll.u32 %v3626, 16
  %v3801 = vrot.slane %v3799, 5
  %v3802 = vsel %vm53, %v3797, %v3801
  %v3804 = vshrl.u32 %v3627, 16
  %v3806 = vrot.slane %v3804, 4
  %v3807 = vshll.u32 %v3627, 16
  %v3809 = vrot.slane %v3807, 5
  %v3810 = vor.u32 %v3806, %v3809
  %v3811 = vrot.slane %v3810, 4
  %v3813 = vshll.u32 %v3628, 16
  %v3815 = vrot.slane %v3813, 5
  %v3816 = vsel %vm53, %v3811, %v3815
  %v3818 = vshrl.u32 %v3629, 16
  %v3820 = vrot.slane %v3818, 4
  %v3821 = vshll.u32 %v3629, 16
  %v3823 = vrot.slane %v3821, 5
  %v3824 = vor.u32 %v3820, %v3823
  %v3825 = vrot.slane %v3824, 4
  %v3827 = vshll.u32 %v3630, 16
  %v3829 = vrot.slane %v3827, 5
  %v3830 = vsel %vm53, %v3825, %v3829
  %v3832 = vshrl.u32 %v3631, 16
  %v3834 = vrot.slane %v3832, 4
  %v3835 = vshll.u32 %v3631, 16
  %v3837 = vrot.slane %v3835, 5
  %v3838 = vor.u32 %v3834, %v3837
  %v3839 = vrot.slane %v3838, 4
  %v3841 = vshll.u32 %v3632, 16
  %v3843 = vrot.slane %v3841, 5
  %v3844 = vsel %vm53, %v3839, %v3843
  %v3846 = vshrl.u32 %v3633, 16
  %v3848 = vrot.slane %v3846, 4
  %v3849 = vshll.u32 %v3633, 16
  %v3851 = vrot.slane %v3849, 5
  %v3852 = vor.u32 %v3848, %v3851
  %v3853 = vrot.slane %v3852, 4
  %v3855 = vshll.u32 %v3634, 16
  %v3857 = vrot.slane %v3855, 5
  %v3858 = vsel %vm53, %v3853, %v3857
  %s3859 = scalar_lea.vmem %s1, 176
  %v3860 = vld [vmem:[%s3859] sm:$0xf]
  %v3861 = vld [vmem:[%s3859 + $0x4] sm:$0xf]
  %v3862 = vld [vmem:[%s3859 + $0x8] sm:$0xf]
  %v3863 = vld [vmem:[%s3859 + $0xc] sm:$0xf]
  %v3864 = vunpack.c.l.b16 %v3648
  %v3865 = vunpack.c.l.b16 %v3662
  %v3866 = vunpack.c.l.b16 %v3676
  %v3867 = vunpack.c.l.b16 %v3690
  %v3868 = vunpack.c.l.b16 %v3704
  %v3869 = vunpack.c.l.b16 %v3718
  %v3870 = vunpack.c.l.b16 %v3732
  %v3871 = vunpack.c.l.b16 %v3746
  %v3872 = vunpack.c.l.b16 %v3760
  %v3873 = vunpack.c.l.b16 %v3774
  %v3874 = vunpack.c.l.b16 %v3788
  %v3875 = vunpack.c.l.b16 %v3802
  %v3876 = vunpack.c.l.b16 %v3816
  %v3877 = vunpack.c.l.b16 %v3830
  %v3878 = vunpack.c.l.b16 %v3844
  %v3879 = vunpack.c.l.b16 %v3858
  %v3880 = vpack.c.b16 %v3865, %v3864
  %v3881 = vpack.c.b16 %v3867, %v3866
  %v3882 = vpack.c.b16 %v3869, %v3868
  %v3883 = vpack.c.b16 %v3871, %v3870
  %v3884 = vpack.c.b16 %v3873, %v3872
  %v3885 = vpack.c.b16 %v3875, %v3874
  %v3886 = vpack.c.b16 %v3877, %v3876
  %v3887 = vpack.c.b16 %v3879, %v3878
  %v3892 = vunpack.c.l.b16 %v3860
  %v3893 = vunpack.c.l.b16 %v3861
  %v3894 = vunpack.c.l.b16 %v3862
  %v3895 = vunpack.c.l.b16 %v3863
  %v3896 = vpack.c.b16 %v3893, %v3892
  %v3897 = vpack.c.b16 %v3895, %v3894
  %v3901 = vsel %vm319, %v3880, 0
  %v3904 = vsel %vm319, %v3881, 0
  %v3907 = vsel %vm319, %v3882, 0
  %v3910 = vsel %vm319, %v3883, 0
  %v3913 = vsel %vm319, %v3884, 0
  %v3916 = vsel %vm319, %v3885, 0
  %v3919 = vsel %vm319, %v3886, 0
  %v3922 = vsel %vm319, %v3887, 0
  %3924 = vmatprep.subr.bf16.mxu0 0
  %3925 = vmatpush1.bf16.msra.mxu0 %v3896
  %3926 = vmatprep.subr.bf16.mxu0 0
  %3927 = vmatpush1.bf16.msra.mxu0 %v3897
  %3928 = vmatprep.subr.bf16.mxu0 0
  %3929 = vmatpush1.bf16.msra.mxu0 0
  %3930 = vmatprep.subr.bf16.mxu0 0
  %3931 = vmatpush1.bf16.msra.mxu0 0
  %3932 = vmatprep.subr.bf16.mxu0 0
  %3933 = vmatpush1.bf16.msra.mxu0 0
  %3934 = vmatprep.subr.bf16.mxu0 0
  %3935 = vmatpush1.bf16.msra.mxu0 0
  %3936 = vmatprep.subr.bf16.mxu0 0
  %3937 = vmatpush1.bf16.msra.mxu0 0
  %3938 = vmatprep.subr.bf16.mxu0 0
  %3939 = vmatpush1.bf16.msra.mxu0 0
  %3940 = vmatprep.subr.bf16.mxu0 0
  %3941 = vmatpush1.bf16.msra.mxu0 0
  %3942 = vmatprep.subr.bf16.mxu0 0
  %3943 = vmatpush1.bf16.msra.mxu0 0
  %3944 = vmatprep.subr.bf16.mxu0 0
  %3945 = vmatpush1.bf16.msra.mxu0 0
  %3946 = vmatprep.subr.bf16.mxu0 0
  %3947 = vmatpush1.bf16.msra.mxu0 0
  %3948 = vmatprep.subr.bf16.mxu0 0
  %3949 = vmatpush1.bf16.msra.mxu0 0
  %3950 = vmatprep.subr.bf16.mxu0 0
  %3951 = vmatpush1.bf16.msra.mxu0 0
  %3952 = vmatprep.subr.bf16.mxu0 0
  %3953 = vmatpush1.bf16.msra.mxu0 0
  %3954 = vmatprep.subr.bf16.mxu0 0
  %3955 = vmatpush1.bf16.msra.mxu0 0
  %3956 = vmatprep.mubr.bf16.mxu0 0
  %3957 = vmatmul.mubr.bf16.gmra.mrb[0].mxu0 %v3901
  %v3958 = vpop.f32.mrb[0].mxu0
  %v3959 = vadd.f32 0.0, %v3958
  %v3960 = vpop.f32.mrb[0].mxu0
  %v3961 = vpop.f32.mrb[0].mxu0
  %v3962 = vadd.f32 0.0, %v3961
  %v3963 = vpop.f32.mrb[0].mxu0
  %3964 = vmatprep.mubr.bf16.mxu0 0
  %3965 = vmatmul.mubr.bf16.gmra.mrb[0].mxu0 %v3904
  %v3966 = vpop.f32.mrb[0].mxu0
  %v3967 = vadd.f32 0.0, %v3966
  %v3968 = vpop.f32.mrb[0].mxu0
  %v3969 = vpop.f32.mrb[0].mxu0
  %v3970 = vadd.f32 0.0, %v3969
  %v3971 = vpop.f32.mrb[0].mxu0
  %3972 = vmatprep.mubr.bf16.mxu0 0
  %3973 = vmatmul.mubr.bf16.gmra.mrb[0].mxu0 %v3907
  %v3974 = vpop.f32.mrb[0].mxu0
  %v3975 = vadd.f32 0.0, %v3974
  %v3976 = vpop.f32.mrb[0].mxu0
  %v3977 = vpop.f32.mrb[0].mxu0
  %v3978 = vadd.f32 0.0, %v3977
  %v3979 = vpop.f32.mrb[0].mxu0
  %3980 = vmatprep.mubr.bf16.mxu0 0
  %3981 = vmatmul.mubr.bf16.gmra.mrb[0].mxu0 %v3910
  %v3982 = vpop.f32.mrb[0].mxu0
  %v3983 = vadd.f32 0.0, %v3982
  %v3984 = vpop.f32.mrb[0].mxu0
  %v3985 = vpop.f32.mrb[0].mxu0
  %v3986 = vadd.f32 0.0, %v3985
  %v3987 = vpop.f32.mrb[0].mxu0
  %3988 = vmatprep.mubr.bf16.mxu0 0
  %3989 = vmatmul.mubr.bf16.gmra.mrb[0].mxu0 %v3913
  %v3990 = vpop.f32.mrb[0].mxu0
  %v3991 = vadd.f32 0.0, %v3990
  %v3992 = vpop.f32.mrb[0].mxu0
  %v3993 = vpop.f32.mrb[0].mxu0
  %v3994 = vadd.f32 0.0, %v3993
  %v3995 = vpop.f32.mrb[0].mxu0
  %3996 = vmatprep.mubr.bf16.mxu0 0
  %3997 = vmatmul.mubr.bf16.gmra.mrb[0].mxu0 %v3916
  %v3998 = vpop.f32.mrb[0].mxu0
  %v3999 = vadd.f32 0.0, %v3998
  %v4000 = vpop.f32.mrb[0].mxu0
  %v4001 = vpop.f32.mrb[0].mxu0
  %v4002 = vadd.f32 0.0, %v4001
  %v4003 = vpop.f32.mrb[0].mxu0
  %4004 = vmatprep.mubr.bf16.mxu0 0
  %4005 = vmatmul.mubr.bf16.gmra.mrb[0].mxu0 %v3919
  %v4006 = vpop.f32.mrb[0].mxu0
  %v4007 = vadd.f32 0.0, %v4006
  %v4008 = vpop.f32.mrb[0].mxu0
  %v4009 = vpop.f32.mrb[0].mxu0
  %v4010 = vadd.f32 0.0, %v4009
  %v4011 = vpop.f32.mrb[0].mxu0
  %4012 = vmatprep.mubr.bf16.mxu0 0
  %4013 = vmatmul.mubr.bf16.gmra.mrb[0].mxu0 %v3922
  %v4014 = vpop.f32.mrb[0].mxu0
  %v4015 = vadd.f32 0.0, %v4014
  %v4016 = vpop.f32.mrb[0].mxu0
  %v4017 = vpop.f32.mrb[0].mxu0
  %v4018 = vadd.f32 0.0, %v4017
  %v4019 = vpop.f32.mrb[0].mxu0
  %4020 = vdwg.mxu0
  %v4021 = vadd.f32 %v3587, %v3959
  %v4022 = vadd.f32 %v3588, %v3962
  %v4023 = vadd.f32 %v3589, %v3967
  %v4024 = vadd.f32 %v3590, %v3970
  %v4025 = vadd.f32 %v3591, %v3975
  %v4026 = vadd.f32 %v3592, %v3978
  %v4027 = vadd.f32 %v3593, %v3983
  %v4028 = vadd.f32 %v3594, %v3986
  %v4029 = vadd.f32 %v3595, %v3991
  %v4030 = vadd.f32 %v3596, %v3994
  %v4031 = vadd.f32 %v3597, %v3999
  %v4032 = vadd.f32 %v3598, %v4002
  %v4033 = vadd.f32 %v3599, %v4007
  %v4034 = vadd.f32 %v3600, %v4010
  %v4035 = vadd.f32 %v3601, %v4015
  %v4036 = vadd.f32 %v3602, %v4018
  %v4037 = vld [vmem:[%s3392] sm:$0xe]
  %v4038 = vld [vmem:[%s3392 + $0x8] sm:$0xe]
  %v4039 = vld [vmem:[%s3392 + $0x10] sm:$0xe]
  %v4040 = vld [vmem:[%s3392 + $0x18] sm:$0xe]
  %v4041 = vld [vmem:[%s3392 + $0x20] sm:$0xe]
  %v4042 = vld [vmem:[%s3392 + $0x28] sm:$0xe]
  %v4043 = vld [vmem:[%s3392 + $0x30] sm:$0xe]
  %v4044 = vld [vmem:[%s3392 + $0x38] sm:$0xe]
  %v4045 = vld [vmem:[%s3392 + $0x60] sm:$0xe]
  %v4046 = vld [vmem:[%s3392 + $0x68] sm:$0xe]
  %v4047 = vld [vmem:[%s3392 + $0x70] sm:$0xe]
  %v4048 = vld [vmem:[%s3392 + $0x78] sm:$0xe]
  %v4049 = vld [vmem:[%s3392 + $0x80] sm:$0xe]
  %v4050 = vld [vmem:[%s3392 + $0x88] sm:$0xe]
  %v4051 = vld [vmem:[%s3392 + $0x90] sm:$0xe]
  %v4052 = vld [vmem:[%s3392 + $0x98] sm:$0xe]
  %v4085 = vrot.slane %v4037, 5
  %v4086 = vrot.slane %v4085, 4
  %v4087 = vrot.slane %v3604, 5
  %v4088 = vsel %vm664, %v4086, %v4087
  %v4089 = vrot.slane %v4038, 5
  %v4090 = vrot.slane %v4089, 4
  %v4091 = vrot.slane %v3606, 5
  %v4092 = vsel %vm664, %v4090, %v4091
  %v4093 = vrot.slane %v4039, 5
  %v4094 = vrot.slane %v4093, 4
  %v4095 = vrot.slane %v3608, 5
  %v4096 = vsel %vm664, %v4094, %v4095
  %v4097 = vrot.slane %v4040, 5
  %v4098 = vrot.slane %v4097, 4
  %v4099 = vrot.slane %v3610, 5
  %v4100 = vsel %vm664, %v4098, %v4099
  %v4101 = vrot.slane %v4041, 5
  %v4102 = vrot.slane %v4101, 4
  %v4103 = vrot.slane %v3612, 5
  %v4104 = vsel %vm664, %v4102, %v4103
  %v4105 = vrot.slane %v4042, 5
  %v4106 = vrot.slane %v4105, 4
  %v4107 = vrot.slane %v3614, 5
  %v4108 = vsel %vm664, %v4106, %v4107
  %v4109 = vrot.slane %v4043, 5
  %v4110 = vrot.slane %v4109, 4
  %v4111 = vrot.slane %v3616, 5
  %v4112 = vsel %vm664, %v4110, %v4111
  %v4113 = vrot.slane %v4044, 5
  %v4114 = vrot.slane %v4113, 4
  %v4115 = vrot.slane %v3618, 5
  %v4116 = vsel %vm664, %v4114, %v4115
  %v4117 = vrot.slane %v4045, 5
  %v4118 = vrot.slane %v4117, 4
  %v4119 = vrot.slane %v3620, 5
  %v4120 = vsel %vm664, %v4118, %v4119
  %v4121 = vrot.slane %v4046, 5
  %v4122 = vrot.slane %v4121, 4
  %v4123 = vrot.slane %v3622, 5
  %v4124 = vsel %vm664, %v4122, %v4123
  %v4125 = vrot.slane %v4047, 5
  %v4126 = vrot.slane %v4125, 4
  %v4127 = vrot.slane %v3624, 5
  %v4128 = vsel %vm664, %v4126, %v4127
  %v4129 = vrot.slane %v4048, 5
  %v4130 = vrot.slane %v4129, 4
  %v4131 = vrot.slane %v3626, 5
  %v4132 = vsel %vm664, %v4130, %v4131
  %v4133 = vrot.slane %v4049, 5
  %v4134 = vrot.slane %v4133, 4
  %v4135 = vrot.slane %v3628, 5
  %v4136 = vsel %vm664, %v4134, %v4135
  %v4137 = vrot.slane %v4050, 5
  %v4138 = vrot.slane %v4137, 4
  %v4139 = vrot.slane %v3630, 5
  %v4140 = vsel %vm664, %v4138, %v4139
  %v4141 = vrot.slane %v4051, 5
  %v4142 = vrot.slane %v4141, 4
  %v4143 = vrot.slane %v3632, 5
  %v4144 = vsel %vm664, %v4142, %v4143
  %v4145 = vrot.slane %v4052, 5
  %v4146 = vrot.slane %v4145, 4
  %v4147 = vrot.slane %v3634, 5
  %v4148 = vsel %vm664, %v4146, %v4147
  %s4149 = scalar_lea.vmem %s1, 192
  %v4150 = vld [vmem:[%s4149] sm:$0xf]
  %v4151 = vld [vmem:[%s4149 + $0x4] sm:$0xf]
  %v4152 = vld [vmem:[%s4149 + $0x8] sm:$0xf]
  %v4153 = vld [vmem:[%s4149 + $0xc] sm:$0xf]
  %v4154 = vunpack.c.l.b16 %v4088
  %v4155 = vunpack.c.l.b16 %v4092
  %v4156 = vunpack.c.l.b16 %v4096
  %v4157 = vunpack.c.l.b16 %v4100
  %v4158 = vunpack.c.l.b16 %v4104
  %v4159 = vunpack.c.l.b16 %v4108
  %v4160 = vunpack.c.l.b16 %v4112
  %v4161 = vunpack.c.l.b16 %v4116
  %v4162 = vunpack.c.l.b16 %v4120
  %v4163 = vunpack.c.l.b16 %v4124
  %v4164 = vunpack.c.l.b16 %v4128
  %v4165 = vunpack.c.l.b16 %v4132
  %v4166 = vunpack.c.l.b16 %v4136
  %v4167 = vunpack.c.l.b16 %v4140
  %v4168 = vunpack.c.l.b16 %v4144
  %v4169 = vunpack.c.l.b16 %v4148
  %v4170 = vpack.c.b16 %v4155, %v4154
  %v4171 = vpack.c.b16 %v4157, %v4156
  %v4172 = vpack.c.b16 %v4159, %v4158
  %v4173 = vpack.c.b16 %v4161, %v4160
  %v4174 = vpack.c.b16 %v4163, %v4162
  %v4175 = vpack.c.b16 %v4165, %v4164
  %v4176 = vpack.c.b16 %v4167, %v4166
  %v4177 = vpack.c.b16 %v4169, %v4168
  %v4182 = vunpack.c.l.b16 %v4150
  %v4183 = vunpack.c.l.b16 %v4151
  %v4184 = vunpack.c.l.b16 %v4152
  %v4185 = vunpack.c.l.b16 %v4153
  %v4186 = vpack.c.b16 %v4183, %v4182
  %v4187 = vpack.c.b16 %v4185, %v4184
  %v4191 = vsel %vm319, %v4170, 0
  %v4194 = vsel %vm319, %v4171, 0
  %v4197 = vsel %vm319, %v4172, 0
  %v4200 = vsel %vm319, %v4173, 0
  %v4203 = vsel %vm319, %v4174, 0
  %v4206 = vsel %vm319, %v4175, 0
  %v4209 = vsel %vm319, %v4176, 0
  %v4212 = vsel %vm319, %v4177, 0
  %4214 = vmatprep.subr.bf16.mxu0 0
  %4215 = vmatpush1.bf16.msra.mxu0 %v4186
  %4216 = vmatprep.subr.bf16.mxu0 0
  %4217 = vmatpush1.bf16.msra.mxu0 %v4187
  %4218 = vmatprep.subr.bf16.mxu0 0
  %4219 = vmatpush1.bf16.msra.mxu0 0
  %4220 = vmatprep.subr.bf16.mxu0 0
  %4221 = vmatpush1.bf16.msra.mxu0 0
  %4222 = vmatprep.subr.bf16.mxu0 0
  %4223 = vmatpush1.bf16.msra.mxu0 0
  %4224 = vmatprep.subr.bf16.mxu0 0
  %4225 = vmatpush1.bf16.msra.mxu0 0
  %4226 = vmatprep.subr.bf16.mxu0 0
  %4227 = vmatpush1.bf16.msra.mxu0 0
  %4228 = vmatprep.subr.bf16.mxu0 0
  %4229 = vmatpush1.bf16.msra.mxu0 0
  %4230 = vmatprep.subr.bf16.mxu0 0
  %4231 = vmatpush1.bf16.msra.mxu0 0
  %4232 = vmatprep.subr.bf16.mxu0 0
  %4233 = vmatpush1.bf16.msra.mxu0 0
  %4234 = vmatprep.subr.bf16.mxu0 0
  %4235 = vmatpush1.bf16.msra.mxu0 0
  %4236 = vmatprep.subr.bf16.mxu0 0
  %4237 = vmatpush1.bf16.msra.mxu0 0
  %4238 = vmatprep.subr.bf16.mxu0 0
  %4239 = vmatpush1.bf16.msra.mxu0 0
  %4240 = vmatprep.subr.bf16.mxu0 0
  %4241 = vmatpush1.bf16.msra.mxu0 0
  %4242 = vmatprep.subr.bf16.mxu0 0
  %4243 = vmatpush1.bf16.msra.mxu0 0
  %4244 = vmatprep.subr.bf16.mxu0 0
  %4245 = vmatpush1.bf16.msra.mxu0 0
  %4246 = vmatprep.mubr.bf16.mxu0 0
  %4247 = vmatmul.mubr.bf16.gmra.mrb[0].mxu0 %v4191
  %v4248 = vpop.f32.mrb[0].mxu0
  %v4249 = vadd.f32 0.0, %v4248
  %v4250 = vpop.f32.mrb[0].mxu0
  %v4251 = vpop.f32.mrb[0].mxu0
  %v4252 = vadd.f32 0.0, %v4251
  %v4253 = vpop.f32.mrb[0].mxu0
  %4254 = vmatprep.mubr.bf16.mxu0 0
  %4255 = vmatmul.mubr.bf16.gmra.mrb[0].mxu0 %v4194
  %v4256 = vpop.f32.mrb[0].mxu0
  %v4257 = vadd.f32 0.0, %v4256
  %v4258 = vpop.f32.mrb[0].mxu0
  %v4259 = vpop.f32.mrb[0].mxu0
  %v4260 = vadd.f32 0.0, %v4259
  %v4261 = vpop.f32.mrb[0].mxu0
  %4262 = vmatprep.mubr.bf16.mxu0 0
  %4263 = vmatmul.mubr.bf16.gmra.mrb[0].mxu0 %v4197
  %v4264 = vpop.f32.mrb[0].mxu0
  %v4265 = vadd.f32 0.0, %v4264
  %v4266 = vpop.f32.mrb[0].mxu0
  %v4267 = vpop.f32.mrb[0].mxu0
  %v4268 = vadd.f32 0.0, %v4267
  %v4269 = vpop.f32.mrb[0].mxu0
  %4270 = vmatprep.mubr.bf16.mxu0 0
  %4271 = vmatmul.mubr.bf16.gmra.mrb[0].mxu0 %v4200
  %v4272 = vpop.f32.mrb[0].mxu0
  %v4273 = vadd.f32 0.0, %v4272
  %v4274 = vpop.f32.mrb[0].mxu0
  %v4275 = vpop.f32.mrb[0].mxu0
  %v4276 = vadd.f32 0.0, %v4275
  %v4277 = vpop.f32.mrb[0].mxu0
  %4278 = vmatprep.mubr.bf16.mxu0 0
  %4279 = vmatmul.mubr.bf16.gmra.mrb[0].mxu0 %v4203
  %v4280 = vpop.f32.mrb[0].mxu0
  %v4281 = vadd.f32 0.0, %v4280
  %v4282 = vpop.f32.mrb[0].mxu0
  %v4283 = vpop.f32.mrb[0].mxu0
  %v4284 = vadd.f32 0.0, %v4283
  %v4285 = vpop.f32.mrb[0].mxu0
  %4286 = vmatprep.mubr.bf16.mxu0 0
  %4287 = vmatmul.mubr.bf16.gmra.mrb[0].mxu0 %v4206
  %v4288 = vpop.f32.mrb[0].mxu0
  %v4289 = vadd.f32 0.0, %v4288
  %v4290 = vpop.f32.mrb[0].mxu0
  %v4291 = vpop.f32.mrb[0].mxu0
  %v4292 = vadd.f32 0.0, %v4291
  %v4293 = vpop.f32.mrb[0].mxu0
  %4294 = vmatprep.mubr.bf16.mxu0 0
  %4295 = vmatmul.mubr.bf16.gmra.mrb[0].mxu0 %v4209
  %v4296 = vpop.f32.mrb[0].mxu0
  %v4297 = vadd.f32 0.0, %v4296
  %v4298 = vpop.f32.mrb[0].mxu0
  %v4299 = vpop.f32.mrb[0].mxu0
  %v4300 = vadd.f32 0.0, %v4299
  %v4301 = vpop.f32.mrb[0].mxu0
  %4302 = vmatprep.mubr.bf16.mxu0 0
  %4303 = vmatmul.mubr.bf16.gmra.mrb[0].mxu0 %v4212
  %v4304 = vpop.f32.mrb[0].mxu0
  %v4305 = vadd.f32 0.0, %v4304
  %v4306 = vpop.f32.mrb[0].mxu0
  %v4307 = vpop.f32.mrb[0].mxu0
  %v4308 = vadd.f32 0.0, %v4307
  %v4309 = vpop.f32.mrb[0].mxu0
  %4310 = vdwg.mxu0
  %v4311 = vadd.f32 %v4021, %v4249
  %v4312 = vadd.f32 %v4022, %v4252
  %v4313 = vadd.f32 %v4023, %v4257
  %v4314 = vadd.f32 %v4024, %v4260
  %v4315 = vadd.f32 %v4025, %v4265
  %v4316 = vadd.f32 %v4026, %v4268
  %v4317 = vadd.f32 %v4027, %v4273
  %v4318 = vadd.f32 %v4028, %v4276
  %v4319 = vadd.f32 %v4029, %v4281
  %v4320 = vadd.f32 %v4030, %v4284
  %v4321 = vadd.f32 %v4031, %v4289
  %v4322 = vadd.f32 %v4032, %v4292
  %v4323 = vadd.f32 %v4033, %v4297
  %v4324 = vadd.f32 %v4034, %v4300
  %v4325 = vadd.f32 %v4035, %v4305
  %v4326 = vadd.f32 %v4036, %v4308
  %v4327 = vld [vmem:[%s3392 + $0x4] sm:$0x3]
  %v4328 = vld [vmem:[%s3392 + $0xc] sm:$0x3]
  %v4329 = vld [vmem:[%s3392 + $0x14] sm:$0x3]
  %v4330 = vld [vmem:[%s3392 + $0x1c] sm:$0x3]
  %v4331 = vld [vmem:[%s3392 + $0x24] sm:$0x3]
  %v4332 = vld [vmem:[%s3392 + $0x2c] sm:$0x3]
  %v4333 = vld [vmem:[%s3392 + $0x34] sm:$0x3]
  %v4334 = vld [vmem:[%s3392 + $0x3c] sm:$0x3]
  %v4335 = vld [vmem:[%s3392 + $0x64] sm:$0x3]
  %v4336 = vld [vmem:[%s3392 + $0x6c] sm:$0x3]
  %v4337 = vld [vmem:[%s3392 + $0x74] sm:$0x3]
  %v4338 = vld [vmem:[%s3392 + $0x7c] sm:$0x3]
  %v4339 = vld [vmem:[%s3392 + $0x84] sm:$0x3]
  %v4340 = vld [vmem:[%s3392 + $0x8c] sm:$0x3]
  %v4341 = vld [vmem:[%s3392 + $0x94] sm:$0x3]
  %v4342 = vld [vmem:[%s3392 + $0x9c] sm:$0x3]
  %v4344 = vshrl.u32 %v4037, 16
  %v4346 = vrot.slane %v4344, 5
  %v4347 = vshll.u32 %v4037, 16
  %v4349 = vrot.slane %v4347, 6
  %v4350 = vor.u32 %v4346, %v4349
  %v4351 = vrot.slane %v4350, 4
  %v4353 = vshrl.u32 %v4327, 16
  %v4355 = vrot.slane %v4353, 5
  %v4356 = vshll.u32 %v4327, 16
  %v4358 = vrot.slane %v4356, 6
  %v4359 = vor.u32 %v4355, %v4358
  %v4360 = vsel %vm925, %v4351, %v4359
  %v4362 = vshrl.u32 %v4038, 16
  %v4364 = vrot.slane %v4362, 5
  %v4365 = vshll.u32 %v4038, 16
  %v4367 = vrot.slane %v4365, 6
  %v4368 = vor.u32 %v4364, %v4367
  %v4369 = vrot.slane %v4368, 4
  %v4371 = vshrl.u32 %v4328, 16
  %v4373 = vrot.slane %v4371, 5
  %v4374 = vshll.u32 %v4328, 16
  %v4376 = vrot.slane %v4374, 6
  %v4377 = vor.u32 %v4373, %v4376
  %v4378 = vsel %vm925, %v4369, %v4377
  %v4380 = vshrl.u32 %v4039, 16
  %v4382 = vrot.slane %v4380, 5
  %v4383 = vshll.u32 %v4039, 16
  %v4385 = vrot.slane %v4383, 6
  %v4386 = vor.u32 %v4382, %v4385
  %v4387 = vrot.slane %v4386, 4
  %v4389 = vshrl.u32 %v4329, 16
  %v4391 = vrot.slane %v4389, 5
  %v4392 = vshll.u32 %v4329, 16
  %v4394 = vrot.slane %v4392, 6
  %v4395 = vor.u32 %v4391, %v4394
  %v4396 = vsel %vm925, %v4387, %v4395
  %v4398 = vshrl.u32 %v4040, 16
  %v4400 = vrot.slane %v4398, 5
  %v4401 = vshll.u32 %v4040, 16
  %v4403 = vrot.slane %v4401, 6
  %v4404 = vor.u32 %v4400, %v4403
  %v4405 = vrot.slane %v4404, 4
  %v4407 = vshrl.u32 %v4330, 16
  %v4409 = vrot.slane %v4407, 5
  %v4410 = vshll.u32 %v4330, 16
  %v4412 = vrot.slane %v4410, 6
  %v4413 = vor.u32 %v4409, %v4412
  %v4414 = vsel %vm925, %v4405, %v4413
  %v4416 = vshrl.u32 %v4041, 16
  %v4418 = vrot.slane %v4416, 5
  %v4419 = vshll.u32 %v4041, 16
  %v4421 = vrot.slane %v4419, 6
  %v4422 = vor.u32 %v4418, %v4421
  %v4423 = vrot.slane %v4422, 4
  %v4425 = vshrl.u32 %v4331, 16
  %v4427 = vrot.slane %v4425, 5
  %v4428 = vshll.u32 %v4331, 16
  %v4430 = vrot.slane %v4428, 6
  %v4431 = vor.u32 %v4427, %v4430
  %v4432 = vsel %vm925, %v4423, %v4431
  %v4434 = vshrl.u32 %v4042, 16
  %v4436 = vrot.slane %v4434, 5
  %v4437 = vshll.u32 %v4042, 16
  %v4439 = vrot.slane %v4437, 6
  %v4440 = vor.u32 %v4436, %v4439
  %v4441 = vrot.slane %v4440, 4
  %v4443 = vshrl.u32 %v4332, 16
  %v4445 = vrot.slane %v4443, 5
  %v4446 = vshll.u32 %v4332, 16
  %v4448 = vrot.slane %v4446, 6
  %v4449 = vor.u32 %v4445, %v4448
  %v4450 = vsel %vm925, %v4441, %v4449
  %v4452 = vshrl.u32 %v4043, 16
  %v4454 = vrot.slane %v4452, 5
  %v4455 = vshll.u32 %v4043, 16
  %v4457 = vrot.slane %v4455, 6
  %v4458 = vor.u32 %v4454, %v4457
  %v4459 = vrot.slane %v4458, 4
  %v4461 = vshrl.u32 %v4333, 16
  %v4463 = vrot.slane %v4461, 5
  %v4464 = vshll.u32 %v4333, 16
  %v4466 = vrot.slane %v4464, 6
  %v4467 = vor.u32 %v4463, %v4466
  %v4468 = vsel %vm925, %v4459, %v4467
  %v4470 = vshrl.u32 %v4044, 16
  %v4472 = vrot.slane %v4470, 5
  %v4473 = vshll.u32 %v4044, 16
  %v4475 = vrot.slane %v4473, 6
  %v4476 = vor.u32 %v4472, %v4475
  %v4477 = vrot.slane %v4476, 4
  %v4479 = vshrl.u32 %v4334, 16
  %v4481 = vrot.slane %v4479, 5
  %v4482 = vshll.u32 %v4334, 16
  %v4484 = vrot.slane %v4482, 6
  %v4485 = vor.u32 %v4481, %v4484
  %v4486 = vsel %vm925, %v4477, %v4485
  %v4488 = vshrl.u32 %v4045, 16
  %v4490 = vrot.slane %v4488, 5
  %v4491 = vshll.u32 %v4045, 16
  %v4493 = vrot.slane %v4491, 6
  %v4494 = vor.u32 %v4490, %v4493
  %v4495 = vrot.slane %v4494, 4
  %v4497 = vshrl.u32 %v4335, 16
  %v4499 = vrot.slane %v4497, 5
  %v4500 = vshll.u32 %v4335, 16
  %v4502 = vrot.slane %v4500, 6
  %v4503 = vor.u32 %v4499, %v4502
  %v4504 = vsel %vm925, %v4495, %v4503
  %v4506 = vshrl.u32 %v4046, 16
  %v4508 = vrot.slane %v4506, 5
  %v4509 = vshll.u32 %v4046, 16
  %v4511 = vrot.slane %v4509, 6
  %v4512 = vor.u32 %v4508, %v4511
  %v4513 = vrot.slane %v4512, 4
  %v4515 = vshrl.u32 %v4336, 16
  %v4517 = vrot.slane %v4515, 5
  %v4518 = vshll.u32 %v4336, 16
  %v4520 = vrot.slane %v4518, 6
  %v4521 = vor.u32 %v4517, %v4520
  %v4522 = vsel %vm925, %v4513, %v4521
  %v4524 = vshrl.u32 %v4047, 16
  %v4526 = vrot.slane %v4524, 5
  %v4527 = vshll.u32 %v4047, 16
  %v4529 = vrot.slane %v4527, 6
  %v4530 = vor.u32 %v4526, %v4529
  %v4531 = vrot.slane %v4530, 4
  %v4533 = vshrl.u32 %v4337, 16
  %v4535 = vrot.slane %v4533, 5
  %v4536 = vshll.u32 %v4337, 16
  %v4538 = vrot.slane %v4536, 6
  %v4539 = vor.u32 %v4535, %v4538
  %v4540 = vsel %vm925, %v4531, %v4539
  %v4542 = vshrl.u32 %v4048, 16
  %v4544 = vrot.slane %v4542, 5
  %v4545 = vshll.u32 %v4048, 16
  %v4547 = vrot.slane %v4545, 6
  %v4548 = vor.u32 %v4544, %v4547
  %v4549 = vrot.slane %v4548, 4
  %v4551 = vshrl.u32 %v4338, 16
  %v4553 = vrot.slane %v4551, 5
  %v4554 = vshll.u32 %v4338, 16
  %v4556 = vrot.slane %v4554, 6
  %v4557 = vor.u32 %v4553, %v4556
  %v4558 = vsel %vm925, %v4549, %v4557
  %v4560 = vshrl.u32 %v4049, 16
  %v4562 = vrot.slane %v4560, 5
  %v4563 = vshll.u32 %v4049, 16
  %v4565 = vrot.slane %v4563, 6
  %v4566 = vor.u32 %v4562, %v4565
  %v4567 = vrot.slane %v4566, 4
  %v4569 = vshrl.u32 %v4339, 16
  %v4571 = vrot.slane %v4569, 5
  %v4572 = vshll.u32 %v4339, 16
  %v4574 = vrot.slane %v4572, 6
  %v4575 = vor.u32 %v4571, %v4574
  %v4576 = vsel %vm925, %v4567, %v4575
  %v4578 = vshrl.u32 %v4050, 16
  %v4580 = vrot.slane %v4578, 5
  %v4581 = vshll.u32 %v4050, 16
  %v4583 = vrot.slane %v4581, 6
  %v4584 = vor.u32 %v4580, %v4583
  %v4585 = vrot.slane %v4584, 4
  %v4587 = vshrl.u32 %v4340, 16
  %v4589 = vrot.slane %v4587, 5
  %v4590 = vshll.u32 %v4340, 16
  %v4592 = vrot.slane %v4590, 6
  %v4593 = vor.u32 %v4589, %v4592
  %v4594 = vsel %vm925, %v4585, %v4593
  %v4596 = vshrl.u32 %v4051, 16
  %v4598 = vrot.slane %v4596, 5
  %v4599 = vshll.u32 %v4051, 16
  %v4601 = vrot.slane %v4599, 6
  %v4602 = vor.u32 %v4598, %v4601
  %v4603 = vrot.slane %v4602, 4
  %v4605 = vshrl.u32 %v4341, 16
  %v4607 = vrot.slane %v4605, 5
  %v4608 = vshll.u32 %v4341, 16
  %v4610 = vrot.slane %v4608, 6
  %v4611 = vor.u32 %v4607, %v4610
  %v4612 = vsel %vm925, %v4603, %v4611
  %v4614 = vshrl.u32 %v4052, 16
  %v4616 = vrot.slane %v4614, 5
  %v4617 = vshll.u32 %v4052, 16
  %v4619 = vrot.slane %v4617, 6
  %v4620 = vor.u32 %v4616, %v4619
  %v4621 = vrot.slane %v4620, 4
  %v4623 = vshrl.u32 %v4342, 16
  %v4625 = vrot.slane %v4623, 5
  %v4626 = vshll.u32 %v4342, 16
  %v4628 = vrot.slane %v4626, 6
  %v4629 = vor.u32 %v4625, %v4628
  %v4630 = vsel %vm925, %v4621, %v4629
  %s4631 = scalar_lea.vmem %s1, 208
  %v4632 = vld [vmem:[%s4631] sm:$0xf]
  %v4633 = vld [vmem:[%s4631 + $0x4] sm:$0xf]
  %v4634 = vld [vmem:[%s4631 + $0x8] sm:$0xf]
  %v4635 = vld [vmem:[%s4631 + $0xc] sm:$0xf]
  %v4636 = vunpack.c.l.b16 %v4360
  %v4637 = vunpack.c.l.b16 %v4378
  %v4638 = vunpack.c.l.b16 %v4396
  %v4639 = vunpack.c.l.b16 %v4414
  %v4640 = vunpack.c.l.b16 %v4432
  %v4641 = vunpack.c.l.b16 %v4450
  %v4642 = vunpack.c.l.b16 %v4468
  %v4643 = vunpack.c.l.b16 %v4486
  %v4644 = vunpack.c.l.b16 %v4504
  %v4645 = vunpack.c.l.b16 %v4522
  %v4646 = vunpack.c.l.b16 %v4540
  %v4647 = vunpack.c.l.b16 %v4558
  %v4648 = vunpack.c.l.b16 %v4576
  %v4649 = vunpack.c.l.b16 %v4594
  %v4650 = vunpack.c.l.b16 %v4612
  %v4651 = vunpack.c.l.b16 %v4630
  %v4652 = vpack.c.b16 %v4637, %v4636
  %v4653 = vpack.c.b16 %v4639, %v4638
  %v4654 = vpack.c.b16 %v4641, %v4640
  %v4655 = vpack.c.b16 %v4643, %v4642
  %v4656 = vpack.c.b16 %v4645, %v4644
  %v4657 = vpack.c.b16 %v4647, %v4646
  %v4658 = vpack.c.b16 %v4649, %v4648
  %v4659 = vpack.c.b16 %v4651, %v4650
  %v4664 = vunpack.c.l.b16 %v4632
  %v4665 = vunpack.c.l.b16 %v4633
  %v4666 = vunpack.c.l.b16 %v4634
  %v4667 = vunpack.c.l.b16 %v4635
  %v4668 = vpack.c.b16 %v4665, %v4664
  %v4669 = vpack.c.b16 %v4667, %v4666
  %v4673 = vsel %vm319, %v4652, 0
  %v4676 = vsel %vm319, %v4653, 0
  %v4679 = vsel %vm319, %v4654, 0
  %v4682 = vsel %vm319, %v4655, 0
  %v4685 = vsel %vm319, %v4656, 0
  %v4688 = vsel %vm319, %v4657, 0
  %v4691 = vsel %vm319, %v4658, 0
  %v4694 = vsel %vm319, %v4659, 0
  %4696 = vmatprep.subr.bf16.mxu0 0
  %4697 = vmatpush1.bf16.msra.mxu0 %v4668
  %4698 = vmatprep.subr.bf16.mxu0 0
  %4699 = vmatpush1.bf16.msra.mxu0 %v4669
  %4700 = vmatprep.subr.bf16.mxu0 0
  %4701 = vmatpush1.bf16.msra.mxu0 0
  %4702 = vmatprep.subr.bf16.mxu0 0
  %4703 = vmatpush1.bf16.msra.mxu0 0
  %4704 = vmatprep.subr.bf16.mxu0 0
  %4705 = vmatpush1.bf16.msra.mxu0 0
  %4706 = vmatprep.subr.bf16.mxu0 0
  %4707 = vmatpush1.bf16.msra.mxu0 0
  %4708 = vmatprep.subr.bf16.mxu0 0
  %4709 = vmatpush1.bf16.msra.mxu0 0
  %4710 = vmatprep.subr.bf16.mxu0 0
  %4711 = vmatpush1.bf16.msra.mxu0 0
  %4712 = vmatprep.subr.bf16.mxu0 0
  %4713 = vmatpush1.bf16.msra.mxu0 0
  %4714 = vmatprep.subr.bf16.mxu0 0
  %4715 = vmatpush1.bf16.msra.mxu0 0
  %4716 = vmatprep.subr.bf16.mxu0 0
  %4717 = vmatpush1.bf16.msra.mxu0 0
  %4718 = vmatprep.subr.bf16.mxu0 0
  %4719 = vmatpush1.bf16.msra.mxu0 0
  %4720 = vmatprep.subr.bf16.mxu0 0
  %4721 = vmatpush1.bf16.msra.mxu0 0
  %4722 = vmatprep.subr.bf16.mxu0 0
  %4723 = vmatpush1.bf16.msra.mxu0 0
  %4724 = vmatprep.subr.bf16.mxu0 0
  %4725 = vmatpush1.bf16.msra.mxu0 0
  %4726 = vmatprep.subr.bf16.mxu0 0
  %4727 = vmatpush1.bf16.msra.mxu0 0
  %4728 = vmatprep.mubr.bf16.mxu0 0
  %4729 = vmatmul.mubr.bf16.gmra.mrb[0].mxu0 %v4673
  %v4730 = vpop.f32.mrb[0].mxu0
  %v4731 = vadd.f32 0.0, %v4730
  %v4732 = vpop.f32.mrb[0].mxu0
  %v4733 = vpop.f32.mrb[0].mxu0
  %v4734 = vadd.f32 0.0, %v4733
  %v4735 = vpop.f32.mrb[0].mxu0
  %4736 = vmatprep.mubr.bf16.mxu0 0
  %4737 = vmatmul.mubr.bf16.gmra.mrb[0].mxu0 %v4676
  %v4738 = vpop.f32.mrb[0].mxu0
  %v4739 = vadd.f32 0.0, %v4738
  %v4740 = vpop.f32.mrb[0].mxu0
  %v4741 = vpop.f32.mrb[0].mxu0
  %v4742 = vadd.f32 0.0, %v4741
  %v4743 = vpop.f32.mrb[0].mxu0
  %4744 = vmatprep.mubr.bf16.mxu0 0
  %4745 = vmatmul.mubr.bf16.gmra.mrb[0].mxu0 %v4679
  %v4746 = vpop.f32.mrb[0].mxu0
  %v4747 = vadd.f32 0.0, %v4746
  %v4748 = vpop.f32.mrb[0].mxu0
  %v4749 = vpop.f32.mrb[0].mxu0
  %v4750 = vadd.f32 0.0, %v4749
  %v4751 = vpop.f32.mrb[0].mxu0
  %4752 = vmatprep.mubr.bf16.mxu0 0
  %4753 = vmatmul.mubr.bf16.gmra.mrb[0].mxu0 %v4682
  %v4754 = vpop.f32.mrb[0].mxu0
  %v4755 = vadd.f32 0.0, %v4754
  %v4756 = vpop.f32.mrb[0].mxu0
  %v4757 = vpop.f32.mrb[0].mxu0
  %v4758 = vadd.f32 0.0, %v4757
  %v4759 = vpop.f32.mrb[0].mxu0
  %4760 = vmatprep.mubr.bf16.mxu0 0
  %4761 = vmatmul.mubr.bf16.gmra.mrb[0].mxu0 %v4685
  %v4762 = vpop.f32.mrb[0].mxu0
  %v4763 = vadd.f32 0.0, %v4762
  %v4764 = vpop.f32.mrb[0].mxu0
  %v4765 = vpop.f32.mrb[0].mxu0
  %v4766 = vadd.f32 0.0, %v4765
  %v4767 = vpop.f32.mrb[0].mxu0
  %4768 = vmatprep.mubr.bf16.mxu0 0
  %4769 = vmatmul.mubr.bf16.gmra.mrb[0].mxu0 %v4688
  %v4770 = vpop.f32.mrb[0].mxu0
  %v4771 = vadd.f32 0.0, %v4770
  %v4772 = vpop.f32.mrb[0].mxu0
  %v4773 = vpop.f32.mrb[0].mxu0
  %v4774 = vadd.f32 0.0, %v4773
  %v4775 = vpop.f32.mrb[0].mxu0
  %4776 = vmatprep.mubr.bf16.mxu0 0
  %4777 = vmatmul.mubr.bf16.gmra.mrb[0].mxu0 %v4691
  %v4778 = vpop.f32.mrb[0].mxu0
  %v4779 = vadd.f32 0.0, %v4778
  %v4780 = vpop.f32.mrb[0].mxu0
  %v4781 = vpop.f32.mrb[0].mxu0
  %v4782 = vadd.f32 0.0, %v4781
  %v4783 = vpop.f32.mrb[0].mxu0
  %4784 = vmatprep.mubr.bf16.mxu0 0
  %4785 = vmatmul.mubr.bf16.gmra.mrb[0].mxu0 %v4694
  %v4786 = vpop.f32.mrb[0].mxu0
  %v4787 = vadd.f32 0.0, %v4786
  %v4788 = vpop.f32.mrb[0].mxu0
  %v4789 = vpop.f32.mrb[0].mxu0
  %v4790 = vadd.f32 0.0, %v4789
  %v4791 = vpop.f32.mrb[0].mxu0
  %4792 = vdwg.mxu0
  %v4793 = vadd.f32 %v4311, %v4731
  %v4794 = vadd.f32 %v4312, %v4734
  %v4795 = vadd.f32 %v4313, %v4739
  %v4796 = vadd.f32 %v4314, %v4742
  %v4797 = vadd.f32 %v4315, %v4747
  %v4798 = vadd.f32 %v4316, %v4750
  %v4799 = vadd.f32 %v4317, %v4755
  %v4800 = vadd.f32 %v4318, %v4758
  %v4801 = vadd.f32 %v4319, %v4763
  %v4802 = vadd.f32 %v4320, %v4766
  %v4803 = vadd.f32 %v4321, %v4771
  %v4804 = vadd.f32 %v4322, %v4774
  %v4805 = vadd.f32 %v4323, %v4779
  %v4806 = vadd.f32 %v4324, %v4782
  %v4807 = vadd.f32 %v4325, %v4787
  %v4808 = vadd.f32 %v4326, %v4790
  %v4809 = vld [vmem:[%s3392] sm:$0xc]
  %v4810 = vld [vmem:[%s3392 + $0x8] sm:$0xc]
  %v4811 = vld [vmem:[%s3392 + $0x10] sm:$0xc]
  %v4812 = vld [vmem:[%s3392 + $0x18] sm:$0xc]
  %v4813 = vld [vmem:[%s3392 + $0x20] sm:$0xc]
  %v4814 = vld [vmem:[%s3392 + $0x28] sm:$0xc]
  %v4815 = vld [vmem:[%s3392 + $0x30] sm:$0xc]
  %v4816 = vld [vmem:[%s3392 + $0x38] sm:$0xc]
  %v4817 = vld [vmem:[%s3392 + $0x60] sm:$0xc]
  %v4818 = vld [vmem:[%s3392 + $0x68] sm:$0xc]
  %v4819 = vld [vmem:[%s3392 + $0x70] sm:$0xc]
  %v4820 = vld [vmem:[%s3392 + $0x78] sm:$0xc]
  %v4821 = vld [vmem:[%s3392 + $0x80] sm:$0xc]
  %v4822 = vld [vmem:[%s3392 + $0x88] sm:$0xc]
  %v4823 = vld [vmem:[%s3392 + $0x90] sm:$0xc]
  %v4824 = vld [vmem:[%s3392 + $0x98] sm:$0xc]
  %v4857 = vrot.slane %v4809, 6
  %v4858 = vrot.slane %v4857, 4
  %v4859 = vrot.slane %v4327, 6
  %v4860 = vsel %vm1442, %v4858, %v4859
  %v4861 = vrot.slane %v4810, 6
  %v4862 = vrot.slane %v4861, 4
  %v4863 = vrot.slane %v4328, 6
  %v4864 = vsel %vm1442, %v4862, %v4863
  %v4865 = vrot.slane %v4811, 6
  %v4866 = vrot.slane %v4865, 4
  %v4867 = vrot.slane %v4329, 6
  %v4868 = vsel %vm1442, %v4866, %v4867
  %v4869 = vrot.slane %v4812, 6
  %v4870 = vrot.slane %v4869, 4
  %v4871 = vrot.slane %v4330, 6
  %v4872 = vsel %vm1442, %v4870, %v4871
  %v4873 = vrot.slane %v4813, 6
  %v4874 = vrot.slane %v4873, 4
  %v4875 = vrot.slane %v4331, 6
  %v4876 = vsel %vm1442, %v4874, %v4875
  %v4877 = vrot.slane %v4814, 6
  %v4878 = vrot.slane %v4877, 4
  %v4879 = vrot.slane %v4332, 6
  %v4880 = vsel %vm1442, %v4878, %v4879
  %v4881 = vrot.slane %v4815, 6
  %v4882 = vrot.slane %v4881, 4
  %v4883 = vrot.slane %v4333, 6
  %v4884 = vsel %vm1442, %v4882, %v4883
  %v4885 = vrot.slane %v4816, 6
  %v4886 = vrot.slane %v4885, 4
  %v4887 = vrot.slane %v4334, 6
  %v4888 = vsel %vm1442, %v4886, %v4887
  %v4889 = vrot.slane %v4817, 6
  %v4890 = vrot.slane %v4889, 4
  %v4891 = vrot.slane %v4335, 6
  %v4892 = vsel %vm1442, %v4890, %v4891
  %v4893 = vrot.slane %v4818, 6
  %v4894 = vrot.slane %v4893, 4
  %v4895 = vrot.slane %v4336, 6
  %v4896 = vsel %vm1442, %v4894, %v4895
  %v4897 = vrot.slane %v4819, 6
  %v4898 = vrot.slane %v4897, 4
  %v4899 = vrot.slane %v4337, 6
  %v4900 = vsel %vm1442, %v4898, %v4899
  %v4901 = vrot.slane %v4820, 6
  %v4902 = vrot.slane %v4901, 4
  %v4903 = vrot.slane %v4338, 6
  %v4904 = vsel %vm1442, %v4902, %v4903
  %v4905 = vrot.slane %v4821, 6
  %v4906 = vrot.slane %v4905, 4
  %v4907 = vrot.slane %v4339, 6
  %v4908 = vsel %vm1442, %v4906, %v4907
  %v4909 = vrot.slane %v4822, 6
  %v4910 = vrot.slane %v4909, 4
  %v4911 = vrot.slane %v4340, 6
  %v4912 = vsel %vm1442, %v4910, %v4911
  %v4913 = vrot.slane %v4823, 6
  %v4914 = vrot.slane %v4913, 4
  %v4915 = vrot.slane %v4341, 6
  %v4916 = vsel %vm1442, %v4914, %v4915
  %v4917 = vrot.slane %v4824, 6
  %v4918 = vrot.slane %v4917, 4
  %v4919 = vrot.slane %v4342, 6
  %v4920 = vsel %vm1442, %v4918, %v4919
  %s4921 = scalar_lea.vmem %s1, 224
  %v4922 = vld [vmem:[%s4921] sm:$0xf]
  %v4923 = vld [vmem:[%s4921 + $0x4] sm:$0xf]
  %v4924 = vld [vmem:[%s4921 + $0x8] sm:$0xf]
  %v4925 = vld [vmem:[%s4921 + $0xc] sm:$0xf]
  %v4926 = vunpack.c.l.b16 %v4860
  %v4927 = vunpack.c.l.b16 %v4864
  %v4928 = vunpack.c.l.b16 %v4868
  %v4929 = vunpack.c.l.b16 %v4872
  %v4930 = vunpack.c.l.b16 %v4876
  %v4931 = vunpack.c.l.b16 %v4880
  %v4932 = vunpack.c.l.b16 %v4884
  %v4933 = vunpack.c.l.b16 %v4888
  %v4934 = vunpack.c.l.b16 %v4892
  %v4935 = vunpack.c.l.b16 %v4896
  %v4936 = vunpack.c.l.b16 %v4900
  %v4937 = vunpack.c.l.b16 %v4904
  %v4938 = vunpack.c.l.b16 %v4908
  %v4939 = vunpack.c.l.b16 %v4912
  %v4940 = vunpack.c.l.b16 %v4916
  %v4941 = vunpack.c.l.b16 %v4920
  %v4942 = vpack.c.b16 %v4927, %v4926
  %v4943 = vpack.c.b16 %v4929, %v4928
  %v4944 = vpack.c.b16 %v4931, %v4930
  %v4945 = vpack.c.b16 %v4933, %v4932
  %v4946 = vpack.c.b16 %v4935, %v4934
  %v4947 = vpack.c.b16 %v4937, %v4936
  %v4948 = vpack.c.b16 %v4939, %v4938
  %v4949 = vpack.c.b16 %v4941, %v4940
  %v4954 = vunpack.c.l.b16 %v4922
  %v4955 = vunpack.c.l.b16 %v4923
  %v4956 = vunpack.c.l.b16 %v4924
  %v4957 = vunpack.c.l.b16 %v4925
  %v4958 = vpack.c.b16 %v4955, %v4954
  %v4959 = vpack.c.b16 %v4957, %v4956
  %v4963 = vsel %vm319, %v4942, 0
  %v4966 = vsel %vm319, %v4943, 0
  %v4969 = vsel %vm319, %v4944, 0
  %v4972 = vsel %vm319, %v4945, 0
  %v4975 = vsel %vm319, %v4946, 0
  %v4978 = vsel %vm319, %v4947, 0
  %v4981 = vsel %vm319, %v4948, 0
  %v4984 = vsel %vm319, %v4949, 0
  %4986 = vmatprep.subr.bf16.mxu0 0
  %4987 = vmatpush1.bf16.msra.mxu0 %v4958
  %4988 = vmatprep.subr.bf16.mxu0 0
  %4989 = vmatpush1.bf16.msra.mxu0 %v4959
  %4990 = vmatprep.subr.bf16.mxu0 0
  %4991 = vmatpush1.bf16.msra.mxu0 0
  %4992 = vmatprep.subr.bf16.mxu0 0
  %4993 = vmatpush1.bf16.msra.mxu0 0
  %4994 = vmatprep.subr.bf16.mxu0 0
  %4995 = vmatpush1.bf16.msra.mxu0 0
  %4996 = vmatprep.subr.bf16.mxu0 0
  %4997 = vmatpush1.bf16.msra.mxu0 0
  %4998 = vmatprep.subr.bf16.mxu0 0
  %4999 = vmatpush1.bf16.msra.mxu0 0
  %5000 = vmatprep.subr.bf16.mxu0 0
  %5001 = vmatpush1.bf16.msra.mxu0 0
  %5002 = vmatprep.subr.bf16.mxu0 0
  %5003 = vmatpush1.bf16.msra.mxu0 0
  %5004 = vmatprep.subr.bf16.mxu0 0
  %5005 = vmatpush1.bf16.msra.mxu0 0
  %5006 = vmatprep.subr.bf16.mxu0 0
  %5007 = vmatpush1.bf16.msra.mxu0 0
  %5008 = vmatprep.subr.bf16.mxu0 0
  %5009 = vmatpush1.bf16.msra.mxu0 0
  %5010 = vmatprep.subr.bf16.mxu0 0
  %5011 = vmatpush1.bf16.msra.mxu0 0
  %5012 = vmatprep.subr.bf16.mxu0 0
  %5013 = vmatpush1.bf16.msra.mxu0 0
  %5014 = vmatprep.subr.bf16.mxu0 0
  %5015 = vmatpush1.bf16.msra.mxu0 0
  %5016 = vmatprep.subr.bf16.mxu0 0
  %5017 = vmatpush1.bf16.msra.mxu0 0
  %5018 = vmatprep.mubr.bf16.mxu0 0
  %5019 = vmatmul.mubr.bf16.gmra.mrb[0].mxu0 %v4963
  %v5020 = vpop.f32.mrb[0].mxu0
  %v5021 = vadd.f32 0.0, %v5020
  %v5022 = vpop.f32.mrb[0].mxu0
  %v5023 = vpop.f32.mrb[0].mxu0
  %v5024 = vadd.f32 0.0, %v5023
  %v5025 = vpop.f32.mrb[0].mxu0
  %5026 = vmatprep.mubr.bf16.mxu0 0
  %5027 = vmatmul.mubr.bf16.gmra.mrb[0].mxu0 %v4966
  %v5028 = vpop.f32.mrb[0].mxu0
  %v5029 = vadd.f32 0.0, %v5028
  %v5030 = vpop.f32.mrb[0].mxu0
  %v5031 = vpop.f32.mrb[0].mxu0
  %v5032 = vadd.f32 0.0, %v5031
  %v5033 = vpop.f32.mrb[0].mxu0
  %5034 = vmatprep.mubr.bf16.mxu0 0
  %5035 = vmatmul.mubr.bf16.gmra.mrb[0].mxu0 %v4969
  %v5036 = vpop.f32.mrb[0].mxu0
  %v5037 = vadd.f32 0.0, %v5036
  %v5038 = vpop.f32.mrb[0].mxu0
  %v5039 = vpop.f32.mrb[0].mxu0
  %v5040 = vadd.f32 0.0, %v5039
  %v5041 = vpop.f32.mrb[0].mxu0
  %5042 = vmatprep.mubr.bf16.mxu0 0
  %5043 = vmatmul.mubr.bf16.gmra.mrb[0].mxu0 %v4972
  %v5044 = vpop.f32.mrb[0].mxu0
  %v5045 = vadd.f32 0.0, %v5044
  %v5046 = vpop.f32.mrb[0].mxu0
  %v5047 = vpop.f32.mrb[0].mxu0
  %v5048 = vadd.f32 0.0, %v5047
  %v5049 = vpop.f32.mrb[0].mxu0
  %5050 = vmatprep.mubr.bf16.mxu0 0
  %5051 = vmatmul.mubr.bf16.gmra.mrb[0].mxu0 %v4975
  %v5052 = vpop.f32.mrb[0].mxu0
  %v5053 = vadd.f32 0.0, %v5052
  %v5054 = vpop.f32.mrb[0].mxu0
  %v5055 = vpop.f32.mrb[0].mxu0
  %v5056 = vadd.f32 0.0, %v5055
  %v5057 = vpop.f32.mrb[0].mxu0
  %5058 = vmatprep.mubr.bf16.mxu0 0
  %5059 = vmatmul.mubr.bf16.gmra.mrb[0].mxu0 %v4978
  %v5060 = vpop.f32.mrb[0].mxu0
  %v5061 = vadd.f32 0.0, %v5060
  %v5062 = vpop.f32.mrb[0].mxu0
  %v5063 = vpop.f32.mrb[0].mxu0
  %v5064 = vadd.f32 0.0, %v5063
  %v5065 = vpop.f32.mrb[0].mxu0
  %5066 = vmatprep.mubr.bf16.mxu0 0
  %5067 = vmatmul.mubr.bf16.gmra.mrb[0].mxu0 %v4981
  %v5068 = vpop.f32.mrb[0].mxu0
  %v5069 = vadd.f32 0.0, %v5068
  %v5070 = vpop.f32.mrb[0].mxu0
  %v5071 = vpop.f32.mrb[0].mxu0
  %v5072 = vadd.f32 0.0, %v5071
  %v5073 = vpop.f32.mrb[0].mxu0
  %5074 = vmatprep.mubr.bf16.mxu0 0
  %5075 = vmatmul.mubr.bf16.gmra.mrb[0].mxu0 %v4984
  %v5076 = vpop.f32.mrb[0].mxu0
  %v5077 = vadd.f32 0.0, %v5076
  %v5078 = vpop.f32.mrb[0].mxu0
  %v5079 = vpop.f32.mrb[0].mxu0
  %v5080 = vadd.f32 0.0, %v5079
  %v5081 = vpop.f32.mrb[0].mxu0
  %5082 = vdwg.mxu0
  %v5083 = vadd.f32 %v4793, %v5021
  %v5084 = vadd.f32 %v4794, %v5024
  %v5085 = vadd.f32 %v4795, %v5029
  %v5086 = vadd.f32 %v4796, %v5032
  %v5087 = vadd.f32 %v4797, %v5037
  %v5088 = vadd.f32 %v4798, %v5040
  %v5089 = vadd.f32 %v4799, %v5045
  %v5090 = vadd.f32 %v4800, %v5048
  %v5091 = vadd.f32 %v4801, %v5053
  %v5092 = vadd.f32 %v4802, %v5056
  %v5093 = vadd.f32 %v4803, %v5061
  %v5094 = vadd.f32 %v4804, %v5064
  %v5095 = vadd.f32 %v4805, %v5069
  %v5096 = vadd.f32 %v4806, %v5072
  %v5097 = vadd.f32 %v4807, %v5077
  %v5098 = vadd.f32 %v4808, %v5080
  %s5099 = scalar_lea.vmem %s0, 24
  %v5100 = vld [vmem:[%s5099] sm:$0xf]
  %v5101 = vld [vmem:[%s5099 + $0x8] sm:$0xf]
  %v5102 = vld [vmem:[%s5099 + $0x10] sm:$0xf]
  %v5103 = vld [vmem:[%s5099 + $0x18] sm:$0xf]
  %v5104 = vld [vmem:[%s5099 + $0x20] sm:$0xf]
  %v5105 = vld [vmem:[%s5099 + $0x28] sm:$0xf]
  %v5106 = vld [vmem:[%s5099 + $0x30] sm:$0xf]
  %v5107 = vld [vmem:[%s5099 + $0x38] sm:$0xf]
  %v5108 = vld [vmem:[%s5099 + $0x60] sm:$0xf]
  %v5109 = vld [vmem:[%s5099 + $0x68] sm:$0xf]
  %v5110 = vld [vmem:[%s5099 + $0x70] sm:$0xf]
  %v5111 = vld [vmem:[%s5099 + $0x78] sm:$0xf]
  %v5112 = vld [vmem:[%s5099 + $0x80] sm:$0xf]
  %v5113 = vld [vmem:[%s5099 + $0x88] sm:$0xf]
  %v5114 = vld [vmem:[%s5099 + $0x90] sm:$0xf]
  %v5115 = vld [vmem:[%s5099 + $0x98] sm:$0xf]
  %s5116 = scalar_lea.vmem %s1, 240
  %v5117 = vld [vmem:[%s5116] sm:$0xf]
  %v5118 = vld [vmem:[%s5116 + $0x4] sm:$0xf]
  %v5119 = vld [vmem:[%s5116 + $0x8] sm:$0xf]
  %v5120 = vld [vmem:[%s5116 + $0xc] sm:$0xf]
  %v5137 = vunpack.c.l.b16 %v5100
  %v5138 = vunpack.c.l.b16 %v5101
  %v5139 = vunpack.c.l.b16 %v5102
  %v5140 = vunpack.c.l.b16 %v5103
  %v5141 = vunpack.c.l.b16 %v5104
  %v5142 = vunpack.c.l.b16 %v5105
  %v5143 = vunpack.c.l.b16 %v5106
  %v5144 = vunpack.c.l.b16 %v5107
  %v5145 = vunpack.c.l.b16 %v5108
  %v5146 = vunpack.c.l.b16 %v5109
  %v5147 = vunpack.c.l.b16 %v5110
  %v5148 = vunpack.c.l.b16 %v5111
  %v5149 = vunpack.c.l.b16 %v5112
  %v5150 = vunpack.c.l.b16 %v5113
  %v5151 = vunpack.c.l.b16 %v5114
  %v5152 = vunpack.c.l.b16 %v5115
  %v5153 = vpack.c.b16 %v5138, %v5137
  %v5154 = vpack.c.b16 %v5140, %v5139
  %v5155 = vpack.c.b16 %v5142, %v5141
  %v5156 = vpack.c.b16 %v5144, %v5143
  %v5157 = vpack.c.b16 %v5146, %v5145
  %v5158 = vpack.c.b16 %v5148, %v5147
  %v5159 = vpack.c.b16 %v5150, %v5149
  %v5160 = vpack.c.b16 %v5152, %v5151
  %v5165 = vunpack.c.l.b16 %v5117
  %v5166 = vunpack.c.l.b16 %v5118
  %v5167 = vunpack.c.l.b16 %v5119
  %v5168 = vunpack.c.l.b16 %v5120
  %v5169 = vpack.c.b16 %v5166, %v5165
  %v5170 = vpack.c.b16 %v5168, %v5167
  %v5174 = vsel %vm319, %v5153, 0
  %v5177 = vsel %vm319, %v5154, 0
  %v5180 = vsel %vm319, %v5155, 0
  %v5183 = vsel %vm319, %v5156, 0
  %v5186 = vsel %vm319, %v5157, 0
  %v5189 = vsel %vm319, %v5158, 0
  %v5192 = vsel %vm319, %v5159, 0
  %v5195 = vsel %vm319, %v5160, 0
  %5197 = vmatprep.subr.bf16.mxu0 0
  %5198 = vmatpush1.bf16.msra.mxu0 %v5169
  %5199 = vmatprep.subr.bf16.mxu0 0
  %5200 = vmatpush1.bf16.msra.mxu0 %v5170
  %5201 = vmatprep.subr.bf16.mxu0 0
  %5202 = vmatpush1.bf16.msra.mxu0 0
  %5203 = vmatprep.subr.bf16.mxu0 0
  %5204 = vmatpush1.bf16.msra.mxu0 0
  %5205 = vmatprep.subr.bf16.mxu0 0
  %5206 = vmatpush1.bf16.msra.mxu0 0
  %5207 = vmatprep.subr.bf16.mxu0 0
  %5208 = vmatpush1.bf16.msra.mxu0 0
  %5209 = vmatprep.subr.bf16.mxu0 0
  %5210 = vmatpush1.bf16.msra.mxu0 0
  %5211 = vmatprep.subr.bf16.mxu0 0
  %5212 = vmatpush1.bf16.msra.mxu0 0
  %5213 = vmatprep.subr.bf16.mxu0 0
  %5214 = vmatpush1.bf16.msra.mxu0 0
  %5215 = vmatprep.subr.bf16.mxu0 0
  %5216 = vmatpush1.bf16.msra.mxu0 0
  %5217 = vmatprep.subr.bf16.mxu0 0
  %5218 = vmatpush1.bf16.msra.mxu0 0
  %5219 = vmatprep.subr.bf16.mxu0 0
  %5220 = vmatpush1.bf16.msra.mxu0 0
  %5221 = vmatprep.subr.bf16.mxu0 0
  %5222 = vmatpush1.bf16.msra.mxu0 0
  %5223 = vmatprep.subr.bf16.mxu0 0
  %5224 = vmatpush1.bf16.msra.mxu0 0
  %5225 = vmatprep.subr.bf16.mxu0 0
  %5226 = vmatpush1.bf16.msra.mxu0 0
  %5227 = vmatprep.subr.bf16.mxu0 0
  %5228 = vmatpush1.bf16.msra.mxu0 0
  %5229 = vmatprep.mubr.bf16.mxu0 0
  %5230 = vmatmul.mubr.bf16.gmra.mrb[0].mxu0 %v5174
  %v5231 = vpop.f32.mrb[0].mxu0
  %v5232 = vadd.f32 0.0, %v5231
  %v5233 = vpop.f32.mrb[0].mxu0
  %v5234 = vpop.f32.mrb[0].mxu0
  %v5235 = vadd.f32 0.0, %v5234
  %v5236 = vpop.f32.mrb[0].mxu0
  %5237 = vmatprep.mubr.bf16.mxu0 0
  %5238 = vmatmul.mubr.bf16.gmra.mrb[0].mxu0 %v5177
  %v5239 = vpop.f32.mrb[0].mxu0
  %v5240 = vadd.f32 0.0, %v5239
  %v5241 = vpop.f32.mrb[0].mxu0
  %v5242 = vpop.f32.mrb[0].mxu0
  %v5243 = vadd.f32 0.0, %v5242
  %v5244 = vpop.f32.mrb[0].mxu0
  %5245 = vmatprep.mubr.bf16.mxu0 0
  %5246 = vmatmul.mubr.bf16.gmra.mrb[0].mxu0 %v5180
  %v5247 = vpop.f32.mrb[0].mxu0
  %v5248 = vadd.f32 0.0, %v5247
  %v5249 = vpop.f32.mrb[0].mxu0
  %v5250 = vpop.f32.mrb[0].mxu0
  %v5251 = vadd.f32 0.0, %v5250
  %v5252 = vpop.f32.mrb[0].mxu0
  %5253 = vmatprep.mubr.bf16.mxu0 0
  %5254 = vmatmul.mubr.bf16.gmra.mrb[0].mxu0 %v5183
  %v5255 = vpop.f32.mrb[0].mxu0
  %v5256 = vadd.f32 0.0, %v5255
  %v5257 = vpop.f32.mrb[0].mxu0
  %v5258 = vpop.f32.mrb[0].mxu0
  %v5259 = vadd.f32 0.0, %v5258
  %v5260 = vpop.f32.mrb[0].mxu0
  %5261 = vmatprep.mubr.bf16.mxu0 0
  %5262 = vmatmul.mubr.bf16.gmra.mrb[0].mxu0 %v5186
  %v5263 = vpop.f32.mrb[0].mxu0
  %v5264 = vadd.f32 0.0, %v5263
  %v5265 = vpop.f32.mrb[0].mxu0
  %v5266 = vpop.f32.mrb[0].mxu0
  %v5267 = vadd.f32 0.0, %v5266
  %v5268 = vpop.f32.mrb[0].mxu0
  %5269 = vmatprep.mubr.bf16.mxu0 0
  %5270 = vmatmul.mubr.bf16.gmra.mrb[0].mxu0 %v5189
  %v5271 = vpop.f32.mrb[0].mxu0
  %v5272 = vadd.f32 0.0, %v5271
  %v5273 = vpop.f32.mrb[0].mxu0
  %v5274 = vpop.f32.mrb[0].mxu0
  %v5275 = vadd.f32 0.0, %v5274
  %v5276 = vpop.f32.mrb[0].mxu0
  %5277 = vmatprep.mubr.bf16.mxu0 0
  %5278 = vmatmul.mubr.bf16.gmra.mrb[0].mxu0 %v5192
  %v5279 = vpop.f32.mrb[0].mxu0
  %v5280 = vadd.f32 0.0, %v5279
  %v5281 = vpop.f32.mrb[0].mxu0
  %v5282 = vpop.f32.mrb[0].mxu0
  %v5283 = vadd.f32 0.0, %v5282
  %v5284 = vpop.f32.mrb[0].mxu0
  %5285 = vmatprep.mubr.bf16.mxu0 0
  %5286 = vmatmul.mubr.bf16.gmra.mrb[0].mxu0 %v5195
  %v5287 = vpop.f32.mrb[0].mxu0
  %v5288 = vadd.f32 0.0, %v5287
  %v5289 = vpop.f32.mrb[0].mxu0
  %v5290 = vpop.f32.mrb[0].mxu0
  %v5291 = vadd.f32 0.0, %v5290
  %v5292 = vpop.f32.mrb[0].mxu0
  %5293 = vdwg.mxu0
  %v5294 = vadd.f32 %v5083, %v5232
  %v5295 = vadd.f32 %v5084, %v5235
  %v5296 = vadd.f32 %v5085, %v5240
  %v5297 = vadd.f32 %v5086, %v5243
  %v5298 = vadd.f32 %v5087, %v5248
  %v5299 = vadd.f32 %v5088, %v5251
  %v5300 = vadd.f32 %v5089, %v5256
  %v5301 = vadd.f32 %v5090, %v5259
  %v5302 = vadd.f32 %v5091, %v5264
  %v5303 = vadd.f32 %v5092, %v5267
  %v5304 = vadd.f32 %v5093, %v5272
  %v5305 = vadd.f32 %v5094, %v5275
  %v5306 = vadd.f32 %v5095, %v5280
  %v5307 = vadd.f32 %v5096, %v5283
  %v5308 = vadd.f32 %v5097, %v5288
  %v5309 = vadd.f32 %v5098, %v5291
  %v5310 = vld [vmem:[%s5099] sm:$0xf]
  %v5311 = vld [vmem:[%s5099 + $0x4] sm:$0x1]
  %v5312 = vld [vmem:[%s5099 + $0x8] sm:$0xf]
  %v5313 = vld [vmem:[%s5099 + $0xc] sm:$0x1]
  %v5314 = vld [vmem:[%s5099 + $0x10] sm:$0xf]
  %v5315 = vld [vmem:[%s5099 + $0x14] sm:$0x1]
  %v5316 = vld [vmem:[%s5099 + $0x18] sm:$0xf]
  %v5317 = vld [vmem:[%s5099 + $0x1c] sm:$0x1]
  %v5318 = vld [vmem:[%s5099 + $0x20] sm:$0xf]
  %v5319 = vld [vmem:[%s5099 + $0x24] sm:$0x1]
  %v5320 = vld [vmem:[%s5099 + $0x28] sm:$0xf]
  %v5321 = vld [vmem:[%s5099 + $0x2c] sm:$0x1]
  %v5322 = vld [vmem:[%s5099 + $0x30] sm:$0xf]
  %v5323 = vld [vmem:[%s5099 + $0x34] sm:$0x1]
  %v5324 = vld [vmem:[%s5099 + $0x38] sm:$0xf]
  %v5325 = vld [vmem:[%s5099 + $0x3c] sm:$0x1]
  %v5326 = vld [vmem:[%s5099 + $0x60] sm:$0xf]
  %v5327 = vld [vmem:[%s5099 + $0x64] sm:$0x1]
  %v5328 = vld [vmem:[%s5099 + $0x68] sm:$0xf]
  %v5329 = vld [vmem:[%s5099 + $0x6c] sm:$0x1]
  %v5330 = vld [vmem:[%s5099 + $0x70] sm:$0xf]
  %v5331 = vld [vmem:[%s5099 + $0x74] sm:$0x1]
  %v5332 = vld [vmem:[%s5099 + $0x78] sm:$0xf]
  %v5333 = vld [vmem:[%s5099 + $0x7c] sm:$0x1]
  %v5334 = vld [vmem:[%s5099 + $0x80] sm:$0xf]
  %v5335 = vld [vmem:[%s5099 + $0x84] sm:$0x1]
  %v5336 = vld [vmem:[%s5099 + $0x88] sm:$0xf]
  %v5337 = vld [vmem:[%s5099 + $0x8c] sm:$0x1]
  %v5338 = vld [vmem:[%s5099 + $0x90] sm:$0xf]
  %v5339 = vld [vmem:[%s5099 + $0x94] sm:$0x1]
  %v5340 = vld [vmem:[%s5099 + $0x98] sm:$0xf]
  %v5341 = vld [vmem:[%s5099 + $0x9c] sm:$0x1]
  %v5343 = vshrl.u32 %v5310, 16
  %v5345 = vrot.slane %v5343, 4
  %v5346 = vshll.u32 %v5310, 16
  %v5348 = vrot.slane %v5346, 5
  %v5349 = vor.u32 %v5345, %v5348
  %v5350 = vrot.slane %v5349, 4
  %v5352 = vshll.u32 %v5311, 16
  %v5354 = vrot.slane %v5352, 5
  %v5355 = vsel %vm53, %v5350, %v5354
  %v5357 = vshrl.u32 %v5312, 16
  %v5359 = vrot.slane %v5357, 4
  %v5360 = vshll.u32 %v5312, 16
  %v5362 = vrot.slane %v5360, 5
  %v5363 = vor.u32 %v5359, %v5362
  %v5364 = vrot.slane %v5363, 4
  %v5366 = vshll.u32 %v5313, 16
  %v5368 = vrot.slane %v5366, 5
  %v5369 = vsel %vm53, %v5364, %v5368
  %v5371 = vshrl.u32 %v5314, 16
  %v5373 = vrot.slane %v5371, 4
  %v5374 = vshll.u32 %v5314, 16
  %v5376 = vrot.slane %v5374, 5
  %v5377 = vor.u32 %v5373, %v5376
  %v5378 = vrot.slane %v5377, 4
  %v5380 = vshll.u32 %v5315, 16
  %v5382 = vrot.slane %v5380, 5
  %v5383 = vsel %vm53, %v5378, %v5382
  %v5385 = vshrl.u32 %v5316, 16
  %v5387 = vrot.slane %v5385, 4
  %v5388 = vshll.u32 %v5316, 16
  %v5390 = vrot.slane %v5388, 5
  %v5391 = vor.u32 %v5387, %v5390
  %v5392 = vrot.slane %v5391, 4
  %v5394 = vshll.u32 %v5317, 16
  %v5396 = vrot.slane %v5394, 5
  %v5397 = vsel %vm53, %v5392, %v5396
  %v5399 = vshrl.u32 %v5318, 16
  %v5401 = vrot.slane %v5399, 4
  %v5402 = vshll.u32 %v5318, 16
  %v5404 = vrot.slane %v5402, 5
  %v5405 = vor.u32 %v5401, %v5404
  %v5406 = vrot.slane %v5405, 4
  %v5408 = vshll.u32 %v5319, 16
  %v5410 = vrot.slane %v5408, 5
  %v5411 = vsel %vm53, %v5406, %v5410
  %v5413 = vshrl.u32 %v5320, 16
  %v5415 = vrot.slane %v5413, 4
  %v5416 = vshll.u32 %v5320, 16
  %v5418 = vrot.slane %v5416, 5
  %v5419 = vor.u32 %v5415, %v5418
  %v5420 = vrot.slane %v5419, 4
  %v5422 = vshll.u32 %v5321, 16
  %v5424 = vrot.slane %v5422, 5
  %v5425 = vsel %vm53, %v5420, %v5424
  %v5427 = vshrl.u32 %v5322, 16
  %v5429 = vrot.slane %v5427, 4
  %v5430 = vshll.u32 %v5322, 16
  %v5432 = vrot.slane %v5430, 5
  %v5433 = vor.u32 %v5429, %v5432
  %v5434 = vrot.slane %v5433, 4
  %v5436 = vshll.u32 %v5323, 16
  %v5438 = vrot.slane %v5436, 5
  %v5439 = vsel %vm53, %v5434, %v5438
  %v5441 = vshrl.u32 %v5324, 16
  %v5443 = vrot.slane %v5441, 4
  %v5444 = vshll.u32 %v5324, 16
  %v5446 = vrot.slane %v5444, 5
  %v5447 = vor.u32 %v5443, %v5446
  %v5448 = vrot.slane %v5447, 4
  %v5450 = vshll.u32 %v5325, 16
  %v5452 = vrot.slane %v5450, 5
  %v5453 = vsel %vm53, %v5448, %v5452
  %v5455 = vshrl.u32 %v5326, 16
  %v5457 = vrot.slane %v5455, 4
  %v5458 = vshll.u32 %v5326, 16
  %v5460 = vrot.slane %v5458, 5
  %v5461 = vor.u32 %v5457, %v5460
  %v5462 = vrot.slane %v5461, 4
  %v5464 = vshll.u32 %v5327, 16
  %v5466 = vrot.slane %v5464, 5
  %v5467 = vsel %vm53, %v5462, %v5466
  %v5469 = vshrl.u32 %v5328, 16
  %v5471 = vrot.slane %v5469, 4
  %v5472 = vshll.u32 %v5328, 16
  %v5474 = vrot.slane %v5472, 5
  %v5475 = vor.u32 %v5471, %v5474
  %v5476 = vrot.slane %v5475, 4
  %v5478 = vshll.u32 %v5329, 16
  %v5480 = vrot.slane %v5478, 5
  %v5481 = vsel %vm53, %v5476, %v5480
  %v5483 = vshrl.u32 %v5330, 16
  %v5485 = vrot.slane %v5483, 4
  %v5486 = vshll.u32 %v5330, 16
  %v5488 = vrot.slane %v5486, 5
  %v5489 = vor.u32 %v5485, %v5488
  %v5490 = vrot.slane %v5489, 4
  %v5492 = vshll.u32 %v5331, 16
  %v5494 = vrot.slane %v5492, 5
  %v5495 = vsel %vm53, %v5490, %v5494
  %v5497 = vshrl.u32 %v5332, 16
  %v5499 = vrot.slane %v5497, 4
  %v5500 = vshll.u32 %v5332, 16
  %v5502 = vrot.slane %v5500, 5
  %v5503 = vor.u32 %v5499, %v5502
  %v5504 = vrot.slane %v5503, 4
  %v5506 = vshll.u32 %v5333, 16
  %v5508 = vrot.slane %v5506, 5
  %v5509 = vsel %vm53, %v5504, %v5508
  %v5511 = vshrl.u32 %v5334, 16
  %v5513 = vrot.slane %v5511, 4
  %v5514 = vshll.u32 %v5334, 16
  %v5516 = vrot.slane %v5514, 5
  %v5517 = vor.u32 %v5513, %v5516
  %v5518 = vrot.slane %v5517, 4
  %v5520 = vshll.u32 %v5335, 16
  %v5522 = vrot.slane %v5520, 5
  %v5523 = vsel %vm53, %v5518, %v5522
  %v5525 = vshrl.u32 %v5336, 16
  %v5527 = vrot.slane %v5525, 4
  %v5528 = vshll.u32 %v5336, 16
  %v5530 = vrot.slane %v5528, 5
  %v5531 = vor.u32 %v5527, %v5530
  %v5532 = vrot.slane %v5531, 4
  %v5534 = vshll.u32 %v5337, 16
  %v5536 = vrot.slane %v5534, 5
  %v5537 = vsel %vm53, %v5532, %v5536
  %v5539 = vshrl.u32 %v5338, 16
  %v5541 = vrot.slane %v5539, 4
  %v5542 = vshll.u32 %v5338, 16
  %v5544 = vrot.slane %v5542, 5
  %v5545 = vor.u32 %v5541, %v5544
  %v5546 = vrot.slane %v5545, 4
  %v5548 = vshll.u32 %v5339, 16
  %v5550 = vrot.slane %v5548, 5
  %v5551 = vsel %vm53, %v5546, %v5550
  %v5553 = vshrl.u32 %v5340, 16
  %v5555 = vrot.slane %v5553, 4
  %v5556 = vshll.u32 %v5340, 16
  %v5558 = vrot.slane %v5556, 5
  %v5559 = vor.u32 %v5555, %v5558
  %v5560 = vrot.slane %v5559, 4
  %v5562 = vshll.u32 %v5341, 16
  %v5564 = vrot.slane %v5562, 5
  %v5565 = vsel %vm53, %v5560, %v5564
  %s5566 = scalar_lea.vmem %s1, 256
  %v5567 = vld [vmem:[%s5566] sm:$0xf]
  %v5568 = vld [vmem:[%s5566 + $0x4] sm:$0xf]
  %v5569 = vld [vmem:[%s5566 + $0x8] sm:$0xf]
  %v5570 = vld [vmem:[%s5566 + $0xc] sm:$0xf]
  %v5571 = vunpack.c.l.b16 %v5355
  %v5572 = vunpack.c.l.b16 %v5369
  %v5573 = vunpack.c.l.b16 %v5383
  %v5574 = vunpack.c.l.b16 %v5397
  %v5575 = vunpack.c.l.b16 %v5411
  %v5576 = vunpack.c.l.b16 %v5425
  %v5577 = vunpack.c.l.b16 %v5439
  %v5578 = vunpack.c.l.b16 %v5453
  %v5579 = vunpack.c.l.b16 %v5467
  %v5580 = vunpack.c.l.b16 %v5481
  %v5581 = vunpack.c.l.b16 %v5495
  %v5582 = vunpack.c.l.b16 %v5509
  %v5583 = vunpack.c.l.b16 %v5523
  %v5584 = vunpack.c.l.b16 %v5537
  %v5585 = vunpack.c.l.b16 %v5551
  %v5586 = vunpack.c.l.b16 %v5565
  %v5587 = vpack.c.b16 %v5572, %v5571
  %v5588 = vpack.c.b16 %v5574, %v5573
  %v5589 = vpack.c.b16 %v5576, %v5575
  %v5590 = vpack.c.b16 %v5578, %v5577
  %v5591 = vpack.c.b16 %v5580, %v5579
  %v5592 = vpack.c.b16 %v5582, %v5581
  %v5593 = vpack.c.b16 %v5584, %v5583
  %v5594 = vpack.c.b16 %v5586, %v5585
  %v5599 = vunpack.c.l.b16 %v5567
  %v5600 = vunpack.c.l.b16 %v5568
  %v5601 = vunpack.c.l.b16 %v5569
  %v5602 = vunpack.c.l.b16 %v5570
  %v5603 = vpack.c.b16 %v5600, %v5599
  %v5604 = vpack.c.b16 %v5602, %v5601
  %v5608 = vsel %vm319, %v5587, 0
  %v5611 = vsel %vm319, %v5588, 0
  %v5614 = vsel %vm319, %v5589, 0
  %v5617 = vsel %vm319, %v5590, 0
  %v5620 = vsel %vm319, %v5591, 0
  %v5623 = vsel %vm319, %v5592, 0
  %v5626 = vsel %vm319, %v5593, 0
  %v5629 = vsel %vm319, %v5594, 0
  %5631 = vmatprep.subr.bf16.mxu0 0
  %5632 = vmatpush1.bf16.msra.mxu0 %v5603
  %5633 = vmatprep.subr.bf16.mxu0 0
  %5634 = vmatpush1.bf16.msra.mxu0 %v5604
  %5635 = vmatprep.subr.bf16.mxu0 0
  %5636 = vmatpush1.bf16.msra.mxu0 0
  %5637 = vmatprep.subr.bf16.mxu0 0
  %5638 = vmatpush1.bf16.msra.mxu0 0
  %5639 = vmatprep.subr.bf16.mxu0 0
  %5640 = vmatpush1.bf16.msra.mxu0 0
  %5641 = vmatprep.subr.bf16.mxu0 0
  %5642 = vmatpush1.bf16.msra.mxu0 0
  %5643 = vmatprep.subr.bf16.mxu0 0
  %5644 = vmatpush1.bf16.msra.mxu0 0
  %5645 = vmatprep.subr.bf16.mxu0 0
  %5646 = vmatpush1.bf16.msra.mxu0 0
  %5647 = vmatprep.subr.bf16.mxu0 0
  %5648 = vmatpush1.bf16.msra.mxu0 0
  %5649 = vmatprep.subr.bf16.mxu0 0
  %5650 = vmatpush1.bf16.msra.mxu0 0
  %5651 = vmatprep.subr.bf16.mxu0 0
  %5652 = vmatpush1.bf16.msra.mxu0 0
  %5653 = vmatprep.subr.bf16.mxu0 0
  %5654 = vmatpush1.bf16.msra.mxu0 0
  %5655 = vmatprep.subr.bf16.mxu0 0
  %5656 = vmatpush1.bf16.msra.mxu0 0
  %5657 = vmatprep.subr.bf16.mxu0 0
  %5658 = vmatpush1.bf16.msra.mxu0 0
  %5659 = vmatprep.subr.bf16.mxu0 0
  %5660 = vmatpush1.bf16.msra.mxu0 0
  %5661 = vmatprep.subr.bf16.mxu0 0
  %5662 = vmatpush1.bf16.msra.mxu0 0
  %5663 = vmatprep.mubr.bf16.mxu0 0
  %5664 = vmatmul.mubr.bf16.gmra.mrb[0].mxu0 %v5608
  %v5665 = vpop.f32.mrb[0].mxu0
  %v5666 = vadd.f32 0.0, %v5665
  %v5667 = vpop.f32.mrb[0].mxu0
  %v5668 = vpop.f32.mrb[0].mxu0
  %v5669 = vadd.f32 0.0, %v5668
  %v5670 = vpop.f32.mrb[0].mxu0
  %5671 = vmatprep.mubr.bf16.mxu0 0
  %5672 = vmatmul.mubr.bf16.gmra.mrb[0].mxu0 %v5611
  %v5673 = vpop.f32.mrb[0].mxu0
  %v5674 = vadd.f32 0.0, %v5673
  %v5675 = vpop.f32.mrb[0].mxu0
  %v5676 = vpop.f32.mrb[0].mxu0
  %v5677 = vadd.f32 0.0, %v5676
  %v5678 = vpop.f32.mrb[0].mxu0
  %5679 = vmatprep.mubr.bf16.mxu0 0
  %5680 = vmatmul.mubr.bf16.gmra.mrb[0].mxu0 %v5614
  %v5681 = vpop.f32.mrb[0].mxu0
  %v5682 = vadd.f32 0.0, %v5681
  %v5683 = vpop.f32.mrb[0].mxu0
  %v5684 = vpop.f32.mrb[0].mxu0
  %v5685 = vadd.f32 0.0, %v5684
  %v5686 = vpop.f32.mrb[0].mxu0
  %5687 = vmatprep.mubr.bf16.mxu0 0
  %5688 = vmatmul.mubr.bf16.gmra.mrb[0].mxu0 %v5617
  %v5689 = vpop.f32.mrb[0].mxu0
  %v5690 = vadd.f32 0.0, %v5689
  %v5691 = vpop.f32.mrb[0].mxu0
  %v5692 = vpop.f32.mrb[0].mxu0
  %v5693 = vadd.f32 0.0, %v5692
  %v5694 = vpop.f32.mrb[0].mxu0
  %5695 = vmatprep.mubr.bf16.mxu0 0
  %5696 = vmatmul.mubr.bf16.gmra.mrb[0].mxu0 %v5620
  %v5697 = vpop.f32.mrb[0].mxu0
  %v5698 = vadd.f32 0.0, %v5697
  %v5699 = vpop.f32.mrb[0].mxu0
  %v5700 = vpop.f32.mrb[0].mxu0
  %v5701 = vadd.f32 0.0, %v5700
  %v5702 = vpop.f32.mrb[0].mxu0
  %5703 = vmatprep.mubr.bf16.mxu0 0
  %5704 = vmatmul.mubr.bf16.gmra.mrb[0].mxu0 %v5623
  %v5705 = vpop.f32.mrb[0].mxu0
  %v5706 = vadd.f32 0.0, %v5705
  %v5707 = vpop.f32.mrb[0].mxu0
  %v5708 = vpop.f32.mrb[0].mxu0
  %v5709 = vadd.f32 0.0, %v5708
  %v5710 = vpop.f32.mrb[0].mxu0
  %5711 = vmatprep.mubr.bf16.mxu0 0
  %5712 = vmatmul.mubr.bf16.gmra.mrb[0].mxu0 %v5626
  %v5713 = vpop.f32.mrb[0].mxu0
  %v5714 = vadd.f32 0.0, %v5713
  %v5715 = vpop.f32.mrb[0].mxu0
  %v5716 = vpop.f32.mrb[0].mxu0
  %v5717 = vadd.f32 0.0, %v5716
  %v5718 = vpop.f32.mrb[0].mxu0
  %5719 = vmatprep.mubr.bf16.mxu0 0
  %5720 = vmatmul.mubr.bf16.gmra.mrb[0].mxu0 %v5629
  %v5721 = vpop.f32.mrb[0].mxu0
  %v5722 = vadd.f32 0.0, %v5721
  %v5723 = vpop.f32.mrb[0].mxu0
  %v5724 = vpop.f32.mrb[0].mxu0
  %v5725 = vadd.f32 0.0, %v5724
  %v5726 = vpop.f32.mrb[0].mxu0
  %5727 = vdwg.mxu0
  %v5728 = vadd.f32 %v5294, %v5666
  %v5729 = vadd.f32 %v5295, %v5669
  %v5730 = vadd.f32 %v5296, %v5674
  %v5731 = vadd.f32 %v5297, %v5677
  %v5732 = vadd.f32 %v5298, %v5682
  %v5733 = vadd.f32 %v5299, %v5685
  %v5734 = vadd.f32 %v5300, %v5690
  %v5735 = vadd.f32 %v5301, %v5693
  %v5736 = vadd.f32 %v5302, %v5698
  %v5737 = vadd.f32 %v5303, %v5701
  %v5738 = vadd.f32 %v5304, %v5706
  %v5739 = vadd.f32 %v5305, %v5709
  %v5740 = vadd.f32 %v5306, %v5714
  %v5741 = vadd.f32 %v5307, %v5717
  %v5742 = vadd.f32 %v5308, %v5722
  %v5743 = vadd.f32 %v5309, %v5725
  %v5744 = vld [vmem:[%s5099] sm:$0xe]
  %v5745 = vld [vmem:[%s5099 + $0x8] sm:$0xe]
  %v5746 = vld [vmem:[%s5099 + $0x10] sm:$0xe]
  %v5747 = vld [vmem:[%s5099 + $0x18] sm:$0xe]
  %v5748 = vld [vmem:[%s5099 + $0x20] sm:$0xe]
  %v5749 = vld [vmem:[%s5099 + $0x28] sm:$0xe]
  %v5750 = vld [vmem:[%s5099 + $0x30] sm:$0xe]
  %v5751 = vld [vmem:[%s5099 + $0x38] sm:$0xe]
  %v5752 = vld [vmem:[%s5099 + $0x60] sm:$0xe]
  %v5753 = vld [vmem:[%s5099 + $0x68] sm:$0xe]
  %v5754 = vld [vmem:[%s5099 + $0x70] sm:$0xe]
  %v5755 = vld [vmem:[%s5099 + $0x78] sm:$0xe]
  %v5756 = vld [vmem:[%s5099 + $0x80] sm:$0xe]
  %v5757 = vld [vmem:[%s5099 + $0x88] sm:$0xe]
  %v5758 = vld [vmem:[%s5099 + $0x90] sm:$0xe]
  %v5759 = vld [vmem:[%s5099 + $0x98] sm:$0xe]
  %v5792 = vrot.slane %v5744, 5
  %v5793 = vrot.slane %v5792, 4
  %v5794 = vrot.slane %v5311, 5
  %v5795 = vsel %vm664, %v5793, %v5794
  %v5796 = vrot.slane %v5745, 5
  %v5797 = vrot.slane %v5796, 4
  %v5798 = vrot.slane %v5313, 5
  %v5799 = vsel %vm664, %v5797, %v5798
  %v5800 = vrot.slane %v5746, 5
  %v5801 = vrot.slane %v5800, 4
  %v5802 = vrot.slane %v5315, 5
  %v5803 = vsel %vm664, %v5801, %v5802
  %v5804 = vrot.slane %v5747, 5
  %v5805 = vrot.slane %v5804, 4
  %v5806 = vrot.slane %v5317, 5
  %v5807 = vsel %vm664, %v5805, %v5806
  %v5808 = vrot.slane %v5748, 5
  %v5809 = vrot.slane %v5808, 4
  %v5810 = vrot.slane %v5319, 5
  %v5811 = vsel %vm664, %v5809, %v5810
  %v5812 = vrot.slane %v5749, 5
  %v5813 = vrot.slane %v5812, 4
  %v5814 = vrot.slane %v5321, 5
  %v5815 = vsel %vm664, %v5813, %v5814
  %v5816 = vrot.slane %v5750, 5
  %v5817 = vrot.slane %v5816, 4
  %v5818 = vrot.slane %v5323, 5
  %v5819 = vsel %vm664, %v5817, %v5818
  %v5820 = vrot.slane %v5751, 5
  %v5821 = vrot.slane %v5820, 4
  %v5822 = vrot.slane %v5325, 5
  %v5823 = vsel %vm664, %v5821, %v5822
  %v5824 = vrot.slane %v5752, 5
  %v5825 = vrot.slane %v5824, 4
  %v5826 = vrot.slane %v5327, 5
  %v5827 = vsel %vm664, %v5825, %v5826
  %v5828 = vrot.slane %v5753, 5
  %v5829 = vrot.slane %v5828, 4
  %v5830 = vrot.slane %v5329, 5
  %v5831 = vsel %vm664, %v5829, %v5830
  %v5832 = vrot.slane %v5754, 5
  %v5833 = vrot.slane %v5832, 4
  %v5834 = vrot.slane %v5331, 5
  %v5835 = vsel %vm664, %v5833, %v5834
  %v5836 = vrot.slane %v5755, 5
  %v5837 = vrot.slane %v5836, 4
  %v5838 = vrot.slane %v5333, 5
  %v5839 = vsel %vm664, %v5837, %v5838
  %v5840 = vrot.slane %v5756, 5
  %v5841 = vrot.slane %v5840, 4
  %v5842 = vrot.slane %v5335, 5
  %v5843 = vsel %vm664, %v5841, %v5842
  %v5844 = vrot.slane %v5757, 5
  %v5845 = vrot.slane %v5844, 4
  %v5846 = vrot.slane %v5337, 5
  %v5847 = vsel %vm664, %v5845, %v5846
  %v5848 = vrot.slane %v5758, 5
  %v5849 = vrot.slane %v5848, 4
  %v5850 = vrot.slane %v5339, 5
  %v5851 = vsel %vm664, %v5849, %v5850
  %v5852 = vrot.slane %v5759, 5
  %v5853 = vrot.slane %v5852, 4
  %v5854 = vrot.slane %v5341, 5
  %v5855 = vsel %vm664, %v5853, %v5854
  %s5856 = scalar_lea.vmem %s1, 272
  %v5857 = vld [vmem:[%s5856] sm:$0xf]
  %v5858 = vld [vmem:[%s5856 + $0x4] sm:$0xf]
  %v5859 = vld [vmem:[%s5856 + $0x8] sm:$0xf]
  %v5860 = vld [vmem:[%s5856 + $0xc] sm:$0xf]
  %v5861 = vunpack.c.l.b16 %v5795
  %v5862 = vunpack.c.l.b16 %v5799
  %v5863 = vunpack.c.l.b16 %v5803
  %v5864 = vunpack.c.l.b16 %v5807
  %v5865 = vunpack.c.l.b16 %v5811
  %v5866 = vunpack.c.l.b16 %v5815
  %v5867 = vunpack.c.l.b16 %v5819
  %v5868 = vunpack.c.l.b16 %v5823
  %v5869 = vunpack.c.l.b16 %v5827
  %v5870 = vunpack.c.l.b16 %v5831
  %v5871 = vunpack.c.l.b16 %v5835
  %v5872 = vunpack.c.l.b16 %v5839
  %v5873 = vunpack.c.l.b16 %v5843
  %v5874 = vunpack.c.l.b16 %v5847
  %v5875 = vunpack.c.l.b16 %v5851
  %v5876 = vunpack.c.l.b16 %v5855
  %v5877 = vpack.c.b16 %v5862, %v5861
  %v5878 = vpack.c.b16 %v5864, %v5863
  %v5879 = vpack.c.b16 %v5866, %v5865
  %v5880 = vpack.c.b16 %v5868, %v5867
  %v5881 = vpack.c.b16 %v5870, %v5869
  %v5882 = vpack.c.b16 %v5872, %v5871
  %v5883 = vpack.c.b16 %v5874, %v5873
  %v5884 = vpack.c.b16 %v5876, %v5875
  %v5889 = vunpack.c.l.b16 %v5857
  %v5890 = vunpack.c.l.b16 %v5858
  %v5891 = vunpack.c.l.b16 %v5859
  %v5892 = vunpack.c.l.b16 %v5860
  %v5893 = vpack.c.b16 %v5890, %v5889
  %v5894 = vpack.c.b16 %v5892, %v5891
  %v5898 = vsel %vm319, %v5877, 0
  %v5901 = vsel %vm319, %v5878, 0
  %v5904 = vsel %vm319, %v5879, 0
  %v5907 = vsel %vm319, %v5880, 0
  %v5910 = vsel %vm319, %v5881, 0
  %v5913 = vsel %vm319, %v5882, 0
  %v5916 = vsel %vm319, %v5883, 0
  %v5919 = vsel %vm319, %v5884, 0
  %5921 = vmatprep.subr.bf16.mxu0 0
  %5922 = vmatpush1.bf16.msra.mxu0 %v5893
  %5923 = vmatprep.subr.bf16.mxu0 0
  %5924 = vmatpush1.bf16.msra.mxu0 %v5894
  %5925 = vmatprep.subr.bf16.mxu0 0
  %5926 = vmatpush1.bf16.msra.mxu0 0
  %5927 = vmatprep.subr.bf16.mxu0 0
  %5928 = vmatpush1.bf16.msra.mxu0 0
  %5929 = vmatprep.subr.bf16.mxu0 0
  %5930 = vmatpush1.bf16.msra.mxu0 0
  %5931 = vmatprep.subr.bf16.mxu0 0
  %5932 = vmatpush1.bf16.msra.mxu0 0
  %5933 = vmatprep.subr.bf16.mxu0 0
  %5934 = vmatpush1.bf16.msra.mxu0 0
  %5935 = vmatprep.subr.bf16.mxu0 0
  %5936 = vmatpush1.bf16.msra.mxu0 0
  %5937 = vmatprep.subr.bf16.mxu0 0
  %5938 = vmatpush1.bf16.msra.mxu0 0
  %5939 = vmatprep.subr.bf16.mxu0 0
  %5940 = vmatpush1.bf16.msra.mxu0 0
  %5941 = vmatprep.subr.bf16.mxu0 0
  %5942 = vmatpush1.bf16.msra.mxu0 0
  %5943 = vmatprep.subr.bf16.mxu0 0
  %5944 = vmatpush1.bf16.msra.mxu0 0
  %5945 = vmatprep.subr.bf16.mxu0 0
  %5946 = vmatpush1.bf16.msra.mxu0 0
  %5947 = vmatprep.subr.bf16.mxu0 0
  %5948 = vmatpush1.bf16.msra.mxu0 0
  %5949 = vmatprep.subr.bf16.mxu0 0
  %5950 = vmatpush1.bf16.msra.mxu0 0
  %5951 = vmatprep.subr.bf16.mxu0 0
  %5952 = vmatpush1.bf16.msra.mxu0 0
  %5953 = vmatprep.mubr.bf16.mxu0 0
  %5954 = vmatmul.mubr.bf16.gmra.mrb[0].mxu0 %v5898
  %v5955 = vpop.f32.mrb[0].mxu0
  %v5956 = vadd.f32 0.0, %v5955
  %v5957 = vpop.f32.mrb[0].mxu0
  %v5958 = vpop.f32.mrb[0].mxu0
  %v5959 = vadd.f32 0.0, %v5958
  %v5960 = vpop.f32.mrb[0].mxu0
  %5961 = vmatprep.mubr.bf16.mxu0 0
  %5962 = vmatmul.mubr.bf16.gmra.mrb[0].mxu0 %v5901
  %v5963 = vpop.f32.mrb[0].mxu0
  %v5964 = vadd.f32 0.0, %v5963
  %v5965 = vpop.f32.mrb[0].mxu0
  %v5966 = vpop.f32.mrb[0].mxu0
  %v5967 = vadd.f32 0.0, %v5966
  %v5968 = vpop.f32.mrb[0].mxu0
  %5969 = vmatprep.mubr.bf16.mxu0 0
  %5970 = vmatmul.mubr.bf16.gmra.mrb[0].mxu0 %v5904
  %v5971 = vpop.f32.mrb[0].mxu0
  %v5972 = vadd.f32 0.0, %v5971
  %v5973 = vpop.f32.mrb[0].mxu0
  %v5974 = vpop.f32.mrb[0].mxu0
  %v5975 = vadd.f32 0.0, %v5974
  %v5976 = vpop.f32.mrb[0].mxu0
  %5977 = vmatprep.mubr.bf16.mxu0 0
  %5978 = vmatmul.mubr.bf16.gmra.mrb[0].mxu0 %v5907
  %v5979 = vpop.f32.mrb[0].mxu0
  %v5980 = vadd.f32 0.0, %v5979
  %v5981 = vpop.f32.mrb[0].mxu0
  %v5982 = vpop.f32.mrb[0].mxu0
  %v5983 = vadd.f32 0.0, %v5982
  %v5984 = vpop.f32.mrb[0].mxu0
  %5985 = vmatprep.mubr.bf16.mxu0 0
  %5986 = vmatmul.mubr.bf16.gmra.mrb[0].mxu0 %v5910
  %v5987 = vpop.f32.mrb[0].mxu0
  %v5988 = vadd.f32 0.0, %v5987
  %v5989 = vpop.f32.mrb[0].mxu0
  %v5990 = vpop.f32.mrb[0].mxu0
  %v5991 = vadd.f32 0.0, %v5990
  %v5992 = vpop.f32.mrb[0].mxu0
  %5993 = vmatprep.mubr.bf16.mxu0 0
  %5994 = vmatmul.mubr.bf16.gmra.mrb[0].mxu0 %v5913
  %v5995 = vpop.f32.mrb[0].mxu0
  %v5996 = vadd.f32 0.0, %v5995
  %v5997 = vpop.f32.mrb[0].mxu0
  %v5998 = vpop.f32.mrb[0].mxu0
  %v5999 = vadd.f32 0.0, %v5998
  %v6000 = vpop.f32.mrb[0].mxu0
  %6001 = vmatprep.mubr.bf16.mxu0 0
  %6002 = vmatmul.mubr.bf16.gmra.mrb[0].mxu0 %v5916
  %v6003 = vpop.f32.mrb[0].mxu0
  %v6004 = vadd.f32 0.0, %v6003
  %v6005 = vpop.f32.mrb[0].mxu0
  %v6006 = vpop.f32.mrb[0].mxu0
  %v6007 = vadd.f32 0.0, %v6006
  %v6008 = vpop.f32.mrb[0].mxu0
  %6009 = vmatprep.mubr.bf16.mxu0 0
  %6010 = vmatmul.mubr.bf16.gmra.mrb[0].mxu0 %v5919
  %v6011 = vpop.f32.mrb[0].mxu0
  %v6012 = vadd.f32 0.0, %v6011
  %v6013 = vpop.f32.mrb[0].mxu0
  %v6014 = vpop.f32.mrb[0].mxu0
  %v6015 = vadd.f32 0.0, %v6014
  %v6016 = vpop.f32.mrb[0].mxu0
  %6017 = vdwg.mxu0
  %v6018 = vadd.f32 %v5728, %v5956
  %v6019 = vadd.f32 %v5729, %v5959
  %v6020 = vadd.f32 %v5730, %v5964
  %v6021 = vadd.f32 %v5731, %v5967
  %v6022 = vadd.f32 %v5732, %v5972
  %v6023 = vadd.f32 %v5733, %v5975
  %v6024 = vadd.f32 %v5734, %v5980
  %v6025 = vadd.f32 %v5735, %v5983
  %v6026 = vadd.f32 %v5736, %v5988
  %v6027 = vadd.f32 %v5737, %v5991
  %v6028 = vadd.f32 %v5738, %v5996
  %v6029 = vadd.f32 %v5739, %v5999
  %v6030 = vadd.f32 %v5740, %v6004
  %v6031 = vadd.f32 %v5741, %v6007
  %v6032 = vadd.f32 %v5742, %v6012
  %v6033 = vadd.f32 %v5743, %v6015
  %v6034 = vld [vmem:[%s5099 + $0x4] sm:$0x3]
  %v6035 = vld [vmem:[%s5099 + $0xc] sm:$0x3]
  %v6036 = vld [vmem:[%s5099 + $0x14] sm:$0x3]
  %v6037 = vld [vmem:[%s5099 + $0x1c] sm:$0x3]
  %v6038 = vld [vmem:[%s5099 + $0x24] sm:$0x3]
  %v6039 = vld [vmem:[%s5099 + $0x2c] sm:$0x3]
  %v6040 = vld [vmem:[%s5099 + $0x34] sm:$0x3]
  %v6041 = vld [vmem:[%s5099 + $0x3c] sm:$0x3]
  %v6042 = vld [vmem:[%s5099 + $0x64] sm:$0x3]
  %v6043 = vld [vmem:[%s5099 + $0x6c] sm:$0x3]
  %v6044 = vld [vmem:[%s5099 + $0x74] sm:$0x3]
  %v6045 = vld [vmem:[%s5099 + $0x7c] sm:$0x3]
  %v6046 = vld [vmem:[%s5099 + $0x84] sm:$0x3]
  %v6047 = vld [vmem:[%s5099 + $0x8c] sm:$0x3]
  %v6048 = vld [vmem:[%s5099 + $0x94] sm:$0x3]
  %v6049 = vld [vmem:[%s5099 + $0x9c] sm:$0x3]
  %v6051 = vshrl.u32 %v5744, 16
  %v6053 = vrot.slane %v6051, 5
  %v6054 = vshll.u32 %v5744, 16
  %v6056 = vrot.slane %v6054, 6
  %v6057 = vor.u32 %v6053, %v6056
  %v6058 = vrot.slane %v6057, 4
  %v6060 = vshrl.u32 %v6034, 16
  %v6062 = vrot.slane %v6060, 5
  %v6063 = vshll.u32 %v6034, 16
  %v6065 = vrot.slane %v6063, 6
  %v6066 = vor.u32 %v6062, %v6065
  %v6067 = vsel %vm925, %v6058, %v6066
  %v6069 = vshrl.u32 %v5745, 16
  %v6071 = vrot.slane %v6069, 5
  %v6072 = vshll.u32 %v5745, 16
  %v6074 = vrot.slane %v6072, 6
  %v6075 = vor.u32 %v6071, %v6074
  %v6076 = vrot.slane %v6075, 4
  %v6078 = vshrl.u32 %v6035, 16
  %v6080 = vrot.slane %v6078, 5
  %v6081 = vshll.u32 %v6035, 16
  %v6083 = vrot.slane %v6081, 6
  %v6084 = vor.u32 %v6080, %v6083
  %v6085 = vsel %vm925, %v6076, %v6084
  %v6087 = vshrl.u32 %v5746, 16
  %v6089 = vrot.slane %v6087, 5
  %v6090 = vshll.u32 %v5746, 16
  %v6092 = vrot.slane %v6090, 6
  %v6093 = vor.u32 %v6089, %v6092
  %v6094 = vrot.slane %v6093, 4
  %v6096 = vshrl.u32 %v6036, 16
  %v6098 = vrot.slane %v6096, 5
  %v6099 = vshll.u32 %v6036, 16
  %v6101 = vrot.slane %v6099, 6
  %v6102 = vor.u32 %v6098, %v6101
  %v6103 = vsel %vm925, %v6094, %v6102
  %v6105 = vshrl.u32 %v5747, 16
  %v6107 = vrot.slane %v6105, 5
  %v6108 = vshll.u32 %v5747, 16
  %v6110 = vrot.slane %v6108, 6
  %v6111 = vor.u32 %v6107, %v6110
  %v6112 = vrot.slane %v6111, 4
  %v6114 = vshrl.u32 %v6037, 16
  %v6116 = vrot.slane %v6114, 5
  %v6117 = vshll.u32 %v6037, 16
  %v6119 = vrot.slane %v6117, 6
  %v6120 = vor.u32 %v6116, %v6119
  %v6121 = vsel %vm925, %v6112, %v6120
  %v6123 = vshrl.u32 %v5748, 16
  %v6125 = vrot.slane %v6123, 5
  %v6126 = vshll.u32 %v5748, 16
  %v6128 = vrot.slane %v6126, 6
  %v6129 = vor.u32 %v6125, %v6128
  %v6130 = vrot.slane %v6129, 4
  %v6132 = vshrl.u32 %v6038, 16
  %v6134 = vrot.slane %v6132, 5
  %v6135 = vshll.u32 %v6038, 16
  %v6137 = vrot.slane %v6135, 6
  %v6138 = vor.u32 %v6134, %v6137
  %v6139 = vsel %vm925, %v6130, %v6138
  %v6141 = vshrl.u32 %v5749, 16
  %v6143 = vrot.slane %v6141, 5
  %v6144 = vshll.u32 %v5749, 16
  %v6146 = vrot.slane %v6144, 6
  %v6147 = vor.u32 %v6143, %v6146
  %v6148 = vrot.slane %v6147, 4
  %v6150 = vshrl.u32 %v6039, 16
  %v6152 = vrot.slane %v6150, 5
  %v6153 = vshll.u32 %v6039, 16
  %v6155 = vrot.slane %v6153, 6
  %v6156 = vor.u32 %v6152, %v6155
  %v6157 = vsel %vm925, %v6148, %v6156
  %v6159 = vshrl.u32 %v5750, 16
  %v6161 = vrot.slane %v6159, 5
  %v6162 = vshll.u32 %v5750, 16
  %v6164 = vrot.slane %v6162, 6
  %v6165 = vor.u32 %v6161, %v6164
  %v6166 = vrot.slane %v6165, 4
  %v6168 = vshrl.u32 %v6040, 16
  %v6170 = vrot.slane %v6168, 5
  %v6171 = vshll.u32 %v6040, 16
  %v6173 = vrot.slane %v6171, 6
  %v6174 = vor.u32 %v6170, %v6173
  %v6175 = vsel %vm925, %v6166, %v6174
  %v6177 = vshrl.u32 %v5751, 16
  %v6179 = vrot.slane %v6177, 5
  %v6180 = vshll.u32 %v5751, 16
  %v6182 = vrot.slane %v6180, 6
  %v6183 = vor.u32 %v6179, %v6182
  %v6184 = vrot.slane %v6183, 4
  %v6186 = vshrl.u32 %v6041, 16
  %v6188 = vrot.slane %v6186, 5
  %v6189 = vshll.u32 %v6041, 16
  %v6191 = vrot.slane %v6189, 6
  %v6192 = vor.u32 %v6188, %v6191
  %v6193 = vsel %vm925, %v6184, %v6192
  %v6195 = vshrl.u32 %v5752, 16
  %v6197 = vrot.slane %v6195, 5
  %v6198 = vshll.u32 %v5752, 16
  %v6200 = vrot.slane %v6198, 6
  %v6201 = vor.u32 %v6197, %v6200
  %v6202 = vrot.slane %v6201, 4
  %v6204 = vshrl.u32 %v6042, 16
  %v6206 = vrot.slane %v6204, 5
  %v6207 = vshll.u32 %v6042, 16
  %v6209 = vrot.slane %v6207, 6
  %v6210 = vor.u32 %v6206, %v6209
  %v6211 = vsel %vm925, %v6202, %v6210
  %v6213 = vshrl.u32 %v5753, 16
  %v6215 = vrot.slane %v6213, 5
  %v6216 = vshll.u32 %v5753, 16
  %v6218 = vrot.slane %v6216, 6
  %v6219 = vor.u32 %v6215, %v6218
  %v6220 = vrot.slane %v6219, 4
  %v6222 = vshrl.u32 %v6043, 16
  %v6224 = vrot.slane %v6222, 5
  %v6225 = vshll.u32 %v6043, 16
  %v6227 = vrot.slane %v6225, 6
  %v6228 = vor.u32 %v6224, %v6227
  %v6229 = vsel %vm925, %v6220, %v6228
  %v6231 = vshrl.u32 %v5754, 16
  %v6233 = vrot.slane %v6231, 5
  %v6234 = vshll.u32 %v5754, 16
  %v6236 = vrot.slane %v6234, 6
  %v6237 = vor.u32 %v6233, %v6236
  %v6238 = vrot.slane %v6237, 4
  %v6240 = vshrl.u32 %v6044, 16
  %v6242 = vrot.slane %v6240, 5
  %v6243 = vshll.u32 %v6044, 16
  %v6245 = vrot.slane %v6243, 6
  %v6246 = vor.u32 %v6242, %v6245
  %v6247 = vsel %vm925, %v6238, %v6246
  %v6249 = vshrl.u32 %v5755, 16
  %v6251 = vrot.slane %v6249, 5
  %v6252 = vshll.u32 %v5755, 16
  %v6254 = vrot.slane %v6252, 6
  %v6255 = vor.u32 %v6251, %v6254
  %v6256 = vrot.slane %v6255, 4
  %v6258 = vshrl.u32 %v6045, 16
  %v6260 = vrot.slane %v6258, 5
  %v6261 = vshll.u32 %v6045, 16
  %v6263 = vrot.slane %v6261, 6
  %v6264 = vor.u32 %v6260, %v6263
  %v6265 = vsel %vm925, %v6256, %v6264
  %v6267 = vshrl.u32 %v5756, 16
  %v6269 = vrot.slane %v6267, 5
  %v6270 = vshll.u32 %v5756, 16
  %v6272 = vrot.slane %v6270, 6
  %v6273 = vor.u32 %v6269, %v6272
  %v6274 = vrot.slane %v6273, 4
  %v6276 = vshrl.u32 %v6046, 16
  %v6278 = vrot.slane %v6276, 5
  %v6279 = vshll.u32 %v6046, 16
  %v6281 = vrot.slane %v6279, 6
  %v6282 = vor.u32 %v6278, %v6281
  %v6283 = vsel %vm925, %v6274, %v6282
  %v6285 = vshrl.u32 %v5757, 16
  %v6287 = vrot.slane %v6285, 5
  %v6288 = vshll.u32 %v5757, 16
  %v6290 = vrot.slane %v6288, 6
  %v6291 = vor.u32 %v6287, %v6290
  %v6292 = vrot.slane %v6291, 4
  %v6294 = vshrl.u32 %v6047, 16
  %v6296 = vrot.slane %v6294, 5
  %v6297 = vshll.u32 %v6047, 16
  %v6299 = vrot.slane %v6297, 6
  %v6300 = vor.u32 %v6296, %v6299
  %v6301 = vsel %vm925, %v6292, %v6300
  %v6303 = vshrl.u32 %v5758, 16
  %v6305 = vrot.slane %v6303, 5
  %v6306 = vshll.u32 %v5758, 16
  %v6308 = vrot.slane %v6306, 6
  %v6309 = vor.u32 %v6305, %v6308
  %v6310 = vrot.slane %v6309, 4
  %v6312 = vshrl.u32 %v6048, 16
  %v6314 = vrot.slane %v6312, 5
  %v6315 = vshll.u32 %v6048, 16
  %v6317 = vrot.slane %v6315, 6
  %v6318 = vor.u32 %v6314, %v6317
  %v6319 = vsel %vm925, %v6310, %v6318
  %v6321 = vshrl.u32 %v5759, 16
  %v6323 = vrot.slane %v6321, 5
  %v6324 = vshll.u32 %v5759, 16
  %v6326 = vrot.slane %v6324, 6
  %v6327 = vor.u32 %v6323, %v6326
  %v6328 = vrot.slane %v6327, 4
  %v6330 = vshrl.u32 %v6049, 16
  %v6332 = vrot.slane %v6330, 5
  %v6333 = vshll.u32 %v6049, 16
  %v6335 = vrot.slane %v6333, 6
  %v6336 = vor.u32 %v6332, %v6335
  %v6337 = vsel %vm925, %v6328, %v6336
  %s6338 = scalar_lea.vmem %s1, 288
  %v6339 = vld [vmem:[%s6338] sm:$0xf]
  %v6340 = vld [vmem:[%s6338 + $0x4] sm:$0xf]
  %v6341 = vld [vmem:[%s6338 + $0x8] sm:$0xf]
  %v6342 = vld [vmem:[%s6338 + $0xc] sm:$0xf]
  %v6343 = vunpack.c.l.b16 %v6067
  %v6344 = vunpack.c.l.b16 %v6085
  %v6345 = vunpack.c.l.b16 %v6103
  %v6346 = vunpack.c.l.b16 %v6121
  %v6347 = vunpack.c.l.b16 %v6139
  %v6348 = vunpack.c.l.b16 %v6157
  %v6349 = vunpack.c.l.b16 %v6175
  %v6350 = vunpack.c.l.b16 %v6193
  %v6351 = vunpack.c.l.b16 %v6211
  %v6352 = vunpack.c.l.b16 %v6229
  %v6353 = vunpack.c.l.b16 %v6247
  %v6354 = vunpack.c.l.b16 %v6265
  %v6355 = vunpack.c.l.b16 %v6283
  %v6356 = vunpack.c.l.b16 %v6301
  %v6357 = vunpack.c.l.b16 %v6319
  %v6358 = vunpack.c.l.b16 %v6337
  %v6359 = vpack.c.b16 %v6344, %v6343
  %v6360 = vpack.c.b16 %v6346, %v6345
  %v6361 = vpack.c.b16 %v6348, %v6347
  %v6362 = vpack.c.b16 %v6350, %v6349
  %v6363 = vpack.c.b16 %v6352, %v6351
  %v6364 = vpack.c.b16 %v6354, %v6353
  %v6365 = vpack.c.b16 %v6356, %v6355
  %v6366 = vpack.c.b16 %v6358, %v6357
  %v6371 = vunpack.c.l.b16 %v6339
  %v6372 = vunpack.c.l.b16 %v6340
  %v6373 = vunpack.c.l.b16 %v6341
  %v6374 = vunpack.c.l.b16 %v6342
  %v6375 = vpack.c.b16 %v6372, %v6371
  %v6376 = vpack.c.b16 %v6374, %v6373
  %v6380 = vsel %vm319, %v6359, 0
  %v6383 = vsel %vm319, %v6360, 0
  %v6386 = vsel %vm319, %v6361, 0
  %v6389 = vsel %vm319, %v6362, 0
  %v6392 = vsel %vm319, %v6363, 0
  %v6395 = vsel %vm319, %v6364, 0
  %v6398 = vsel %vm319, %v6365, 0
  %v6401 = vsel %vm319, %v6366, 0
  %6403 = vmatprep.subr.bf16.mxu0 0
  %6404 = vmatpush1.bf16.msra.mxu0 %v6375
  %6405 = vmatprep.subr.bf16.mxu0 0
  %6406 = vmatpush1.bf16.msra.mxu0 %v6376
  %6407 = vmatprep.subr.bf16.mxu0 0
  %6408 = vmatpush1.bf16.msra.mxu0 0
  %6409 = vmatprep.subr.bf16.mxu0 0
  %6410 = vmatpush1.bf16.msra.mxu0 0
  %6411 = vmatprep.subr.bf16.mxu0 0
  %6412 = vmatpush1.bf16.msra.mxu0 0
  %6413 = vmatprep.subr.bf16.mxu0 0
  %6414 = vmatpush1.bf16.msra.mxu0 0
  %6415 = vmatprep.subr.bf16.mxu0 0
  %6416 = vmatpush1.bf16.msra.mxu0 0
  %6417 = vmatprep.subr.bf16.mxu0 0
  %6418 = vmatpush1.bf16.msra.mxu0 0
  %6419 = vmatprep.subr.bf16.mxu0 0
  %6420 = vmatpush1.bf16.msra.mxu0 0
  %6421 = vmatprep.subr.bf16.mxu0 0
  %6422 = vmatpush1.bf16.msra.mxu0 0
  %6423 = vmatprep.subr.bf16.mxu0 0
  %6424 = vmatpush1.bf16.msra.mxu0 0
  %6425 = vmatprep.subr.bf16.mxu0 0
  %6426 = vmatpush1.bf16.msra.mxu0 0
  %6427 = vmatprep.subr.bf16.mxu0 0
  %6428 = vmatpush1.bf16.msra.mxu0 0
  %6429 = vmatprep.subr.bf16.mxu0 0
  %6430 = vmatpush1.bf16.msra.mxu0 0
  %6431 = vmatprep.subr.bf16.mxu0 0
  %6432 = vmatpush1.bf16.msra.mxu0 0
  %6433 = vmatprep.subr.bf16.mxu0 0
  %6434 = vmatpush1.bf16.msra.mxu0 0
  %6435 = vmatprep.mubr.bf16.mxu0 0
  %6436 = vmatmul.mubr.bf16.gmra.mrb[0].mxu0 %v6380
  %v6437 = vpop.f32.mrb[0].mxu0
  %v6438 = vadd.f32 0.0, %v6437
  %v6439 = vpop.f32.mrb[0].mxu0
  %v6440 = vpop.f32.mrb[0].mxu0
  %v6441 = vadd.f32 0.0, %v6440
  %v6442 = vpop.f32.mrb[0].mxu0
  %6443 = vmatprep.mubr.bf16.mxu0 0
  %6444 = vmatmul.mubr.bf16.gmra.mrb[0].mxu0 %v6383
  %v6445 = vpop.f32.mrb[0].mxu0
  %v6446 = vadd.f32 0.0, %v6445
  %v6447 = vpop.f32.mrb[0].mxu0
  %v6448 = vpop.f32.mrb[0].mxu0
  %v6449 = vadd.f32 0.0, %v6448
  %v6450 = vpop.f32.mrb[0].mxu0
  %6451 = vmatprep.mubr.bf16.mxu0 0
  %6452 = vmatmul.mubr.bf16.gmra.mrb[0].mxu0 %v6386
  %v6453 = vpop.f32.mrb[0].mxu0
  %v6454 = vadd.f32 0.0, %v6453
  %v6455 = vpop.f32.mrb[0].mxu0
  %v6456 = vpop.f32.mrb[0].mxu0
  %v6457 = vadd.f32 0.0, %v6456
  %v6458 = vpop.f32.mrb[0].mxu0
  %6459 = vmatprep.mubr.bf16.mxu0 0
  %6460 = vmatmul.mubr.bf16.gmra.mrb[0].mxu0 %v6389
  %v6461 = vpop.f32.mrb[0].mxu0
  %v6462 = vadd.f32 0.0, %v6461
  %v6463 = vpop.f32.mrb[0].mxu0
  %v6464 = vpop.f32.mrb[0].mxu0
  %v6465 = vadd.f32 0.0, %v6464
  %v6466 = vpop.f32.mrb[0].mxu0
  %6467 = vmatprep.mubr.bf16.mxu0 0
  %6468 = vmatmul.mubr.bf16.gmra.mrb[0].mxu0 %v6392
  %v6469 = vpop.f32.mrb[0].mxu0
  %v6470 = vadd.f32 0.0, %v6469
  %v6471 = vpop.f32.mrb[0].mxu0
  %v6472 = vpop.f32.mrb[0].mxu0
  %v6473 = vadd.f32 0.0, %v6472
  %v6474 = vpop.f32.mrb[0].mxu0
  %6475 = vmatprep.mubr.bf16.mxu0 0
  %6476 = vmatmul.mubr.bf16.gmra.mrb[0].mxu0 %v6395
  %v6477 = vpop.f32.mrb[0].mxu0
  %v6478 = vadd.f32 0.0, %v6477
  %v6479 = vpop.f32.mrb[0].mxu0
  %v6480 = vpop.f32.mrb[0].mxu0
  %v6481 = vadd.f32 0.0, %v6480
  %v6482 = vpop.f32.mrb[0].mxu0
  %6483 = vmatprep.mubr.bf16.mxu0 0
  %6484 = vmatmul.mubr.bf16.gmra.mrb[0].mxu0 %v6398
  %v6485 = vpop.f32.mrb[0].mxu0
  %v6486 = vadd.f32 0.0, %v6485
  %v6487 = vpop.f32.mrb[0].mxu0
  %v6488 = vpop.f32.mrb[0].mxu0
  %v6489 = vadd.f32 0.0, %v6488
  %v6490 = vpop.f32.mrb[0].mxu0
  %6491 = vmatprep.mubr.bf16.mxu0 0
  %6492 = vmatmul.mubr.bf16.gmra.mrb[0].mxu0 %v6401
  %v6493 = vpop.f32.mrb[0].mxu0
  %v6494 = vadd.f32 0.0, %v6493
  %v6495 = vpop.f32.mrb[0].mxu0
  %v6496 = vpop.f32.mrb[0].mxu0
  %v6497 = vadd.f32 0.0, %v6496
  %v6498 = vpop.f32.mrb[0].mxu0
  %6499 = vdwg.mxu0
  %v6500 = vadd.f32 %v6018, %v6438
  %v6501 = vadd.f32 %v6019, %v6441
  %v6502 = vadd.f32 %v6020, %v6446
  %v6503 = vadd.f32 %v6021, %v6449
  %v6504 = vadd.f32 %v6022, %v6454
  %v6505 = vadd.f32 %v6023, %v6457
  %v6506 = vadd.f32 %v6024, %v6462
  %v6507 = vadd.f32 %v6025, %v6465
  %v6508 = vadd.f32 %v6026, %v6470
  %v6509 = vadd.f32 %v6027, %v6473
  %v6510 = vadd.f32 %v6028, %v6478
  %v6511 = vadd.f32 %v6029, %v6481
  %v6512 = vadd.f32 %v6030, %v6486
  %v6513 = vadd.f32 %v6031, %v6489
  %v6514 = vadd.f32 %v6032, %v6494
  %v6515 = vadd.f32 %v6033, %v6497
  %v6516 = vld [vmem:[%s5099] sm:$0xc]
  %v6517 = vld [vmem:[%s5099 + $0x8] sm:$0xc]
  %v6518 = vld [vmem:[%s5099 + $0x10] sm:$0xc]
  %v6519 = vld [vmem:[%s5099 + $0x18] sm:$0xc]
  %v6520 = vld [vmem:[%s5099 + $0x20] sm:$0xc]
  %v6521 = vld [vmem:[%s5099 + $0x28] sm:$0xc]
  %v6522 = vld [vmem:[%s5099 + $0x30] sm:$0xc]
  %v6523 = vld [vmem:[%s5099 + $0x38] sm:$0xc]
  %v6524 = vld [vmem:[%s5099 + $0x60] sm:$0xc]
  %v6525 = vld [vmem:[%s5099 + $0x68] sm:$0xc]
  %v6526 = vld [vmem:[%s5099 + $0x70] sm:$0xc]
  %v6527 = vld [vmem:[%s5099 + $0x78] sm:$0xc]
  %v6528 = vld [vmem:[%s5099 + $0x80] sm:$0xc]
  %v6529 = vld [vmem:[%s5099 + $0x88] sm:$0xc]
  %v6530 = vld [vmem:[%s5099 + $0x90] sm:$0xc]
  %v6531 = vld [vmem:[%s5099 + $0x98] sm:$0xc]
  %v6564 = vrot.slane %v6516, 6
  %v6565 = vrot.slane %v6564, 4
  %v6566 = vrot.slane %v6034, 6
  %v6567 = vsel %vm1442, %v6565, %v6566
  %v6568 = vrot.slane %v6517, 6
  %v6569 = vrot.slane %v6568, 4
  %v6570 = vrot.slane %v6035, 6
  %v6571 = vsel %vm1442, %v6569, %v6570
  %v6572 = vrot.slane %v6518, 6
  %v6573 = vrot.slane %v6572, 4
  %v6574 = vrot.slane %v6036, 6
  %v6575 = vsel %vm1442, %v6573, %v6574
  %v6576 = vrot.slane %v6519, 6
  %v6577 = vrot.slane %v6576, 4
  %v6578 = vrot.slane %v6037, 6
  %v6579 = vsel %vm1442, %v6577, %v6578
  %v6580 = vrot.slane %v6520, 6
  %v6581 = vrot.slane %v6580, 4
  %v6582 = vrot.slane %v6038, 6
  %v6583 = vsel %vm1442, %v6581, %v6582
  %v6584 = vrot.slane %v6521, 6
  %v6585 = vrot.slane %v6584, 4
  %v6586 = vrot.slane %v6039, 6
  %v6587 = vsel %vm1442, %v6585, %v6586
  %v6588 = vrot.slane %v6522, 6
  %v6589 = vrot.slane %v6588, 4
  %v6590 = vrot.slane %v6040, 6
  %v6591 = vsel %vm1442, %v6589, %v6590
  %v6592 = vrot.slane %v6523, 6
  %v6593 = vrot.slane %v6592, 4
  %v6594 = vrot.slane %v6041, 6
  %v6595 = vsel %vm1442, %v6593, %v6594
  %v6596 = vrot.slane %v6524, 6
  %v6597 = vrot.slane %v6596, 4
  %v6598 = vrot.slane %v6042, 6
  %v6599 = vsel %vm1442, %v6597, %v6598
  %v6600 = vrot.slane %v6525, 6
  %v6601 = vrot.slane %v6600, 4
  %v6602 = vrot.slane %v6043, 6
  %v6603 = vsel %vm1442, %v6601, %v6602
  %v6604 = vrot.slane %v6526, 6
  %v6605 = vrot.slane %v6604, 4
  %v6606 = vrot.slane %v6044, 6
  %v6607 = vsel %vm1442, %v6605, %v6606
  %v6608 = vrot.slane %v6527, 6
  %v6609 = vrot.slane %v6608, 4
  %v6610 = vrot.slane %v6045, 6
  %v6611 = vsel %vm1442, %v6609, %v6610
  %v6612 = vrot.slane %v6528, 6
  %v6613 = vrot.slane %v6612, 4
  %v6614 = vrot.slane %v6046, 6
  %v6615 = vsel %vm1442, %v6613, %v6614
  %v6616 = vrot.slane %v6529, 6
  %v6617 = vrot.slane %v6616, 4
  %v6618 = vrot.slane %v6047, 6
  %v6619 = vsel %vm1442, %v6617, %v6618
  %v6620 = vrot.slane %v6530, 6
  %v6621 = vrot.slane %v6620, 4
  %v6622 = vrot.slane %v6048, 6
  %v6623 = vsel %vm1442, %v6621, %v6622
  %v6624 = vrot.slane %v6531, 6
  %v6625 = vrot.slane %v6624, 4
  %v6626 = vrot.slane %v6049, 6
  %v6627 = vsel %vm1442, %v6625, %v6626
  %s6628 = scalar_lea.vmem %s1, 304
  %v6629 = vld [vmem:[%s6628] sm:$0xf]
  %v6630 = vld [vmem:[%s6628 + $0x4] sm:$0xf]
  %v6631 = vld [vmem:[%s6628 + $0x8] sm:$0xf]
  %v6632 = vld [vmem:[%s6628 + $0xc] sm:$0xf]
  %v6633 = vunpack.c.l.b16 %v6567
  %v6634 = vunpack.c.l.b16 %v6571
  %v6635 = vunpack.c.l.b16 %v6575
  %v6636 = vunpack.c.l.b16 %v6579
  %v6637 = vunpack.c.l.b16 %v6583
  %v6638 = vunpack.c.l.b16 %v6587
  %v6639 = vunpack.c.l.b16 %v6591
  %v6640 = vunpack.c.l.b16 %v6595
  %v6641 = vunpack.c.l.b16 %v6599
  %v6642 = vunpack.c.l.b16 %v6603
  %v6643 = vunpack.c.l.b16 %v6607
  %v6644 = vunpack.c.l.b16 %v6611
  %v6645 = vunpack.c.l.b16 %v6615
  %v6646 = vunpack.c.l.b16 %v6619
  %v6647 = vunpack.c.l.b16 %v6623
  %v6648 = vunpack.c.l.b16 %v6627
  %v6649 = vpack.c.b16 %v6634, %v6633
  %v6650 = vpack.c.b16 %v6636, %v6635
  %v6651 = vpack.c.b16 %v6638, %v6637
  %v6652 = vpack.c.b16 %v6640, %v6639
  %v6653 = vpack.c.b16 %v6642, %v6641
  %v6654 = vpack.c.b16 %v6644, %v6643
  %v6655 = vpack.c.b16 %v6646, %v6645
  %v6656 = vpack.c.b16 %v6648, %v6647
  %v6661 = vunpack.c.l.b16 %v6629
  %v6662 = vunpack.c.l.b16 %v6630
  %v6663 = vunpack.c.l.b16 %v6631
  %v6664 = vunpack.c.l.b16 %v6632
  %v6665 = vpack.c.b16 %v6662, %v6661
  %v6666 = vpack.c.b16 %v6664, %v6663
  %v6670 = vsel %vm319, %v6649, 0
  %v6673 = vsel %vm319, %v6650, 0
  %v6676 = vsel %vm319, %v6651, 0
  %v6679 = vsel %vm319, %v6652, 0
  %v6682 = vsel %vm319, %v6653, 0
  %v6685 = vsel %vm319, %v6654, 0
  %v6688 = vsel %vm319, %v6655, 0
  %v6691 = vsel %vm319, %v6656, 0
  %6693 = vmatprep.subr.bf16.mxu0 0
  %6694 = vmatpush1.bf16.msra.mxu0 %v6665
  %6695 = vmatprep.subr.bf16.mxu0 0
  %6696 = vmatpush1.bf16.msra.mxu0 %v6666
  %6697 = vmatprep.subr.bf16.mxu0 0
  %6698 = vmatpush1.bf16.msra.mxu0 0
  %6699 = vmatprep.subr.bf16.mxu0 0
  %6700 = vmatpush1.bf16.msra.mxu0 0
  %6701 = vmatprep.subr.bf16.mxu0 0
  %6702 = vmatpush1.bf16.msra.mxu0 0
  %6703 = vmatprep.subr.bf16.mxu0 0
  %6704 = vmatpush1.bf16.msra.mxu0 0
  %6705 = vmatprep.subr.bf16.mxu0 0
  %6706 = vmatpush1.bf16.msra.mxu0 0
  %6707 = vmatprep.subr.bf16.mxu0 0
  %6708 = vmatpush1.bf16.msra.mxu0 0
  %6709 = vmatprep.subr.bf16.mxu0 0
  %6710 = vmatpush1.bf16.msra.mxu0 0
  %6711 = vmatprep.subr.bf16.mxu0 0
  %6712 = vmatpush1.bf16.msra.mxu0 0
  %6713 = vmatprep.subr.bf16.mxu0 0
  %6714 = vmatpush1.bf16.msra.mxu0 0
  %6715 = vmatprep.subr.bf16.mxu0 0
  %6716 = vmatpush1.bf16.msra.mxu0 0
  %6717 = vmatprep.subr.bf16.mxu0 0
  %6718 = vmatpush1.bf16.msra.mxu0 0
  %6719 = vmatprep.subr.bf16.mxu0 0
  %6720 = vmatpush1.bf16.msra.mxu0 0
  %6721 = vmatprep.subr.bf16.mxu0 0
  %6722 = vmatpush1.bf16.msra.mxu0 0
  %6723 = vmatprep.subr.bf16.mxu0 0
  %6724 = vmatpush1.bf16.msra.mxu0 0
  %6725 = vmatprep.mubr.bf16.mxu0 0
  %6726 = vmatmul.mubr.bf16.gmra.mrb[0].mxu0 %v6670
  %v6727 = vpop.f32.mrb[0].mxu0
  %v6728 = vadd.f32 0.0, %v6727
  %v6729 = vpop.f32.mrb[0].mxu0
  %v6730 = vpop.f32.mrb[0].mxu0
  %v6731 = vadd.f32 0.0, %v6730
  %v6732 = vpop.f32.mrb[0].mxu0
  %6733 = vmatprep.mubr.bf16.mxu0 0
  %6734 = vmatmul.mubr.bf16.gmra.mrb[0].mxu0 %v6673
  %v6735 = vpop.f32.mrb[0].mxu0
  %v6736 = vadd.f32 0.0, %v6735
  %v6737 = vpop.f32.mrb[0].mxu0
  %v6738 = vpop.f32.mrb[0].mxu0
  %v6739 = vadd.f32 0.0, %v6738
  %v6740 = vpop.f32.mrb[0].mxu0
  %6741 = vmatprep.mubr.bf16.mxu0 0
  %6742 = vmatmul.mubr.bf16.gmra.mrb[0].mxu0 %v6676
  %v6743 = vpop.f32.mrb[0].mxu0
  %v6744 = vadd.f32 0.0, %v6743
  %v6745 = vpop.f32.mrb[0].mxu0
  %v6746 = vpop.f32.mrb[0].mxu0
  %v6747 = vadd.f32 0.0, %v6746
  %v6748 = vpop.f32.mrb[0].mxu0
  %6749 = vmatprep.mubr.bf16.mxu0 0
  %6750 = vmatmul.mubr.bf16.gmra.mrb[0].mxu0 %v6679
  %v6751 = vpop.f32.mrb[0].mxu0
  %v6752 = vadd.f32 0.0, %v6751
  %v6753 = vpop.f32.mrb[0].mxu0
  %v6754 = vpop.f32.mrb[0].mxu0
  %v6755 = vadd.f32 0.0, %v6754
  %v6756 = vpop.f32.mrb[0].mxu0
  %6757 = vmatprep.mubr.bf16.mxu0 0
  %6758 = vmatmul.mubr.bf16.gmra.mrb[0].mxu0 %v6682
  %v6759 = vpop.f32.mrb[0].mxu0
  %v6760 = vadd.f32 0.0, %v6759
  %v6761 = vpop.f32.mrb[0].mxu0
  %v6762 = vpop.f32.mrb[0].mxu0
  %v6763 = vadd.f32 0.0, %v6762
  %v6764 = vpop.f32.mrb[0].mxu0
  %6765 = vmatprep.mubr.bf16.mxu0 0
  %6766 = vmatmul.mubr.bf16.gmra.mrb[0].mxu0 %v6685
  %v6767 = vpop.f32.mrb[0].mxu0
  %v6768 = vadd.f32 0.0, %v6767
  %v6769 = vpop.f32.mrb[0].mxu0
  %v6770 = vpop.f32.mrb[0].mxu0
  %v6771 = vadd.f32 0.0, %v6770
  %v6772 = vpop.f32.mrb[0].mxu0
  %6773 = vmatprep.mubr.bf16.mxu0 0
  %6774 = vmatmul.mubr.bf16.gmra.mrb[0].mxu0 %v6688
  %v6775 = vpop.f32.mrb[0].mxu0
  %v6776 = vadd.f32 0.0, %v6775
  %v6777 = vpop.f32.mrb[0].mxu0
  %v6778 = vpop.f32.mrb[0].mxu0
  %v6779 = vadd.f32 0.0, %v6778
  %v6780 = vpop.f32.mrb[0].mxu0
  %6781 = vmatprep.mubr.bf16.mxu0 0
  %6782 = vmatmul.mubr.bf16.gmra.mrb[0].mxu0 %v6691
  %v6783 = vpop.f32.mrb[0].mxu0
  %v6784 = vadd.f32 0.0, %v6783
  %v6785 = vpop.f32.mrb[0].mxu0
  %v6786 = vpop.f32.mrb[0].mxu0
  %v6787 = vadd.f32 0.0, %v6786
  %v6788 = vpop.f32.mrb[0].mxu0
  %6789 = vdwg.mxu0
  %v6790 = vadd.f32 %v6500, %v6728
  %v6791 = vadd.f32 %v6501, %v6731
  %v6792 = vadd.f32 %v6502, %v6736
  %v6793 = vadd.f32 %v6503, %v6739
  %v6794 = vadd.f32 %v6504, %v6744
  %v6795 = vadd.f32 %v6505, %v6747
  %v6796 = vadd.f32 %v6506, %v6752
  %v6797 = vadd.f32 %v6507, %v6755
  %v6798 = vadd.f32 %v6508, %v6760
  %v6799 = vadd.f32 %v6509, %v6763
  %v6800 = vadd.f32 %v6510, %v6768
  %v6801 = vadd.f32 %v6511, %v6771
  %v6802 = vadd.f32 %v6512, %v6776
  %v6803 = vadd.f32 %v6513, %v6779
  %v6804 = vadd.f32 %v6514, %v6784
  %v6805 = vadd.f32 %v6515, %v6787
  %s6806 = scalar_lea.vmem %s0, 32
  %v6807 = vld [vmem:[%s6806] sm:$0xf]
  %v6808 = vld [vmem:[%s6806 + $0x8] sm:$0xf]
  %v6809 = vld [vmem:[%s6806 + $0x10] sm:$0xf]
  %v6810 = vld [vmem:[%s6806 + $0x18] sm:$0xf]
  %v6811 = vld [vmem:[%s6806 + $0x20] sm:$0xf]
  %v6812 = vld [vmem:[%s6806 + $0x28] sm:$0xf]
  %v6813 = vld [vmem:[%s6806 + $0x30] sm:$0xf]
  %v6814 = vld [vmem:[%s6806 + $0x38] sm:$0xf]
  %v6815 = vld [vmem:[%s6806 + $0x60] sm:$0xf]
  %v6816 = vld [vmem:[%s6806 + $0x68] sm:$0xf]
  %v6817 = vld [vmem:[%s6806 + $0x70] sm:$0xf]
  %v6818 = vld [vmem:[%s6806 + $0x78] sm:$0xf]
  %v6819 = vld [vmem:[%s6806 + $0x80] sm:$0xf]
  %v6820 = vld [vmem:[%s6806 + $0x88] sm:$0xf]
  %v6821 = vld [vmem:[%s6806 + $0x90] sm:$0xf]
  %v6822 = vld [vmem:[%s6806 + $0x98] sm:$0xf]
  %s6823 = scalar_lea.vmem %s1, 320
  %v6824 = vld [vmem:[%s6823] sm:$0xf]
  %v6825 = vld [vmem:[%s6823 + $0x4] sm:$0xf]
  %v6826 = vld [vmem:[%s6823 + $0x8] sm:$0xf]
  %v6827 = vld [vmem:[%s6823 + $0xc] sm:$0xf]
  %v6844 = vunpack.c.l.b16 %v6807
  %v6845 = vunpack.c.l.b16 %v6808
  %v6846 = vunpack.c.l.b16 %v6809
  %v6847 = vunpack.c.l.b16 %v6810
  %v6848 = vunpack.c.l.b16 %v6811
  %v6849 = vunpack.c.l.b16 %v6812
  %v6850 = vunpack.c.l.b16 %v6813
  %v6851 = vunpack.c.l.b16 %v6814
  %v6852 = vunpack.c.l.b16 %v6815
  %v6853 = vunpack.c.l.b16 %v6816
  %v6854 = vunpack.c.l.b16 %v6817
  %v6855 = vunpack.c.l.b16 %v6818
  %v6856 = vunpack.c.l.b16 %v6819
  %v6857 = vunpack.c.l.b16 %v6820
  %v6858 = vunpack.c.l.b16 %v6821
  %v6859 = vunpack.c.l.b16 %v6822
  %v6860 = vpack.c.b16 %v6845, %v6844
  %v6861 = vpack.c.b16 %v6847, %v6846
  %v6862 = vpack.c.b16 %v6849, %v6848
  %v6863 = vpack.c.b16 %v6851, %v6850
  %v6864 = vpack.c.b16 %v6853, %v6852
  %v6865 = vpack.c.b16 %v6855, %v6854
  %v6866 = vpack.c.b16 %v6857, %v6856
  %v6867 = vpack.c.b16 %v6859, %v6858
  %v6872 = vunpack.c.l.b16 %v6824
  %v6873 = vunpack.c.l.b16 %v6825
  %v6874 = vunpack.c.l.b16 %v6826
  %v6875 = vunpack.c.l.b16 %v6827
  %v6876 = vpack.c.b16 %v6873, %v6872
  %v6877 = vpack.c.b16 %v6875, %v6874
  %v6881 = vsel %vm319, %v6860, 0
  %v6884 = vsel %vm319, %v6861, 0
  %v6887 = vsel %vm319, %v6862, 0
  %v6890 = vsel %vm319, %v6863, 0
  %v6893 = vsel %vm319, %v6864, 0
  %v6896 = vsel %vm319, %v6865, 0
  %v6899 = vsel %vm319, %v6866, 0
  %v6902 = vsel %vm319, %v6867, 0
  %6904 = vmatprep.subr.bf16.mxu0 0
  %6905 = vmatpush1.bf16.msra.mxu0 %v6876
  %6906 = vmatprep.subr.bf16.mxu0 0
  %6907 = vmatpush1.bf16.msra.mxu0 %v6877
  %6908 = vmatprep.subr.bf16.mxu0 0
  %6909 = vmatpush1.bf16.msra.mxu0 0
  %6910 = vmatprep.subr.bf16.mxu0 0
  %6911 = vmatpush1.bf16.msra.mxu0 0
  %6912 = vmatprep.subr.bf16.mxu0 0
  %6913 = vmatpush1.bf16.msra.mxu0 0
  %6914 = vmatprep.subr.bf16.mxu0 0
  %6915 = vmatpush1.bf16.msra.mxu0 0
  %6916 = vmatprep.subr.bf16.mxu0 0
  %6917 = vmatpush1.bf16.msra.mxu0 0
  %6918 = vmatprep.subr.bf16.mxu0 0
  %6919 = vmatpush1.bf16.msra.mxu0 0
  %6920 = vmatprep.subr.bf16.mxu0 0
  %6921 = vmatpush1.bf16.msra.mxu0 0
  %6922 = vmatprep.subr.bf16.mxu0 0
  %6923 = vmatpush1.bf16.msra.mxu0 0
  %6924 = vmatprep.subr.bf16.mxu0 0
  %6925 = vmatpush1.bf16.msra.mxu0 0
  %6926 = vmatprep.subr.bf16.mxu0 0
  %6927 = vmatpush1.bf16.msra.mxu0 0
  %6928 = vmatprep.subr.bf16.mxu0 0
  %6929 = vmatpush1.bf16.msra.mxu0 0
  %6930 = vmatprep.subr.bf16.mxu0 0
  %6931 = vmatpush1.bf16.msra.mxu0 0
  %6932 = vmatprep.subr.bf16.mxu0 0
  %6933 = vmatpush1.bf16.msra.mxu0 0
  %6934 = vmatprep.subr.bf16.mxu0 0
  %6935 = vmatpush1.bf16.msra.mxu0 0
  %6936 = vmatprep.mubr.bf16.mxu0 0
  %6937 = vmatmul.mubr.bf16.gmra.mrb[0].mxu0 %v6881
  %v6938 = vpop.f32.mrb[0].mxu0
  %v6939 = vadd.f32 0.0, %v6938
  %v6940 = vpop.f32.mrb[0].mxu0
  %v6941 = vpop.f32.mrb[0].mxu0
  %v6942 = vadd.f32 0.0, %v6941
  %v6943 = vpop.f32.mrb[0].mxu0
  %6944 = vmatprep.mubr.bf16.mxu0 0
  %6945 = vmatmul.mubr.bf16.gmra.mrb[0].mxu0 %v6884
  %v6946 = vpop.f32.mrb[0].mxu0
  %v6947 = vadd.f32 0.0, %v6946
  %v6948 = vpop.f32.mrb[0].mxu0
  %v6949 = vpop.f32.mrb[0].mxu0
  %v6950 = vadd.f32 0.0, %v6949
  %v6951 = vpop.f32.mrb[0].mxu0
  %6952 = vmatprep.mubr.bf16.mxu0 0
  %6953 = vmatmul.mubr.bf16.gmra.mrb[0].mxu0 %v6887
  %v6954 = vpop.f32.mrb[0].mxu0
  %v6955 = vadd.f32 0.0, %v6954
  %v6956 = vpop.f32.mrb[0].mxu0
  %v6957 = vpop.f32.mrb[0].mxu0
  %v6958 = vadd.f32 0.0, %v6957
  %v6959 = vpop.f32.mrb[0].mxu0
  %6960 = vmatprep.mubr.bf16.mxu0 0
  %6961 = vmatmul.mubr.bf16.gmra.mrb[0].mxu0 %v6890
  %v6962 = vpop.f32.mrb[0].mxu0
  %v6963 = vadd.f32 0.0, %v6962
  %v6964 = vpop.f32.mrb[0].mxu0
  %v6965 = vpop.f32.mrb[0].mxu0
  %v6966 = vadd.f32 0.0, %v6965
  %v6967 = vpop.f32.mrb[0].mxu0
  %6968 = vmatprep.mubr.bf16.mxu0 0
  %6969 = vmatmul.mubr.bf16.gmra.mrb[0].mxu0 %v6893
  %v6970 = vpop.f32.mrb[0].mxu0
  %v6971 = vadd.f32 0.0, %v6970
  %v6972 = vpop.f32.mrb[0].mxu0
  %v6973 = vpop.f32.mrb[0].mxu0
  %v6974 = vadd.f32 0.0, %v6973
  %v6975 = vpop.f32.mrb[0].mxu0
  %6976 = vmatprep.mubr.bf16.mxu0 0
  %6977 = vmatmul.mubr.bf16.gmra.mrb[0].mxu0 %v6896
  %v6978 = vpop.f32.mrb[0].mxu0
  %v6979 = vadd.f32 0.0, %v6978
  %v6980 = vpop.f32.mrb[0].mxu0
  %v6981 = vpop.f32.mrb[0].mxu0
  %v6982 = vadd.f32 0.0, %v6981
  %v6983 = vpop.f32.mrb[0].mxu0
  %6984 = vmatprep.mubr.bf16.mxu0 0
  %6985 = vmatmul.mubr.bf16.gmra.mrb[0].mxu0 %v6899
  %v6986 = vpop.f32.mrb[0].mxu0
  %v6987 = vadd.f32 0.0, %v6986
  %v6988 = vpop.f32.mrb[0].mxu0
  %v6989 = vpop.f32.mrb[0].mxu0
  %v6990 = vadd.f32 0.0, %v6989
  %v6991 = vpop.f32.mrb[0].mxu0
  %6992 = vmatprep.mubr.bf16.mxu0 0
  %6993 = vmatmul.mubr.bf16.gmra.mrb[0].mxu0 %v6902
  %v6994 = vpop.f32.mrb[0].mxu0
  %v6995 = vadd.f32 0.0, %v6994
  %v6996 = vpop.f32.mrb[0].mxu0
  %v6997 = vpop.f32.mrb[0].mxu0
  %v6998 = vadd.f32 0.0, %v6997
  %v6999 = vpop.f32.mrb[0].mxu0
  %7000 = vdwg.mxu0
  %v7001 = vadd.f32 %v6790, %v6939
  %v7002 = vadd.f32 %v6791, %v6942
  %v7003 = vadd.f32 %v6792, %v6947
  %v7004 = vadd.f32 %v6793, %v6950
  %v7005 = vadd.f32 %v6794, %v6955
  %v7006 = vadd.f32 %v6795, %v6958
  %v7007 = vadd.f32 %v6796, %v6963
  %v7008 = vadd.f32 %v6797, %v6966
  %v7009 = vadd.f32 %v6798, %v6971
  %v7010 = vadd.f32 %v6799, %v6974
  %v7011 = vadd.f32 %v6800, %v6979
  %v7012 = vadd.f32 %v6801, %v6982
  %v7013 = vadd.f32 %v6802, %v6987
  %v7014 = vadd.f32 %v6803, %v6990
  %v7015 = vadd.f32 %v6804, %v6995
  %v7016 = vadd.f32 %v6805, %v6998
  %v7017 = vld [vmem:[%s6806] sm:$0xf]
  %v7018 = vld [vmem:[%s6806 + $0x4] sm:$0x1]
  %v7019 = vld [vmem:[%s6806 + $0x8] sm:$0xf]
  %v7020 = vld [vmem:[%s6806 + $0xc] sm:$0x1]
  %v7021 = vld [vmem:[%s6806 + $0x10] sm:$0xf]
  %v7022 = vld [vmem:[%s6806 + $0x14] sm:$0x1]
  %v7023 = vld [vmem:[%s6806 + $0x18] sm:$0xf]
  %v7024 = vld [vmem:[%s6806 + $0x1c] sm:$0x1]
  %v7025 = vld [vmem:[%s6806 + $0x20] sm:$0xf]
  %v7026 = vld [vmem:[%s6806 + $0x24] sm:$0x1]
  %v7027 = vld [vmem:[%s6806 + $0x28] sm:$0xf]
  %v7028 = vld [vmem:[%s6806 + $0x2c] sm:$0x1]
  %v7029 = vld [vmem:[%s6806 + $0x30] sm:$0xf]
  %v7030 = vld [vmem:[%s6806 + $0x34] sm:$0x1]
  %v7031 = vld [vmem:[%s6806 + $0x38] sm:$0xf]
  %v7032 = vld [vmem:[%s6806 + $0x3c] sm:$0x1]
  %v7033 = vld [vmem:[%s6806 + $0x60] sm:$0xf]
  %v7034 = vld [vmem:[%s6806 + $0x64] sm:$0x1]
  %v7035 = vld [vmem:[%s6806 + $0x68] sm:$0xf]
  %v7036 = vld [vmem:[%s6806 + $0x6c] sm:$0x1]
  %v7037 = vld [vmem:[%s6806 + $0x70] sm:$0xf]
  %v7038 = vld [vmem:[%s6806 + $0x74] sm:$0x1]
  %v7039 = vld [vmem:[%s6806 + $0x78] sm:$0xf]
  %v7040 = vld [vmem:[%s6806 + $0x7c] sm:$0x1]
  %v7041 = vld [vmem:[%s6806 + $0x80] sm:$0xf]
  %v7042 = vld [vmem:[%s6806 + $0x84] sm:$0x1]
  %v7043 = vld [vmem:[%s6806 + $0x88] sm:$0xf]
  %v7044 = vld [vmem:[%s6806 + $0x8c] sm:$0x1]
  %v7045 = vld [vmem:[%s6806 + $0x90] sm:$0xf]
  %v7046 = vld [vmem:[%s6806 + $0x94] sm:$0x1]
  %v7047 = vld [vmem:[%s6806 + $0x98] sm:$0xf]
  %v7048 = vld [vmem:[%s6806 + $0x9c] sm:$0x1]
  %v7050 = vshrl.u32 %v7017, 16
  %v7052 = vrot.slane %v7050, 4
  %v7053 = vshll.u32 %v7017, 16
  %v7055 = vrot.slane %v7053, 5
  %v7056 = vor.u32 %v7052, %v7055
  %v7057 = vrot.slane %v7056, 4
  %v7059 = vshll.u32 %v7018, 16
  %v7061 = vrot.slane %v7059, 5
  %v7062 = vsel %vm53, %v7057, %v7061
  %v7064 = vshrl.u32 %v7019, 16
  %v7066 = vrot.slane %v7064, 4
  %v7067 = vshll.u32 %v7019, 16
  %v7069 = vrot.slane %v7067, 5
  %v7070 = vor.u32 %v7066, %v7069
  %v7071 = vrot.slane %v7070, 4
  %v7073 = vshll.u32 %v7020, 16
  %v7075 = vrot.slane %v7073, 5
  %v7076 = vsel %vm53, %v7071, %v7075
  %v7078 = vshrl.u32 %v7021, 16
  %v7080 = vrot.slane %v7078, 4
  %v7081 = vshll.u32 %v7021, 16
  %v7083 = vrot.slane %v7081, 5
  %v7084 = vor.u32 %v7080, %v7083
  %v7085 = vrot.slane %v7084, 4
  %v7087 = vshll.u32 %v7022, 16
  %v7089 = vrot.slane %v7087, 5
  %v7090 = vsel %vm53, %v7085, %v7089
  %v7092 = vshrl.u32 %v7023, 16
  %v7094 = vrot.slane %v7092, 4
  %v7095 = vshll.u32 %v7023, 16
  %v7097 = vrot.slane %v7095, 5
  %v7098 = vor.u32 %v7094, %v7097
  %v7099 = vrot.slane %v7098, 4
  %v7101 = vshll.u32 %v7024, 16
  %v7103 = vrot.slane %v7101, 5
  %v7104 = vsel %vm53, %v7099, %v7103
  %v7106 = vshrl.u32 %v7025, 16
  %v7108 = vrot.slane %v7106, 4
  %v7109 = vshll.u32 %v7025, 16
  %v7111 = vrot.slane %v7109, 5
  %v7112 = vor.u32 %v7108, %v7111
  %v7113 = vrot.slane %v7112, 4
  %v7115 = vshll.u32 %v7026, 16
  %v7117 = vrot.slane %v7115, 5
  %v7118 = vsel %vm53, %v7113, %v7117
  %v7120 = vshrl.u32 %v7027, 16
  %v7122 = vrot.slane %v7120, 4
  %v7123 = vshll.u32 %v7027, 16
  %v7125 = vrot.slane %v7123, 5
  %v7126 = vor.u32 %v7122, %v7125
  %v7127 = vrot.slane %v7126, 4
  %v7129 = vshll.u32 %v7028, 16
  %v7131 = vrot.slane %v7129, 5
  %v7132 = vsel %vm53, %v7127, %v7131
  %v7134 = vshrl.u32 %v7029, 16
  %v7136 = vrot.slane %v7134, 4
  %v7137 = vshll.u32 %v7029, 16
  %v7139 = vrot.slane %v7137, 5
  %v7140 = vor.u32 %v7136, %v7139
  %v7141 = vrot.slane %v7140, 4
  %v7143 = vshll.u32 %v7030, 16
  %v7145 = vrot.slane %v7143, 5
  %v7146 = vsel %vm53, %v7141, %v7145
  %v7148 = vshrl.u32 %v7031, 16
  %v7150 = vrot.slane %v7148, 4
  %v7151 = vshll.u32 %v7031, 16
  %v7153 = vrot.slane %v7151, 5
  %v7154 = vor.u32 %v7150, %v7153
  %v7155 = vrot.slane %v7154, 4
  %v7157 = vshll.u32 %v7032, 16
  %v7159 = vrot.slane %v7157, 5
  %v7160 = vsel %vm53, %v7155, %v7159
  %v7162 = vshrl.u32 %v7033, 16
  %v7164 = vrot.slane %v7162, 4
  %v7165 = vshll.u32 %v7033, 16
  %v7167 = vrot.slane %v7165, 5
  %v7168 = vor.u32 %v7164, %v7167
  %v7169 = vrot.slane %v7168, 4
  %v7171 = vshll.u32 %v7034, 16
  %v7173 = vrot.slane %v7171, 5
  %v7174 = vsel %vm53, %v7169, %v7173
  %v7176 = vshrl.u32 %v7035, 16
  %v7178 = vrot.slane %v7176, 4
  %v7179 = vshll.u32 %v7035, 16
  %v7181 = vrot.slane %v7179, 5
  %v7182 = vor.u32 %v7178, %v7181
  %v7183 = vrot.slane %v7182, 4
  %v7185 = vshll.u32 %v7036, 16
  %v7187 = vrot.slane %v7185, 5
  %v7188 = vsel %vm53, %v7183, %v7187
  %v7190 = vshrl.u32 %v7037, 16
  %v7192 = vrot.slane %v7190, 4
  %v7193 = vshll.u32 %v7037, 16
  %v7195 = vrot.slane %v7193, 5
  %v7196 = vor.u32 %v7192, %v7195
  %v7197 = vrot.slane %v7196, 4
  %v7199 = vshll.u32 %v7038, 16
  %v7201 = vrot.slane %v7199, 5
  %v7202 = vsel %vm53, %v7197, %v7201
  %v7204 = vshrl.u32 %v7039, 16
  %v7206 = vrot.slane %v7204, 4
  %v7207 = vshll.u32 %v7039, 16
  %v7209 = vrot.slane %v7207, 5
  %v7210 = vor.u32 %v7206, %v7209
  %v7211 = vrot.slane %v7210, 4
  %v7213 = vshll.u32 %v7040, 16
  %v7215 = vrot.slane %v7213, 5
  %v7216 = vsel %vm53, %v7211, %v7215
  %v7218 = vshrl.u32 %v7041, 16
  %v7220 = vrot.slane %v7218, 4
  %v7221 = vshll.u32 %v7041, 16
  %v7223 = vrot.slane %v7221, 5
  %v7224 = vor.u32 %v7220, %v7223
  %v7225 = vrot.slane %v7224, 4
  %v7227 = vshll.u32 %v7042, 16
  %v7229 = vrot.slane %v7227, 5
  %v7230 = vsel %vm53, %v7225, %v7229
  %v7232 = vshrl.u32 %v7043, 16
  %v7234 = vrot.slane %v7232, 4
  %v7235 = vshll.u32 %v7043, 16
  %v7237 = vrot.slane %v7235, 5
  %v7238 = vor.u32 %v7234, %v7237
  %v7239 = vrot.slane %v7238, 4
  %v7241 = vshll.u32 %v7044, 16
  %v7243 = vrot.slane %v7241, 5
  %v7244 = vsel %vm53, %v7239, %v7243
  %v7246 = vshrl.u32 %v7045, 16
  %v7248 = vrot.slane %v7246, 4
  %v7249 = vshll.u32 %v7045, 16
  %v7251 = vrot.slane %v7249, 5
  %v7252 = vor.u32 %v7248, %v7251
  %v7253 = vrot.slane %v7252, 4
  %v7255 = vshll.u32 %v7046, 16
  %v7257 = vrot.slane %v7255, 5
  %v7258 = vsel %vm53, %v7253, %v7257
  %v7260 = vshrl.u32 %v7047, 16
  %v7262 = vrot.slane %v7260, 4
  %v7263 = vshll.u32 %v7047, 16
  %v7265 = vrot.slane %v7263, 5
  %v7266 = vor.u32 %v7262, %v7265
  %v7267 = vrot.slane %v7266, 4
  %v7269 = vshll.u32 %v7048, 16
  %v7271 = vrot.slane %v7269, 5
  %v7272 = vsel %vm53, %v7267, %v7271
  %s7273 = scalar_lea.vmem %s1, 336
  %v7274 = vld [vmem:[%s7273] sm:$0xf]
  %v7275 = vld [vmem:[%s7273 + $0x4] sm:$0xf]
  %v7276 = vld [vmem:[%s7273 + $0x8] sm:$0xf]
  %v7277 = vld [vmem:[%s7273 + $0xc] sm:$0xf]
  %v7278 = vunpack.c.l.b16 %v7062
  %v7279 = vunpack.c.l.b16 %v7076
  %v7280 = vunpack.c.l.b16 %v7090
  %v7281 = vunpack.c.l.b16 %v7104
  %v7282 = vunpack.c.l.b16 %v7118
  %v7283 = vunpack.c.l.b16 %v7132
  %v7284 = vunpack.c.l.b16 %v7146
  %v7285 = vunpack.c.l.b16 %v7160
  %v7286 = vunpack.c.l.b16 %v7174
  %v7287 = vunpack.c.l.b16 %v7188
  %v7288 = vunpack.c.l.b16 %v7202
  %v7289 = vunpack.c.l.b16 %v7216
  %v7290 = vunpack.c.l.b16 %v7230
  %v7291 = vunpack.c.l.b16 %v7244
  %v7292 = vunpack.c.l.b16 %v7258
  %v7293 = vunpack.c.l.b16 %v7272
  %v7294 = vpack.c.b16 %v7279, %v7278
  %v7295 = vpack.c.b16 %v7281, %v7280
  %v7296 = vpack.c.b16 %v7283, %v7282
  %v7297 = vpack.c.b16 %v7285, %v7284
  %v7298 = vpack.c.b16 %v7287, %v7286
  %v7299 = vpack.c.b16 %v7289, %v7288
  %v7300 = vpack.c.b16 %v7291, %v7290
  %v7301 = vpack.c.b16 %v7293, %v7292
  %v7306 = vunpack.c.l.b16 %v7274
  %v7307 = vunpack.c.l.b16 %v7275
  %v7308 = vunpack.c.l.b16 %v7276
  %v7309 = vunpack.c.l.b16 %v7277
  %v7310 = vpack.c.b16 %v7307, %v7306
  %v7311 = vpack.c.b16 %v7309, %v7308
  %v7315 = vsel %vm319, %v7294, 0
  %v7318 = vsel %vm319, %v7295, 0
  %v7321 = vsel %vm319, %v7296, 0
  %v7324 = vsel %vm319, %v7297, 0
  %v7327 = vsel %vm319, %v7298, 0
  %v7330 = vsel %vm319, %v7299, 0
  %v7333 = vsel %vm319, %v7300, 0
  %v7336 = vsel %vm319, %v7301, 0
  %7338 = vmatprep.subr.bf16.mxu0 0
  %7339 = vmatpush1.bf16.msra.mxu0 %v7310
  %7340 = vmatprep.subr.bf16.mxu0 0
  %7341 = vmatpush1.bf16.msra.mxu0 %v7311
  %7342 = vmatprep.subr.bf16.mxu0 0
  %7343 = vmatpush1.bf16.msra.mxu0 0
  %7344 = vmatprep.subr.bf16.mxu0 0
  %7345 = vmatpush1.bf16.msra.mxu0 0
  %7346 = vmatprep.subr.bf16.mxu0 0
  %7347 = vmatpush1.bf16.msra.mxu0 0
  %7348 = vmatprep.subr.bf16.mxu0 0
  %7349 = vmatpush1.bf16.msra.mxu0 0
  %7350 = vmatprep.subr.bf16.mxu0 0
  %7351 = vmatpush1.bf16.msra.mxu0 0
  %7352 = vmatprep.subr.bf16.mxu0 0
  %7353 = vmatpush1.bf16.msra.mxu0 0
  %7354 = vmatprep.subr.bf16.mxu0 0
  %7355 = vmatpush1.bf16.msra.mxu0 0
  %7356 = vmatprep.subr.bf16.mxu0 0
  %7357 = vmatpush1.bf16.msra.mxu0 0
  %7358 = vmatprep.subr.bf16.mxu0 0
  %7359 = vmatpush1.bf16.msra.mxu0 0
  %7360 = vmatprep.subr.bf16.mxu0 0
  %7361 = vmatpush1.bf16.msra.mxu0 0
  %7362 = vmatprep.subr.bf16.mxu0 0
  %7363 = vmatpush1.bf16.msra.mxu0 0
  %7364 = vmatprep.subr.bf16.mxu0 0
  %7365 = vmatpush1.bf16.msra.mxu0 0
  %7366 = vmatprep.subr.bf16.mxu0 0
  %7367 = vmatpush1.bf16.msra.mxu0 0
  %7368 = vmatprep.subr.bf16.mxu0 0
  %7369 = vmatpush1.bf16.msra.mxu0 0
  %7370 = vmatprep.mubr.bf16.mxu0 0
  %7371 = vmatmul.mubr.bf16.gmra.mrb[0].mxu0 %v7315
  %v7372 = vpop.f32.mrb[0].mxu0
  %v7373 = vadd.f32 0.0, %v7372
  %v7374 = vpop.f32.mrb[0].mxu0
  %v7375 = vpop.f32.mrb[0].mxu0
  %v7376 = vadd.f32 0.0, %v7375
  %v7377 = vpop.f32.mrb[0].mxu0
  %7378 = vmatprep.mubr.bf16.mxu0 0
  %7379 = vmatmul.mubr.bf16.gmra.mrb[0].mxu0 %v7318
  %v7380 = vpop.f32.mrb[0].mxu0
  %v7381 = vadd.f32 0.0, %v7380
  %v7382 = vpop.f32.mrb[0].mxu0
  %v7383 = vpop.f32.mrb[0].mxu0
  %v7384 = vadd.f32 0.0, %v7383
  %v7385 = vpop.f32.mrb[0].mxu0
  %7386 = vmatprep.mubr.bf16.mxu0 0
  %7387 = vmatmul.mubr.bf16.gmra.mrb[0].mxu0 %v7321
  %v7388 = vpop.f32.mrb[0].mxu0
  %v7389 = vadd.f32 0.0, %v7388
  %v7390 = vpop.f32.mrb[0].mxu0
  %v7391 = vpop.f32.mrb[0].mxu0
  %v7392 = vadd.f32 0.0, %v7391
  %v7393 = vpop.f32.mrb[0].mxu0
  %7394 = vmatprep.mubr.bf16.mxu0 0
  %7395 = vmatmul.mubr.bf16.gmra.mrb[0].mxu0 %v7324
  %v7396 = vpop.f32.mrb[0].mxu0
  %v7397 = vadd.f32 0.0, %v7396
  %v7398 = vpop.f32.mrb[0].mxu0
  %v7399 = vpop.f32.mrb[0].mxu0
  %v7400 = vadd.f32 0.0, %v7399
  %v7401 = vpop.f32.mrb[0].mxu0
  %7402 = vmatprep.mubr.bf16.mxu0 0
  %7403 = vmatmul.mubr.bf16.gmra.mrb[0].mxu0 %v7327
  %v7404 = vpop.f32.mrb[0].mxu0
  %v7405 = vadd.f32 0.0, %v7404
  %v7406 = vpop.f32.mrb[0].mxu0
  %v7407 = vpop.f32.mrb[0].mxu0
  %v7408 = vadd.f32 0.0, %v7407
  %v7409 = vpop.f32.mrb[0].mxu0
  %7410 = vmatprep.mubr.bf16.mxu0 0
  %7411 = vmatmul.mubr.bf16.gmra.mrb[0].mxu0 %v7330
  %v7412 = vpop.f32.mrb[0].mxu0
  %v7413 = vadd.f32 0.0, %v7412
  %v7414 = vpop.f32.mrb[0].mxu0
  %v7415 = vpop.f32.mrb[0].mxu0
  %v7416 = vadd.f32 0.0, %v7415
  %v7417 = vpop.f32.mrb[0].mxu0
  %7418 = vmatprep.mubr.bf16.mxu0 0
  %7419 = vmatmul.mubr.bf16.gmra.mrb[0].mxu0 %v7333
  %v7420 = vpop.f32.mrb[0].mxu0
  %v7421 = vadd.f32 0.0, %v7420
  %v7422 = vpop.f32.mrb[0].mxu0
  %v7423 = vpop.f32.mrb[0].mxu0
  %v7424 = vadd.f32 0.0, %v7423
  %v7425 = vpop.f32.mrb[0].mxu0
  %7426 = vmatprep.mubr.bf16.mxu0 0
  %7427 = vmatmul.mubr.bf16.gmra.mrb[0].mxu0 %v7336
  %v7428 = vpop.f32.mrb[0].mxu0
  %v7429 = vadd.f32 0.0, %v7428
  %v7430 = vpop.f32.mrb[0].mxu0
  %v7431 = vpop.f32.mrb[0].mxu0
  %v7432 = vadd.f32 0.0, %v7431
  %v7433 = vpop.f32.mrb[0].mxu0
  %7434 = vdwg.mxu0
  %v7435 = vadd.f32 %v7001, %v7373
  %v7436 = vadd.f32 %v7002, %v7376
  %v7437 = vadd.f32 %v7003, %v7381
  %v7438 = vadd.f32 %v7004, %v7384
  %v7439 = vadd.f32 %v7005, %v7389
  %v7440 = vadd.f32 %v7006, %v7392
  %v7441 = vadd.f32 %v7007, %v7397
  %v7442 = vadd.f32 %v7008, %v7400
  %v7443 = vadd.f32 %v7009, %v7405
  %v7444 = vadd.f32 %v7010, %v7408
  %v7445 = vadd.f32 %v7011, %v7413
  %v7446 = vadd.f32 %v7012, %v7416
  %v7447 = vadd.f32 %v7013, %v7421
  %v7448 = vadd.f32 %v7014, %v7424
  %v7449 = vadd.f32 %v7015, %v7429
  %v7450 = vadd.f32 %v7016, %v7432
  %v7451 = vld [vmem:[%s6806] sm:$0xe]
  %v7452 = vld [vmem:[%s6806 + $0x8] sm:$0xe]
  %v7453 = vld [vmem:[%s6806 + $0x10] sm:$0xe]
  %v7454 = vld [vmem:[%s6806 + $0x18] sm:$0xe]
  %v7455 = vld [vmem:[%s6806 + $0x20] sm:$0xe]
  %v7456 = vld [vmem:[%s6806 + $0x28] sm:$0xe]
  %v7457 = vld [vmem:[%s6806 + $0x30] sm:$0xe]
  %v7458 = vld [vmem:[%s6806 + $0x38] sm:$0xe]
  %v7459 = vld [vmem:[%s6806 + $0x60] sm:$0xe]
  %v7460 = vld [vmem:[%s6806 + $0x68] sm:$0xe]
  %v7461 = vld [vmem:[%s6806 + $0x70] sm:$0xe]
  %v7462 = vld [vmem:[%s6806 + $0x78] sm:$0xe]
  %v7463 = vld [vmem:[%s6806 + $0x80] sm:$0xe]
  %v7464 = vld [vmem:[%s6806 + $0x88] sm:$0xe]
  %v7465 = vld [vmem:[%s6806 + $0x90] sm:$0xe]
  %v7466 = vld [vmem:[%s6806 + $0x98] sm:$0xe]
  %v7499 = vrot.slane %v7451, 5
  %v7500 = vrot.slane %v7499, 4
  %v7501 = vrot.slane %v7018, 5
  %v7502 = vsel %vm664, %v7500, %v7501
  %v7503 = vrot.slane %v7452, 5
  %v7504 = vrot.slane %v7503, 4
  %v7505 = vrot.slane %v7020, 5
  %v7506 = vsel %vm664, %v7504, %v7505
  %v7507 = vrot.slane %v7453, 5
  %v7508 = vrot.slane %v7507, 4
  %v7509 = vrot.slane %v7022, 5
  %v7510 = vsel %vm664, %v7508, %v7509
  %v7511 = vrot.slane %v7454, 5
  %v7512 = vrot.slane %v7511, 4
  %v7513 = vrot.slane %v7024, 5
  %v7514 = vsel %vm664, %v7512, %v7513
  %v7515 = vrot.slane %v7455, 5
  %v7516 = vrot.slane %v7515, 4
  %v7517 = vrot.slane %v7026, 5
  %v7518 = vsel %vm664, %v7516, %v7517
  %v7519 = vrot.slane %v7456, 5
  %v7520 = vrot.slane %v7519, 4
  %v7521 = vrot.slane %v7028, 5
  %v7522 = vsel %vm664, %v7520, %v7521
  %v7523 = vrot.slane %v7457, 5
  %v7524 = vrot.slane %v7523, 4
  %v7525 = vrot.slane %v7030, 5
  %v7526 = vsel %vm664, %v7524, %v7525
  %v7527 = vrot.slane %v7458, 5
  %v7528 = vrot.slane %v7527, 4
  %v7529 = vrot.slane %v7032, 5
  %v7530 = vsel %vm664, %v7528, %v7529
  %v7531 = vrot.slane %v7459, 5
  %v7532 = vrot.slane %v7531, 4
  %v7533 = vrot.slane %v7034, 5
  %v7534 = vsel %vm664, %v7532, %v7533
  %v7535 = vrot.slane %v7460, 5
  %v7536 = vrot.slane %v7535, 4
  %v7537 = vrot.slane %v7036, 5
  %v7538 = vsel %vm664, %v7536, %v7537
  %v7539 = vrot.slane %v7461, 5
  %v7540 = vrot.slane %v7539, 4
  %v7541 = vrot.slane %v7038, 5
  %v7542 = vsel %vm664, %v7540, %v7541
  %v7543 = vrot.slane %v7462, 5
  %v7544 = vrot.slane %v7543, 4
  %v7545 = vrot.slane %v7040, 5
  %v7546 = vsel %vm664, %v7544, %v7545
  %v7547 = vrot.slane %v7463, 5
  %v7548 = vrot.slane %v7547, 4
  %v7549 = vrot.slane %v7042, 5
  %v7550 = vsel %vm664, %v7548, %v7549
  %v7551 = vrot.slane %v7464, 5
  %v7552 = vrot.slane %v7551, 4
  %v7553 = vrot.slane %v7044, 5
  %v7554 = vsel %vm664, %v7552, %v7553
  %v7555 = vrot.slane %v7465, 5
  %v7556 = vrot.slane %v7555, 4
  %v7557 = vrot.slane %v7046, 5
  %v7558 = vsel %vm664, %v7556, %v7557
  %v7559 = vrot.slane %v7466, 5
  %v7560 = vrot.slane %v7559, 4
  %v7561 = vrot.slane %v7048, 5
  %v7562 = vsel %vm664, %v7560, %v7561
  %s7563 = scalar_lea.vmem %s1, 352
  %v7564 = vld [vmem:[%s7563] sm:$0xf]
  %v7565 = vld [vmem:[%s7563 + $0x4] sm:$0xf]
  %v7566 = vld [vmem:[%s7563 + $0x8] sm:$0xf]
  %v7567 = vld [vmem:[%s7563 + $0xc] sm:$0xf]
  %v7568 = vunpack.c.l.b16 %v7502
  %v7569 = vunpack.c.l.b16 %v7506
  %v7570 = vunpack.c.l.b16 %v7510
  %v7571 = vunpack.c.l.b16 %v7514
  %v7572 = vunpack.c.l.b16 %v7518
  %v7573 = vunpack.c.l.b16 %v7522
  %v7574 = vunpack.c.l.b16 %v7526
  %v7575 = vunpack.c.l.b16 %v7530
  %v7576 = vunpack.c.l.b16 %v7534
  %v7577 = vunpack.c.l.b16 %v7538
  %v7578 = vunpack.c.l.b16 %v7542
  %v7579 = vunpack.c.l.b16 %v7546
  %v7580 = vunpack.c.l.b16 %v7550
  %v7581 = vunpack.c.l.b16 %v7554
  %v7582 = vunpack.c.l.b16 %v7558
  %v7583 = vunpack.c.l.b16 %v7562
  %v7584 = vpack.c.b16 %v7569, %v7568
  %v7585 = vpack.c.b16 %v7571, %v7570
  %v7586 = vpack.c.b16 %v7573, %v7572
  %v7587 = vpack.c.b16 %v7575, %v7574
  %v7588 = vpack.c.b16 %v7577, %v7576
  %v7589 = vpack.c.b16 %v7579, %v7578
  %v7590 = vpack.c.b16 %v7581, %v7580
  %v7591 = vpack.c.b16 %v7583, %v7582
  %v7596 = vunpack.c.l.b16 %v7564
  %v7597 = vunpack.c.l.b16 %v7565
  %v7598 = vunpack.c.l.b16 %v7566
  %v7599 = vunpack.c.l.b16 %v7567
  %v7600 = vpack.c.b16 %v7597, %v7596
  %v7601 = vpack.c.b16 %v7599, %v7598
  %v7605 = vsel %vm319, %v7584, 0
  %v7608 = vsel %vm319, %v7585, 0
  %v7611 = vsel %vm319, %v7586, 0
  %v7614 = vsel %vm319, %v7587, 0
  %v7617 = vsel %vm319, %v7588, 0
  %v7620 = vsel %vm319, %v7589, 0
  %v7623 = vsel %vm319, %v7590, 0
  %v7626 = vsel %vm319, %v7591, 0
  %7628 = vmatprep.subr.bf16.mxu0 0
  %7629 = vmatpush1.bf16.msra.mxu0 %v7600
  %7630 = vmatprep.subr.bf16.mxu0 0
  %7631 = vmatpush1.bf16.msra.mxu0 %v7601
  %7632 = vmatprep.subr.bf16.mxu0 0
  %7633 = vmatpush1.bf16.msra.mxu0 0
  %7634 = vmatprep.subr.bf16.mxu0 0
  %7635 = vmatpush1.bf16.msra.mxu0 0
  %7636 = vmatprep.subr.bf16.mxu0 0
  %7637 = vmatpush1.bf16.msra.mxu0 0
  %7638 = vmatprep.subr.bf16.mxu0 0
  %7639 = vmatpush1.bf16.msra.mxu0 0
  %7640 = vmatprep.subr.bf16.mxu0 0
  %7641 = vmatpush1.bf16.msra.mxu0 0
  %7642 = vmatprep.subr.bf16.mxu0 0
  %7643 = vmatpush1.bf16.msra.mxu0 0
  %7644 = vmatprep.subr.bf16.mxu0 0
  %7645 = vmatpush1.bf16.msra.mxu0 0
  %7646 = vmatprep.subr.bf16.mxu0 0
  %7647 = vmatpush1.bf16.msra.mxu0 0
  %7648 = vmatprep.subr.bf16.mxu0 0
  %7649 = vmatpush1.bf16.msra.mxu0 0
  %7650 = vmatprep.subr.bf16.mxu0 0
  %7651 = vmatpush1.bf16.msra.mxu0 0
  %7652 = vmatprep.subr.bf16.mxu0 0
  %7653 = vmatpush1.bf16.msra.mxu0 0
  %7654 = vmatprep.subr.bf16.mxu0 0
  %7655 = vmatpush1.bf16.msra.mxu0 0
  %7656 = vmatprep.subr.bf16.mxu0 0
  %7657 = vmatpush1.bf16.msra.mxu0 0
  %7658 = vmatprep.subr.bf16.mxu0 0
  %7659 = vmatpush1.bf16.msra.mxu0 0
  %7660 = vmatprep.mubr.bf16.mxu0 0
  %7661 = vmatmul.mubr.bf16.gmra.mrb[0].mxu0 %v7605
  %v7662 = vpop.f32.mrb[0].mxu0
  %v7663 = vadd.f32 0.0, %v7662
  %v7664 = vpop.f32.mrb[0].mxu0
  %v7665 = vpop.f32.mrb[0].mxu0
  %v7666 = vadd.f32 0.0, %v7665
  %v7667 = vpop.f32.mrb[0].mxu0
  %7668 = vmatprep.mubr.bf16.mxu0 0
  %7669 = vmatmul.mubr.bf16.gmra.mrb[0].mxu0 %v7608
  %v7670 = vpop.f32.mrb[0].mxu0
  %v7671 = vadd.f32 0.0, %v7670
  %v7672 = vpop.f32.mrb[0].mxu0
  %v7673 = vpop.f32.mrb[0].mxu0
  %v7674 = vadd.f32 0.0, %v7673
  %v7675 = vpop.f32.mrb[0].mxu0
  %7676 = vmatprep.mubr.bf16.mxu0 0
  %7677 = vmatmul.mubr.bf16.gmra.mrb[0].mxu0 %v7611
  %v7678 = vpop.f32.mrb[0].mxu0
  %v7679 = vadd.f32 0.0, %v7678
  %v7680 = vpop.f32.mrb[0].mxu0
  %v7681 = vpop.f32.mrb[0].mxu0
  %v7682 = vadd.f32 0.0, %v7681
  %v7683 = vpop.f32.mrb[0].mxu0
  %7684 = vmatprep.mubr.bf16.mxu0 0
  %7685 = vmatmul.mubr.bf16.gmra.mrb[0].mxu0 %v7614
  %v7686 = vpop.f32.mrb[0].mxu0
  %v7687 = vadd.f32 0.0, %v7686
  %v7688 = vpop.f32.mrb[0].mxu0
  %v7689 = vpop.f32.mrb[0].mxu0
  %v7690 = vadd.f32 0.0, %v7689
  %v7691 = vpop.f32.mrb[0].mxu0
  %7692 = vmatprep.mubr.bf16.mxu0 0
  %7693 = vmatmul.mubr.bf16.gmra.mrb[0].mxu0 %v7617
  %v7694 = vpop.f32.mrb[0].mxu0
  %v7695 = vadd.f32 0.0, %v7694
  %v7696 = vpop.f32.mrb[0].mxu0
  %v7697 = vpop.f32.mrb[0].mxu0
  %v7698 = vadd.f32 0.0, %v7697
  %v7699 = vpop.f32.mrb[0].mxu0
  %7700 = vmatprep.mubr.bf16.mxu0 0
  %7701 = vmatmul.mubr.bf16.gmra.mrb[0].mxu0 %v7620
  %v7702 = vpop.f32.mrb[0].mxu0
  %v7703 = vadd.f32 0.0, %v7702
  %v7704 = vpop.f32.mrb[0].mxu0
  %v7705 = vpop.f32.mrb[0].mxu0
  %v7706 = vadd.f32 0.0, %v7705
  %v7707 = vpop.f32.mrb[0].mxu0
  %7708 = vmatprep.mubr.bf16.mxu0 0
  %7709 = vmatmul.mubr.bf16.gmra.mrb[0].mxu0 %v7623
  %v7710 = vpop.f32.mrb[0].mxu0
  %v7711 = vadd.f32 0.0, %v7710
  %v7712 = vpop.f32.mrb[0].mxu0
  %v7713 = vpop.f32.mrb[0].mxu0
  %v7714 = vadd.f32 0.0, %v7713
  %v7715 = vpop.f32.mrb[0].mxu0
  %7716 = vmatprep.mubr.bf16.mxu0 0
  %7717 = vmatmul.mubr.bf16.gmra.mrb[0].mxu0 %v7626
  %v7718 = vpop.f32.mrb[0].mxu0
  %v7719 = vadd.f32 0.0, %v7718
  %v7720 = vpop.f32.mrb[0].mxu0
  %v7721 = vpop.f32.mrb[0].mxu0
  %v7722 = vadd.f32 0.0, %v7721
  %v7723 = vpop.f32.mrb[0].mxu0
  %7724 = vdwg.mxu0
  %v7725 = vadd.f32 %v7435, %v7663
  %v7726 = vadd.f32 %v7436, %v7666
  %v7727 = vadd.f32 %v7437, %v7671
  %v7728 = vadd.f32 %v7438, %v7674
  %v7729 = vadd.f32 %v7439, %v7679
  %v7730 = vadd.f32 %v7440, %v7682
  %v7731 = vadd.f32 %v7441, %v7687
  %v7732 = vadd.f32 %v7442, %v7690
  %v7733 = vadd.f32 %v7443, %v7695
  %v7734 = vadd.f32 %v7444, %v7698
  %v7735 = vadd.f32 %v7445, %v7703
  %v7736 = vadd.f32 %v7446, %v7706
  %v7737 = vadd.f32 %v7447, %v7711
  %v7738 = vadd.f32 %v7448, %v7714
  %v7739 = vadd.f32 %v7449, %v7719
  %v7740 = vadd.f32 %v7450, %v7722
  %v7741 = vld [vmem:[%s6806 + $0x4] sm:$0x3]
  %v7742 = vld [vmem:[%s6806 + $0xc] sm:$0x3]
  %v7743 = vld [vmem:[%s6806 + $0x14] sm:$0x3]
  %v7744 = vld [vmem:[%s6806 + $0x1c] sm:$0x3]
  %v7745 = vld [vmem:[%s6806 + $0x24] sm:$0x3]
  %v7746 = vld [vmem:[%s6806 + $0x2c] sm:$0x3]
  %v7747 = vld [vmem:[%s6806 + $0x34] sm:$0x3]
  %v7748 = vld [vmem:[%s6806 + $0x3c] sm:$0x3]
  %v7749 = vld [vmem:[%s6806 + $0x64] sm:$0x3]
  %v7750 = vld [vmem:[%s6806 + $0x6c] sm:$0x3]
  %v7751 = vld [vmem:[%s6806 + $0x74] sm:$0x3]
  %v7752 = vld [vmem:[%s6806 + $0x7c] sm:$0x3]
  %v7753 = vld [vmem:[%s6806 + $0x84] sm:$0x3]
  %v7754 = vld [vmem:[%s6806 + $0x8c] sm:$0x3]
  %v7755 = vld [vmem:[%s6806 + $0x94] sm:$0x3]
  %v7756 = vld [vmem:[%s6806 + $0x9c] sm:$0x3]
  %v7758 = vshrl.u32 %v7451, 16
  %v7760 = vrot.slane %v7758, 5
  %v7761 = vshll.u32 %v7451, 16
  %v7763 = vrot.slane %v7761, 6
  %v7764 = vor.u32 %v7760, %v7763
  %v7765 = vrot.slane %v7764, 4
  %v7767 = vshrl.u32 %v7741, 16
  %v7769 = vrot.slane %v7767, 5
  %v7770 = vshll.u32 %v7741, 16
  %v7772 = vrot.slane %v7770, 6
  %v7773 = vor.u32 %v7769, %v7772
  %v7774 = vsel %vm925, %v7765, %v7773
  %v7776 = vshrl.u32 %v7452, 16
  %v7778 = vrot.slane %v7776, 5
  %v7779 = vshll.u32 %v7452, 16
  %v7781 = vrot.slane %v7779, 6
  %v7782 = vor.u32 %v7778, %v7781
  %v7783 = vrot.slane %v7782, 4
  %v7785 = vshrl.u32 %v7742, 16
  %v7787 = vrot.slane %v7785, 5
  %v7788 = vshll.u32 %v7742, 16
  %v7790 = vrot.slane %v7788, 6
  %v7791 = vor.u32 %v7787, %v7790
  %v7792 = vsel %vm925, %v7783, %v7791
  %v7794 = vshrl.u32 %v7453, 16
  %v7796 = vrot.slane %v7794, 5
  %v7797 = vshll.u32 %v7453, 16
  %v7799 = vrot.slane %v7797, 6
  %v7800 = vor.u32 %v7796, %v7799
  %v7801 = vrot.slane %v7800, 4
  %v7803 = vshrl.u32 %v7743, 16
  %v7805 = vrot.slane %v7803, 5
  %v7806 = vshll.u32 %v7743, 16
  %v7808 = vrot.slane %v7806, 6
  %v7809 = vor.u32 %v7805, %v7808
  %v7810 = vsel %vm925, %v7801, %v7809
  %v7812 = vshrl.u32 %v7454, 16
  %v7814 = vrot.slane %v7812, 5
  %v7815 = vshll.u32 %v7454, 16
  %v7817 = vrot.slane %v7815, 6
  %v7818 = vor.u32 %v7814, %v7817
  %v7819 = vrot.slane %v7818, 4
  %v7821 = vshrl.u32 %v7744, 16
  %v7823 = vrot.slane %v7821, 5
  %v7824 = vshll.u32 %v7744, 16
  %v7826 = vrot.slane %v7824, 6
  %v7827 = vor.u32 %v7823, %v7826
  %v7828 = vsel %vm925, %v7819, %v7827
  %v7830 = vshrl.u32 %v7455, 16
  %v7832 = vrot.slane %v7830, 5
  %v7833 = vshll.u32 %v7455, 16
  %v7835 = vrot.slane %v7833, 6
  %v7836 = vor.u32 %v7832, %v7835
  %v7837 = vrot.slane %v7836, 4
  %v7839 = vshrl.u32 %v7745, 16
  %v7841 = vrot.slane %v7839, 5
  %v7842 = vshll.u32 %v7745, 16
  %v7844 = vrot.slane %v7842, 6
  %v7845 = vor.u32 %v7841, %v7844
  %v7846 = vsel %vm925, %v7837, %v7845
  %v7848 = vshrl.u32 %v7456, 16
  %v7850 = vrot.slane %v7848, 5
  %v7851 = vshll.u32 %v7456, 16
  %v7853 = vrot.slane %v7851, 6
  %v7854 = vor.u32 %v7850, %v7853
  %v7855 = vrot.slane %v7854, 4
  %v7857 = vshrl.u32 %v7746, 16
  %v7859 = vrot.slane %v7857, 5
  %v7860 = vshll.u32 %v7746, 16
  %v7862 = vrot.slane %v7860, 6
  %v7863 = vor.u32 %v7859, %v7862
  %v7864 = vsel %vm925, %v7855, %v7863
  %v7866 = vshrl.u32 %v7457, 16
  %v7868 = vrot.slane %v7866, 5
  %v7869 = vshll.u32 %v7457, 16
  %v7871 = vrot.slane %v7869, 6
  %v7872 = vor.u32 %v7868, %v7871
  %v7873 = vrot.slane %v7872, 4
  %v7875 = vshrl.u32 %v7747, 16
  %v7877 = vrot.slane %v7875, 5
  %v7878 = vshll.u32 %v7747, 16
  %v7880 = vrot.slane %v7878, 6
  %v7881 = vor.u32 %v7877, %v7880
  %v7882 = vsel %vm925, %v7873, %v7881
  %v7884 = vshrl.u32 %v7458, 16
  %v7886 = vrot.slane %v7884, 5
  %v7887 = vshll.u32 %v7458, 16
  %v7889 = vrot.slane %v7887, 6
  %v7890 = vor.u32 %v7886, %v7889
  %v7891 = vrot.slane %v7890, 4
  %v7893 = vshrl.u32 %v7748, 16
  %v7895 = vrot.slane %v7893, 5
  %v7896 = vshll.u32 %v7748, 16
  %v7898 = vrot.slane %v7896, 6
  %v7899 = vor.u32 %v7895, %v7898
  %v7900 = vsel %vm925, %v7891, %v7899
  %v7902 = vshrl.u32 %v7459, 16
  %v7904 = vrot.slane %v7902, 5
  %v7905 = vshll.u32 %v7459, 16
  %v7907 = vrot.slane %v7905, 6
  %v7908 = vor.u32 %v7904, %v7907
  %v7909 = vrot.slane %v7908, 4
  %v7911 = vshrl.u32 %v7749, 16
  %v7913 = vrot.slane %v7911, 5
  %v7914 = vshll.u32 %v7749, 16
  %v7916 = vrot.slane %v7914, 6
  %v7917 = vor.u32 %v7913, %v7916
  %v7918 = vsel %vm925, %v7909, %v7917
  %v7920 = vshrl.u32 %v7460, 16
  %v7922 = vrot.slane %v7920, 5
  %v7923 = vshll.u32 %v7460, 16
  %v7925 = vrot.slane %v7923, 6
  %v7926 = vor.u32 %v7922, %v7925
  %v7927 = vrot.slane %v7926, 4
  %v7929 = vshrl.u32 %v7750, 16
  %v7931 = vrot.slane %v7929, 5
  %v7932 = vshll.u32 %v7750, 16
  %v7934 = vrot.slane %v7932, 6
  %v7935 = vor.u32 %v7931, %v7934
  %v7936 = vsel %vm925, %v7927, %v7935
  %v7938 = vshrl.u32 %v7461, 16
  %v7940 = vrot.slane %v7938, 5
  %v7941 = vshll.u32 %v7461, 16
  %v7943 = vrot.slane %v7941, 6
  %v7944 = vor.u32 %v7940, %v7943
  %v7945 = vrot.slane %v7944, 4
  %v7947 = vshrl.u32 %v7751, 16
  %v7949 = vrot.slane %v7947, 5
  %v7950 = vshll.u32 %v7751, 16
  %v7952 = vrot.slane %v7950, 6
  %v7953 = vor.u32 %v7949, %v7952
  %v7954 = vsel %vm925, %v7945, %v7953
  %v7956 = vshrl.u32 %v7462, 16
  %v7958 = vrot.slane %v7956, 5
  %v7959 = vshll.u32 %v7462, 16
  %v7961 = vrot.slane %v7959, 6
  %v7962 = vor.u32 %v7958, %v7961
  %v7963 = vrot.slane %v7962, 4
  %v7965 = vshrl.u32 %v7752, 16
  %v7967 = vrot.slane %v7965, 5
  %v7968 = vshll.u32 %v7752, 16
  %v7970 = vrot.slane %v7968, 6
  %v7971 = vor.u32 %v7967, %v7970
  %v7972 = vsel %vm925, %v7963, %v7971
  %v7974 = vshrl.u32 %v7463, 16
  %v7976 = vrot.slane %v7974, 5
  %v7977 = vshll.u32 %v7463, 16
  %v7979 = vrot.slane %v7977, 6
  %v7980 = vor.u32 %v7976, %v7979
  %v7981 = vrot.slane %v7980, 4
  %v7983 = vshrl.u32 %v7753, 16
  %v7985 = vrot.slane %v7983, 5
  %v7986 = vshll.u32 %v7753, 16
  %v7988 = vrot.slane %v7986, 6
  %v7989 = vor.u32 %v7985, %v7988
  %v7990 = vsel %vm925, %v7981, %v7989
  %v7992 = vshrl.u32 %v7464, 16
  %v7994 = vrot.slane %v7992, 5
  %v7995 = vshll.u32 %v7464, 16
  %v7997 = vrot.slane %v7995, 6
  %v7998 = vor.u32 %v7994, %v7997
  %v7999 = vrot.slane %v7998, 4
  %v8001 = vshrl.u32 %v7754, 16
  %v8003 = vrot.slane %v8001, 5
  %v8004 = vshll.u32 %v7754, 16
  %v8006 = vrot.slane %v8004, 6
  %v8007 = vor.u32 %v8003, %v8006
  %v8008 = vsel %vm925, %v7999, %v8007
  %v8010 = vshrl.u32 %v7465, 16
  %v8012 = vrot.slane %v8010, 5
  %v8013 = vshll.u32 %v7465, 16
  %v8015 = vrot.slane %v8013, 6
  %v8016 = vor.u32 %v8012, %v8015
  %v8017 = vrot.slane %v8016, 4
  %v8019 = vshrl.u32 %v7755, 16
  %v8021 = vrot.slane %v8019, 5
  %v8022 = vshll.u32 %v7755, 16
  %v8024 = vrot.slane %v8022, 6
  %v8025 = vor.u32 %v8021, %v8024
  %v8026 = vsel %vm925, %v8017, %v8025
  %v8028 = vshrl.u32 %v7466, 16
  %v8030 = vrot.slane %v8028, 5
  %v8031 = vshll.u32 %v7466, 16
  %v8033 = vrot.slane %v8031, 6
  %v8034 = vor.u32 %v8030, %v8033
  %v8035 = vrot.slane %v8034, 4
  %v8037 = vshrl.u32 %v7756, 16
  %v8039 = vrot.slane %v8037, 5
  %v8040 = vshll.u32 %v7756, 16
  %v8042 = vrot.slane %v8040, 6
  %v8043 = vor.u32 %v8039, %v8042
  %v8044 = vsel %vm925, %v8035, %v8043
  %s8045 = scalar_lea.vmem %s1, 368
  %v8046 = vld [vmem:[%s8045] sm:$0xf]
  %v8047 = vld [vmem:[%s8045 + $0x4] sm:$0xf]
  %v8048 = vld [vmem:[%s8045 + $0x8] sm:$0xf]
  %v8049 = vld [vmem:[%s8045 + $0xc] sm:$0xf]
  %v8050 = vunpack.c.l.b16 %v7774
  %v8051 = vunpack.c.l.b16 %v7792
  %v8052 = vunpack.c.l.b16 %v7810
  %v8053 = vunpack.c.l.b16 %v7828
  %v8054 = vunpack.c.l.b16 %v7846
  %v8055 = vunpack.c.l.b16 %v7864
  %v8056 = vunpack.c.l.b16 %v7882
  %v8057 = vunpack.c.l.b16 %v7900
  %v8058 = vunpack.c.l.b16 %v7918
  %v8059 = vunpack.c.l.b16 %v7936
  %v8060 = vunpack.c.l.b16 %v7954
  %v8061 = vunpack.c.l.b16 %v7972
  %v8062 = vunpack.c.l.b16 %v7990
  %v8063 = vunpack.c.l.b16 %v8008
  %v8064 = vunpack.c.l.b16 %v8026
  %v8065 = vunpack.c.l.b16 %v8044
  %v8066 = vpack.c.b16 %v8051, %v8050
  %v8067 = vpack.c.b16 %v8053, %v8052
  %v8068 = vpack.c.b16 %v8055, %v8054
  %v8069 = vpack.c.b16 %v8057, %v8056
  %v8070 = vpack.c.b16 %v8059, %v8058
  %v8071 = vpack.c.b16 %v8061, %v8060
  %v8072 = vpack.c.b16 %v8063, %v8062
  %v8073 = vpack.c.b16 %v8065, %v8064
  %v8078 = vunpack.c.l.b16 %v8046
  %v8079 = vunpack.c.l.b16 %v8047
  %v8080 = vunpack.c.l.b16 %v8048
  %v8081 = vunpack.c.l.b16 %v8049
  %v8082 = vpack.c.b16 %v8079, %v8078
  %v8083 = vpack.c.b16 %v8081, %v8080
  %v8087 = vsel %vm319, %v8066, 0
  %v8090 = vsel %vm319, %v8067, 0
  %v8093 = vsel %vm319, %v8068, 0
  %v8096 = vsel %vm319, %v8069, 0
  %v8099 = vsel %vm319, %v8070, 0
  %v8102 = vsel %vm319, %v8071, 0
  %v8105 = vsel %vm319, %v8072, 0
  %v8108 = vsel %vm319, %v8073, 0
  %8110 = vmatprep.subr.bf16.mxu0 0
  %8111 = vmatpush1.bf16.msra.mxu0 %v8082
  %8112 = vmatprep.subr.bf16.mxu0 0
  %8113 = vmatpush1.bf16.msra.mxu0 %v8083
  %8114 = vmatprep.subr.bf16.mxu0 0
  %8115 = vmatpush1.bf16.msra.mxu0 0
  %8116 = vmatprep.subr.bf16.mxu0 0
  %8117 = vmatpush1.bf16.msra.mxu0 0
  %8118 = vmatprep.subr.bf16.mxu0 0
  %8119 = vmatpush1.bf16.msra.mxu0 0
  %8120 = vmatprep.subr.bf16.mxu0 0
  %8121 = vmatpush1.bf16.msra.mxu0 0
  %8122 = vmatprep.subr.bf16.mxu0 0
  %8123 = vmatpush1.bf16.msra.mxu0 0
  %8124 = vmatprep.subr.bf16.mxu0 0
  %8125 = vmatpush1.bf16.msra.mxu0 0
  %8126 = vmatprep.subr.bf16.mxu0 0
  %8127 = vmatpush1.bf16.msra.mxu0 0
  %8128 = vmatprep.subr.bf16.mxu0 0
  %8129 = vmatpush1.bf16.msra.mxu0 0
  %8130 = vmatprep.subr.bf16.mxu0 0
  %8131 = vmatpush1.bf16.msra.mxu0 0
  %8132 = vmatprep.subr.bf16.mxu0 0
  %8133 = vmatpush1.bf16.msra.mxu0 0
  %8134 = vmatprep.subr.bf16.mxu0 0
  %8135 = vmatpush1.bf16.msra.mxu0 0
  %8136 = vmatprep.subr.bf16.mxu0 0
  %8137 = vmatpush1.bf16.msra.mxu0 0
  %8138 = vmatprep.subr.bf16.mxu0 0
  %8139 = vmatpush1.bf16.msra.mxu0 0
  %8140 = vmatprep.subr.bf16.mxu0 0
  %8141 = vmatpush1.bf16.msra.mxu0 0
  %8142 = vmatprep.mubr.bf16.mxu0 0
  %8143 = vmatmul.mubr.bf16.gmra.mrb[0].mxu0 %v8087
  %v8144 = vpop.f32.mrb[0].mxu0
  %v8145 = vadd.f32 0.0, %v8144
  %v8146 = vpop.f32.mrb[0].mxu0
  %v8147 = vpop.f32.mrb[0].mxu0
  %v8148 = vadd.f32 0.0, %v8147
  %v8149 = vpop.f32.mrb[0].mxu0
  %8150 = vmatprep.mubr.bf16.mxu0 0
  %8151 = vmatmul.mubr.bf16.gmra.mrb[0].mxu0 %v8090
  %v8152 = vpop.f32.mrb[0].mxu0
  %v8153 = vadd.f32 0.0, %v8152
  %v8154 = vpop.f32.mrb[0].mxu0
  %v8155 = vpop.f32.mrb[0].mxu0
  %v8156 = vadd.f32 0.0, %v8155
  %v8157 = vpop.f32.mrb[0].mxu0
  %8158 = vmatprep.mubr.bf16.mxu0 0
  %8159 = vmatmul.mubr.bf16.gmra.mrb[0].mxu0 %v8093
  %v8160 = vpop.f32.mrb[0].mxu0
  %v8161 = vadd.f32 0.0, %v8160
  %v8162 = vpop.f32.mrb[0].mxu0
  %v8163 = vpop.f32.mrb[0].mxu0
  %v8164 = vadd.f32 0.0, %v8163
  %v8165 = vpop.f32.mrb[0].mxu0
  %8166 = vmatprep.mubr.bf16.mxu0 0
  %8167 = vmatmul.mubr.bf16.gmra.mrb[0].mxu0 %v8096
  %v8168 = vpop.f32.mrb[0].mxu0
  %v8169 = vadd.f32 0.0, %v8168
  %v8170 = vpop.f32.mrb[0].mxu0
  %v8171 = vpop.f32.mrb[0].mxu0
  %v8172 = vadd.f32 0.0, %v8171
  %v8173 = vpop.f32.mrb[0].mxu0
  %8174 = vmatprep.mubr.bf16.mxu0 0
  %8175 = vmatmul.mubr.bf16.gmra.mrb[0].mxu0 %v8099
  %v8176 = vpop.f32.mrb[0].mxu0
  %v8177 = vadd.f32 0.0, %v8176
  %v8178 = vpop.f32.mrb[0].mxu0
  %v8179 = vpop.f32.mrb[0].mxu0
  %v8180 = vadd.f32 0.0, %v8179
  %v8181 = vpop.f32.mrb[0].mxu0
  %8182 = vmatprep.mubr.bf16.mxu0 0
  %8183 = vmatmul.mubr.bf16.gmra.mrb[0].mxu0 %v8102
  %v8184 = vpop.f32.mrb[0].mxu0
  %v8185 = vadd.f32 0.0, %v8184
  %v8186 = vpop.f32.mrb[0].mxu0
  %v8187 = vpop.f32.mrb[0].mxu0
  %v8188 = vadd.f32 0.0, %v8187
  %v8189 = vpop.f32.mrb[0].mxu0
  %8190 = vmatprep.mubr.bf16.mxu0 0
  %8191 = vmatmul.mubr.bf16.gmra.mrb[0].mxu0 %v8105
  %v8192 = vpop.f32.mrb[0].mxu0
  %v8193 = vadd.f32 0.0, %v8192
  %v8194 = vpop.f32.mrb[0].mxu0
  %v8195 = vpop.f32.mrb[0].mxu0
  %v8196 = vadd.f32 0.0, %v8195
  %v8197 = vpop.f32.mrb[0].mxu0
  %8198 = vmatprep.mubr.bf16.mxu0 0
  %8199 = vmatmul.mubr.bf16.gmra.mrb[0].mxu0 %v8108
  %v8200 = vpop.f32.mrb[0].mxu0
  %v8201 = vadd.f32 0.0, %v8200
  %v8202 = vpop.f32.mrb[0].mxu0
  %v8203 = vpop.f32.mrb[0].mxu0
  %v8204 = vadd.f32 0.0, %v8203
  %v8205 = vpop.f32.mrb[0].mxu0
  %8206 = vdwg.mxu0
  %v8207 = vadd.f32 %v7725, %v8145
  %v8208 = vadd.f32 %v7726, %v8148
  %v8209 = vadd.f32 %v7727, %v8153
  %v8210 = vadd.f32 %v7728, %v8156
  %v8211 = vadd.f32 %v7729, %v8161
  %v8212 = vadd.f32 %v7730, %v8164
  %v8213 = vadd.f32 %v7731, %v8169
  %v8214 = vadd.f32 %v7732, %v8172
  %v8215 = vadd.f32 %v7733, %v8177
  %v8216 = vadd.f32 %v7734, %v8180
  %v8217 = vadd.f32 %v7735, %v8185
  %v8218 = vadd.f32 %v7736, %v8188
  %v8219 = vadd.f32 %v7737, %v8193
  %v8220 = vadd.f32 %v7738, %v8196
  %v8221 = vadd.f32 %v7739, %v8201
  %v8222 = vadd.f32 %v7740, %v8204
  %v8223 = vld [vmem:[%s6806] sm:$0xc]
  %v8224 = vld [vmem:[%s6806 + $0x8] sm:$0xc]
  %v8225 = vld [vmem:[%s6806 + $0x10] sm:$0xc]
  %v8226 = vld [vmem:[%s6806 + $0x18] sm:$0xc]
  %v8227 = vld [vmem:[%s6806 + $0x20] sm:$0xc]
  %v8228 = vld [vmem:[%s6806 + $0x28] sm:$0xc]
  %v8229 = vld [vmem:[%s6806 + $0x30] sm:$0xc]
  %v8230 = vld [vmem:[%s6806 + $0x38] sm:$0xc]
  %v8231 = vld [vmem:[%s6806 + $0x60] sm:$0xc]
  %v8232 = vld [vmem:[%s6806 + $0x68] sm:$0xc]
  %v8233 = vld [vmem:[%s6806 + $0x70] sm:$0xc]
  %v8234 = vld [vmem:[%s6806 + $0x78] sm:$0xc]
  %v8235 = vld [vmem:[%s6806 + $0x80] sm:$0xc]
  %v8236 = vld [vmem:[%s6806 + $0x88] sm:$0xc]
  %v8237 = vld [vmem:[%s6806 + $0x90] sm:$0xc]
  %v8238 = vld [vmem:[%s6806 + $0x98] sm:$0xc]
  %v8271 = vrot.slane %v8223, 6
  %v8272 = vrot.slane %v8271, 4
  %v8273 = vrot.slane %v7741, 6
  %v8274 = vsel %vm1442, %v8272, %v8273
  %v8275 = vrot.slane %v8224, 6
  %v8276 = vrot.slane %v8275, 4
  %v8277 = vrot.slane %v7742, 6
  %v8278 = vsel %vm1442, %v8276, %v8277
  %v8279 = vrot.slane %v8225, 6
  %v8280 = vrot.slane %v8279, 4
  %v8281 = vrot.slane %v7743, 6
  %v8282 = vsel %vm1442, %v8280, %v8281
  %v8283 = vrot.slane %v8226, 6
  %v8284 = vrot.slane %v8283, 4
  %v8285 = vrot.slane %v7744, 6
  %v8286 = vsel %vm1442, %v8284, %v8285
  %v8287 = vrot.slane %v8227, 6
  %v8288 = vrot.slane %v8287, 4
  %v8289 = vrot.slane %v7745, 6
  %v8290 = vsel %vm1442, %v8288, %v8289
  %v8291 = vrot.slane %v8228, 6
  %v8292 = vrot.slane %v8291, 4
  %v8293 = vrot.slane %v7746, 6
  %v8294 = vsel %vm1442, %v8292, %v8293
  %v8295 = vrot.slane %v8229, 6
  %v8296 = vrot.slane %v8295, 4
  %v8297 = vrot.slane %v7747, 6
  %v8298 = vsel %vm1442, %v8296, %v8297
  %v8299 = vrot.slane %v8230, 6
  %v8300 = vrot.slane %v8299, 4
  %v8301 = vrot.slane %v7748, 6
  %v8302 = vsel %vm1442, %v8300, %v8301
  %v8303 = vrot.slane %v8231, 6
  %v8304 = vrot.slane %v8303, 4
  %v8305 = vrot.slane %v7749, 6
  %v8306 = vsel %vm1442, %v8304, %v8305
  %v8307 = vrot.slane %v8232, 6
  %v8308 = vrot.slane %v8307, 4
  %v8309 = vrot.slane %v7750, 6
  %v8310 = vsel %vm1442, %v8308, %v8309
  %v8311 = vrot.slane %v8233, 6
  %v8312 = vrot.slane %v8311, 4
  %v8313 = vrot.slane %v7751, 6
  %v8314 = vsel %vm1442, %v8312, %v8313
  %v8315 = vrot.slane %v8234, 6
  %v8316 = vrot.slane %v8315, 4
  %v8317 = vrot.slane %v7752, 6
  %v8318 = vsel %vm1442, %v8316, %v8317
  %v8319 = vrot.slane %v8235, 6
  %v8320 = vrot.slane %v8319, 4
  %v8321 = vrot.slane %v7753, 6
  %v8322 = vsel %vm1442, %v8320, %v8321
  %v8323 = vrot.slane %v8236, 6
  %v8324 = vrot.slane %v8323, 4
  %v8325 = vrot.slane %v7754, 6
  %v8326 = vsel %vm1442, %v8324, %v8325
  %v8327 = vrot.slane %v8237, 6
  %v8328 = vrot.slane %v8327, 4
  %v8329 = vrot.slane %v7755, 6
  %v8330 = vsel %vm1442, %v8328, %v8329
  %v8331 = vrot.slane %v8238, 6
  %v8332 = vrot.slane %v8331, 4
  %v8333 = vrot.slane %v7756, 6
  %v8334 = vsel %vm1442, %v8332, %v8333
  %s8335 = scalar_lea.vmem %s1, 384
  %v8336 = vld [vmem:[%s8335] sm:$0xf]
  %v8337 = vld [vmem:[%s8335 + $0x4] sm:$0xf]
  %v8338 = vld [vmem:[%s8335 + $0x8] sm:$0xf]
  %v8339 = vld [vmem:[%s8335 + $0xc] sm:$0xf]
  %v8340 = vunpack.c.l.b16 %v8274
  %v8341 = vunpack.c.l.b16 %v8278
  %v8342 = vunpack.c.l.b16 %v8282
  %v8343 = vunpack.c.l.b16 %v8286
  %v8344 = vunpack.c.l.b16 %v8290
  %v8345 = vunpack.c.l.b16 %v8294
  %v8346 = vunpack.c.l.b16 %v8298
  %v8347 = vunpack.c.l.b16 %v8302
  %v8348 = vunpack.c.l.b16 %v8306
  %v8349 = vunpack.c.l.b16 %v8310
  %v8350 = vunpack.c.l.b16 %v8314
  %v8351 = vunpack.c.l.b16 %v8318
  %v8352 = vunpack.c.l.b16 %v8322
  %v8353 = vunpack.c.l.b16 %v8326
  %v8354 = vunpack.c.l.b16 %v8330
  %v8355 = vunpack.c.l.b16 %v8334
  %v8356 = vpack.c.b16 %v8341, %v8340
  %v8357 = vpack.c.b16 %v8343, %v8342
  %v8358 = vpack.c.b16 %v8345, %v8344
  %v8359 = vpack.c.b16 %v8347, %v8346
  %v8360 = vpack.c.b16 %v8349, %v8348
  %v8361 = vpack.c.b16 %v8351, %v8350
  %v8362 = vpack.c.b16 %v8353, %v8352
  %v8363 = vpack.c.b16 %v8355, %v8354
  %v8368 = vunpack.c.l.b16 %v8336
  %v8369 = vunpack.c.l.b16 %v8337
  %v8370 = vunpack.c.l.b16 %v8338
  %v8371 = vunpack.c.l.b16 %v8339
  %v8372 = vpack.c.b16 %v8369, %v8368
  %v8373 = vpack.c.b16 %v8371, %v8370
  %v8377 = vsel %vm319, %v8356, 0
  %v8380 = vsel %vm319, %v8357, 0
  %v8383 = vsel %vm319, %v8358, 0
  %v8386 = vsel %vm319, %v8359, 0
  %v8389 = vsel %vm319, %v8360, 0
  %v8392 = vsel %vm319, %v8361, 0
  %v8395 = vsel %vm319, %v8362, 0
  %v8398 = vsel %vm319, %v8363, 0
  %8400 = vmatprep.subr.bf16.mxu0 0
  %8401 = vmatpush1.bf16.msra.mxu0 %v8372
  %8402 = vmatprep.subr.bf16.mxu0 0
  %8403 = vmatpush1.bf16.msra.mxu0 %v8373
  %8404 = vmatprep.subr.bf16.mxu0 0
  %8405 = vmatpush1.bf16.msra.mxu0 0
  %8406 = vmatprep.subr.bf16.mxu0 0
  %8407 = vmatpush1.bf16.msra.mxu0 0
  %8408 = vmatprep.subr.bf16.mxu0 0
  %8409 = vmatpush1.bf16.msra.mxu0 0
  %8410 = vmatprep.subr.bf16.mxu0 0
  %8411 = vmatpush1.bf16.msra.mxu0 0
  %8412 = vmatprep.subr.bf16.mxu0 0
  %8413 = vmatpush1.bf16.msra.mxu0 0
  %8414 = vmatprep.subr.bf16.mxu0 0
  %8415 = vmatpush1.bf16.msra.mxu0 0
  %8416 = vmatprep.subr.bf16.mxu0 0
  %8417 = vmatpush1.bf16.msra.mxu0 0
  %8418 = vmatprep.subr.bf16.mxu0 0
  %8419 = vmatpush1.bf16.msra.mxu0 0
  %8420 = vmatprep.subr.bf16.mxu0 0
  %8421 = vmatpush1.bf16.msra.mxu0 0
  %8422 = vmatprep.subr.bf16.mxu0 0
  %8423 = vmatpush1.bf16.msra.mxu0 0
  %8424 = vmatprep.subr.bf16.mxu0 0
  %8425 = vmatpush1.bf16.msra.mxu0 0
  %8426 = vmatprep.subr.bf16.mxu0 0
  %8427 = vmatpush1.bf16.msra.mxu0 0
  %8428 = vmatprep.subr.bf16.mxu0 0
  %8429 = vmatpush1.bf16.msra.mxu0 0
  %8430 = vmatprep.subr.bf16.mxu0 0
  %8431 = vmatpush1.bf16.msra.mxu0 0
  %8432 = vmatprep.mubr.bf16.mxu0 0
  %8433 = vmatmul.mubr.bf16.gmra.mrb[0].mxu0 %v8377
  %v8434 = vpop.f32.mrb[0].mxu0
  %v8435 = vadd.f32 0.0, %v8434
  %v8436 = vpop.f32.mrb[0].mxu0
  %v8437 = vpop.f32.mrb[0].mxu0
  %v8438 = vadd.f32 0.0, %v8437
  %v8439 = vpop.f32.mrb[0].mxu0
  %8440 = vmatprep.mubr.bf16.mxu0 0
  %8441 = vmatmul.mubr.bf16.gmra.mrb[0].mxu0 %v8380
  %v8442 = vpop.f32.mrb[0].mxu0
  %v8443 = vadd.f32 0.0, %v8442
  %v8444 = vpop.f32.mrb[0].mxu0
  %v8445 = vpop.f32.mrb[0].mxu0
  %v8446 = vadd.f32 0.0, %v8445
  %v8447 = vpop.f32.mrb[0].mxu0
  %8448 = vmatprep.mubr.bf16.mxu0 0
  %8449 = vmatmul.mubr.bf16.gmra.mrb[0].mxu0 %v8383
  %v8450 = vpop.f32.mrb[0].mxu0
  %v8451 = vadd.f32 0.0, %v8450
  %v8452 = vpop.f32.mrb[0].mxu0
  %v8453 = vpop.f32.mrb[0].mxu0
  %v8454 = vadd.f32 0.0, %v8453
  %v8455 = vpop.f32.mrb[0].mxu0
  %8456 = vmatprep.mubr.bf16.mxu0 0
  %8457 = vmatmul.mubr.bf16.gmra.mrb[0].mxu0 %v8386
  %v8458 = vpop.f32.mrb[0].mxu0
  %v8459 = vadd.f32 0.0, %v8458
  %v8460 = vpop.f32.mrb[0].mxu0
  %v8461 = vpop.f32.mrb[0].mxu0
  %v8462 = vadd.f32 0.0, %v8461
  %v8463 = vpop.f32.mrb[0].mxu0
  %8464 = vmatprep.mubr.bf16.mxu0 0
  %8465 = vmatmul.mubr.bf16.gmra.mrb[0].mxu0 %v8389
  %v8466 = vpop.f32.mrb[0].mxu0
  %v8467 = vadd.f32 0.0, %v8466
  %v8468 = vpop.f32.mrb[0].mxu0
  %v8469 = vpop.f32.mrb[0].mxu0
  %v8470 = vadd.f32 0.0, %v8469
  %v8471 = vpop.f32.mrb[0].mxu0
  %8472 = vmatprep.mubr.bf16.mxu0 0
  %8473 = vmatmul.mubr.bf16.gmra.mrb[0].mxu0 %v8392
  %v8474 = vpop.f32.mrb[0].mxu0
  %v8475 = vadd.f32 0.0, %v8474
  %v8476 = vpop.f32.mrb[0].mxu0
  %v8477 = vpop.f32.mrb[0].mxu0
  %v8478 = vadd.f32 0.0, %v8477
  %v8479 = vpop.f32.mrb[0].mxu0
  %8480 = vmatprep.mubr.bf16.mxu0 0
  %8481 = vmatmul.mubr.bf16.gmra.mrb[0].mxu0 %v8395
  %v8482 = vpop.f32.mrb[0].mxu0
  %v8483 = vadd.f32 0.0, %v8482
  %v8484 = vpop.f32.mrb[0].mxu0
  %v8485 = vpop.f32.mrb[0].mxu0
  %v8486 = vadd.f32 0.0, %v8485
  %v8487 = vpop.f32.mrb[0].mxu0
  %8488 = vmatprep.mubr.bf16.mxu0 0
  %8489 = vmatmul.mubr.bf16.gmra.mrb[0].mxu0 %v8398
  %v8490 = vpop.f32.mrb[0].mxu0
  %v8491 = vadd.f32 0.0, %v8490
  %v8492 = vpop.f32.mrb[0].mxu0
  %v8493 = vpop.f32.mrb[0].mxu0
  %v8494 = vadd.f32 0.0, %v8493
  %v8495 = vpop.f32.mrb[0].mxu0
  %8496 = vdwg.mxu0
  %v8497 = vadd.f32 %v8207, %v8435
  %v8498 = vadd.f32 %v8208, %v8438
  %v8499 = vadd.f32 %v8209, %v8443
  %v8500 = vadd.f32 %v8210, %v8446
  %v8501 = vadd.f32 %v8211, %v8451
  %v8502 = vadd.f32 %v8212, %v8454
  %v8503 = vadd.f32 %v8213, %v8459
  %v8504 = vadd.f32 %v8214, %v8462
  %v8505 = vadd.f32 %v8215, %v8467
  %v8506 = vadd.f32 %v8216, %v8470
  %v8507 = vadd.f32 %v8217, %v8475
  %v8508 = vadd.f32 %v8218, %v8478
  %v8509 = vadd.f32 %v8219, %v8483
  %v8510 = vadd.f32 %v8220, %v8486
  %v8511 = vadd.f32 %v8221, %v8491
  %v8512 = vadd.f32 %v8222, %v8494
  %v8513 = vld [vmem:[%s2] sm:$0x1]
  %v8515 = vlaneseq
  %v8516 = vshrl.u32 %v8515, 7
  %v8517 = vsub.s32 0, %v8516
  %v8518 = vrot.slane %v8513, %v8517
  %v8520 = vadd.f32 %v8497, %v8518
  %v8521 = vadd.f32 %v8498, %v8518
  %v8522 = vadd.f32 %v8499, %v8518
  %v8523 = vadd.f32 %v8500, %v8518
  %v8524 = vadd.f32 %v8501, %v8518
  %v8525 = vadd.f32 %v8502, %v8518
  %v8526 = vadd.f32 %v8503, %v8518
  %v8527 = vadd.f32 %v8504, %v8518
  %v8528 = vadd.f32 %v8505, %v8518
  %v8529 = vadd.f32 %v8506, %v8518
  %v8530 = vadd.f32 %v8507, %v8518
  %v8531 = vadd.f32 %v8508, %v8518
  %v8532 = vadd.f32 %v8509, %v8518
  %v8533 = vadd.f32 %v8510, %v8518
  %v8534 = vadd.f32 %v8511, %v8518
  %v8535 = vadd.f32 %v8512, %v8518
  %vm8536 = vcmp.ge.f32.partialorder %v8520, 0.0
  %vm8537 = vcmp.ge.f32.partialorder %v8521, 0.0
  %vm8538 = vcmp.ge.f32.partialorder %v8522, 0.0
  %vm8539 = vcmp.ge.f32.partialorder %v8523, 0.0
  %vm8540 = vcmp.ge.f32.partialorder %v8524, 0.0
  %vm8541 = vcmp.ge.f32.partialorder %v8525, 0.0
  %vm8542 = vcmp.ge.f32.partialorder %v8526, 0.0
  %vm8543 = vcmp.ge.f32.partialorder %v8527, 0.0
  %vm8544 = vcmp.ge.f32.partialorder %v8528, 0.0
  %vm8545 = vcmp.ge.f32.partialorder %v8529, 0.0
  %vm8546 = vcmp.ge.f32.partialorder %v8530, 0.0
  %vm8547 = vcmp.ge.f32.partialorder %v8531, 0.0
  %vm8548 = vcmp.ge.f32.partialorder %v8532, 0.0
  %vm8549 = vcmp.ge.f32.partialorder %v8533, 0.0
  %vm8550 = vcmp.ge.f32.partialorder %v8534, 0.0
  %vm8551 = vcmp.ge.f32.partialorder %v8535, 0.0
  %v8552 = vmul.f32 %v8520, 0.01
  %v8553 = vmul.f32 %v8521, 0.01
  %v8554 = vmul.f32 %v8522, 0.01
  %v8555 = vmul.f32 %v8523, 0.01
  %v8556 = vmul.f32 %v8524, 0.01
  %v8557 = vmul.f32 %v8525, 0.01
  %v8558 = vmul.f32 %v8526, 0.01
  %v8559 = vmul.f32 %v8527, 0.01
  %v8560 = vmul.f32 %v8528, 0.01
  %v8561 = vmul.f32 %v8529, 0.01
  %v8562 = vmul.f32 %v8530, 0.01
  %v8563 = vmul.f32 %v8531, 0.01
  %v8564 = vmul.f32 %v8532, 0.01
  %v8565 = vmul.f32 %v8533, 0.01
  %v8566 = vmul.f32 %v8534, 0.01
  %v8567 = vmul.f32 %v8535, 0.01
  %v8568 = vsel %vm8536, %v8520, %v8552
  %v8569 = vsel %vm8537, %v8521, %v8553
  %v8570 = vsel %vm8538, %v8522, %v8554
  %v8571 = vsel %vm8539, %v8523, %v8555
  %v8572 = vsel %vm8540, %v8524, %v8556
  %v8573 = vsel %vm8541, %v8525, %v8557
  %v8574 = vsel %vm8542, %v8526, %v8558
  %v8575 = vsel %vm8543, %v8527, %v8559
  %v8576 = vsel %vm8544, %v8528, %v8560
  %v8577 = vsel %vm8545, %v8529, %v8561
  %v8578 = vsel %vm8546, %v8530, %v8562
  %v8579 = vsel %vm8547, %v8531, %v8563
  %v8580 = vsel %vm8548, %v8532, %v8564
  %v8581 = vsel %vm8549, %v8533, %v8565
  %v8582 = vsel %vm8550, %v8534, %v8566
  %v8583 = vsel %vm8551, %v8535, %v8567
  %v8584 = vmax.f32 %v8568, %v8569
  %v8585 = vmax.f32 %v8576, %v8577
  %v8586 = vpack.c.bf16 %v8584, %v8584
  %v8587 = vpack.c.bf16 %v8585, %v8585
  %vm8588 = vcmask 519168
  %8589 = vst.msk [vmem:[%s3] sm:$0xf] %vm8588, %v8586
  %8590 = vst.msk [vmem:[%s3 + $0x10] sm:$0xf] %vm8588, %v8587
  %v8591 = vmax.f32 %v8570, %v8571
  %v8592 = vmax.f32 %v8578, %v8579
  %v8593 = vpack.c.bf16 %v8591, %v8591
  %v8594 = vpack.c.bf16 %v8592, %v8592
  %8595 = vst.msk [vmem:[%s3 + $0x4] sm:$0xf] %vm8588, %v8593
  %8596 = vst.msk [vmem:[%s3 + $0x14] sm:$0xf] %vm8588, %v8594
  %v8597 = vmax.f32 %v8572, %v8573
  %v8598 = vmax.f32 %v8580, %v8581
  %v8599 = vpack.c.bf16 %v8597, %v8597
  %v8600 = vpack.c.bf16 %v8598, %v8598
  %8601 = vst.msk [vmem:[%s3 + $0x8] sm:$0xf] %vm8588, %v8599
  %8602 = vst.msk [vmem:[%s3 + $0x18] sm:$0xf] %vm8588, %v8600
  %v8603 = vmax.f32 %v8574, %v8575
  %v8604 = vmax.f32 %v8582, %v8583
  %v8605 = vpack.c.bf16 %v8603, %v8603
  %v8606 = vpack.c.bf16 %v8604, %v8604
  %8607 = vst.msk [vmem:[%s3 + $0xc] sm:$0xf] %vm8588, %v8605
  %8608 = vst.msk [vmem:[%s3 + $0x1c] sm:$0xf] %vm8588, %v8606
  // Predicated region
  $region14: #{discriminator_forward.4} parent=0 // pred_check
    _
  $region15: #{discriminator_forward.4} parent=0 // pred_check_branch
    %8610 = sbr.rel (0) target = $region17
  $region16: #{discriminator_forward.4} parent=0 // pred_region
    _
  $region17: #{discriminator_forward.4} parent=0 // pred_fallthru
    _
  // Predicated region
  $region18: #{discriminator_forward.4} parent=0 // pred_check
    _
  $region19: #{discriminator_forward.4} parent=0 // pred_check_branch
    %8612 = sbr.rel (0) target = $region21
  $region20: #{discriminator_forward.4} parent=0 // pred_region
    _
  $region21: #{discriminator_forward.4} parent=0 // pred_fallthru
    _

</llo_original>
